<compile_context>
chip_gen: v5e
topology: v5e:2x2
jax: 0.10.0
libtpu: 0.0.40
codegen_flags: <defaults>
</compile_context>

<pallas_src>
import math
import functools

import jax
import jax.numpy as jnp
from jax.experimental import pallas as pl
from jax.experimental.pallas import tpu as pltpu

NEG = -1e30  # additive mask value (every query row keeps >= 1 valid key)


# ------------------------------ fused kernel ---------------------------------

def _fused_kernel(motion_ref, embs_ref, mask_ref,
                  wenc_ref, benc_ref,
                  wq_ref, bq_ref, wk_ref, bk_ref, wv_ref, bv_ref,
                  wo_ref, bo_ref,
                  cavw_ref, cavb_ref, caow_ref, caob_ref,
                  w1_ref, b1_ref, w2_ref, b2_ref,
                  n1g_ref, n1b_ref, n2g_ref, n2b_ref, n3g_ref, n3b_ref,
                  fcw_ref, fcb_ref,
                  logits_ref,
                  *, L, H, num_heads, num_layers, eps):
    Dh = H // num_heads
    scale = 1.0 / math.sqrt(Dh)

    def ln(z, g, b):
        mu = jnp.mean(z, axis=-1, keepdims=True)
        zc = z - mu
        var = jnp.mean(zc * zc, axis=-1, keepdims=True)
        return zc * jax.lax.rsqrt(var + eps) * g + b

    # ------------- encoder: folded affine map + L2 normalize (per batch) ------
    pooled = jnp.mean(motion_ref[...], axis=0, keepdims=True)            # (1, J*C)
    e = jnp.dot(pooled, wenc_ref[...],
                preferred_element_type=jnp.float32) + benc_ref[...]      # (1, H)
    nrm = jnp.sqrt(jnp.sum(e * e, axis=-1, keepdims=True))
    enc = e / jnp.maximum(nrm, 1e-12)                                    # exact F.normalize
    encb = enc.astype(jnp.bfloat16)

    x = embs_ref[...]                                                    # (L, H) f32
    addm = mask_ref[...]                                                 # (L, L) f32, causal+padding

    # --------------------- decoder stack, layers unrolled ---------------------
    for l in range(num_layers):
        # ---- masked multi-head self-attention (per-head weights, no lane slicing)
        xb = x.astype(jnp.bfloat16)
        sa = jnp.zeros((L, H), jnp.float32)
        for h in range(num_heads):
            i = l * num_heads + h
            qh = jnp.dot(xb, wq_ref[i], preferred_element_type=jnp.float32) + bq_ref[i]
            kh = jnp.dot(xb, wk_ref[i], preferred_element_type=jnp.float32) + bk_ref[i]
            vh = jnp.dot(xb, wv_ref[i], preferred_element_type=jnp.float32) + bv_ref[i]
            s = jax.lax.dot_general(qh, kh, (((1,), (1,)), ((), ())),
                                    preferred_element_type=jnp.float32) * scale + addm
            s = s - jnp.max(s, axis=-1, keepdims=True)
            p = jnp.exp(s)
            p = p / jnp.sum(p, axis=-1, keepdims=True)                   # exact softmax denom
            oh = jnp.dot(p.astype(jnp.bfloat16), vh.astype(jnp.bfloat16),
                         preferred_element_type=jnp.float32)             # (L, Dh)
            sa = sa + jnp.dot(oh.astype(jnp.bfloat16), wo_ref[i],
                              preferred_element_type=jnp.float32)        # accumulate (L, H)
        sa = sa + bo_ref[l]
        x = ln(x + sa, n1g_ref[l], n1b_ref[l])

        # ---- cross-attention with a single (unmasked) memory token:
        #      softmax over one key == 1  =>  out_proj(v_proj(enc)), bcast over L.
        cv = jnp.dot(encb, cavw_ref[l],
                     preferred_element_type=jnp.float32) + cavb_ref[l]   # (1, H)
        co = jnp.dot(cv.astype(jnp.bfloat16), caow_ref[l],
                     preferred_element_type=jnp.float32) + caob_ref[l]   # (1, H)
        x = ln(x + co, n2g_ref[l], n2b_ref[l])

        # ---- FFN (relu) ----
        h1 = jnp.maximum(jnp.dot(x.astype(jnp.bfloat16), w1_ref[l],
                                 preferred_element_type=jnp.float32) + b1_ref[l], 0.0)
        ff = jnp.dot(h1.astype(jnp.bfloat16), w2_ref[l],
                     preferred_element_type=jnp.float32) + b2_ref[l]
        x = ln(x + ff, n3g_ref[l], n3b_ref[l])

    # ----------------- fused output projection (lane-dense vocab) -------------
    logits_ref[...] = jnp.dot(x.astype(jnp.bfloat16), fcw_ref[...],
                              preferred_element_type=jnp.float32) + fcb_ref[...]


# -------------------------------- glue layers ---------------------------------

def sinusoidal_pos_emb(L, dim):
    half = dim // 2
    scale = math.log(10000.0) / (half - 1)
    freqs = jnp.exp(jnp.arange(half, dtype=jnp.float32) * -scale)
    arg = jnp.arange(L, dtype=jnp.float32)[:, None] * freqs[None, :]
    return jnp.concatenate([jnp.sin(arg), jnp.cos(arg)], axis=-1)       # (L, dim)


def prepare_inference_params(params, *, num_heads):
    """One-time (outside jit) transform of PyTorch-style params into the
    kernel-friendly layout: folded encoder affine, per-head Q/K/V/O weights,
    lane-padded fc_out, bf16 matmul weights."""
    backbone_w = params["backbone_w"]                  # (C=3, dim_rep)
    C, dim_rep = backbone_w.shape
    JD, H = params["enc_fc1_w"].shape
    J = JD // dim_rep
    NL = params["sa_wqkv"].shape[0]
    Dh = H // num_heads
    vocab = params["fc_out_w"].shape[1]
    Vp = ((vocab + 127) // 128) * 128

    # encoder fold: mean-pool -> per-joint backbone affine -> fc1  collapses to
    # one (J*C, H) affine map (exact: pooling commutes with affine maps).
    W1r = params["enc_fc1_w"].reshape(J, dim_rep, H)
    wenc = jnp.einsum("cd,jdh->jch", backbone_w, W1r).reshape(J * C, H)
    benc = (jnp.einsum("d,jdh->h", params["backbone_b"], W1r)
            + params["enc_fc1_b"]).reshape(1, H)

    def per_head_w(w):      # (NL, H, H) -> (NL*nh, H, Dh)
        return (w.reshape(NL, H, num_heads, Dh)
                 .transpose(0, 2, 1, 3).reshape(NL * num_heads, H, Dh))

    def per_head_b(b):      # (NL, H) -> (NL*nh, 1, Dh)
        return b.reshape(NL * num_heads, 1, Dh)

    wqkv, bqkv = params["sa_wqkv"], params["sa_bqkv"]
    wq = per_head_w(wqkv[:, :, 0:H])
    wk = per_head_w(wqkv[:, :, H:2 * H])
    wv = per_head_w(wqkv[:, :, 2 * H:3 * H])
    bq = per_head_b(bqkv[:, 0:H])
    bk = per_head_b(bqkv[:, H:2 * H])
    bv = per_head_b(bqkv[:, 2 * H:3 * H])
    wo = params["sa_wo"].reshape(NL, num_heads, Dh, H).reshape(NL * num_heads, Dh, H)

    fcw = jnp.zeros((H, Vp), jnp.float32).at[:, :vocab].set(params["fc_out_w"])
    fcb = jnp.zeros((1, Vp), jnp.float32).at[:, :vocab].set(params["fc_out_b"][None, :])

    bf = lambda a: a.astype(jnp.bfloat16)      # matmul weights streamed in bf16
    b3 = lambda a: a[:, None, :]               # (NL, d) -> (NL, 1, d)

    return dict(
        emb=params["emb"],
        wenc=wenc, benc=benc,
        wq=bf(wq), bq=bq, wk=bf(wk), bk=bk, wv=bf(wv), bv=bv,
        wo=bf(wo), bo=b3(params["sa_bo"]),
        cavw=bf(params["ca_wv"]), cavb=b3(params["ca_bv"]),
        caow=bf(params["ca_wo"]), caob=b3(params["ca_bo"]),
        w1=bf(params["ff_w1"]), b1=b3(params["ff_b1"]),
        w2=bf(params["ff_w2"]), b2=b3(params["ff_b2"]),
        n1g=b3(params["n1_g"]), n1b=b3(params["n1_b"]),
        n2g=b3(params["n2_g"]), n2b=b3(params["n2_b"]),
        n3g=b3(params["n3_g"]), n3b=b3(params["n3_b"]),
        fcw=bf(fcw), fcb=fcb,
    )


def encoder_decoder_forward(kp, motion, target_seq, padding_mask, *, num_heads):
    N, M, T, J, C = motion.shape
    H = kp["wenc"].shape[1]
    NL = kp["w1"].shape[0]
    vocab = kp["emb"].shape[0]
    Vp = kp["fcw"].shape[1]
    B, L = target_seq.shape

    motion3 = motion.reshape(N, M * T, J * C).astype(jnp.float32)

    embs = kp["emb"][target_seq] + sinusoidal_pos_emb(L, H)[None]        # (B, L, H)
    embs2 = embs.reshape(B * L, H).astype(jnp.float32)

    # causal + key-padding additive mask, precomputed once per batch (tiny)
    ii = jnp.arange(L)
    causal = ii[None, :] > ii[:, None]                                   # True = masked
    pad = (padding_mask == 0)                                            # True = padding
    bad = causal[None, :, :] | pad[:, None, :]
    addm = jnp.where(bad, NEG, 0.0).astype(jnp.float32)                  # (B, L, L)

    kern = functools.partial(_fused_kernel, L=L, H=H, num_heads=num_heads,
                             num_layers=NL, eps=1e-5)

    wkeys = ["wenc", "benc", "wq", "bq", "wk", "bk", "wv", "bv", "wo", "bo",
             "cavw", "cavb", "caow", "caob", "w1", "b1", "w2", "b2",
             "n1g", "n1b", "n2g", "n2b", "n3g", "n3b", "fcw", "fcb"]
    wvals = [kp[k] for k in wkeys]

    in_specs = [
        pl.BlockSpec((None, M * T, J * C), lambda b: (b, 0, 0)),   # motion (per batch)
        pl.BlockSpec((L, H), lambda b: (b, 0)),                    # embeddings (per batch)
        pl.BlockSpec((None, L, L), lambda b: (b, 0, 0)),           # additive mask (per batch)
    ] + [
        # full-array blocks with constant index maps -> weights resident in VMEM,
        # DMA'd once (block index never changes across grid steps).
        pl.BlockSpec(v.shape, lambda b, n=v.ndim: (0,) * n) for v in wvals
    ]

    logits = pl.pallas_call(
        kern,
        out_shape=jax.ShapeDtypeStruct((B * L, Vp), jnp.float32),
        grid=(B,),
        in_specs=in_specs,
        out_specs=pl.BlockSpec((L, Vp), lambda b: (b, 0)),
        compiler_params=pltpu.CompilerParams(
            dimension_semantics=("parallel",)),                    # v7x: 2 TCs over batch
    )(motion3, embs2, addm, *wvals)

    return logits[:, :vocab].reshape(B, L, vocab)


# -------------------------------- parameters ----------------------------------

def init_params(key, *, dim_rep, num_joints, enc_hidden, vocab, num_layers):
    H = enc_hidden
    NL = num_layers
    keys = iter(jax.random.split(key, 32))

    def nrm(shape, scale=0.02):
        return (scale * jax.random.normal(next(keys), shape)).astype(jnp.float32)

    ones = lambda s: jnp.ones(s, jnp.float32)
    zeros = lambda s: jnp.zeros(s, jnp.float32)

    return dict(
        backbone_w=nrm((3, dim_rep)), backbone_b=nrm((dim_rep,)),
        enc_fc1_w=nrm((dim_rep * num_joints, H)), enc_fc1_b=nrm((H,)),
        emb=(0.001 * jax.random.normal(next(keys), (vocab, H))).astype(jnp.float32),
        fc_out_w=nrm((H, vocab)), fc_out_b=nrm((vocab,)),
        # decoder layers, stacked over the leading layer axis; QKV fused (H, 3H).
        sa_wqkv=nrm((NL, H, 3 * H)), sa_bqkv=nrm((NL, 3 * H)),
        sa_wo=nrm((NL, H, H)), sa_bo=nrm((NL, H)),
        # cross-attn Q/K projections are mathematically irrelevant for a single
        # memory token (softmax over one key == 1); only V and out-proj are kept.
        ca_wv=nrm((NL, H, H)), ca_bv=nrm((NL, H)),
        ca_wo=nrm((NL, H, H)), ca_bo=nrm((NL, H)),
        ff_w1=nrm((NL, H, 4 * H)), ff_b1=nrm((NL, 4 * H)),
        ff_w2=nrm((NL, 4 * H, H)), ff_b2=nrm((NL, H)),
        n1_g=ones((NL, H)), n1_b=zeros((NL, H)),
        n2_g=ones((NL, H)), n2_b=zeros((NL, H)),
        n3_g=ones((NL, H)), n3_b=zeros((NL, H)),
    )


# ------------------------------------ main -------------------------------------

if __name__ == "__main__":
    key = jax.random.PRNGKey(0)
    N, M, T, J, C = 2, 2, 8, 17, 3          # motion: (N, M, T, J, 3)
    dim_rep = 32
    enc_hidden = 128                        # = decoder d_model (hidden_size)
    vocab = 60
    num_layers = 3
    num_heads = 4
    L = 8                                   # target sequence length

    k_params, k_motion, k_seq = jax.random.split(key, 3)
    params = init_params(k_params, dim_rep=dim_rep, num_joints=J,
                         enc_hidden=enc_hidden, vocab=vocab, num_layers=num_layers)
    # one-time layout/precision prep, outside the jitted forward
    kparams = prepare_inference_params(params, num_heads=num_heads)

    motion = jax.random.normal(k_motion, (N, M, T, J, C), dtype=jnp.float32)
    target_seq = jax.random.randint(k_seq, (N, L), 0, vocab, dtype=jnp.int32)
    # 1 = valid token, 0 = padding (trailing padding so no row is fully masked)
    padding_mask = jnp.array([[1] * L, [1] * 6 + [0] * 2], dtype=jnp.int32)

    fwd = jax.jit(functools.partial(encoder_decoder_forward, num_heads=num_heads))
    out = jax.block_until_ready(fwd(kparams, motion, target_seq, padding_mask))

    assert out.shape == (N, L, vocab), out.shape
    assert bool(jnp.all(jnp.isfinite(out)))
    print("KERNEL_OK")
</pallas_src>

<mosaic_0001>
module attributes {stable_mosaic.version = 11 : i64} {
  func.func @_fused_kernel(%arg0: i32, %arg1: memref<1x16x51xf32, #tpu.memory_space<vmem>>, %arg2: memref<8x128xf32, #tpu.memory_space<vmem>>, %arg3: memref<1x8x8xf32, #tpu.memory_space<vmem>>, %arg4: memref<51x128xf32, #tpu.memory_space<vmem>>, %arg5: memref<1x128xf32, #tpu.memory_space<vmem>>, %arg6: memref<12x128x32xbf16, #tpu.memory_space<vmem>>, %arg7: memref<12x1x32xf32, #tpu.memory_space<vmem>>, %arg8: memref<12x128x32xbf16, #tpu.memory_space<vmem>>, %arg9: memref<12x1x32xf32, #tpu.memory_space<vmem>>, %arg10: memref<12x128x32xbf16, #tpu.memory_space<vmem>>, %arg11: memref<12x1x32xf32, #tpu.memory_space<vmem>>, %arg12: memref<12x32x128xbf16, #tpu.memory_space<vmem>>, %arg13: memref<3x1x128xf32, #tpu.memory_space<vmem>>, %arg14: memref<3x128x128xbf16, #tpu.memory_space<vmem>>, %arg15: memref<3x1x128xf32, #tpu.memory_space<vmem>>, %arg16: memref<3x128x128xbf16, #tpu.memory_space<vmem>>, %arg17: memref<3x1x128xf32, #tpu.memory_space<vmem>>, %arg18: memref<3x128x512xbf16, #tpu.memory_space<vmem>>, %arg19: memref<3x1x512xf32, #tpu.memory_space<vmem>>, %arg20: memref<3x512x128xbf16, #tpu.memory_space<vmem>>, %arg21: memref<3x1x128xf32, #tpu.memory_space<vmem>>, %arg22: memref<3x1x128xf32, #tpu.memory_space<vmem>>, %arg23: memref<3x1x128xf32, #tpu.memory_space<vmem>>, %arg24: memref<3x1x128xf32, #tpu.memory_space<vmem>>, %arg25: memref<3x1x128xf32, #tpu.memory_space<vmem>>, %arg26: memref<3x1x128xf32, #tpu.memory_space<vmem>>, %arg27: memref<3x1x128xf32, #tpu.memory_space<vmem>>, %arg28: memref<128x128xbf16, #tpu.memory_space<vmem>>, %arg29: memref<1x128xf32, #tpu.memory_space<vmem>>, %arg30: memref<8x128xf32, #tpu.memory_space<vmem>>) attributes {dimension_semantics = [#tpu.dimension_semantics<parallel>], iteration_bounds = array<i64: 2>, scalar_prefetch = 0 : i64, scratch_operands = 0 : i64, tpu.core_type = #tpu.core_type<tc>, window_params = [{transform_indices = @transform_0, window_bounds = array<i64: 1, 16, 51>}, {transform_indices = @transform_1, window_bounds = array<i64: 8, 128>}, {transform_indices = @transform_2, window_bounds = array<i64: 1, 8, 8>}, {pipeline_mode = #tpu.pipeline_mode<synchronous>, transform_indices = @transform_3, window_bounds = array<i64: 51, 128>}, {pipeline_mode = #tpu.pipeline_mode<synchronous>, transform_indices = @transform_4, window_bounds = array<i64: 1, 128>}, {pipeline_mode = #tpu.pipeline_mode<synchronous>, transform_indices = @transform_5, window_bounds = array<i64: 12, 128, 32>}, {pipeline_mode = #tpu.pipeline_mode<synchronous>, transform_indices = @transform_6, window_bounds = array<i64: 12, 1, 32>}, {pipeline_mode = #tpu.pipeline_mode<synchronous>, transform_indices = @transform_7, window_bounds = array<i64: 12, 128, 32>}, {pipeline_mode = #tpu.pipeline_mode<synchronous>, transform_indices = @transform_8, window_bounds = array<i64: 12, 1, 32>}, {pipeline_mode = #tpu.pipeline_mode<synchronous>, transform_indices = @transform_9, window_bounds = array<i64: 12, 128, 32>}, {pipeline_mode = #tpu.pipeline_mode<synchronous>, transform_indices = @transform_10, window_bounds = array<i64: 12, 1, 32>}, {pipeline_mode = #tpu.pipeline_mode<synchronous>, transform_indices = @transform_11, window_bounds = array<i64: 12, 32, 128>}, {pipeline_mode = #tpu.pipeline_mode<synchronous>, transform_indices = @transform_12, window_bounds = array<i64: 3, 1, 128>}, {pipeline_mode = #tpu.pipeline_mode<synchronous>, transform_indices = @transform_13, window_bounds = array<i64: 3, 128, 128>}, {pipeline_mode = #tpu.pipeline_mode<synchronous>, transform_indices = @transform_14, window_bounds = array<i64: 3, 1, 128>}, {pipeline_mode = #tpu.pipeline_mode<synchronous>, transform_indices = @transform_15, window_bounds = array<i64: 3, 128, 128>}, {pipeline_mode = #tpu.pipeline_mode<synchronous>, transform_indices = @transform_16, window_bounds = array<i64: 3, 1, 128>}, {pipeline_mode = #tpu.pipeline_mode<synchronous>, transform_indices = @transform_17, window_bounds = array<i64: 3, 128, 512>}, {pipeline_mode = #tpu.pipeline_mode<synchronous>, transform_indices = @transform_18, window_bounds = array<i64: 3, 1, 512>}, {pipeline_mode = #tpu.pipeline_mode<synchronous>, transform_indices = @transform_19, window_bounds = array<i64: 3, 512, 128>}, {pipeline_mode = #tpu.pipeline_mode<synchronous>, transform_indices = @transform_20, window_bounds = array<i64: 3, 1, 128>}, {pipeline_mode = #tpu.pipeline_mode<synchronous>, transform_indices = @transform_21, window_bounds = array<i64: 3, 1, 128>}, {pipeline_mode = #tpu.pipeline_mode<synchronous>, transform_indices = @transform_22, window_bounds = array<i64: 3, 1, 128>}, {pipeline_mode = #tpu.pipeline_mode<synchronous>, transform_indices = @transform_23, window_bounds = array<i64: 3, 1, 128>}, {pipeline_mode = #tpu.pipeline_mode<synchronous>, transform_indices = @transform_24, window_bounds = array<i64: 3, 1, 128>}, {pipeline_mode = #tpu.pipeline_mode<synchronous>, transform_indices = @transform_25, window_bounds = array<i64: 3, 1, 128>}, {pipeline_mode = #tpu.pipeline_mode<synchronous>, transform_indices = @transform_26, window_bounds = array<i64: 3, 1, 128>}, {pipeline_mode = #tpu.pipeline_mode<synchronous>, transform_indices = @transform_27, window_bounds = array<i64: 128, 128>}, {pipeline_mode = #tpu.pipeline_mode<synchronous>, transform_indices = @transform_28, window_bounds = array<i64: 1, 128>}, {transform_indices = @transform_29, window_bounds = array<i64: 8, 128>}]} {
    %c0 = arith.constant 0 : index
    %c0_0 = arith.constant 0 : index
    %c0_1 = arith.constant 0 : index
    %0 = vector.load %arg1[%c0, %c0_0, %c0_1] : memref<1x16x51xf32, #tpu.memory_space<vmem>>, vector<1x16x51xf32>
    %1 = vector.shape_cast %0 : vector<1x16x51xf32> to vector<16x51xf32>
    %cst = arith.constant dense<0.000000e+00> : vector<51xf32>
    %2 = vector.multi_reduction <add>, %1, %cst [0] : vector<16x51xf32> to vector<51xf32>
    %3 = vector.shape_cast %2 : vector<51xf32> to vector<1x51xf32>
    %cst_2 = arith.constant 1.600000e+01 : f32
    %4 = vector.broadcast %cst_2 : f32 to vector<1x51xf32>
    %5 = arith.divf %3, %4 : vector<1x51xf32>
    %c0_3 = arith.constant 0 : index
    %c0_4 = arith.constant 0 : index
    %6 = vector.load %arg4[%c0_3, %c0_4] : memref<51x128xf32, #tpu.memory_space<vmem>>, vector<51x128xf32>
    %cst_5 = arith.constant dense<0.000000e+00> : vector<1x128xf32>
    %7 = tpu.matmul %5, %6, %cst_5 {dimension_numbers = #tpu.dot_dimension_numbers<[1], [0], [0], [1], [0, 0, 1, 1], [], []>} : vector<1x51xf32>, vector<51x128xf32>, vector<1x128xf32> -> vector<1x128xf32>
    %c0_6 = arith.constant 0 : index
    %c0_7 = arith.constant 0 : index
    %8 = vector.load %arg5[%c0_6, %c0_7] : memref<1x128xf32, #tpu.memory_space<vmem>>, vector<1x128xf32>
    %9 = arith.addf %7, %8 : vector<1x128xf32>
    %10 = arith.mulf %9, %9 : vector<1x128xf32>
    %cst_8 = arith.constant dense<0.000000e+00> : vector<1xf32>
    %11 = vector.multi_reduction <add>, %10, %cst_8 [1] : vector<1x128xf32> to vector<1xf32>
    %12 = vector.shape_cast %11 : vector<1xf32> to vector<1x1xf32>
    %13 = math.sqrt %12 : vector<1x1xf32>
    %cst_9 = arith.constant 9.99999996E-13 : f32
    %14 = vector.broadcast %cst_9 : f32 to vector<1x1xf32>
    %15 = arith.maximumf %13, %14 : vector<1x1xf32>
    %16 = vector.broadcast %15 : vector<1x1xf32> to vector<1x128xf32>
    %17 = arith.divf %9, %16 : vector<1x128xf32>
    %18 = arith.truncf %17 : vector<1x128xf32> to vector<1x128xbf16>
    %c0_10 = arith.constant 0 : index
    %c0_11 = arith.constant 0 : index
    %19 = vector.load %arg2[%c0_10, %c0_11] : memref<8x128xf32, #tpu.memory_space<vmem>>, vector<8x128xf32>
    %c0_12 = arith.constant 0 : index
    %c0_13 = arith.constant 0 : index
    %c0_14 = arith.constant 0 : index
    %20 = vector.load %arg3[%c0_12, %c0_13, %c0_14] : memref<1x8x8xf32, #tpu.memory_space<vmem>>, vector<1x8x8xf32>
    %21 = vector.shape_cast %20 : vector<1x8x8xf32> to vector<8x8xf32>
    %22 = arith.truncf %19 : vector<8x128xf32> to vector<8x128xbf16>
    %cst_15 = arith.constant 0.000000e+00 : f32
    %23 = vector.broadcast %cst_15 : f32 to vector<8x128xf32>
    %c0_16 = arith.constant 0 : index
    %c0_17 = arith.constant 0 : index
    %c0_18 = arith.constant 0 : index
    %24 = vector.load %arg6[%c0_16, %c0_17, %c0_18] : memref<12x128x32xbf16, #tpu.memory_space<vmem>>, vector<1x128x32xbf16>
    %25 = vector.shape_cast %24 : vector<1x128x32xbf16> to vector<128x32xbf16>
    %cst_19 = arith.constant dense<0.000000e+00> : vector<8x32xf32>
    %26 = tpu.matmul %22, %25, %cst_19 {dimension_numbers = #tpu.dot_dimension_numbers<[1], [0], [0], [1], [0, 0, 1, 1], [], []>} : vector<8x128xbf16>, vector<128x32xbf16>, vector<8x32xf32> -> vector<8x32xf32>
    %c0_20 = arith.constant 0 : index
    %c0_21 = arith.constant 0 : index
    %c0_22 = arith.constant 0 : index
    %27 = vector.load %arg7[%c0_20, %c0_21, %c0_22] : memref<12x1x32xf32, #tpu.memory_space<vmem>>, vector<1x1x32xf32>
    %28 = vector.shape_cast %27 : vector<1x1x32xf32> to vector<1x32xf32>
    %29 = vector.broadcast %28 : vector<1x32xf32> to vector<8x32xf32>
    %30 = arith.addf %26, %29 : vector<8x32xf32>
    %c0_23 = arith.constant 0 : index
    %c0_24 = arith.constant 0 : index
    %c0_25 = arith.constant 0 : index
    %31 = vector.load %arg8[%c0_23, %c0_24, %c0_25] : memref<12x128x32xbf16, #tpu.memory_space<vmem>>, vector<1x128x32xbf16>
    %32 = vector.shape_cast %31 : vector<1x128x32xbf16> to vector<128x32xbf16>
    %cst_26 = arith.constant dense<0.000000e+00> : vector<8x32xf32>
    %33 = tpu.matmul %22, %32, %cst_26 {dimension_numbers = #tpu.dot_dimension_numbers<[1], [0], [0], [1], [0, 0, 1, 1], [], []>} : vector<8x128xbf16>, vector<128x32xbf16>, vector<8x32xf32> -> vector<8x32xf32>
    %c0_27 = arith.constant 0 : index
    %c0_28 = arith.constant 0 : index
    %c0_29 = arith.constant 0 : index
    %34 = vector.load %arg9[%c0_27, %c0_28, %c0_29] : memref<12x1x32xf32, #tpu.memory_space<vmem>>, vector<1x1x32xf32>
    %35 = vector.shape_cast %34 : vector<1x1x32xf32> to vector<1x32xf32>
    %36 = vector.broadcast %35 : vector<1x32xf32> to vector<8x32xf32>
    %37 = arith.addf %33, %36 : vector<8x32xf32>
    %c0_30 = arith.constant 0 : index
    %c0_31 = arith.constant 0 : index
    %c0_32 = arith.constant 0 : index
    %38 = vector.load %arg10[%c0_30, %c0_31, %c0_32] : memref<12x128x32xbf16, #tpu.memory_space<vmem>>, vector<1x128x32xbf16>
    %39 = vector.shape_cast %38 : vector<1x128x32xbf16> to vector<128x32xbf16>
    %cst_33 = arith.constant dense<0.000000e+00> : vector<8x32xf32>
    %40 = tpu.matmul %22, %39, %cst_33 {dimension_numbers = #tpu.dot_dimension_numbers<[1], [0], [0], [1], [0, 0, 1, 1], [], []>} : vector<8x128xbf16>, vector<128x32xbf16>, vector<8x32xf32> -> vector<8x32xf32>
    %c0_34 = arith.constant 0 : index
    %c0_35 = arith.constant 0 : index
    %c0_36 = arith.constant 0 : index
    %41 = vector.load %arg11[%c0_34, %c0_35, %c0_36] : memref<12x1x32xf32, #tpu.memory_space<vmem>>, vector<1x1x32xf32>
    %42 = vector.shape_cast %41 : vector<1x1x32xf32> to vector<1x32xf32>
    %43 = vector.broadcast %42 : vector<1x32xf32> to vector<8x32xf32>
    %44 = arith.addf %40, %43 : vector<8x32xf32>
    %cst_37 = arith.constant dense<0.000000e+00> : vector<8x8xf32>
    %45 = tpu.matmul %30, %37, %cst_37 {dimension_numbers = #tpu.dot_dimension_numbers<[1], [1], [0], [0], [0, 0, 1, 0], [], []>} : vector<8x32xf32>, vector<8x32xf32>, vector<8x8xf32> -> vector<8x8xf32>
    %cst_38 = arith.constant 0.176776692 : f32
    %46 = vector.broadcast %cst_38 : f32 to vector<8x8xf32>
    %47 = arith.mulf %45, %46 : vector<8x8xf32>
    %48 = arith.addf %47, %21 : vector<8x8xf32>
    %cst_39 = arith.constant dense<0xFF800000> : vector<8xf32>
    %49 = vector.multi_reduction <maximumf>, %48, %cst_39 [1] : vector<8x8xf32> to vector<8xf32>
    %50 = vector.shape_cast %49 : vector<8xf32> to vector<8x1xf32>
    %51 = vector.broadcast %50 : vector<8x1xf32> to vector<8x8xf32>
    %52 = arith.subf %48, %51 : vector<8x8xf32>
    %53 = math.exp %52 : vector<8x8xf32>
    %cst_40 = arith.constant dense<0.000000e+00> : vector<8xf32>
    %54 = vector.multi_reduction <add>, %53, %cst_40 [1] : vector<8x8xf32> to vector<8xf32>
    %55 = vector.shape_cast %54 : vector<8xf32> to vector<8x1xf32>
    %56 = vector.broadcast %55 : vector<8x1xf32> to vector<8x8xf32>
    %57 = arith.divf %53, %56 : vector<8x8xf32>
    %58 = arith.truncf %57 : vector<8x8xf32> to vector<8x8xbf16>
    %59 = arith.truncf %44 : vector<8x32xf32> to vector<8x32xbf16>
    %cst_41 = arith.constant dense<0.000000e+00> : vector<8x32xf32>
    %60 = tpu.matmul %58, %59, %cst_41 {dimension_numbers = #tpu.dot_dimension_numbers<[1], [0], [0], [1], [0, 0, 1, 1], [], []>} : vector<8x8xbf16>, vector<8x32xbf16>, vector<8x32xf32> -> vector<8x32xf32>
    %61 = arith.truncf %60 : vector<8x32xf32> to vector<8x32xbf16>
    %c0_42 = arith.constant 0 : index
    %c0_43 = arith.constant 0 : index
    %c0_44 = arith.constant 0 : index
    %62 = vector.load %arg12[%c0_42, %c0_43, %c0_44] : memref<12x32x128xbf16, #tpu.memory_space<vmem>>, vector<1x32x128xbf16>
    %63 = vector.shape_cast %62 : vector<1x32x128xbf16> to vector<32x128xbf16>
    %cst_45 = arith.constant dense<0.000000e+00> : vector<8x128xf32>
    %64 = tpu.matmul %61, %63, %cst_45 {dimension_numbers = #tpu.dot_dimension_numbers<[1], [0], [0], [1], [0, 0, 1, 1], [], []>} : vector<8x32xbf16>, vector<32x128xbf16>, vector<8x128xf32> -> vector<8x128xf32>
    %65 = arith.addf %23, %64 : vector<8x128xf32>
    %c1 = arith.constant 1 : index
    %c0_46 = arith.constant 0 : index
    %c0_47 = arith.constant 0 : index
    %66 = vector.load %arg6[%c1, %c0_46, %c0_47] : memref<12x128x32xbf16, #tpu.memory_space<vmem>>, vector<1x128x32xbf16>
    %67 = vector.shape_cast %66 : vector<1x128x32xbf16> to vector<128x32xbf16>
    %cst_48 = arith.constant dense<0.000000e+00> : vector<8x32xf32>
    %68 = tpu.matmul %22, %67, %cst_48 {dimension_numbers = #tpu.dot_dimension_numbers<[1], [0], [0], [1], [0, 0, 1, 1], [], []>} : vector<8x128xbf16>, vector<128x32xbf16>, vector<8x32xf32> -> vector<8x32xf32>
    %c1_49 = arith.constant 1 : index
    %c0_50 = arith.constant 0 : index
    %c0_51 = arith.constant 0 : index
    %69 = vector.load %arg7[%c1_49, %c0_50, %c0_51] : memref<12x1x32xf32, #tpu.memory_space<vmem>>, vector<1x1x32xf32>
    %70 = vector.shape_cast %69 : vector<1x1x32xf32> to vector<1x32xf32>
    %71 = vector.broadcast %70 : vector<1x32xf32> to vector<8x32xf32>
    %72 = arith.addf %68, %71 : vector<8x32xf32>
    %c1_52 = arith.constant 1 : index
    %c0_53 = arith.constant 0 : index
    %c0_54 = arith.constant 0 : index
    %73 = vector.load %arg8[%c1_52, %c0_53, %c0_54] : memref<12x128x32xbf16, #tpu.memory_space<vmem>>, vector<1x128x32xbf16>
    %74 = vector.shape_cast %73 : vector<1x128x32xbf16> to vector<128x32xbf16>
    %cst_55 = arith.constant dense<0.000000e+00> : vector<8x32xf32>
    %75 = tpu.matmul %22, %74, %cst_55 {dimension_numbers = #tpu.dot_dimension_numbers<[1], [0], [0], [1], [0, 0, 1, 1], [], []>} : vector<8x128xbf16>, vector<128x32xbf16>, vector<8x32xf32> -> vector<8x32xf32>
    %c1_56 = arith.constant 1 : index
    %c0_57 = arith.constant 0 : index
    %c0_58 = arith.constant 0 : index
    %76 = vector.load %arg9[%c1_56, %c0_57, %c0_58] : memref<12x1x32xf32, #tpu.memory_space<vmem>>, vector<1x1x32xf32>
    %77 = vector.shape_cast %76 : vector<1x1x32xf32> to vector<1x32xf32>
    %78 = vector.broadcast %77 : vector<1x32xf32> to vector<8x32xf32>
    %79 = arith.addf %75, %78 : vector<8x32xf32>
    %c1_59 = arith.constant 1 : index
    %c0_60 = arith.constant 0 : index
    %c0_61 = arith.constant 0 : index
    %80 = vector.load %arg10[%c1_59, %c0_60, %c0_61] : memref<12x128x32xbf16, #tpu.memory_space<vmem>>, vector<1x128x32xbf16>
    %81 = vector.shape_cast %80 : vector<1x128x32xbf16> to vector<128x32xbf16>
    %cst_62 = arith.constant dense<0.000000e+00> : vector<8x32xf32>
    %82 = tpu.matmul %22, %81, %cst_62 {dimension_numbers = #tpu.dot_dimension_numbers<[1], [0], [0], [1], [0, 0, 1, 1], [], []>} : vector<8x128xbf16>, vector<128x32xbf16>, vector<8x32xf32> -> vector<8x32xf32>
    %c1_63 = arith.constant 1 : index
    %c0_64 = arith.constant 0 : index
    %c0_65 = arith.constant 0 : index
    %83 = vector.load %arg11[%c1_63, %c0_64, %c0_65] : memref<12x1x32xf32, #tpu.memory_space<vmem>>, vector<1x1x32xf32>
    %84 = vector.shape_cast %83 : vector<1x1x32xf32> to vector<1x32xf32>
    %85 = vector.broadcast %84 : vector<1x32xf32> to vector<8x32xf32>
    %86 = arith.addf %82, %85 : vector<8x32xf32>
    %cst_66 = arith.constant dense<0.000000e+00> : vector<8x8xf32>
    %87 = tpu.matmul %72, %79, %cst_66 {dimension_numbers = #tpu.dot_dimension_numbers<[1], [1], [0], [0], [0, 0, 1, 0], [], []>} : vector<8x32xf32>, vector<8x32xf32>, vector<8x8xf32> -> vector<8x8xf32>
    %cst_67 = arith.constant 0.176776692 : f32
    %88 = vector.broadcast %cst_67 : f32 to vector<8x8xf32>
    %89 = arith.mulf %87, %88 : vector<8x8xf32>
    %90 = arith.addf %89, %21 : vector<8x8xf32>
    %cst_68 = arith.constant dense<0xFF800000> : vector<8xf32>
    %91 = vector.multi_reduction <maximumf>, %90, %cst_68 [1] : vector<8x8xf32> to vector<8xf32>
    %92 = vector.shape_cast %91 : vector<8xf32> to vector<8x1xf32>
    %93 = vector.broadcast %92 : vector<8x1xf32> to vector<8x8xf32>
    %94 = arith.subf %90, %93 : vector<8x8xf32>
    %95 = math.exp %94 : vector<8x8xf32>
    %cst_69 = arith.constant dense<0.000000e+00> : vector<8xf32>
    %96 = vector.multi_reduction <add>, %95, %cst_69 [1] : vector<8x8xf32> to vector<8xf32>
    %97 = vector.shape_cast %96 : vector<8xf32> to vector<8x1xf32>
    %98 = vector.broadcast %97 : vector<8x1xf32> to vector<8x8xf32>
    %99 = arith.divf %95, %98 : vector<8x8xf32>
    %100 = arith.truncf %99 : vector<8x8xf32> to vector<8x8xbf16>
    %101 = arith.truncf %86 : vector<8x32xf32> to vector<8x32xbf16>
    %cst_70 = arith.constant dense<0.000000e+00> : vector<8x32xf32>
    %102 = tpu.matmul %100, %101, %cst_70 {dimension_numbers = #tpu.dot_dimension_numbers<[1], [0], [0], [1], [0, 0, 1, 1], [], []>} : vector<8x8xbf16>, vector<8x32xbf16>, vector<8x32xf32> -> vector<8x32xf32>
    %103 = arith.truncf %102 : vector<8x32xf32> to vector<8x32xbf16>
    %c1_71 = arith.constant 1 : index
    %c0_72 = arith.constant 0 : index
    %c0_73 = arith.constant 0 : index
    %104 = vector.load %arg12[%c1_71, %c0_72, %c0_73] : memref<12x32x128xbf16, #tpu.memory_space<vmem>>, vector<1x32x128xbf16>
    %105 = vector.shape_cast %104 : vector<1x32x128xbf16> to vector<32x128xbf16>
    %cst_74 = arith.constant dense<0.000000e+00> : vector<8x128xf32>
    %106 = tpu.matmul %103, %105, %cst_74 {dimension_numbers = #tpu.dot_dimension_numbers<[1], [0], [0], [1], [0, 0, 1, 1], [], []>} : vector<8x32xbf16>, vector<32x128xbf16>, vector<8x128xf32> -> vector<8x128xf32>
    %107 = arith.addf %65, %106 : vector<8x128xf32>
    %c2 = arith.constant 2 : index
    %c0_75 = arith.constant 0 : index
    %c0_76 = arith.constant 0 : index
    %108 = vector.load %arg6[%c2, %c0_75, %c0_76] : memref<12x128x32xbf16, #tpu.memory_space<vmem>>, vector<1x128x32xbf16>
    %109 = vector.shape_cast %108 : vector<1x128x32xbf16> to vector<128x32xbf16>
    %cst_77 = arith.constant dense<0.000000e+00> : vector<8x32xf32>
    %110 = tpu.matmul %22, %109, %cst_77 {dimension_numbers = #tpu.dot_dimension_numbers<[1], [0], [0], [1], [0, 0, 1, 1], [], []>} : vector<8x128xbf16>, vector<128x32xbf16>, vector<8x32xf32> -> vector<8x32xf32>
    %c2_78 = arith.constant 2 : index
    %c0_79 = arith.constant 0 : index
    %c0_80 = arith.constant 0 : index
    %111 = vector.load %arg7[%c2_78, %c0_79, %c0_80] : memref<12x1x32xf32, #tpu.memory_space<vmem>>, vector<1x1x32xf32>
    %112 = vector.shape_cast %111 : vector<1x1x32xf32> to vector<1x32xf32>
    %113 = vector.broadcast %112 : vector<1x32xf32> to vector<8x32xf32>
    %114 = arith.addf %110, %113 : vector<8x32xf32>
    %c2_81 = arith.constant 2 : index
    %c0_82 = arith.constant 0 : index
    %c0_83 = arith.constant 0 : index
    %115 = vector.load %arg8[%c2_81, %c0_82, %c0_83] : memref<12x128x32xbf16, #tpu.memory_space<vmem>>, vector<1x128x32xbf16>
    %116 = vector.shape_cast %115 : vector<1x128x32xbf16> to vector<128x32xbf16>
    %cst_84 = arith.constant dense<0.000000e+00> : vector<8x32xf32>
    %117 = tpu.matmul %22, %116, %cst_84 {dimension_numbers = #tpu.dot_dimension_numbers<[1], [0], [0], [1], [0, 0, 1, 1], [], []>} : vector<8x128xbf16>, vector<128x32xbf16>, vector<8x32xf32> -> vector<8x32xf32>
    %c2_85 = arith.constant 2 : index
    %c0_86 = arith.constant 0 : index
    %c0_87 = arith.constant 0 : index
    %118 = vector.load %arg9[%c2_85, %c0_86, %c0_87] : memref<12x1x32xf32, #tpu.memory_space<vmem>>, vector<1x1x32xf32>
    %119 = vector.shape_cast %118 : vector<1x1x32xf32> to vector<1x32xf32>
    %120 = vector.broadcast %119 : vector<1x32xf32> to vector<8x32xf32>
    %121 = arith.addf %117, %120 : vector<8x32xf32>
    %c2_88 = arith.constant 2 : index
    %c0_89 = arith.constant 0 : index
    %c0_90 = arith.constant 0 : index
    %122 = vector.load %arg10[%c2_88, %c0_89, %c0_90] : memref<12x128x32xbf16, #tpu.memory_space<vmem>>, vector<1x128x32xbf16>
    %123 = vector.shape_cast %122 : vector<1x128x32xbf16> to vector<128x32xbf16>
    %cst_91 = arith.constant dense<0.000000e+00> : vector<8x32xf32>
    %124 = tpu.matmul %22, %123, %cst_91 {dimension_numbers = #tpu.dot_dimension_numbers<[1], [0], [0], [1], [0, 0, 1, 1], [], []>} : vector<8x128xbf16>, vector<128x32xbf16>, vector<8x32xf32> -> vector<8x32xf32>
    %c2_92 = arith.constant 2 : index
    %c0_93 = arith.constant 0 : index
    %c0_94 = arith.constant 0 : index
    %125 = vector.load %arg11[%c2_92, %c0_93, %c0_94] : memref<12x1x32xf32, #tpu.memory_space<vmem>>, vector<1x1x32xf32>
    %126 = vector.shape_cast %125 : vector<1x1x32xf32> to vector<1x32xf32>
    %127 = vector.broadcast %126 : vector<1x32xf32> to vector<8x32xf32>
    %128 = arith.addf %124, %127 : vector<8x32xf32>
    %cst_95 = arith.constant dense<0.000000e+00> : vector<8x8xf32>
    %129 = tpu.matmul %114, %121, %cst_95 {dimension_numbers = #tpu.dot_dimension_numbers<[1], [1], [0], [0], [0, 0, 1, 0], [], []>} : vector<8x32xf32>, vector<8x32xf32>, vector<8x8xf32> -> vector<8x8xf32>
    %cst_96 = arith.constant 0.176776692 : f32
    %130 = vector.broadcast %cst_96 : f32 to vector<8x8xf32>
    %131 = arith.mulf %129, %130 : vector<8x8xf32>
    %132 = arith.addf %131, %21 : vector<8x8xf32>
    %cst_97 = arith.constant dense<0xFF800000> : vector<8xf32>
    %133 = vector.multi_reduction <maximumf>, %132, %cst_97 [1] : vector<8x8xf32> to vector<8xf32>
    %134 = vector.shape_cast %133 : vector<8xf32> to vector<8x1xf32>
    %135 = vector.broadcast %134 : vector<8x1xf32> to vector<8x8xf32>
    %136 = arith.subf %132, %135 : vector<8x8xf32>
    %137 = math.exp %136 : vector<8x8xf32>
    %cst_98 = arith.constant dense<0.000000e+00> : vector<8xf32>
    %138 = vector.multi_reduction <add>, %137, %cst_98 [1] : vector<8x8xf32> to vector<8xf32>
    %139 = vector.shape_cast %138 : vector<8xf32> to vector<8x1xf32>
    %140 = vector.broadcast %139 : vector<8x1xf32> to vector<8x8xf32>
    %141 = arith.divf %137, %140 : vector<8x8xf32>
    %142 = arith.truncf %141 : vector<8x8xf32> to vector<8x8xbf16>
    %143 = arith.truncf %128 : vector<8x32xf32> to vector<8x32xbf16>
    %cst_99 = arith.constant dense<0.000000e+00> : vector<8x32xf32>
    %144 = tpu.matmul %142, %143, %cst_99 {dimension_numbers = #tpu.dot_dimension_numbers<[1], [0], [0], [1], [0, 0, 1, 1], [], []>} : vector<8x8xbf16>, vector<8x32xbf16>, vector<8x32xf32> -> vector<8x32xf32>
    %145 = arith.truncf %144 : vector<8x32xf32> to vector<8x32xbf16>
    %c2_100 = arith.constant 2 : index
    %c0_101 = arith.constant 0 : index
    %c0_102 = arith.constant 0 : index
    %146 = vector.load %arg12[%c2_100, %c0_101, %c0_102] : memref<12x32x128xbf16, #tpu.memory_space<vmem>>, vector<1x32x128xbf16>
    %147 = vector.shape_cast %146 : vector<1x32x128xbf16> to vector<32x128xbf16>
    %cst_103 = arith.constant dense<0.000000e+00> : vector<8x128xf32>
    %148 = tpu.matmul %145, %147, %cst_103 {dimension_numbers = #tpu.dot_dimension_numbers<[1], [0], [0], [1], [0, 0, 1, 1], [], []>} : vector<8x32xbf16>, vector<32x128xbf16>, vector<8x128xf32> -> vector<8x128xf32>
    %149 = arith.addf %107, %148 : vector<8x128xf32>
    %c3 = arith.constant 3 : index
    %c0_104 = arith.constant 0 : index
    %c0_105 = arith.constant 0 : index
    %150 = vector.load %arg6[%c3, %c0_104, %c0_105] : memref<12x128x32xbf16, #tpu.memory_space<vmem>>, vector<1x128x32xbf16>
    %151 = vector.shape_cast %150 : vector<1x128x32xbf16> to vector<128x32xbf16>
    %cst_106 = arith.constant dense<0.000000e+00> : vector<8x32xf32>
    %152 = tpu.matmul %22, %151, %cst_106 {dimension_numbers = #tpu.dot_dimension_numbers<[1], [0], [0], [1], [0, 0, 1, 1], [], []>} : vector<8x128xbf16>, vector<128x32xbf16>, vector<8x32xf32> -> vector<8x32xf32>
    %c3_107 = arith.constant 3 : index
    %c0_108 = arith.constant 0 : index
    %c0_109 = arith.constant 0 : index
    %153 = vector.load %arg7[%c3_107, %c0_108, %c0_109] : memref<12x1x32xf32, #tpu.memory_space<vmem>>, vector<1x1x32xf32>
    %154 = vector.shape_cast %153 : vector<1x1x32xf32> to vector<1x32xf32>
    %155 = vector.broadcast %154 : vector<1x32xf32> to vector<8x32xf32>
    %156 = arith.addf %152, %155 : vector<8x32xf32>
    %c3_110 = arith.constant 3 : index
    %c0_111 = arith.constant 0 : index
    %c0_112 = arith.constant 0 : index
    %157 = vector.load %arg8[%c3_110, %c0_111, %c0_112] : memref<12x128x32xbf16, #tpu.memory_space<vmem>>, vector<1x128x32xbf16>
    %158 = vector.shape_cast %157 : vector<1x128x32xbf16> to vector<128x32xbf16>
    %cst_113 = arith.constant dense<0.000000e+00> : vector<8x32xf32>
    %159 = tpu.matmul %22, %158, %cst_113 {dimension_numbers = #tpu.dot_dimension_numbers<[1], [0], [0], [1], [0, 0, 1, 1], [], []>} : vector<8x128xbf16>, vector<128x32xbf16>, vector<8x32xf32> -> vector<8x32xf32>
    %c3_114 = arith.constant 3 : index
    %c0_115 = arith.constant 0 : index
    %c0_116 = arith.constant 0 : index
    %160 = vector.load %arg9[%c3_114, %c0_115, %c0_116] : memref<12x1x32xf32, #tpu.memory_space<vmem>>, vector<1x1x32xf32>
    %161 = vector.shape_cast %160 : vector<1x1x32xf32> to vector<1x32xf32>
    %162 = vector.broadcast %161 : vector<1x32xf32> to vector<8x32xf32>
    %163 = arith.addf %159, %162 : vector<8x32xf32>
    %c3_117 = arith.constant 3 : index
    %c0_118 = arith.constant 0 : index
    %c0_119 = arith.constant 0 : index
    %164 = vector.load %arg10[%c3_117, %c0_118, %c0_119] : memref<12x128x32xbf16, #tpu.memory_space<vmem>>, vector<1x128x32xbf16>
    %165 = vector.shape_cast %164 : vector<1x128x32xbf16> to vector<128x32xbf16>
    %cst_120 = arith.constant dense<0.000000e+00> : vector<8x32xf32>
    %166 = tpu.matmul %22, %165, %cst_120 {dimension_numbers = #tpu.dot_dimension_numbers<[1], [0], [0], [1], [0, 0, 1, 1], [], []>} : vector<8x128xbf16>, vector<128x32xbf16>, vector<8x32xf32> -> vector<8x32xf32>
    %c3_121 = arith.constant 3 : index
    %c0_122 = arith.constant 0 : index
    %c0_123 = arith.constant 0 : index
    %167 = vector.load %arg11[%c3_121, %c0_122, %c0_123] : memref<12x1x32xf32, #tpu.memory_space<vmem>>, vector<1x1x32xf32>
    %168 = vector.shape_cast %167 : vector<1x1x32xf32> to vector<1x32xf32>
    %169 = vector.broadcast %168 : vector<1x32xf32> to vector<8x32xf32>
    %170 = arith.addf %166, %169 : vector<8x32xf32>
    %cst_124 = arith.constant dense<0.000000e+00> : vector<8x8xf32>
    %171 = tpu.matmul %156, %163, %cst_124 {dimension_numbers = #tpu.dot_dimension_numbers<[1], [1], [0], [0], [0, 0, 1, 0], [], []>} : vector<8x32xf32>, vector<8x32xf32>, vector<8x8xf32> -> vector<8x8xf32>
    %cst_125 = arith.constant 0.176776692 : f32
    %172 = vector.broadcast %cst_125 : f32 to vector<8x8xf32>
    %173 = arith.mulf %171, %172 : vector<8x8xf32>
    %174 = arith.addf %173, %21 : vector<8x8xf32>
    %cst_126 = arith.constant dense<0xFF800000> : vector<8xf32>
    %175 = vector.multi_reduction <maximumf>, %174, %cst_126 [1] : vector<8x8xf32> to vector<8xf32>
    %176 = vector.shape_cast %175 : vector<8xf32> to vector<8x1xf32>
    %177 = vector.broadcast %176 : vector<8x1xf32> to vector<8x8xf32>
    %178 = arith.subf %174, %177 : vector<8x8xf32>
    %179 = math.exp %178 : vector<8x8xf32>
    %cst_127 = arith.constant dense<0.000000e+00> : vector<8xf32>
    %180 = vector.multi_reduction <add>, %179, %cst_127 [1] : vector<8x8xf32> to vector<8xf32>
    %181 = vector.shape_cast %180 : vector<8xf32> to vector<8x1xf32>
    %182 = vector.broadcast %181 : vector<8x1xf32> to vector<8x8xf32>
    %183 = arith.divf %179, %182 : vector<8x8xf32>
    %184 = arith.truncf %183 : vector<8x8xf32> to vector<8x8xbf16>
    %185 = arith.truncf %170 : vector<8x32xf32> to vector<8x32xbf16>
    %cst_128 = arith.constant dense<0.000000e+00> : vector<8x32xf32>
    %186 = tpu.matmul %184, %185, %cst_128 {dimension_numbers = #tpu.dot_dimension_numbers<[1], [0], [0], [1], [0, 0, 1, 1], [], []>} : vector<8x8xbf16>, vector<8x32xbf16>, vector<8x32xf32> -> vector<8x32xf32>
    %187 = arith.truncf %186 : vector<8x32xf32> to vector<8x32xbf16>
    %c3_129 = arith.constant 3 : index
    %c0_130 = arith.constant 0 : index
    %c0_131 = arith.constant 0 : index
    %188 = vector.load %arg12[%c3_129, %c0_130, %c0_131] : memref<12x32x128xbf16, #tpu.memory_space<vmem>>, vector<1x32x128xbf16>
    %189 = vector.shape_cast %188 : vector<1x32x128xbf16> to vector<32x128xbf16>
    %cst_132 = arith.constant dense<0.000000e+00> : vector<8x128xf32>
    %190 = tpu.matmul %187, %189, %cst_132 {dimension_numbers = #tpu.dot_dimension_numbers<[1], [0], [0], [1], [0, 0, 1, 1], [], []>} : vector<8x32xbf16>, vector<32x128xbf16>, vector<8x128xf32> -> vector<8x128xf32>
    %191 = arith.addf %149, %190 : vector<8x128xf32>
    %c0_133 = arith.constant 0 : index
    %c0_134 = arith.constant 0 : index
    %c0_135 = arith.constant 0 : index
    %192 = vector.load %arg13[%c0_133, %c0_134, %c0_135] : memref<3x1x128xf32, #tpu.memory_space<vmem>>, vector<1x1x128xf32>
    %193 = vector.shape_cast %192 : vector<1x1x128xf32> to vector<1x128xf32>
    %194 = vector.broadcast %193 : vector<1x128xf32> to vector<8x128xf32>
    %195 = arith.addf %191, %194 : vector<8x128xf32>
    %196 = arith.addf %19, %195 : vector<8x128xf32>
    %c0_136 = arith.constant 0 : index
    %c0_137 = arith.constant 0 : index
    %c0_138 = arith.constant 0 : index
    %197 = vector.load %arg22[%c0_136, %c0_137, %c0_138] : memref<3x1x128xf32, #tpu.memory_space<vmem>>, vector<1x1x128xf32>
    %198 = vector.shape_cast %197 : vector<1x1x128xf32> to vector<1x128xf32>
    %c0_139 = arith.constant 0 : index
    %c0_140 = arith.constant 0 : index
    %c0_141 = arith.constant 0 : index
    %199 = vector.load %arg23[%c0_139, %c0_140, %c0_141] : memref<3x1x128xf32, #tpu.memory_space<vmem>>, vector<1x1x128xf32>
    %200 = vector.shape_cast %199 : vector<1x1x128xf32> to vector<1x128xf32>
    %cst_142 = arith.constant dense<0.000000e+00> : vector<8xf32>
    %201 = vector.multi_reduction <add>, %196, %cst_142 [1] : vector<8x128xf32> to vector<8xf32>
    %202 = vector.shape_cast %201 : vector<8xf32> to vector<8x1xf32>
    %cst_143 = arith.constant 1.280000e+02 : f32
    %203 = vector.broadcast %cst_143 : f32 to vector<8x1xf32>
    %204 = arith.divf %202, %203 : vector<8x1xf32>
    %205 = vector.broadcast %204 : vector<8x1xf32> to vector<8x128xf32>
    %206 = arith.subf %196, %205 : vector<8x128xf32>
    %207 = arith.mulf %206, %206 : vector<8x128xf32>
    %cst_144 = arith.constant dense<0.000000e+00> : vector<8xf32>
    %208 = vector.multi_reduction <add>, %207, %cst_144 [1] : vector<8x128xf32> to vector<8xf32>
    %209 = vector.shape_cast %208 : vector<8xf32> to vector<8x1xf32>
    %cst_145 = arith.constant 1.280000e+02 : f32
    %210 = vector.broadcast %cst_145 : f32 to vector<8x1xf32>
    %211 = arith.divf %209, %210 : vector<8x1xf32>
    %cst_146 = arith.constant 9.99999974E-6 : f32
    %212 = vector.broadcast %cst_146 : f32 to vector<8x1xf32>
    %213 = arith.addf %211, %212 : vector<8x1xf32>
    %214 = math.rsqrt %213 : vector<8x1xf32>
    %215 = vector.broadcast %214 : vector<8x1xf32> to vector<8x128xf32>
    %216 = arith.mulf %206, %215 : vector<8x128xf32>
    %217 = vector.broadcast %198 : vector<1x128xf32> to vector<8x128xf32>
    %218 = arith.mulf %216, %217 : vector<8x128xf32>
    %219 = vector.broadcast %200 : vector<1x128xf32> to vector<8x128xf32>
    %220 = arith.addf %218, %219 : vector<8x128xf32>
    %c0_147 = arith.constant 0 : index
    %c0_148 = arith.constant 0 : index
    %c0_149 = arith.constant 0 : index
    %221 = vector.load %arg14[%c0_147, %c0_148, %c0_149] : memref<3x128x128xbf16, #tpu.memory_space<vmem>>, vector<1x128x128xbf16>
    %222 = vector.shape_cast %221 : vector<1x128x128xbf16> to vector<128x128xbf16>
    %cst_150 = arith.constant dense<0.000000e+00> : vector<1x128xf32>
    %223 = tpu.matmul %18, %222, %cst_150 {dimension_numbers = #tpu.dot_dimension_numbers<[1], [0], [0], [1], [0, 0, 1, 1], [], []>} : vector<1x128xbf16>, vector<128x128xbf16>, vector<1x128xf32> -> vector<1x128xf32>
    %c0_151 = arith.constant 0 : index
    %c0_152 = arith.constant 0 : index
    %c0_153 = arith.constant 0 : index
    %224 = vector.load %arg15[%c0_151, %c0_152, %c0_153] : memref<3x1x128xf32, #tpu.memory_space<vmem>>, vector<1x1x128xf32>
    %225 = vector.shape_cast %224 : vector<1x1x128xf32> to vector<1x128xf32>
    %226 = arith.addf %223, %225 : vector<1x128xf32>
    %227 = arith.truncf %226 : vector<1x128xf32> to vector<1x128xbf16>
    %c0_154 = arith.constant 0 : index
    %c0_155 = arith.constant 0 : index
    %c0_156 = arith.constant 0 : index
    %228 = vector.load %arg16[%c0_154, %c0_155, %c0_156] : memref<3x128x128xbf16, #tpu.memory_space<vmem>>, vector<1x128x128xbf16>
    %229 = vector.shape_cast %228 : vector<1x128x128xbf16> to vector<128x128xbf16>
    %cst_157 = arith.constant dense<0.000000e+00> : vector<1x128xf32>
    %230 = tpu.matmul %227, %229, %cst_157 {dimension_numbers = #tpu.dot_dimension_numbers<[1], [0], [0], [1], [0, 0, 1, 1], [], []>} : vector<1x128xbf16>, vector<128x128xbf16>, vector<1x128xf32> -> vector<1x128xf32>
    %c0_158 = arith.constant 0 : index
    %c0_159 = arith.constant 0 : index
    %c0_160 = arith.constant 0 : index
    %231 = vector.load %arg17[%c0_158, %c0_159, %c0_160] : memref<3x1x128xf32, #tpu.memory_space<vmem>>, vector<1x1x128xf32>
    %232 = vector.shape_cast %231 : vector<1x1x128xf32> to vector<1x128xf32>
    %233 = arith.addf %230, %232 : vector<1x128xf32>
    %234 = vector.broadcast %233 : vector<1x128xf32> to vector<8x128xf32>
    %235 = arith.addf %220, %234 : vector<8x128xf32>
    %c0_161 = arith.constant 0 : index
    %c0_162 = arith.constant 0 : index
    %c0_163 = arith.constant 0 : index
    %236 = vector.load %arg24[%c0_161, %c0_162, %c0_163] : memref<3x1x128xf32, #tpu.memory_space<vmem>>, vector<1x1x128xf32>
    %237 = vector.shape_cast %236 : vector<1x1x128xf32> to vector<1x128xf32>
    %c0_164 = arith.constant 0 : index
    %c0_165 = arith.constant 0 : index
    %c0_166 = arith.constant 0 : index
    %238 = vector.load %arg25[%c0_164, %c0_165, %c0_166] : memref<3x1x128xf32, #tpu.memory_space<vmem>>, vector<1x1x128xf32>
    %239 = vector.shape_cast %238 : vector<1x1x128xf32> to vector<1x128xf32>
    %cst_167 = arith.constant dense<0.000000e+00> : vector<8xf32>
    %240 = vector.multi_reduction <add>, %235, %cst_167 [1] : vector<8x128xf32> to vector<8xf32>
    %241 = vector.shape_cast %240 : vector<8xf32> to vector<8x1xf32>
    %cst_168 = arith.constant 1.280000e+02 : f32
    %242 = vector.broadcast %cst_168 : f32 to vector<8x1xf32>
    %243 = arith.divf %241, %242 : vector<8x1xf32>
    %244 = vector.broadcast %243 : vector<8x1xf32> to vector<8x128xf32>
    %245 = arith.subf %235, %244 : vector<8x128xf32>
    %246 = arith.mulf %245, %245 : vector<8x128xf32>
    %cst_169 = arith.constant dense<0.000000e+00> : vector<8xf32>
    %247 = vector.multi_reduction <add>, %246, %cst_169 [1] : vector<8x128xf32> to vector<8xf32>
    %248 = vector.shape_cast %247 : vector<8xf32> to vector<8x1xf32>
    %cst_170 = arith.constant 1.280000e+02 : f32
    %249 = vector.broadcast %cst_170 : f32 to vector<8x1xf32>
    %250 = arith.divf %248, %249 : vector<8x1xf32>
    %cst_171 = arith.constant 9.99999974E-6 : f32
    %251 = vector.broadcast %cst_171 : f32 to vector<8x1xf32>
    %252 = arith.addf %250, %251 : vector<8x1xf32>
    %253 = math.rsqrt %252 : vector<8x1xf32>
    %254 = vector.broadcast %253 : vector<8x1xf32> to vector<8x128xf32>
    %255 = arith.mulf %245, %254 : vector<8x128xf32>
    %256 = vector.broadcast %237 : vector<1x128xf32> to vector<8x128xf32>
    %257 = arith.mulf %255, %256 : vector<8x128xf32>
    %258 = vector.broadcast %239 : vector<1x128xf32> to vector<8x128xf32>
    %259 = arith.addf %257, %258 : vector<8x128xf32>
    %260 = arith.truncf %259 : vector<8x128xf32> to vector<8x128xbf16>
    %c0_172 = arith.constant 0 : index
    %c0_173 = arith.constant 0 : index
    %c0_174 = arith.constant 0 : index
    %261 = vector.load %arg18[%c0_172, %c0_173, %c0_174] : memref<3x128x512xbf16, #tpu.memory_space<vmem>>, vector<1x128x512xbf16>
    %262 = vector.shape_cast %261 : vector<1x128x512xbf16> to vector<128x512xbf16>
    %cst_175 = arith.constant dense<0.000000e+00> : vector<8x512xf32>
    %263 = tpu.matmul %260, %262, %cst_175 {dimension_numbers = #tpu.dot_dimension_numbers<[1], [0], [0], [1], [0, 0, 1, 1], [], []>} : vector<8x128xbf16>, vector<128x512xbf16>, vector<8x512xf32> -> vector<8x512xf32>
    %c0_176 = arith.constant 0 : index
    %c0_177 = arith.constant 0 : index
    %c0_178 = arith.constant 0 : index
    %264 = vector.load %arg19[%c0_176, %c0_177, %c0_178] : memref<3x1x512xf32, #tpu.memory_space<vmem>>, vector<1x1x512xf32>
    %265 = vector.shape_cast %264 : vector<1x1x512xf32> to vector<1x512xf32>
    %266 = vector.broadcast %265 : vector<1x512xf32> to vector<8x512xf32>
    %267 = arith.addf %263, %266 : vector<8x512xf32>
    %cst_179 = arith.constant 0.000000e+00 : f32
    %268 = vector.broadcast %cst_179 : f32 to vector<8x512xf32>
    %269 = arith.maximumf %267, %268 : vector<8x512xf32>
    %270 = arith.truncf %269 : vector<8x512xf32> to vector<8x512xbf16>
    %c0_180 = arith.constant 0 : index
    %c0_181 = arith.constant 0 : index
    %c0_182 = arith.constant 0 : index
    %271 = vector.load %arg20[%c0_180, %c0_181, %c0_182] : memref<3x512x128xbf16, #tpu.memory_space<vmem>>, vector<1x512x128xbf16>
    %272 = vector.shape_cast %271 : vector<1x512x128xbf16> to vector<512x128xbf16>
    %cst_183 = arith.constant dense<0.000000e+00> : vector<8x128xf32>
    %273 = tpu.matmul %270, %272, %cst_183 {dimension_numbers = #tpu.dot_dimension_numbers<[1], [0], [0], [1], [0, 0, 1, 1], [], []>} : vector<8x512xbf16>, vector<512x128xbf16>, vector<8x128xf32> -> vector<8x128xf32>
    %c0_184 = arith.constant 0 : index
    %c0_185 = arith.constant 0 : index
    %c0_186 = arith.constant 0 : index
    %274 = vector.load %arg21[%c0_184, %c0_185, %c0_186] : memref<3x1x128xf32, #tpu.memory_space<vmem>>, vector<1x1x128xf32>
    %275 = vector.shape_cast %274 : vector<1x1x128xf32> to vector<1x128xf32>
    %276 = vector.broadcast %275 : vector<1x128xf32> to vector<8x128xf32>
    %277 = arith.addf %273, %276 : vector<8x128xf32>
    %278 = arith.addf %259, %277 : vector<8x128xf32>
    %c0_187 = arith.constant 0 : index
    %c0_188 = arith.constant 0 : index
    %c0_189 = arith.constant 0 : index
    %279 = vector.load %arg26[%c0_187, %c0_188, %c0_189] : memref<3x1x128xf32, #tpu.memory_space<vmem>>, vector<1x1x128xf32>
    %280 = vector.shape_cast %279 : vector<1x1x128xf32> to vector<1x128xf32>
    %c0_190 = arith.constant 0 : index
    %c0_191 = arith.constant 0 : index
    %c0_192 = arith.constant 0 : index
    %281 = vector.load %arg27[%c0_190, %c0_191, %c0_192] : memref<3x1x128xf32, #tpu.memory_space<vmem>>, vector<1x1x128xf32>
    %282 = vector.shape_cast %281 : vector<1x1x128xf32> to vector<1x128xf32>
    %cst_193 = arith.constant dense<0.000000e+00> : vector<8xf32>
    %283 = vector.multi_reduction <add>, %278, %cst_193 [1] : vector<8x128xf32> to vector<8xf32>
    %284 = vector.shape_cast %283 : vector<8xf32> to vector<8x1xf32>
    %cst_194 = arith.constant 1.280000e+02 : f32
    %285 = vector.broadcast %cst_194 : f32 to vector<8x1xf32>
    %286 = arith.divf %284, %285 : vector<8x1xf32>
    %287 = vector.broadcast %286 : vector<8x1xf32> to vector<8x128xf32>
    %288 = arith.subf %278, %287 : vector<8x128xf32>
    %289 = arith.mulf %288, %288 : vector<8x128xf32>
    %cst_195 = arith.constant dense<0.000000e+00> : vector<8xf32>
    %290 = vector.multi_reduction <add>, %289, %cst_195 [1] : vector<8x128xf32> to vector<8xf32>
    %291 = vector.shape_cast %290 : vector<8xf32> to vector<8x1xf32>
    %cst_196 = arith.constant 1.280000e+02 : f32
    %292 = vector.broadcast %cst_196 : f32 to vector<8x1xf32>
    %293 = arith.divf %291, %292 : vector<8x1xf32>
    %cst_197 = arith.constant 9.99999974E-6 : f32
    %294 = vector.broadcast %cst_197 : f32 to vector<8x1xf32>
    %295 = arith.addf %293, %294 : vector<8x1xf32>
    %296 = math.rsqrt %295 : vector<8x1xf32>
    %297 = vector.broadcast %296 : vector<8x1xf32> to vector<8x128xf32>
    %298 = arith.mulf %288, %297 : vector<8x128xf32>
    %299 = vector.broadcast %280 : vector<1x128xf32> to vector<8x128xf32>
    %300 = arith.mulf %298, %299 : vector<8x128xf32>
    %301 = vector.broadcast %282 : vector<1x128xf32> to vector<8x128xf32>
    %302 = arith.addf %300, %301 : vector<8x128xf32>
    %303 = arith.truncf %302 : vector<8x128xf32> to vector<8x128xbf16>
    %cst_198 = arith.constant 0.000000e+00 : f32
    %304 = vector.broadcast %cst_198 : f32 to vector<8x128xf32>
    %c4 = arith.constant 4 : index
    %c0_199 = arith.constant 0 : index
    %c0_200 = arith.constant 0 : index
    %305 = vector.load %arg6[%c4, %c0_199, %c0_200] : memref<12x128x32xbf16, #tpu.memory_space<vmem>>, vector<1x128x32xbf16>
    %306 = vector.shape_cast %305 : vector<1x128x32xbf16> to vector<128x32xbf16>
    %cst_201 = arith.constant dense<0.000000e+00> : vector<8x32xf32>
    %307 = tpu.matmul %303, %306, %cst_201 {dimension_numbers = #tpu.dot_dimension_numbers<[1], [0], [0], [1], [0, 0, 1, 1], [], []>} : vector<8x128xbf16>, vector<128x32xbf16>, vector<8x32xf32> -> vector<8x32xf32>
    %c4_202 = arith.constant 4 : index
    %c0_203 = arith.constant 0 : index
    %c0_204 = arith.constant 0 : index
    %308 = vector.load %arg7[%c4_202, %c0_203, %c0_204] : memref<12x1x32xf32, #tpu.memory_space<vmem>>, vector<1x1x32xf32>
    %309 = vector.shape_cast %308 : vector<1x1x32xf32> to vector<1x32xf32>
    %310 = vector.broadcast %309 : vector<1x32xf32> to vector<8x32xf32>
    %311 = arith.addf %307, %310 : vector<8x32xf32>
    %c4_205 = arith.constant 4 : index
    %c0_206 = arith.constant 0 : index
    %c0_207 = arith.constant 0 : index
    %312 = vector.load %arg8[%c4_205, %c0_206, %c0_207] : memref<12x128x32xbf16, #tpu.memory_space<vmem>>, vector<1x128x32xbf16>
    %313 = vector.shape_cast %312 : vector<1x128x32xbf16> to vector<128x32xbf16>
    %cst_208 = arith.constant dense<0.000000e+00> : vector<8x32xf32>
    %314 = tpu.matmul %303, %313, %cst_208 {dimension_numbers = #tpu.dot_dimension_numbers<[1], [0], [0], [1], [0, 0, 1, 1], [], []>} : vector<8x128xbf16>, vector<128x32xbf16>, vector<8x32xf32> -> vector<8x32xf32>
    %c4_209 = arith.constant 4 : index
    %c0_210 = arith.constant 0 : index
    %c0_211 = arith.constant 0 : index
    %315 = vector.load %arg9[%c4_209, %c0_210, %c0_211] : memref<12x1x32xf32, #tpu.memory_space<vmem>>, vector<1x1x32xf32>
    %316 = vector.shape_cast %315 : vector<1x1x32xf32> to vector<1x32xf32>
    %317 = vector.broadcast %316 : vector<1x32xf32> to vector<8x32xf32>
    %318 = arith.addf %314, %317 : vector<8x32xf32>
    %c4_212 = arith.constant 4 : index
    %c0_213 = arith.constant 0 : index
    %c0_214 = arith.constant 0 : index
    %319 = vector.load %arg10[%c4_212, %c0_213, %c0_214] : memref<12x128x32xbf16, #tpu.memory_space<vmem>>, vector<1x128x32xbf16>
    %320 = vector.shape_cast %319 : vector<1x128x32xbf16> to vector<128x32xbf16>
    %cst_215 = arith.constant dense<0.000000e+00> : vector<8x32xf32>
    %321 = tpu.matmul %303, %320, %cst_215 {dimension_numbers = #tpu.dot_dimension_numbers<[1], [0], [0], [1], [0, 0, 1, 1], [], []>} : vector<8x128xbf16>, vector<128x32xbf16>, vector<8x32xf32> -> vector<8x32xf32>
    %c4_216 = arith.constant 4 : index
    %c0_217 = arith.constant 0 : index
    %c0_218 = arith.constant 0 : index
    %322 = vector.load %arg11[%c4_216, %c0_217, %c0_218] : memref<12x1x32xf32, #tpu.memory_space<vmem>>, vector<1x1x32xf32>
    %323 = vector.shape_cast %322 : vector<1x1x32xf32> to vector<1x32xf32>
    %324 = vector.broadcast %323 : vector<1x32xf32> to vector<8x32xf32>
    %325 = arith.addf %321, %324 : vector<8x32xf32>
    %cst_219 = arith.constant dense<0.000000e+00> : vector<8x8xf32>
    %326 = tpu.matmul %311, %318, %cst_219 {dimension_numbers = #tpu.dot_dimension_numbers<[1], [1], [0], [0], [0, 0, 1, 0], [], []>} : vector<8x32xf32>, vector<8x32xf32>, vector<8x8xf32> -> vector<8x8xf32>
    %cst_220 = arith.constant 0.176776692 : f32
    %327 = vector.broadcast %cst_220 : f32 to vector<8x8xf32>
    %328 = arith.mulf %326, %327 : vector<8x8xf32>
    %329 = arith.addf %328, %21 : vector<8x8xf32>
    %cst_221 = arith.constant dense<0xFF800000> : vector<8xf32>
    %330 = vector.multi_reduction <maximumf>, %329, %cst_221 [1] : vector<8x8xf32> to vector<8xf32>
    %331 = vector.shape_cast %330 : vector<8xf32> to vector<8x1xf32>
    %332 = vector.broadcast %331 : vector<8x1xf32> to vector<8x8xf32>
    %333 = arith.subf %329, %332 : vector<8x8xf32>
    %334 = math.exp %333 : vector<8x8xf32>
    %cst_222 = arith.constant dense<0.000000e+00> : vector<8xf32>
    %335 = vector.multi_reduction <add>, %334, %cst_222 [1] : vector<8x8xf32> to vector<8xf32>
    %336 = vector.shape_cast %335 : vector<8xf32> to vector<8x1xf32>
    %337 = vector.broadcast %336 : vector<8x1xf32> to vector<8x8xf32>
    %338 = arith.divf %334, %337 : vector<8x8xf32>
    %339 = arith.truncf %338 : vector<8x8xf32> to vector<8x8xbf16>
    %340 = arith.truncf %325 : vector<8x32xf32> to vector<8x32xbf16>
    %cst_223 = arith.constant dense<0.000000e+00> : vector<8x32xf32>
    %341 = tpu.matmul %339, %340, %cst_223 {dimension_numbers = #tpu.dot_dimension_numbers<[1], [0], [0], [1], [0, 0, 1, 1], [], []>} : vector<8x8xbf16>, vector<8x32xbf16>, vector<8x32xf32> -> vector<8x32xf32>
    %342 = arith.truncf %341 : vector<8x32xf32> to vector<8x32xbf16>
    %c4_224 = arith.constant 4 : index
    %c0_225 = arith.constant 0 : index
    %c0_226 = arith.constant 0 : index
    %343 = vector.load %arg12[%c4_224, %c0_225, %c0_226] : memref<12x32x128xbf16, #tpu.memory_space<vmem>>, vector<1x32x128xbf16>
    %344 = vector.shape_cast %343 : vector<1x32x128xbf16> to vector<32x128xbf16>
    %cst_227 = arith.constant dense<0.000000e+00> : vector<8x128xf32>
    %345 = tpu.matmul %342, %344, %cst_227 {dimension_numbers = #tpu.dot_dimension_numbers<[1], [0], [0], [1], [0, 0, 1, 1], [], []>} : vector<8x32xbf16>, vector<32x128xbf16>, vector<8x128xf32> -> vector<8x128xf32>
    %346 = arith.addf %304, %345 : vector<8x128xf32>
    %c5 = arith.constant 5 : index
    %c0_228 = arith.constant 0 : index
    %c0_229 = arith.constant 0 : index
    %347 = vector.load %arg6[%c5, %c0_228, %c0_229] : memref<12x128x32xbf16, #tpu.memory_space<vmem>>, vector<1x128x32xbf16>
    %348 = vector.shape_cast %347 : vector<1x128x32xbf16> to vector<128x32xbf16>
    %cst_230 = arith.constant dense<0.000000e+00> : vector<8x32xf32>
    %349 = tpu.matmul %303, %348, %cst_230 {dimension_numbers = #tpu.dot_dimension_numbers<[1], [0], [0], [1], [0, 0, 1, 1], [], []>} : vector<8x128xbf16>, vector<128x32xbf16>, vector<8x32xf32> -> vector<8x32xf32>
    %c5_231 = arith.constant 5 : index
    %c0_232 = arith.constant 0 : index
    %c0_233 = arith.constant 0 : index
    %350 = vector.load %arg7[%c5_231, %c0_232, %c0_233] : memref<12x1x32xf32, #tpu.memory_space<vmem>>, vector<1x1x32xf32>
    %351 = vector.shape_cast %350 : vector<1x1x32xf32> to vector<1x32xf32>
    %352 = vector.broadcast %351 : vector<1x32xf32> to vector<8x32xf32>
    %353 = arith.addf %349, %352 : vector<8x32xf32>
    %c5_234 = arith.constant 5 : index
    %c0_235 = arith.constant 0 : index
    %c0_236 = arith.constant 0 : index
    %354 = vector.load %arg8[%c5_234, %c0_235, %c0_236] : memref<12x128x32xbf16, #tpu.memory_space<vmem>>, vector<1x128x32xbf16>
    %355 = vector.shape_cast %354 : vector<1x128x32xbf16> to vector<128x32xbf16>
    %cst_237 = arith.constant dense<0.000000e+00> : vector<8x32xf32>
    %356 = tpu.matmul %303, %355, %cst_237 {dimension_numbers = #tpu.dot_dimension_numbers<[1], [0], [0], [1], [0, 0, 1, 1], [], []>} : vector<8x128xbf16>, vector<128x32xbf16>, vector<8x32xf32> -> vector<8x32xf32>
    %c5_238 = arith.constant 5 : index
    %c0_239 = arith.constant 0 : index
    %c0_240 = arith.constant 0 : index
    %357 = vector.load %arg9[%c5_238, %c0_239, %c0_240] : memref<12x1x32xf32, #tpu.memory_space<vmem>>, vector<1x1x32xf32>
    %358 = vector.shape_cast %357 : vector<1x1x32xf32> to vector<1x32xf32>
    %359 = vector.broadcast %358 : vector<1x32xf32> to vector<8x32xf32>
    %360 = arith.addf %356, %359 : vector<8x32xf32>
    %c5_241 = arith.constant 5 : index
    %c0_242 = arith.constant 0 : index
    %c0_243 = arith.constant 0 : index
    %361 = vector.load %arg10[%c5_241, %c0_242, %c0_243] : memref<12x128x32xbf16, #tpu.memory_space<vmem>>, vector<1x128x32xbf16>
    %362 = vector.shape_cast %361 : vector<1x128x32xbf16> to vector<128x32xbf16>
    %cst_244 = arith.constant dense<0.000000e+00> : vector<8x32xf32>
    %363 = tpu.matmul %303, %362, %cst_244 {dimension_numbers = #tpu.dot_dimension_numbers<[1], [0], [0], [1], [0, 0, 1, 1], [], []>} : vector<8x128xbf16>, vector<128x32xbf16>, vector<8x32xf32> -> vector<8x32xf32>
    %c5_245 = arith.constant 5 : index
    %c0_246 = arith.constant 0 : index
    %c0_247 = arith.constant 0 : index
    %364 = vector.load %arg11[%c5_245, %c0_246, %c0_247] : memref<12x1x32xf32, #tpu.memory_space<vmem>>, vector<1x1x32xf32>
    %365 = vector.shape_cast %364 : vector<1x1x32xf32> to vector<1x32xf32>
    %366 = vector.broadcast %365 : vector<1x32xf32> to vector<8x32xf32>
    %367 = arith.addf %363, %366 : vector<8x32xf32>
    %cst_248 = arith.constant dense<0.000000e+00> : vector<8x8xf32>
    %368 = tpu.matmul %353, %360, %cst_248 {dimension_numbers = #tpu.dot_dimension_numbers<[1], [1], [0], [0], [0, 0, 1, 0], [], []>} : vector<8x32xf32>, vector<8x32xf32>, vector<8x8xf32> -> vector<8x8xf32>
    %cst_249 = arith.constant 0.176776692 : f32
    %369 = vector.broadcast %cst_249 : f32 to vector<8x8xf32>
    %370 = arith.mulf %368, %369 : vector<8x8xf32>
    %371 = arith.addf %370, %21 : vector<8x8xf32>
    %cst_250 = arith.constant dense<0xFF800000> : vector<8xf32>
    %372 = vector.multi_reduction <maximumf>, %371, %cst_250 [1] : vector<8x8xf32> to vector<8xf32>
    %373 = vector.shape_cast %372 : vector<8xf32> to vector<8x1xf32>
    %374 = vector.broadcast %373 : vector<8x1xf32> to vector<8x8xf32>
    %375 = arith.subf %371, %374 : vector<8x8xf32>
    %376 = math.exp %375 : vector<8x8xf32>
    %cst_251 = arith.constant dense<0.000000e+00> : vector<8xf32>
    %377 = vector.multi_reduction <add>, %376, %cst_251 [1] : vector<8x8xf32> to vector<8xf32>
    %378 = vector.shape_cast %377 : vector<8xf32> to vector<8x1xf32>
    %379 = vector.broadcast %378 : vector<8x1xf32> to vector<8x8xf32>
    %380 = arith.divf %376, %379 : vector<8x8xf32>
    %381 = arith.truncf %380 : vector<8x8xf32> to vector<8x8xbf16>
    %382 = arith.truncf %367 : vector<8x32xf32> to vector<8x32xbf16>
    %cst_252 = arith.constant dense<0.000000e+00> : vector<8x32xf32>
    %383 = tpu.matmul %381, %382, %cst_252 {dimension_numbers = #tpu.dot_dimension_numbers<[1], [0], [0], [1], [0, 0, 1, 1], [], []>} : vector<8x8xbf16>, vector<8x32xbf16>, vector<8x32xf32> -> vector<8x32xf32>
    %384 = arith.truncf %383 : vector<8x32xf32> to vector<8x32xbf16>
    %c5_253 = arith.constant 5 : index
    %c0_254 = arith.constant 0 : index
    %c0_255 = arith.constant 0 : index
    %385 = vector.load %arg12[%c5_253, %c0_254, %c0_255] : memref<12x32x128xbf16, #tpu.memory_space<vmem>>, vector<1x32x128xbf16>
    %386 = vector.shape_cast %385 : vector<1x32x128xbf16> to vector<32x128xbf16>
    %cst_256 = arith.constant dense<0.000000e+00> : vector<8x128xf32>
    %387 = tpu.matmul %384, %386, %cst_256 {dimension_numbers = #tpu.dot_dimension_numbers<[1], [0], [0], [1], [0, 0, 1, 1], [], []>} : vector<8x32xbf16>, vector<32x128xbf16>, vector<8x128xf32> -> vector<8x128xf32>
    %388 = arith.addf %346, %387 : vector<8x128xf32>
    %c6 = arith.constant 6 : index
    %c0_257 = arith.constant 0 : index
    %c0_258 = arith.constant 0 : index
    %389 = vector.load %arg6[%c6, %c0_257, %c0_258] : memref<12x128x32xbf16, #tpu.memory_space<vmem>>, vector<1x128x32xbf16>
    %390 = vector.shape_cast %389 : vector<1x128x32xbf16> to vector<128x32xbf16>
    %cst_259 = arith.constant dense<0.000000e+00> : vector<8x32xf32>
    %391 = tpu.matmul %303, %390, %cst_259 {dimension_numbers = #tpu.dot_dimension_numbers<[1], [0], [0], [1], [0, 0, 1, 1], [], []>} : vector<8x128xbf16>, vector<128x32xbf16>, vector<8x32xf32> -> vector<8x32xf32>
    %c6_260 = arith.constant 6 : index
    %c0_261 = arith.constant 0 : index
    %c0_262 = arith.constant 0 : index
    %392 = vector.load %arg7[%c6_260, %c0_261, %c0_262] : memref<12x1x32xf32, #tpu.memory_space<vmem>>, vector<1x1x32xf32>
    %393 = vector.shape_cast %392 : vector<1x1x32xf32> to vector<1x32xf32>
    %394 = vector.broadcast %393 : vector<1x32xf32> to vector<8x32xf32>
    %395 = arith.addf %391, %394 : vector<8x32xf32>
    %c6_263 = arith.constant 6 : index
    %c0_264 = arith.constant 0 : index
    %c0_265 = arith.constant 0 : index
    %396 = vector.load %arg8[%c6_263, %c0_264, %c0_265] : memref<12x128x32xbf16, #tpu.memory_space<vmem>>, vector<1x128x32xbf16>
    %397 = vector.shape_cast %396 : vector<1x128x32xbf16> to vector<128x32xbf16>
    %cst_266 = arith.constant dense<0.000000e+00> : vector<8x32xf32>
    %398 = tpu.matmul %303, %397, %cst_266 {dimension_numbers = #tpu.dot_dimension_numbers<[1], [0], [0], [1], [0, 0, 1, 1], [], []>} : vector<8x128xbf16>, vector<128x32xbf16>, vector<8x32xf32> -> vector<8x32xf32>
    %c6_267 = arith.constant 6 : index
    %c0_268 = arith.constant 0 : index
    %c0_269 = arith.constant 0 : index
    %399 = vector.load %arg9[%c6_267, %c0_268, %c0_269] : memref<12x1x32xf32, #tpu.memory_space<vmem>>, vector<1x1x32xf32>
    %400 = vector.shape_cast %399 : vector<1x1x32xf32> to vector<1x32xf32>
    %401 = vector.broadcast %400 : vector<1x32xf32> to vector<8x32xf32>
    %402 = arith.addf %398, %401 : vector<8x32xf32>
    %c6_270 = arith.constant 6 : index
    %c0_271 = arith.constant 0 : index
    %c0_272 = arith.constant 0 : index
    %403 = vector.load %arg10[%c6_270, %c0_271, %c0_272] : memref<12x128x32xbf16, #tpu.memory_space<vmem>>, vector<1x128x32xbf16>
    %404 = vector.shape_cast %403 : vector<1x128x32xbf16> to vector<128x32xbf16>
    %cst_273 = arith.constant dense<0.000000e+00> : vector<8x32xf32>
    %405 = tpu.matmul %303, %404, %cst_273 {dimension_numbers = #tpu.dot_dimension_numbers<[1], [0], [0], [1], [0, 0, 1, 1], [], []>} : vector<8x128xbf16>, vector<128x32xbf16>, vector<8x32xf32> -> vector<8x32xf32>
    %c6_274 = arith.constant 6 : index
    %c0_275 = arith.constant 0 : index
    %c0_276 = arith.constant 0 : index
    %406 = vector.load %arg11[%c6_274, %c0_275, %c0_276] : memref<12x1x32xf32, #tpu.memory_space<vmem>>, vector<1x1x32xf32>
    %407 = vector.shape_cast %406 : vector<1x1x32xf32> to vector<1x32xf32>
    %408 = vector.broadcast %407 : vector<1x32xf32> to vector<8x32xf32>
    %409 = arith.addf %405, %408 : vector<8x32xf32>
    %cst_277 = arith.constant dense<0.000000e+00> : vector<8x8xf32>
    %410 = tpu.matmul %395, %402, %cst_277 {dimension_numbers = #tpu.dot_dimension_numbers<[1], [1], [0], [0], [0, 0, 1, 0], [], []>} : vector<8x32xf32>, vector<8x32xf32>, vector<8x8xf32> -> vector<8x8xf32>
    %cst_278 = arith.constant 0.176776692 : f32
    %411 = vector.broadcast %cst_278 : f32 to vector<8x8xf32>
    %412 = arith.mulf %410, %411 : vector<8x8xf32>
    %413 = arith.addf %412, %21 : vector<8x8xf32>
    %cst_279 = arith.constant dense<0xFF800000> : vector<8xf32>
    %414 = vector.multi_reduction <maximumf>, %413, %cst_279 [1] : vector<8x8xf32> to vector<8xf32>
    %415 = vector.shape_cast %414 : vector<8xf32> to vector<8x1xf32>
    %416 = vector.broadcast %415 : vector<8x1xf32> to vector<8x8xf32>
    %417 = arith.subf %413, %416 : vector<8x8xf32>
    %418 = math.exp %417 : vector<8x8xf32>
    %cst_280 = arith.constant dense<0.000000e+00> : vector<8xf32>
    %419 = vector.multi_reduction <add>, %418, %cst_280 [1] : vector<8x8xf32> to vector<8xf32>
    %420 = vector.shape_cast %419 : vector<8xf32> to vector<8x1xf32>
    %421 = vector.broadcast %420 : vector<8x1xf32> to vector<8x8xf32>
    %422 = arith.divf %418, %421 : vector<8x8xf32>
    %423 = arith.truncf %422 : vector<8x8xf32> to vector<8x8xbf16>
    %424 = arith.truncf %409 : vector<8x32xf32> to vector<8x32xbf16>
    %cst_281 = arith.constant dense<0.000000e+00> : vector<8x32xf32>
    %425 = tpu.matmul %423, %424, %cst_281 {dimension_numbers = #tpu.dot_dimension_numbers<[1], [0], [0], [1], [0, 0, 1, 1], [], []>} : vector<8x8xbf16>, vector<8x32xbf16>, vector<8x32xf32> -> vector<8x32xf32>
    %426 = arith.truncf %425 : vector<8x32xf32> to vector<8x32xbf16>
    %c6_282 = arith.constant 6 : index
    %c0_283 = arith.constant 0 : index
    %c0_284 = arith.constant 0 : index
    %427 = vector.load %arg12[%c6_282, %c0_283, %c0_284] : memref<12x32x128xbf16, #tpu.memory_space<vmem>>, vector<1x32x128xbf16>
    %428 = vector.shape_cast %427 : vector<1x32x128xbf16> to vector<32x128xbf16>
    %cst_285 = arith.constant dense<0.000000e+00> : vector<8x128xf32>
    %429 = tpu.matmul %426, %428, %cst_285 {dimension_numbers = #tpu.dot_dimension_numbers<[1], [0], [0], [1], [0, 0, 1, 1], [], []>} : vector<8x32xbf16>, vector<32x128xbf16>, vector<8x128xf32> -> vector<8x128xf32>
    %430 = arith.addf %388, %429 : vector<8x128xf32>
    %c7 = arith.constant 7 : index
    %c0_286 = arith.constant 0 : index
    %c0_287 = arith.constant 0 : index
    %431 = vector.load %arg6[%c7, %c0_286, %c0_287] : memref<12x128x32xbf16, #tpu.memory_space<vmem>>, vector<1x128x32xbf16>
    %432 = vector.shape_cast %431 : vector<1x128x32xbf16> to vector<128x32xbf16>
    %cst_288 = arith.constant dense<0.000000e+00> : vector<8x32xf32>
    %433 = tpu.matmul %303, %432, %cst_288 {dimension_numbers = #tpu.dot_dimension_numbers<[1], [0], [0], [1], [0, 0, 1, 1], [], []>} : vector<8x128xbf16>, vector<128x32xbf16>, vector<8x32xf32> -> vector<8x32xf32>
    %c7_289 = arith.constant 7 : index
    %c0_290 = arith.constant 0 : index
    %c0_291 = arith.constant 0 : index
    %434 = vector.load %arg7[%c7_289, %c0_290, %c0_291] : memref<12x1x32xf32, #tpu.memory_space<vmem>>, vector<1x1x32xf32>
    %435 = vector.shape_cast %434 : vector<1x1x32xf32> to vector<1x32xf32>
    %436 = vector.broadcast %435 : vector<1x32xf32> to vector<8x32xf32>
    %437 = arith.addf %433, %436 : vector<8x32xf32>
    %c7_292 = arith.constant 7 : index
    %c0_293 = arith.constant 0 : index
    %c0_294 = arith.constant 0 : index
    %438 = vector.load %arg8[%c7_292, %c0_293, %c0_294] : memref<12x128x32xbf16, #tpu.memory_space<vmem>>, vector<1x128x32xbf16>
    %439 = vector.shape_cast %438 : vector<1x128x32xbf16> to vector<128x32xbf16>
    %cst_295 = arith.constant dense<0.000000e+00> : vector<8x32xf32>
    %440 = tpu.matmul %303, %439, %cst_295 {dimension_numbers = #tpu.dot_dimension_numbers<[1], [0], [0], [1], [0, 0, 1, 1], [], []>} : vector<8x128xbf16>, vector<128x32xbf16>, vector<8x32xf32> -> vector<8x32xf32>
    %c7_296 = arith.constant 7 : index
    %c0_297 = arith.constant 0 : index
    %c0_298 = arith.constant 0 : index
    %441 = vector.load %arg9[%c7_296, %c0_297, %c0_298] : memref<12x1x32xf32, #tpu.memory_space<vmem>>, vector<1x1x32xf32>
    %442 = vector.shape_cast %441 : vector<1x1x32xf32> to vector<1x32xf32>
    %443 = vector.broadcast %442 : vector<1x32xf32> to vector<8x32xf32>
    %444 = arith.addf %440, %443 : vector<8x32xf32>
    %c7_299 = arith.constant 7 : index
    %c0_300 = arith.constant 0 : index
    %c0_301 = arith.constant 0 : index
    %445 = vector.load %arg10[%c7_299, %c0_300, %c0_301] : memref<12x128x32xbf16, #tpu.memory_space<vmem>>, vector<1x128x32xbf16>
    %446 = vector.shape_cast %445 : vector<1x128x32xbf16> to vector<128x32xbf16>
    %cst_302 = arith.constant dense<0.000000e+00> : vector<8x32xf32>
    %447 = tpu.matmul %303, %446, %cst_302 {dimension_numbers = #tpu.dot_dimension_numbers<[1], [0], [0], [1], [0, 0, 1, 1], [], []>} : vector<8x128xbf16>, vector<128x32xbf16>, vector<8x32xf32> -> vector<8x32xf32>
    %c7_303 = arith.constant 7 : index
    %c0_304 = arith.constant 0 : index
    %c0_305 = arith.constant 0 : index
    %448 = vector.load %arg11[%c7_303, %c0_304, %c0_305] : memref<12x1x32xf32, #tpu.memory_space<vmem>>, vector<1x1x32xf32>
    %449 = vector.shape_cast %448 : vector<1x1x32xf32> to vector<1x32xf32>
    %450 = vector.broadcast %449 : vector<1x32xf32> to vector<8x32xf32>
    %451 = arith.addf %447, %450 : vector<8x32xf32>
    %cst_306 = arith.constant dense<0.000000e+00> : vector<8x8xf32>
    %452 = tpu.matmul %437, %444, %cst_306 {dimension_numbers = #tpu.dot_dimension_numbers<[1], [1], [0], [0], [0, 0, 1, 0], [], []>} : vector<8x32xf32>, vector<8x32xf32>, vector<8x8xf32> -> vector<8x8xf32>
    %cst_307 = arith.constant 0.176776692 : f32
    %453 = vector.broadcast %cst_307 : f32 to vector<8x8xf32>
    %454 = arith.mulf %452, %453 : vector<8x8xf32>
    %455 = arith.addf %454, %21 : vector<8x8xf32>
    %cst_308 = arith.constant dense<0xFF800000> : vector<8xf32>
    %456 = vector.multi_reduction <maximumf>, %455, %cst_308 [1] : vector<8x8xf32> to vector<8xf32>
    %457 = vector.shape_cast %456 : vector<8xf32> to vector<8x1xf32>
    %458 = vector.broadcast %457 : vector<8x1xf32> to vector<8x8xf32>
    %459 = arith.subf %455, %458 : vector<8x8xf32>
    %460 = math.exp %459 : vector<8x8xf32>
    %cst_309 = arith.constant dense<0.000000e+00> : vector<8xf32>
    %461 = vector.multi_reduction <add>, %460, %cst_309 [1] : vector<8x8xf32> to vector<8xf32>
    %462 = vector.shape_cast %461 : vector<8xf32> to vector<8x1xf32>
    %463 = vector.broadcast %462 : vector<8x1xf32> to vector<8x8xf32>
    %464 = arith.divf %460, %463 : vector<8x8xf32>
    %465 = arith.truncf %464 : vector<8x8xf32> to vector<8x8xbf16>
    %466 = arith.truncf %451 : vector<8x32xf32> to vector<8x32xbf16>
    %cst_310 = arith.constant dense<0.000000e+00> : vector<8x32xf32>
    %467 = tpu.matmul %465, %466, %cst_310 {dimension_numbers = #tpu.dot_dimension_numbers<[1], [0], [0], [1], [0, 0, 1, 1], [], []>} : vector<8x8xbf16>, vector<8x32xbf16>, vector<8x32xf32> -> vector<8x32xf32>
    %468 = arith.truncf %467 : vector<8x32xf32> to vector<8x32xbf16>
    %c7_311 = arith.constant 7 : index
    %c0_312 = arith.constant 0 : index
    %c0_313 = arith.constant 0 : index
    %469 = vector.load %arg12[%c7_311, %c0_312, %c0_313] : memref<12x32x128xbf16, #tpu.memory_space<vmem>>, vector<1x32x128xbf16>
    %470 = vector.shape_cast %469 : vector<1x32x128xbf16> to vector<32x128xbf16>
    %cst_314 = arith.constant dense<0.000000e+00> : vector<8x128xf32>
    %471 = tpu.matmul %468, %470, %cst_314 {dimension_numbers = #tpu.dot_dimension_numbers<[1], [0], [0], [1], [0, 0, 1, 1], [], []>} : vector<8x32xbf16>, vector<32x128xbf16>, vector<8x128xf32> -> vector<8x128xf32>
    %472 = arith.addf %430, %471 : vector<8x128xf32>
    %c1_315 = arith.constant 1 : index
    %c0_316 = arith.constant 0 : index
    %c0_317 = arith.constant 0 : index
    %473 = vector.load %arg13[%c1_315, %c0_316, %c0_317] : memref<3x1x128xf32, #tpu.memory_space<vmem>>, vector<1x1x128xf32>
    %474 = vector.shape_cast %473 : vector<1x1x128xf32> to vector<1x128xf32>
    %475 = vector.broadcast %474 : vector<1x128xf32> to vector<8x128xf32>
    %476 = arith.addf %472, %475 : vector<8x128xf32>
    %477 = arith.addf %302, %476 : vector<8x128xf32>
    %c1_318 = arith.constant 1 : index
    %c0_319 = arith.constant 0 : index
    %c0_320 = arith.constant 0 : index
    %478 = vector.load %arg22[%c1_318, %c0_319, %c0_320] : memref<3x1x128xf32, #tpu.memory_space<vmem>>, vector<1x1x128xf32>
    %479 = vector.shape_cast %478 : vector<1x1x128xf32> to vector<1x128xf32>
    %c1_321 = arith.constant 1 : index
    %c0_322 = arith.constant 0 : index
    %c0_323 = arith.constant 0 : index
    %480 = vector.load %arg23[%c1_321, %c0_322, %c0_323] : memref<3x1x128xf32, #tpu.memory_space<vmem>>, vector<1x1x128xf32>
    %481 = vector.shape_cast %480 : vector<1x1x128xf32> to vector<1x128xf32>
    %cst_324 = arith.constant dense<0.000000e+00> : vector<8xf32>
    %482 = vector.multi_reduction <add>, %477, %cst_324 [1] : vector<8x128xf32> to vector<8xf32>
    %483 = vector.shape_cast %482 : vector<8xf32> to vector<8x1xf32>
    %cst_325 = arith.constant 1.280000e+02 : f32
    %484 = vector.broadcast %cst_325 : f32 to vector<8x1xf32>
    %485 = arith.divf %483, %484 : vector<8x1xf32>
    %486 = vector.broadcast %485 : vector<8x1xf32> to vector<8x128xf32>
    %487 = arith.subf %477, %486 : vector<8x128xf32>
    %488 = arith.mulf %487, %487 : vector<8x128xf32>
    %cst_326 = arith.constant dense<0.000000e+00> : vector<8xf32>
    %489 = vector.multi_reduction <add>, %488, %cst_326 [1] : vector<8x128xf32> to vector<8xf32>
    %490 = vector.shape_cast %489 : vector<8xf32> to vector<8x1xf32>
    %cst_327 = arith.constant 1.280000e+02 : f32
    %491 = vector.broadcast %cst_327 : f32 to vector<8x1xf32>
    %492 = arith.divf %490, %491 : vector<8x1xf32>
    %cst_328 = arith.constant 9.99999974E-6 : f32
    %493 = vector.broadcast %cst_328 : f32 to vector<8x1xf32>
    %494 = arith.addf %492, %493 : vector<8x1xf32>
    %495 = math.rsqrt %494 : vector<8x1xf32>
    %496 = vector.broadcast %495 : vector<8x1xf32> to vector<8x128xf32>
    %497 = arith.mulf %487, %496 : vector<8x128xf32>
    %498 = vector.broadcast %479 : vector<1x128xf32> to vector<8x128xf32>
    %499 = arith.mulf %497, %498 : vector<8x128xf32>
    %500 = vector.broadcast %481 : vector<1x128xf32> to vector<8x128xf32>
    %501 = arith.addf %499, %500 : vector<8x128xf32>
    %c1_329 = arith.constant 1 : index
    %c0_330 = arith.constant 0 : index
    %c0_331 = arith.constant 0 : index
    %502 = vector.load %arg14[%c1_329, %c0_330, %c0_331] : memref<3x128x128xbf16, #tpu.memory_space<vmem>>, vector<1x128x128xbf16>
    %503 = vector.shape_cast %502 : vector<1x128x128xbf16> to vector<128x128xbf16>
    %cst_332 = arith.constant dense<0.000000e+00> : vector<1x128xf32>
    %504 = tpu.matmul %18, %503, %cst_332 {dimension_numbers = #tpu.dot_dimension_numbers<[1], [0], [0], [1], [0, 0, 1, 1], [], []>} : vector<1x128xbf16>, vector<128x128xbf16>, vector<1x128xf32> -> vector<1x128xf32>
    %c1_333 = arith.constant 1 : index
    %c0_334 = arith.constant 0 : index
    %c0_335 = arith.constant 0 : index
    %505 = vector.load %arg15[%c1_333, %c0_334, %c0_335] : memref<3x1x128xf32, #tpu.memory_space<vmem>>, vector<1x1x128xf32>
    %506 = vector.shape_cast %505 : vector<1x1x128xf32> to vector<1x128xf32>
    %507 = arith.addf %504, %506 : vector<1x128xf32>
    %508 = arith.truncf %507 : vector<1x128xf32> to vector<1x128xbf16>
    %c1_336 = arith.constant 1 : index
    %c0_337 = arith.constant 0 : index
    %c0_338 = arith.constant 0 : index
    %509 = vector.load %arg16[%c1_336, %c0_337, %c0_338] : memref<3x128x128xbf16, #tpu.memory_space<vmem>>, vector<1x128x128xbf16>
    %510 = vector.shape_cast %509 : vector<1x128x128xbf16> to vector<128x128xbf16>
    %cst_339 = arith.constant dense<0.000000e+00> : vector<1x128xf32>
    %511 = tpu.matmul %508, %510, %cst_339 {dimension_numbers = #tpu.dot_dimension_numbers<[1], [0], [0], [1], [0, 0, 1, 1], [], []>} : vector<1x128xbf16>, vector<128x128xbf16>, vector<1x128xf32> -> vector<1x128xf32>
    %c1_340 = arith.constant 1 : index
    %c0_341 = arith.constant 0 : index
    %c0_342 = arith.constant 0 : index
    %512 = vector.load %arg17[%c1_340, %c0_341, %c0_342] : memref<3x1x128xf32, #tpu.memory_space<vmem>>, vector<1x1x128xf32>
    %513 = vector.shape_cast %512 : vector<1x1x128xf32> to vector<1x128xf32>
    %514 = arith.addf %511, %513 : vector<1x128xf32>
    %515 = vector.broadcast %514 : vector<1x128xf32> to vector<8x128xf32>
    %516 = arith.addf %501, %515 : vector<8x128xf32>
    %c1_343 = arith.constant 1 : index
    %c0_344 = arith.constant 0 : index
    %c0_345 = arith.constant 0 : index
    %517 = vector.load %arg24[%c1_343, %c0_344, %c0_345] : memref<3x1x128xf32, #tpu.memory_space<vmem>>, vector<1x1x128xf32>
    %518 = vector.shape_cast %517 : vector<1x1x128xf32> to vector<1x128xf32>
    %c1_346 = arith.constant 1 : index
    %c0_347 = arith.constant 0 : index
    %c0_348 = arith.constant 0 : index
    %519 = vector.load %arg25[%c1_346, %c0_347, %c0_348] : memref<3x1x128xf32, #tpu.memory_space<vmem>>, vector<1x1x128xf32>
    %520 = vector.shape_cast %519 : vector<1x1x128xf32> to vector<1x128xf32>
    %cst_349 = arith.constant dense<0.000000e+00> : vector<8xf32>
    %521 = vector.multi_reduction <add>, %516, %cst_349 [1] : vector<8x128xf32> to vector<8xf32>
    %522 = vector.shape_cast %521 : vector<8xf32> to vector<8x1xf32>
    %cst_350 = arith.constant 1.280000e+02 : f32
    %523 = vector.broadcast %cst_350 : f32 to vector<8x1xf32>
    %524 = arith.divf %522, %523 : vector<8x1xf32>
    %525 = vector.broadcast %524 : vector<8x1xf32> to vector<8x128xf32>
    %526 = arith.subf %516, %525 : vector<8x128xf32>
    %527 = arith.mulf %526, %526 : vector<8x128xf32>
    %cst_351 = arith.constant dense<0.000000e+00> : vector<8xf32>
    %528 = vector.multi_reduction <add>, %527, %cst_351 [1] : vector<8x128xf32> to vector<8xf32>
    %529 = vector.shape_cast %528 : vector<8xf32> to vector<8x1xf32>
    %cst_352 = arith.constant 1.280000e+02 : f32
    %530 = vector.broadcast %cst_352 : f32 to vector<8x1xf32>
    %531 = arith.divf %529, %530 : vector<8x1xf32>
    %cst_353 = arith.constant 9.99999974E-6 : f32
    %532 = vector.broadcast %cst_353 : f32 to vector<8x1xf32>
    %533 = arith.addf %531, %532 : vector<8x1xf32>
    %534 = math.rsqrt %533 : vector<8x1xf32>
    %535 = vector.broadcast %534 : vector<8x1xf32> to vector<8x128xf32>
    %536 = arith.mulf %526, %535 : vector<8x128xf32>
    %537 = vector.broadcast %518 : vector<1x128xf32> to vector<8x128xf32>
    %538 = arith.mulf %536, %537 : vector<8x128xf32>
    %539 = vector.broadcast %520 : vector<1x128xf32> to vector<8x128xf32>
    %540 = arith.addf %538, %539 : vector<8x128xf32>
    %541 = arith.truncf %540 : vector<8x128xf32> to vector<8x128xbf16>
    %c1_354 = arith.constant 1 : index
    %c0_355 = arith.constant 0 : index
    %c0_356 = arith.constant 0 : index
    %542 = vector.load %arg18[%c1_354, %c0_355, %c0_356] : memref<3x128x512xbf16, #tpu.memory_space<vmem>>, vector<1x128x512xbf16>
    %543 = vector.shape_cast %542 : vector<1x128x512xbf16> to vector<128x512xbf16>
    %cst_357 = arith.constant dense<0.000000e+00> : vector<8x512xf32>
    %544 = tpu.matmul %541, %543, %cst_357 {dimension_numbers = #tpu.dot_dimension_numbers<[1], [0], [0], [1], [0, 0, 1, 1], [], []>} : vector<8x128xbf16>, vector<128x512xbf16>, vector<8x512xf32> -> vector<8x512xf32>
    %c1_358 = arith.constant 1 : index
    %c0_359 = arith.constant 0 : index
    %c0_360 = arith.constant 0 : index
    %545 = vector.load %arg19[%c1_358, %c0_359, %c0_360] : memref<3x1x512xf32, #tpu.memory_space<vmem>>, vector<1x1x512xf32>
    %546 = vector.shape_cast %545 : vector<1x1x512xf32> to vector<1x512xf32>
    %547 = vector.broadcast %546 : vector<1x512xf32> to vector<8x512xf32>
    %548 = arith.addf %544, %547 : vector<8x512xf32>
    %cst_361 = arith.constant 0.000000e+00 : f32
    %549 = vector.broadcast %cst_361 : f32 to vector<8x512xf32>
    %550 = arith.maximumf %548, %549 : vector<8x512xf32>
    %551 = arith.truncf %550 : vector<8x512xf32> to vector<8x512xbf16>
    %c1_362 = arith.constant 1 : index
    %c0_363 = arith.constant 0 : index
    %c0_364 = arith.constant 0 : index
    %552 = vector.load %arg20[%c1_362, %c0_363, %c0_364] : memref<3x512x128xbf16, #tpu.memory_space<vmem>>, vector<1x512x128xbf16>
    %553 = vector.shape_cast %552 : vector<1x512x128xbf16> to vector<512x128xbf16>
    %cst_365 = arith.constant dense<0.000000e+00> : vector<8x128xf32>
    %554 = tpu.matmul %551, %553, %cst_365 {dimension_numbers = #tpu.dot_dimension_numbers<[1], [0], [0], [1], [0, 0, 1, 1], [], []>} : vector<8x512xbf16>, vector<512x128xbf16>, vector<8x128xf32> -> vector<8x128xf32>
    %c1_366 = arith.constant 1 : index
    %c0_367 = arith.constant 0 : index
    %c0_368 = arith.constant 0 : index
    %555 = vector.load %arg21[%c1_366, %c0_367, %c0_368] : memref<3x1x128xf32, #tpu.memory_space<vmem>>, vector<1x1x128xf32>
    %556 = vector.shape_cast %555 : vector<1x1x128xf32> to vector<1x128xf32>
    %557 = vector.broadcast %556 : vector<1x128xf32> to vector<8x128xf32>
    %558 = arith.addf %554, %557 : vector<8x128xf32>
    %559 = arith.addf %540, %558 : vector<8x128xf32>
    %c1_369 = arith.constant 1 : index
    %c0_370 = arith.constant 0 : index
    %c0_371 = arith.constant 0 : index
    %560 = vector.load %arg26[%c1_369, %c0_370, %c0_371] : memref<3x1x128xf32, #tpu.memory_space<vmem>>, vector<1x1x128xf32>
    %561 = vector.shape_cast %560 : vector<1x1x128xf32> to vector<1x128xf32>
    %c1_372 = arith.constant 1 : index
    %c0_373 = arith.constant 0 : index
    %c0_374 = arith.constant 0 : index
    %562 = vector.load %arg27[%c1_372, %c0_373, %c0_374] : memref<3x1x128xf32, #tpu.memory_space<vmem>>, vector<1x1x128xf32>
    %563 = vector.shape_cast %562 : vector<1x1x128xf32> to vector<1x128xf32>
    %cst_375 = arith.constant dense<0.000000e+00> : vector<8xf32>
    %564 = vector.multi_reduction <add>, %559, %cst_375 [1] : vector<8x128xf32> to vector<8xf32>
    %565 = vector.shape_cast %564 : vector<8xf32> to vector<8x1xf32>
    %cst_376 = arith.constant 1.280000e+02 : f32
    %566 = vector.broadcast %cst_376 : f32 to vector<8x1xf32>
    %567 = arith.divf %565, %566 : vector<8x1xf32>
    %568 = vector.broadcast %567 : vector<8x1xf32> to vector<8x128xf32>
    %569 = arith.subf %559, %568 : vector<8x128xf32>
    %570 = arith.mulf %569, %569 : vector<8x128xf32>
    %cst_377 = arith.constant dense<0.000000e+00> : vector<8xf32>
    %571 = vector.multi_reduction <add>, %570, %cst_377 [1] : vector<8x128xf32> to vector<8xf32>
    %572 = vector.shape_cast %571 : vector<8xf32> to vector<8x1xf32>
    %cst_378 = arith.constant 1.280000e+02 : f32
    %573 = vector.broadcast %cst_378 : f32 to vector<8x1xf32>
    %574 = arith.divf %572, %573 : vector<8x1xf32>
    %cst_379 = arith.constant 9.99999974E-6 : f32
    %575 = vector.broadcast %cst_379 : f32 to vector<8x1xf32>
    %576 = arith.addf %574, %575 : vector<8x1xf32>
    %577 = math.rsqrt %576 : vector<8x1xf32>
    %578 = vector.broadcast %577 : vector<8x1xf32> to vector<8x128xf32>
    %579 = arith.mulf %569, %578 : vector<8x128xf32>
    %580 = vector.broadcast %561 : vector<1x128xf32> to vector<8x128xf32>
    %581 = arith.mulf %579, %580 : vector<8x128xf32>
    %582 = vector.broadcast %563 : vector<1x128xf32> to vector<8x128xf32>
    %583 = arith.addf %581, %582 : vector<8x128xf32>
    %584 = arith.truncf %583 : vector<8x128xf32> to vector<8x128xbf16>
    %cst_380 = arith.constant 0.000000e+00 : f32
    %585 = vector.broadcast %cst_380 : f32 to vector<8x128xf32>
    %c8 = arith.constant 8 : index
    %c0_381 = arith.constant 0 : index
    %c0_382 = arith.constant 0 : index
    %586 = vector.load %arg6[%c8, %c0_381, %c0_382] : memref<12x128x32xbf16, #tpu.memory_space<vmem>>, vector<1x128x32xbf16>
    %587 = vector.shape_cast %586 : vector<1x128x32xbf16> to vector<128x32xbf16>
    %cst_383 = arith.constant dense<0.000000e+00> : vector<8x32xf32>
    %588 = tpu.matmul %584, %587, %cst_383 {dimension_numbers = #tpu.dot_dimension_numbers<[1], [0], [0], [1], [0, 0, 1, 1], [], []>} : vector<8x128xbf16>, vector<128x32xbf16>, vector<8x32xf32> -> vector<8x32xf32>
    %c8_384 = arith.constant 8 : index
    %c0_385 = arith.constant 0 : index
    %c0_386 = arith.constant 0 : index
    %589 = vector.load %arg7[%c8_384, %c0_385, %c0_386] : memref<12x1x32xf32, #tpu.memory_space<vmem>>, vector<1x1x32xf32>
    %590 = vector.shape_cast %589 : vector<1x1x32xf32> to vector<1x32xf32>
    %591 = vector.broadcast %590 : vector<1x32xf32> to vector<8x32xf32>
    %592 = arith.addf %588, %591 : vector<8x32xf32>
    %c8_387 = arith.constant 8 : index
    %c0_388 = arith.constant 0 : index
    %c0_389 = arith.constant 0 : index
    %593 = vector.load %arg8[%c8_387, %c0_388, %c0_389] : memref<12x128x32xbf16, #tpu.memory_space<vmem>>, vector<1x128x32xbf16>
    %594 = vector.shape_cast %593 : vector<1x128x32xbf16> to vector<128x32xbf16>
    %cst_390 = arith.constant dense<0.000000e+00> : vector<8x32xf32>
    %595 = tpu.matmul %584, %594, %cst_390 {dimension_numbers = #tpu.dot_dimension_numbers<[1], [0], [0], [1], [0, 0, 1, 1], [], []>} : vector<8x128xbf16>, vector<128x32xbf16>, vector<8x32xf32> -> vector<8x32xf32>
    %c8_391 = arith.constant 8 : index
    %c0_392 = arith.constant 0 : index
    %c0_393 = arith.constant 0 : index
    %596 = vector.load %arg9[%c8_391, %c0_392, %c0_393] : memref<12x1x32xf32, #tpu.memory_space<vmem>>, vector<1x1x32xf32>
    %597 = vector.shape_cast %596 : vector<1x1x32xf32> to vector<1x32xf32>
    %598 = vector.broadcast %597 : vector<1x32xf32> to vector<8x32xf32>
    %599 = arith.addf %595, %598 : vector<8x32xf32>
    %c8_394 = arith.constant 8 : index
    %c0_395 = arith.constant 0 : index
    %c0_396 = arith.constant 0 : index
    %600 = vector.load %arg10[%c8_394, %c0_395, %c0_396] : memref<12x128x32xbf16, #tpu.memory_space<vmem>>, vector<1x128x32xbf16>
    %601 = vector.shape_cast %600 : vector<1x128x32xbf16> to vector<128x32xbf16>
    %cst_397 = arith.constant dense<0.000000e+00> : vector<8x32xf32>
    %602 = tpu.matmul %584, %601, %cst_397 {dimension_numbers = #tpu.dot_dimension_numbers<[1], [0], [0], [1], [0, 0, 1, 1], [], []>} : vector<8x128xbf16>, vector<128x32xbf16>, vector<8x32xf32> -> vector<8x32xf32>
    %c8_398 = arith.constant 8 : index
    %c0_399 = arith.constant 0 : index
    %c0_400 = arith.constant 0 : index
    %603 = vector.load %arg11[%c8_398, %c0_399, %c0_400] : memref<12x1x32xf32, #tpu.memory_space<vmem>>, vector<1x1x32xf32>
    %604 = vector.shape_cast %603 : vector<1x1x32xf32> to vector<1x32xf32>
    %605 = vector.broadcast %604 : vector<1x32xf32> to vector<8x32xf32>
    %606 = arith.addf %602, %605 : vector<8x32xf32>
    %cst_401 = arith.constant dense<0.000000e+00> : vector<8x8xf32>
    %607 = tpu.matmul %592, %599, %cst_401 {dimension_numbers = #tpu.dot_dimension_numbers<[1], [1], [0], [0], [0, 0, 1, 0], [], []>} : vector<8x32xf32>, vector<8x32xf32>, vector<8x8xf32> -> vector<8x8xf32>
    %cst_402 = arith.constant 0.176776692 : f32
    %608 = vector.broadcast %cst_402 : f32 to vector<8x8xf32>
    %609 = arith.mulf %607, %608 : vector<8x8xf32>
    %610 = arith.addf %609, %21 : vector<8x8xf32>
    %cst_403 = arith.constant dense<0xFF800000> : vector<8xf32>
    %611 = vector.multi_reduction <maximumf>, %610, %cst_403 [1] : vector<8x8xf32> to vector<8xf32>
    %612 = vector.shape_cast %611 : vector<8xf32> to vector<8x1xf32>
    %613 = vector.broadcast %612 : vector<8x1xf32> to vector<8x8xf32>
    %614 = arith.subf %610, %613 : vector<8x8xf32>
    %615 = math.exp %614 : vector<8x8xf32>
    %cst_404 = arith.constant dense<0.000000e+00> : vector<8xf32>
    %616 = vector.multi_reduction <add>, %615, %cst_404 [1] : vector<8x8xf32> to vector<8xf32>
    %617 = vector.shape_cast %616 : vector<8xf32> to vector<8x1xf32>
    %618 = vector.broadcast %617 : vector<8x1xf32> to vector<8x8xf32>
    %619 = arith.divf %615, %618 : vector<8x8xf32>
    %620 = arith.truncf %619 : vector<8x8xf32> to vector<8x8xbf16>
    %621 = arith.truncf %606 : vector<8x32xf32> to vector<8x32xbf16>
    %cst_405 = arith.constant dense<0.000000e+00> : vector<8x32xf32>
    %622 = tpu.matmul %620, %621, %cst_405 {dimension_numbers = #tpu.dot_dimension_numbers<[1], [0], [0], [1], [0, 0, 1, 1], [], []>} : vector<8x8xbf16>, vector<8x32xbf16>, vector<8x32xf32> -> vector<8x32xf32>
    %623 = arith.truncf %622 : vector<8x32xf32> to vector<8x32xbf16>
    %c8_406 = arith.constant 8 : index
    %c0_407 = arith.constant 0 : index
    %c0_408 = arith.constant 0 : index
    %624 = vector.load %arg12[%c8_406, %c0_407, %c0_408] : memref<12x32x128xbf16, #tpu.memory_space<vmem>>, vector<1x32x128xbf16>
    %625 = vector.shape_cast %624 : vector<1x32x128xbf16> to vector<32x128xbf16>
    %cst_409 = arith.constant dense<0.000000e+00> : vector<8x128xf32>
    %626 = tpu.matmul %623, %625, %cst_409 {dimension_numbers = #tpu.dot_dimension_numbers<[1], [0], [0], [1], [0, 0, 1, 1], [], []>} : vector<8x32xbf16>, vector<32x128xbf16>, vector<8x128xf32> -> vector<8x128xf32>
    %627 = arith.addf %585, %626 : vector<8x128xf32>
    %c9 = arith.constant 9 : index
    %c0_410 = arith.constant 0 : index
    %c0_411 = arith.constant 0 : index
    %628 = vector.load %arg6[%c9, %c0_410, %c0_411] : memref<12x128x32xbf16, #tpu.memory_space<vmem>>, vector<1x128x32xbf16>
    %629 = vector.shape_cast %628 : vector<1x128x32xbf16> to vector<128x32xbf16>
    %cst_412 = arith.constant dense<0.000000e+00> : vector<8x32xf32>
    %630 = tpu.matmul %584, %629, %cst_412 {dimension_numbers = #tpu.dot_dimension_numbers<[1], [0], [0], [1], [0, 0, 1, 1], [], []>} : vector<8x128xbf16>, vector<128x32xbf16>, vector<8x32xf32> -> vector<8x32xf32>
    %c9_413 = arith.constant 9 : index
    %c0_414 = arith.constant 0 : index
    %c0_415 = arith.constant 0 : index
    %631 = vector.load %arg7[%c9_413, %c0_414, %c0_415] : memref<12x1x32xf32, #tpu.memory_space<vmem>>, vector<1x1x32xf32>
    %632 = vector.shape_cast %631 : vector<1x1x32xf32> to vector<1x32xf32>
    %633 = vector.broadcast %632 : vector<1x32xf32> to vector<8x32xf32>
    %634 = arith.addf %630, %633 : vector<8x32xf32>
    %c9_416 = arith.constant 9 : index
    %c0_417 = arith.constant 0 : index
    %c0_418 = arith.constant 0 : index
    %635 = vector.load %arg8[%c9_416, %c0_417, %c0_418] : memref<12x128x32xbf16, #tpu.memory_space<vmem>>, vector<1x128x32xbf16>
    %636 = vector.shape_cast %635 : vector<1x128x32xbf16> to vector<128x32xbf16>
    %cst_419 = arith.constant dense<0.000000e+00> : vector<8x32xf32>
    %637 = tpu.matmul %584, %636, %cst_419 {dimension_numbers = #tpu.dot_dimension_numbers<[1], [0], [0], [1], [0, 0, 1, 1], [], []>} : vector<8x128xbf16>, vector<128x32xbf16>, vector<8x32xf32> -> vector<8x32xf32>
    %c9_420 = arith.constant 9 : index
    %c0_421 = arith.constant 0 : index
    %c0_422 = arith.constant 0 : index
    %638 = vector.load %arg9[%c9_420, %c0_421, %c0_422] : memref<12x1x32xf32, #tpu.memory_space<vmem>>, vector<1x1x32xf32>
    %639 = vector.shape_cast %638 : vector<1x1x32xf32> to vector<1x32xf32>
    %640 = vector.broadcast %639 : vector<1x32xf32> to vector<8x32xf32>
    %641 = arith.addf %637, %640 : vector<8x32xf32>
    %c9_423 = arith.constant 9 : index
    %c0_424 = arith.constant 0 : index
    %c0_425 = arith.constant 0 : index
    %642 = vector.load %arg10[%c9_423, %c0_424, %c0_425] : memref<12x128x32xbf16, #tpu.memory_space<vmem>>, vector<1x128x32xbf16>
    %643 = vector.shape_cast %642 : vector<1x128x32xbf16> to vector<128x32xbf16>
    %cst_426 = arith.constant dense<0.000000e+00> : vector<8x32xf32>
    %644 = tpu.matmul %584, %643, %cst_426 {dimension_numbers = #tpu.dot_dimension_numbers<[1], [0], [0], [1], [0, 0, 1, 1], [], []>} : vector<8x128xbf16>, vector<128x32xbf16>, vector<8x32xf32> -> vector<8x32xf32>
    %c9_427 = arith.constant 9 : index
    %c0_428 = arith.constant 0 : index
    %c0_429 = arith.constant 0 : index
    %645 = vector.load %arg11[%c9_427, %c0_428, %c0_429] : memref<12x1x32xf32, #tpu.memory_space<vmem>>, vector<1x1x32xf32>
    %646 = vector.shape_cast %645 : vector<1x1x32xf32> to vector<1x32xf32>
    %647 = vector.broadcast %646 : vector<1x32xf32> to vector<8x32xf32>
    %648 = arith.addf %644, %647 : vector<8x32xf32>
    %cst_430 = arith.constant dense<0.000000e+00> : vector<8x8xf32>
    %649 = tpu.matmul %634, %641, %cst_430 {dimension_numbers = #tpu.dot_dimension_numbers<[1], [1], [0], [0], [0, 0, 1, 0], [], []>} : vector<8x32xf32>, vector<8x32xf32>, vector<8x8xf32> -> vector<8x8xf32>
    %cst_431 = arith.constant 0.176776692 : f32
    %650 = vector.broadcast %cst_431 : f32 to vector<8x8xf32>
    %651 = arith.mulf %649, %650 : vector<8x8xf32>
    %652 = arith.addf %651, %21 : vector<8x8xf32>
    %cst_432 = arith.constant dense<0xFF800000> : vector<8xf32>
    %653 = vector.multi_reduction <maximumf>, %652, %cst_432 [1] : vector<8x8xf32> to vector<8xf32>
    %654 = vector.shape_cast %653 : vector<8xf32> to vector<8x1xf32>
    %655 = vector.broadcast %654 : vector<8x1xf32> to vector<8x8xf32>
    %656 = arith.subf %652, %655 : vector<8x8xf32>
    %657 = math.exp %656 : vector<8x8xf32>
    %cst_433 = arith.constant dense<0.000000e+00> : vector<8xf32>
    %658 = vector.multi_reduction <add>, %657, %cst_433 [1] : vector<8x8xf32> to vector<8xf32>
    %659 = vector.shape_cast %658 : vector<8xf32> to vector<8x1xf32>
    %660 = vector.broadcast %659 : vector<8x1xf32> to vector<8x8xf32>
    %661 = arith.divf %657, %660 : vector<8x8xf32>
    %662 = arith.truncf %661 : vector<8x8xf32> to vector<8x8xbf16>
    %663 = arith.truncf %648 : vector<8x32xf32> to vector<8x32xbf16>
    %cst_434 = arith.constant dense<0.000000e+00> : vector<8x32xf32>
    %664 = tpu.matmul %662, %663, %cst_434 {dimension_numbers = #tpu.dot_dimension_numbers<[1], [0], [0], [1], [0, 0, 1, 1], [], []>} : vector<8x8xbf16>, vector<8x32xbf16>, vector<8x32xf32> -> vector<8x32xf32>
    %665 = arith.truncf %664 : vector<8x32xf32> to vector<8x32xbf16>
    %c9_435 = arith.constant 9 : index
    %c0_436 = arith.constant 0 : index
    %c0_437 = arith.constant 0 : index
    %666 = vector.load %arg12[%c9_435, %c0_436, %c0_437] : memref<12x32x128xbf16, #tpu.memory_space<vmem>>, vector<1x32x128xbf16>
    %667 = vector.shape_cast %666 : vector<1x32x128xbf16> to vector<32x128xbf16>
    %cst_438 = arith.constant dense<0.000000e+00> : vector<8x128xf32>
    %668 = tpu.matmul %665, %667, %cst_438 {dimension_numbers = #tpu.dot_dimension_numbers<[1], [0], [0], [1], [0, 0, 1, 1], [], []>} : vector<8x32xbf16>, vector<32x128xbf16>, vector<8x128xf32> -> vector<8x128xf32>
    %669 = arith.addf %627, %668 : vector<8x128xf32>
    %c10 = arith.constant 10 : index
    %c0_439 = arith.constant 0 : index
    %c0_440 = arith.constant 0 : index
    %670 = vector.load %arg6[%c10, %c0_439, %c0_440] : memref<12x128x32xbf16, #tpu.memory_space<vmem>>, vector<1x128x32xbf16>
    %671 = vector.shape_cast %670 : vector<1x128x32xbf16> to vector<128x32xbf16>
    %cst_441 = arith.constant dense<0.000000e+00> : vector<8x32xf32>
    %672 = tpu.matmul %584, %671, %cst_441 {dimension_numbers = #tpu.dot_dimension_numbers<[1], [0], [0], [1], [0, 0, 1, 1], [], []>} : vector<8x128xbf16>, vector<128x32xbf16>, vector<8x32xf32> -> vector<8x32xf32>
    %c10_442 = arith.constant 10 : index
    %c0_443 = arith.constant 0 : index
    %c0_444 = arith.constant 0 : index
    %673 = vector.load %arg7[%c10_442, %c0_443, %c0_444] : memref<12x1x32xf32, #tpu.memory_space<vmem>>, vector<1x1x32xf32>
    %674 = vector.shape_cast %673 : vector<1x1x32xf32> to vector<1x32xf32>
    %675 = vector.broadcast %674 : vector<1x32xf32> to vector<8x32xf32>
    %676 = arith.addf %672, %675 : vector<8x32xf32>
    %c10_445 = arith.constant 10 : index
    %c0_446 = arith.constant 0 : index
    %c0_447 = arith.constant 0 : index
    %677 = vector.load %arg8[%c10_445, %c0_446, %c0_447] : memref<12x128x32xbf16, #tpu.memory_space<vmem>>, vector<1x128x32xbf16>
    %678 = vector.shape_cast %677 : vector<1x128x32xbf16> to vector<128x32xbf16>
    %cst_448 = arith.constant dense<0.000000e+00> : vector<8x32xf32>
    %679 = tpu.matmul %584, %678, %cst_448 {dimension_numbers = #tpu.dot_dimension_numbers<[1], [0], [0], [1], [0, 0, 1, 1], [], []>} : vector<8x128xbf16>, vector<128x32xbf16>, vector<8x32xf32> -> vector<8x32xf32>
    %c10_449 = arith.constant 10 : index
    %c0_450 = arith.constant 0 : index
    %c0_451 = arith.constant 0 : index
    %680 = vector.load %arg9[%c10_449, %c0_450, %c0_451] : memref<12x1x32xf32, #tpu.memory_space<vmem>>, vector<1x1x32xf32>
    %681 = vector.shape_cast %680 : vector<1x1x32xf32> to vector<1x32xf32>
    %682 = vector.broadcast %681 : vector<1x32xf32> to vector<8x32xf32>
    %683 = arith.addf %679, %682 : vector<8x32xf32>
    %c10_452 = arith.constant 10 : index
    %c0_453 = arith.constant 0 : index
    %c0_454 = arith.constant 0 : index
    %684 = vector.load %arg10[%c10_452, %c0_453, %c0_454] : memref<12x128x32xbf16, #tpu.memory_space<vmem>>, vector<1x128x32xbf16>
    %685 = vector.shape_cast %684 : vector<1x128x32xbf16> to vector<128x32xbf16>
    %cst_455 = arith.constant dense<0.000000e+00> : vector<8x32xf32>
    %686 = tpu.matmul %584, %685, %cst_455 {dimension_numbers = #tpu.dot_dimension_numbers<[1], [0], [0], [1], [0, 0, 1, 1], [], []>} : vector<8x128xbf16>, vector<128x32xbf16>, vector<8x32xf32> -> vector<8x32xf32>
    %c10_456 = arith.constant 10 : index
    %c0_457 = arith.constant 0 : index
    %c0_458 = arith.constant 0 : index
    %687 = vector.load %arg11[%c10_456, %c0_457, %c0_458] : memref<12x1x32xf32, #tpu.memory_space<vmem>>, vector<1x1x32xf32>
    %688 = vector.shape_cast %687 : vector<1x1x32xf32> to vector<1x32xf32>
    %689 = vector.broadcast %688 : vector<1x32xf32> to vector<8x32xf32>
    %690 = arith.addf %686, %689 : vector<8x32xf32>
    %cst_459 = arith.constant dense<0.000000e+00> : vector<8x8xf32>
    %691 = tpu.matmul %676, %683, %cst_459 {dimension_numbers = #tpu.dot_dimension_numbers<[1], [1], [0], [0], [0, 0, 1, 0], [], []>} : vector<8x32xf32>, vector<8x32xf32>, vector<8x8xf32> -> vector<8x8xf32>
    %cst_460 = arith.constant 0.176776692 : f32
    %692 = vector.broadcast %cst_460 : f32 to vector<8x8xf32>
    %693 = arith.mulf %691, %692 : vector<8x8xf32>
    %694 = arith.addf %693, %21 : vector<8x8xf32>
    %cst_461 = arith.constant dense<0xFF800000> : vector<8xf32>
    %695 = vector.multi_reduction <maximumf>, %694, %cst_461 [1] : vector<8x8xf32> to vector<8xf32>
    %696 = vector.shape_cast %695 : vector<8xf32> to vector<8x1xf32>
    %697 = vector.broadcast %696 : vector<8x1xf32> to vector<8x8xf32>
    %698 = arith.subf %694, %697 : vector<8x8xf32>
    %699 = math.exp %698 : vector<8x8xf32>
    %cst_462 = arith.constant dense<0.000000e+00> : vector<8xf32>
    %700 = vector.multi_reduction <add>, %699, %cst_462 [1] : vector<8x8xf32> to vector<8xf32>
    %701 = vector.shape_cast %700 : vector<8xf32> to vector<8x1xf32>
    %702 = vector.broadcast %701 : vector<8x1xf32> to vector<8x8xf32>
    %703 = arith.divf %699, %702 : vector<8x8xf32>
    %704 = arith.truncf %703 : vector<8x8xf32> to vector<8x8xbf16>
    %705 = arith.truncf %690 : vector<8x32xf32> to vector<8x32xbf16>
    %cst_463 = arith.constant dense<0.000000e+00> : vector<8x32xf32>
    %706 = tpu.matmul %704, %705, %cst_463 {dimension_numbers = #tpu.dot_dimension_numbers<[1], [0], [0], [1], [0, 0, 1, 1], [], []>} : vector<8x8xbf16>, vector<8x32xbf16>, vector<8x32xf32> -> vector<8x32xf32>
    %707 = arith.truncf %706 : vector<8x32xf32> to vector<8x32xbf16>
    %c10_464 = arith.constant 10 : index
    %c0_465 = arith.constant 0 : index
    %c0_466 = arith.constant 0 : index
    %708 = vector.load %arg12[%c10_464, %c0_465, %c0_466] : memref<12x32x128xbf16, #tpu.memory_space<vmem>>, vector<1x32x128xbf16>
    %709 = vector.shape_cast %708 : vector<1x32x128xbf16> to vector<32x128xbf16>
    %cst_467 = arith.constant dense<0.000000e+00> : vector<8x128xf32>
    %710 = tpu.matmul %707, %709, %cst_467 {dimension_numbers = #tpu.dot_dimension_numbers<[1], [0], [0], [1], [0, 0, 1, 1], [], []>} : vector<8x32xbf16>, vector<32x128xbf16>, vector<8x128xf32> -> vector<8x128xf32>
    %711 = arith.addf %669, %710 : vector<8x128xf32>
    %c11 = arith.constant 11 : index
    %c0_468 = arith.constant 0 : index
    %c0_469 = arith.constant 0 : index
    %712 = vector.load %arg6[%c11, %c0_468, %c0_469] : memref<12x128x32xbf16, #tpu.memory_space<vmem>>, vector<1x128x32xbf16>
    %713 = vector.shape_cast %712 : vector<1x128x32xbf16> to vector<128x32xbf16>
    %cst_470 = arith.constant dense<0.000000e+00> : vector<8x32xf32>
    %714 = tpu.matmul %584, %713, %cst_470 {dimension_numbers = #tpu.dot_dimension_numbers<[1], [0], [0], [1], [0, 0, 1, 1], [], []>} : vector<8x128xbf16>, vector<128x32xbf16>, vector<8x32xf32> -> vector<8x32xf32>
    %c11_471 = arith.constant 11 : index
    %c0_472 = arith.constant 0 : index
    %c0_473 = arith.constant 0 : index
    %715 = vector.load %arg7[%c11_471, %c0_472, %c0_473] : memref<12x1x32xf32, #tpu.memory_space<vmem>>, vector<1x1x32xf32>
    %716 = vector.shape_cast %715 : vector<1x1x32xf32> to vector<1x32xf32>
    %717 = vector.broadcast %716 : vector<1x32xf32> to vector<8x32xf32>
    %718 = arith.addf %714, %717 : vector<8x32xf32>
    %c11_474 = arith.constant 11 : index
    %c0_475 = arith.constant 0 : index
    %c0_476 = arith.constant 0 : index
    %719 = vector.load %arg8[%c11_474, %c0_475, %c0_476] : memref<12x128x32xbf16, #tpu.memory_space<vmem>>, vector<1x128x32xbf16>
    %720 = vector.shape_cast %719 : vector<1x128x32xbf16> to vector<128x32xbf16>
    %cst_477 = arith.constant dense<0.000000e+00> : vector<8x32xf32>
    %721 = tpu.matmul %584, %720, %cst_477 {dimension_numbers = #tpu.dot_dimension_numbers<[1], [0], [0], [1], [0, 0, 1, 1], [], []>} : vector<8x128xbf16>, vector<128x32xbf16>, vector<8x32xf32> -> vector<8x32xf32>
    %c11_478 = arith.constant 11 : index
    %c0_479 = arith.constant 0 : index
    %c0_480 = arith.constant 0 : index
    %722 = vector.load %arg9[%c11_478, %c0_479, %c0_480] : memref<12x1x32xf32, #tpu.memory_space<vmem>>, vector<1x1x32xf32>
    %723 = vector.shape_cast %722 : vector<1x1x32xf32> to vector<1x32xf32>
    %724 = vector.broadcast %723 : vector<1x32xf32> to vector<8x32xf32>
    %725 = arith.addf %721, %724 : vector<8x32xf32>
    %c11_481 = arith.constant 11 : index
    %c0_482 = arith.constant 0 : index
    %c0_483 = arith.constant 0 : index
    %726 = vector.load %arg10[%c11_481, %c0_482, %c0_483] : memref<12x128x32xbf16, #tpu.memory_space<vmem>>, vector<1x128x32xbf16>
    %727 = vector.shape_cast %726 : vector<1x128x32xbf16> to vector<128x32xbf16>
    %cst_484 = arith.constant dense<0.000000e+00> : vector<8x32xf32>
    %728 = tpu.matmul %584, %727, %cst_484 {dimension_numbers = #tpu.dot_dimension_numbers<[1], [0], [0], [1], [0, 0, 1, 1], [], []>} : vector<8x128xbf16>, vector<128x32xbf16>, vector<8x32xf32> -> vector<8x32xf32>
    %c11_485 = arith.constant 11 : index
    %c0_486 = arith.constant 0 : index
    %c0_487 = arith.constant 0 : index
    %729 = vector.load %arg11[%c11_485, %c0_486, %c0_487] : memref<12x1x32xf32, #tpu.memory_space<vmem>>, vector<1x1x32xf32>
    %730 = vector.shape_cast %729 : vector<1x1x32xf32> to vector<1x32xf32>
    %731 = vector.broadcast %730 : vector<1x32xf32> to vector<8x32xf32>
    %732 = arith.addf %728, %731 : vector<8x32xf32>
    %cst_488 = arith.constant dense<0.000000e+00> : vector<8x8xf32>
    %733 = tpu.matmul %718, %725, %cst_488 {dimension_numbers = #tpu.dot_dimension_numbers<[1], [1], [0], [0], [0, 0, 1, 0], [], []>} : vector<8x32xf32>, vector<8x32xf32>, vector<8x8xf32> -> vector<8x8xf32>
    %cst_489 = arith.constant 0.176776692 : f32
    %734 = vector.broadcast %cst_489 : f32 to vector<8x8xf32>
    %735 = arith.mulf %733, %734 : vector<8x8xf32>
    %736 = arith.addf %735, %21 : vector<8x8xf32>
    %cst_490 = arith.constant dense<0xFF800000> : vector<8xf32>
    %737 = vector.multi_reduction <maximumf>, %736, %cst_490 [1] : vector<8x8xf32> to vector<8xf32>
    %738 = vector.shape_cast %737 : vector<8xf32> to vector<8x1xf32>
    %739 = vector.broadcast %738 : vector<8x1xf32> to vector<8x8xf32>
    %740 = arith.subf %736, %739 : vector<8x8xf32>
    %741 = math.exp %740 : vector<8x8xf32>
    %cst_491 = arith.constant dense<0.000000e+00> : vector<8xf32>
    %742 = vector.multi_reduction <add>, %741, %cst_491 [1] : vector<8x8xf32> to vector<8xf32>
    %743 = vector.shape_cast %742 : vector<8xf32> to vector<8x1xf32>
    %744 = vector.broadcast %743 : vector<8x1xf32> to vector<8x8xf32>
    %745 = arith.divf %741, %744 : vector<8x8xf32>
    %746 = arith.truncf %745 : vector<8x8xf32> to vector<8x8xbf16>
    %747 = arith.truncf %732 : vector<8x32xf32> to vector<8x32xbf16>
    %cst_492 = arith.constant dense<0.000000e+00> : vector<8x32xf32>
    %748 = tpu.matmul %746, %747, %cst_492 {dimension_numbers = #tpu.dot_dimension_numbers<[1], [0], [0], [1], [0, 0, 1, 1], [], []>} : vector<8x8xbf16>, vector<8x32xbf16>, vector<8x32xf32> -> vector<8x32xf32>
    %749 = arith.truncf %748 : vector<8x32xf32> to vector<8x32xbf16>
    %c11_493 = arith.constant 11 : index
    %c0_494 = arith.constant 0 : index
    %c0_495 = arith.constant 0 : index
    %750 = vector.load %arg12[%c11_493, %c0_494, %c0_495] : memref<12x32x128xbf16, #tpu.memory_space<vmem>>, vector<1x32x128xbf16>
    %751 = vector.shape_cast %750 : vector<1x32x128xbf16> to vector<32x128xbf16>
    %cst_496 = arith.constant dense<0.000000e+00> : vector<8x128xf32>
    %752 = tpu.matmul %749, %751, %cst_496 {dimension_numbers = #tpu.dot_dimension_numbers<[1], [0], [0], [1], [0, 0, 1, 1], [], []>} : vector<8x32xbf16>, vector<32x128xbf16>, vector<8x128xf32> -> vector<8x128xf32>
    %753 = arith.addf %711, %752 : vector<8x128xf32>
    %c2_497 = arith.constant 2 : index
    %c0_498 = arith.constant 0 : index
    %c0_499 = arith.constant 0 : index
    %754 = vector.load %arg13[%c2_497, %c0_498, %c0_499] : memref<3x1x128xf32, #tpu.memory_space<vmem>>, vector<1x1x128xf32>
    %755 = vector.shape_cast %754 : vector<1x1x128xf32> to vector<1x128xf32>
    %756 = vector.broadcast %755 : vector<1x128xf32> to vector<8x128xf32>
    %757 = arith.addf %753, %756 : vector<8x128xf32>
    %758 = arith.addf %583, %757 : vector<8x128xf32>
    %c2_500 = arith.constant 2 : index
    %c0_501 = arith.constant 0 : index
    %c0_502 = arith.constant 0 : index
    %759 = vector.load %arg22[%c2_500, %c0_501, %c0_502] : memref<3x1x128xf32, #tpu.memory_space<vmem>>, vector<1x1x128xf32>
    %760 = vector.shape_cast %759 : vector<1x1x128xf32> to vector<1x128xf32>
    %c2_503 = arith.constant 2 : index
    %c0_504 = arith.constant 0 : index
    %c0_505 = arith.constant 0 : index
    %761 = vector.load %arg23[%c2_503, %c0_504, %c0_505] : memref<3x1x128xf32, #tpu.memory_space<vmem>>, vector<1x1x128xf32>
    %762 = vector.shape_cast %761 : vector<1x1x128xf32> to vector<1x128xf32>
    %cst_506 = arith.constant dense<0.000000e+00> : vector<8xf32>
    %763 = vector.multi_reduction <add>, %758, %cst_506 [1] : vector<8x128xf32> to vector<8xf32>
    %764 = vector.shape_cast %763 : vector<8xf32> to vector<8x1xf32>
    %cst_507 = arith.constant 1.280000e+02 : f32
    %765 = vector.broadcast %cst_507 : f32 to vector<8x1xf32>
    %766 = arith.divf %764, %765 : vector<8x1xf32>
    %767 = vector.broadcast %766 : vector<8x1xf32> to vector<8x128xf32>
    %768 = arith.subf %758, %767 : vector<8x128xf32>
    %769 = arith.mulf %768, %768 : vector<8x128xf32>
    %cst_508 = arith.constant dense<0.000000e+00> : vector<8xf32>
    %770 = vector.multi_reduction <add>, %769, %cst_508 [1] : vector<8x128xf32> to vector<8xf32>
    %771 = vector.shape_cast %770 : vector<8xf32> to vector<8x1xf32>
    %cst_509 = arith.constant 1.280000e+02 : f32
    %772 = vector.broadcast %cst_509 : f32 to vector<8x1xf32>
    %773 = arith.divf %771, %772 : vector<8x1xf32>
    %cst_510 = arith.constant 9.99999974E-6 : f32
    %774 = vector.broadcast %cst_510 : f32 to vector<8x1xf32>
    %775 = arith.addf %773, %774 : vector<8x1xf32>
    %776 = math.rsqrt %775 : vector<8x1xf32>
    %777 = vector.broadcast %776 : vector<8x1xf32> to vector<8x128xf32>
    %778 = arith.mulf %768, %777 : vector<8x128xf32>
    %779 = vector.broadcast %760 : vector<1x128xf32> to vector<8x128xf32>
    %780 = arith.mulf %778, %779 : vector<8x128xf32>
    %781 = vector.broadcast %762 : vector<1x128xf32> to vector<8x128xf32>
    %782 = arith.addf %780, %781 : vector<8x128xf32>
    %c2_511 = arith.constant 2 : index
    %c0_512 = arith.constant 0 : index
    %c0_513 = arith.constant 0 : index
    %783 = vector.load %arg14[%c2_511, %c0_512, %c0_513] : memref<3x128x128xbf16, #tpu.memory_space<vmem>>, vector<1x128x128xbf16>
    %784 = vector.shape_cast %783 : vector<1x128x128xbf16> to vector<128x128xbf16>
    %cst_514 = arith.constant dense<0.000000e+00> : vector<1x128xf32>
    %785 = tpu.matmul %18, %784, %cst_514 {dimension_numbers = #tpu.dot_dimension_numbers<[1], [0], [0], [1], [0, 0, 1, 1], [], []>} : vector<1x128xbf16>, vector<128x128xbf16>, vector<1x128xf32> -> vector<1x128xf32>
    %c2_515 = arith.constant 2 : index
    %c0_516 = arith.constant 0 : index
    %c0_517 = arith.constant 0 : index
    %786 = vector.load %arg15[%c2_515, %c0_516, %c0_517] : memref<3x1x128xf32, #tpu.memory_space<vmem>>, vector<1x1x128xf32>
    %787 = vector.shape_cast %786 : vector<1x1x128xf32> to vector<1x128xf32>
    %788 = arith.addf %785, %787 : vector<1x128xf32>
    %789 = arith.truncf %788 : vector<1x128xf32> to vector<1x128xbf16>
    %c2_518 = arith.constant 2 : index
    %c0_519 = arith.constant 0 : index
    %c0_520 = arith.constant 0 : index
    %790 = vector.load %arg16[%c2_518, %c0_519, %c0_520] : memref<3x128x128xbf16, #tpu.memory_space<vmem>>, vector<1x128x128xbf16>
    %791 = vector.shape_cast %790 : vector<1x128x128xbf16> to vector<128x128xbf16>
    %cst_521 = arith.constant dense<0.000000e+00> : vector<1x128xf32>
    %792 = tpu.matmul %789, %791, %cst_521 {dimension_numbers = #tpu.dot_dimension_numbers<[1], [0], [0], [1], [0, 0, 1, 1], [], []>} : vector<1x128xbf16>, vector<128x128xbf16>, vector<1x128xf32> -> vector<1x128xf32>
    %c2_522 = arith.constant 2 : index
    %c0_523 = arith.constant 0 : index
    %c0_524 = arith.constant 0 : index
    %793 = vector.load %arg17[%c2_522, %c0_523, %c0_524] : memref<3x1x128xf32, #tpu.memory_space<vmem>>, vector<1x1x128xf32>
    %794 = vector.shape_cast %793 : vector<1x1x128xf32> to vector<1x128xf32>
    %795 = arith.addf %792, %794 : vector<1x128xf32>
    %796 = vector.broadcast %795 : vector<1x128xf32> to vector<8x128xf32>
    %797 = arith.addf %782, %796 : vector<8x128xf32>
    %c2_525 = arith.constant 2 : index
    %c0_526 = arith.constant 0 : index
    %c0_527 = arith.constant 0 : index
    %798 = vector.load %arg24[%c2_525, %c0_526, %c0_527] : memref<3x1x128xf32, #tpu.memory_space<vmem>>, vector<1x1x128xf32>
    %799 = vector.shape_cast %798 : vector<1x1x128xf32> to vector<1x128xf32>
    %c2_528 = arith.constant 2 : index
    %c0_529 = arith.constant 0 : index
    %c0_530 = arith.constant 0 : index
    %800 = vector.load %arg25[%c2_528, %c0_529, %c0_530] : memref<3x1x128xf32, #tpu.memory_space<vmem>>, vector<1x1x128xf32>
    %801 = vector.shape_cast %800 : vector<1x1x128xf32> to vector<1x128xf32>
    %cst_531 = arith.constant dense<0.000000e+00> : vector<8xf32>
    %802 = vector.multi_reduction <add>, %797, %cst_531 [1] : vector<8x128xf32> to vector<8xf32>
    %803 = vector.shape_cast %802 : vector<8xf32> to vector<8x1xf32>
    %cst_532 = arith.constant 1.280000e+02 : f32
    %804 = vector.broadcast %cst_532 : f32 to vector<8x1xf32>
    %805 = arith.divf %803, %804 : vector<8x1xf32>
    %806 = vector.broadcast %805 : vector<8x1xf32> to vector<8x128xf32>
    %807 = arith.subf %797, %806 : vector<8x128xf32>
    %808 = arith.mulf %807, %807 : vector<8x128xf32>
    %cst_533 = arith.constant dense<0.000000e+00> : vector<8xf32>
    %809 = vector.multi_reduction <add>, %808, %cst_533 [1] : vector<8x128xf32> to vector<8xf32>
    %810 = vector.shape_cast %809 : vector<8xf32> to vector<8x1xf32>
    %cst_534 = arith.constant 1.280000e+02 : f32
    %811 = vector.broadcast %cst_534 : f32 to vector<8x1xf32>
    %812 = arith.divf %810, %811 : vector<8x1xf32>
    %cst_535 = arith.constant 9.99999974E-6 : f32
    %813 = vector.broadcast %cst_535 : f32 to vector<8x1xf32>
    %814 = arith.addf %812, %813 : vector<8x1xf32>
    %815 = math.rsqrt %814 : vector<8x1xf32>
    %816 = vector.broadcast %815 : vector<8x1xf32> to vector<8x128xf32>
    %817 = arith.mulf %807, %816 : vector<8x128xf32>
    %818 = vector.broadcast %799 : vector<1x128xf32> to vector<8x128xf32>
    %819 = arith.mulf %817, %818 : vector<8x128xf32>
    %820 = vector.broadcast %801 : vector<1x128xf32> to vector<8x128xf32>
    %821 = arith.addf %819, %820 : vector<8x128xf32>
    %822 = arith.truncf %821 : vector<8x128xf32> to vector<8x128xbf16>
    %c2_536 = arith.constant 2 : index
    %c0_537 = arith.constant 0 : index
    %c0_538 = arith.constant 0 : index
    %823 = vector.load %arg18[%c2_536, %c0_537, %c0_538] : memref<3x128x512xbf16, #tpu.memory_space<vmem>>, vector<1x128x512xbf16>
    %824 = vector.shape_cast %823 : vector<1x128x512xbf16> to vector<128x512xbf16>
    %cst_539 = arith.constant dense<0.000000e+00> : vector<8x512xf32>
    %825 = tpu.matmul %822, %824, %cst_539 {dimension_numbers = #tpu.dot_dimension_numbers<[1], [0], [0], [1], [0, 0, 1, 1], [], []>} : vector<8x128xbf16>, vector<128x512xbf16>, vector<8x512xf32> -> vector<8x512xf32>
    %c2_540 = arith.constant 2 : index
    %c0_541 = arith.constant 0 : index
    %c0_542 = arith.constant 0 : index
    %826 = vector.load %arg19[%c2_540, %c0_541, %c0_542] : memref<3x1x512xf32, #tpu.memory_space<vmem>>, vector<1x1x512xf32>
    %827 = vector.shape_cast %826 : vector<1x1x512xf32> to vector<1x512xf32>
    %828 = vector.broadcast %827 : vector<1x512xf32> to vector<8x512xf32>
    %829 = arith.addf %825, %828 : vector<8x512xf32>
    %cst_543 = arith.constant 0.000000e+00 : f32
    %830 = vector.broadcast %cst_543 : f32 to vector<8x512xf32>
    %831 = arith.maximumf %829, %830 : vector<8x512xf32>
    %832 = arith.truncf %831 : vector<8x512xf32> to vector<8x512xbf16>
    %c2_544 = arith.constant 2 : index
    %c0_545 = arith.constant 0 : index
    %c0_546 = arith.constant 0 : index
    %833 = vector.load %arg20[%c2_544, %c0_545, %c0_546] : memref<3x512x128xbf16, #tpu.memory_space<vmem>>, vector<1x512x128xbf16>
    %834 = vector.shape_cast %833 : vector<1x512x128xbf16> to vector<512x128xbf16>
    %cst_547 = arith.constant dense<0.000000e+00> : vector<8x128xf32>
    %835 = tpu.matmul %832, %834, %cst_547 {dimension_numbers = #tpu.dot_dimension_numbers<[1], [0], [0], [1], [0, 0, 1, 1], [], []>} : vector<8x512xbf16>, vector<512x128xbf16>, vector<8x128xf32> -> vector<8x128xf32>
    %c2_548 = arith.constant 2 : index
    %c0_549 = arith.constant 0 : index
    %c0_550 = arith.constant 0 : index
    %836 = vector.load %arg21[%c2_548, %c0_549, %c0_550] : memref<3x1x128xf32, #tpu.memory_space<vmem>>, vector<1x1x128xf32>
    %837 = vector.shape_cast %836 : vector<1x1x128xf32> to vector<1x128xf32>
    %838 = vector.broadcast %837 : vector<1x128xf32> to vector<8x128xf32>
    %839 = arith.addf %835, %838 : vector<8x128xf32>
    %840 = arith.addf %821, %839 : vector<8x128xf32>
    %c2_551 = arith.constant 2 : index
    %c0_552 = arith.constant 0 : index
    %c0_553 = arith.constant 0 : index
    %841 = vector.load %arg26[%c2_551, %c0_552, %c0_553] : memref<3x1x128xf32, #tpu.memory_space<vmem>>, vector<1x1x128xf32>
    %842 = vector.shape_cast %841 : vector<1x1x128xf32> to vector<1x128xf32>
    %c2_554 = arith.constant 2 : index
    %c0_555 = arith.constant 0 : index
    %c0_556 = arith.constant 0 : index
    %843 = vector.load %arg27[%c2_554, %c0_555, %c0_556] : memref<3x1x128xf32, #tpu.memory_space<vmem>>, vector<1x1x128xf32>
    %844 = vector.shape_cast %843 : vector<1x1x128xf32> to vector<1x128xf32>
    %cst_557 = arith.constant dense<0.000000e+00> : vector<8xf32>
    %845 = vector.multi_reduction <add>, %840, %cst_557 [1] : vector<8x128xf32> to vector<8xf32>
    %846 = vector.shape_cast %845 : vector<8xf32> to vector<8x1xf32>
    %cst_558 = arith.constant 1.280000e+02 : f32
    %847 = vector.broadcast %cst_558 : f32 to vector<8x1xf32>
    %848 = arith.divf %846, %847 : vector<8x1xf32>
    %849 = vector.broadcast %848 : vector<8x1xf32> to vector<8x128xf32>
    %850 = arith.subf %840, %849 : vector<8x128xf32>
    %851 = arith.mulf %850, %850 : vector<8x128xf32>
    %cst_559 = arith.constant dense<0.000000e+00> : vector<8xf32>
    %852 = vector.multi_reduction <add>, %851, %cst_559 [1] : vector<8x128xf32> to vector<8xf32>
    %853 = vector.shape_cast %852 : vector<8xf32> to vector<8x1xf32>
    %cst_560 = arith.constant 1.280000e+02 : f32
    %854 = vector.broadcast %cst_560 : f32 to vector<8x1xf32>
    %855 = arith.divf %853, %854 : vector<8x1xf32>
    %cst_561 = arith.constant 9.99999974E-6 : f32
    %856 = vector.broadcast %cst_561 : f32 to vector<8x1xf32>
    %857 = arith.addf %855, %856 : vector<8x1xf32>
    %858 = math.rsqrt %857 : vector<8x1xf32>
    %859 = vector.broadcast %858 : vector<8x1xf32> to vector<8x128xf32>
    %860 = arith.mulf %850, %859 : vector<8x128xf32>
    %861 = vector.broadcast %842 : vector<1x128xf32> to vector<8x128xf32>
    %862 = arith.mulf %860, %861 : vector<8x128xf32>
    %863 = vector.broadcast %844 : vector<1x128xf32> to vector<8x128xf32>
    %864 = arith.addf %862, %863 : vector<8x128xf32>
    %865 = arith.truncf %864 : vector<8x128xf32> to vector<8x128xbf16>
    %c0_562 = arith.constant 0 : index
    %c0_563 = arith.constant 0 : index
    %866 = vector.load %arg28[%c0_562, %c0_563] : memref<128x128xbf16, #tpu.memory_space<vmem>>, vector<128x128xbf16>
    %cst_564 = arith.constant dense<0.000000e+00> : vector<8x128xf32>
    %867 = tpu.matmul %865, %866, %cst_564 {dimension_numbers = #tpu.dot_dimension_numbers<[1], [0], [0], [1], [0, 0, 1, 1], [], []>} : vector<8x128xbf16>, vector<128x128xbf16>, vector<8x128xf32> -> vector<8x128xf32>
    %c0_565 = arith.constant 0 : index
    %c0_566 = arith.constant 0 : index
    %868 = vector.load %arg29[%c0_565, %c0_566] : memref<1x128xf32, #tpu.memory_space<vmem>>, vector<1x128xf32>
    %869 = vector.broadcast %868 : vector<1x128xf32> to vector<8x128xf32>
    %870 = arith.addf %867, %869 : vector<8x128xf32>
    %c0_567 = arith.constant 0 : index
    %c0_568 = arith.constant 0 : index
    %871 = vector.load %arg30[%c0_567, %c0_568] : memref<8x128xf32, #tpu.memory_space<vmem>>, vector<8x128xf32>
    tpu.vector_store %arg30[%c0_567, %c0_568], %870 {strides = array<i32>} : memref<8x128xf32, #tpu.memory_space<vmem>>, vector<8x128xf32>,
    return
  }
  func.func @transform_0(%arg0: i32) -> (i32, i32, i32) {
    %c0_i32 = arith.constant 0 : i32
    %c0_i32_0 = arith.constant 0 : i32
    %c0_i32_1 = arith.constant 0 : i32
    return %arg0, %c0_i32, %c0_i32_0 : i32, i32, i32
  }
  func.func @transform_1(%arg0: i32) -> (i32, i32) {
    %c0_i32 = arith.constant 0 : i32
    %c0_i32_0 = arith.constant 0 : i32
    return %arg0, %c0_i32 : i32, i32
  }
  func.func @transform_2(%arg0: i32) -> (i32, i32, i32) {
    %c0_i32 = arith.constant 0 : i32
    %c0_i32_0 = arith.constant 0 : i32
    %c0_i32_1 = arith.constant 0 : i32
    return %arg0, %c0_i32, %c0_i32_0 : i32, i32, i32
  }
  func.func @transform_3(%arg0: i32) -> (i32, i32) {
    %c0_i32 = arith.constant 0 : i32
    %c0_i32_0 = arith.constant 0 : i32
    %c0_i32_1 = arith.constant 0 : i32
    return %c0_i32, %c0_i32_0 : i32, i32
  }
  func.func @transform_4(%arg0: i32) -> (i32, i32) {
    %c0_i32 = arith.constant 0 : i32
    %c0_i32_0 = arith.constant 0 : i32
    %c0_i32_1 = arith.constant 0 : i32
    return %c0_i32, %c0_i32_0 : i32, i32
  }
  func.func @transform_5(%arg0: i32) -> (i32, i32, i32) {
    %c0_i32 = arith.constant 0 : i32
    %c0_i32_0 = arith.constant 0 : i32
    %c0_i32_1 = arith.constant 0 : i32
    %c0_i32_2 = arith.constant 0 : i32
    return %c0_i32, %c0_i32_0, %c0_i32_1 : i32, i32, i32
  }
  func.func @transform_6(%arg0: i32) -> (i32, i32, i32) {
    %c0_i32 = arith.constant 0 : i32
    %c0_i32_0 = arith.constant 0 : i32
    %c0_i32_1 = arith.constant 0 : i32
    %c0_i32_2 = arith.constant 0 : i32
    return %c0_i32, %c0_i32_0, %c0_i32_1 : i32, i32, i32
  }
  func.func @transform_7(%arg0: i32) -> (i32, i32, i32) {
    %c0_i32 = arith.constant 0 : i32
    %c0_i32_0 = arith.constant 0 : i32
    %c0_i32_1 = arith.constant 0 : i32
    %c0_i32_2 = arith.constant 0 : i32
    return %c0_i32, %c0_i32_0, %c0_i32_1 : i32, i32, i32
  }
  func.func @transform_8(%arg0: i32) -> (i32, i32, i32) {
    %c0_i32 = arith.constant 0 : i32
    %c0_i32_0 = arith.constant 0 : i32
    %c0_i32_1 = arith.constant 0 : i32
    %c0_i32_2 = arith.constant 0 : i32
    return %c0_i32, %c0_i32_0, %c0_i32_1 : i32, i32, i32
  }
  func.func @transform_9(%arg0: i32) -> (i32, i32, i32) {
    %c0_i32 = arith.constant 0 : i32
    %c0_i32_0 = arith.constant 0 : i32
    %c0_i32_1 = arith.constant 0 : i32
    %c0_i32_2 = arith.constant 0 : i32
    return %c0_i32, %c0_i32_0, %c0_i32_1 : i32, i32, i32
  }
  func.func @transform_10(%arg0: i32) -> (i32, i32, i32) {
    %c0_i32 = arith.constant 0 : i32
    %c0_i32_0 = arith.constant 0 : i32
    %c0_i32_1 = arith.constant 0 : i32
    %c0_i32_2 = arith.constant 0 : i32
    return %c0_i32, %c0_i32_0, %c0_i32_1 : i32, i32, i32
  }
  func.func @transform_11(%arg0: i32) -> (i32, i32, i32) {
    %c0_i32 = arith.constant 0 : i32
    %c0_i32_0 = arith.constant 0 : i32
    %c0_i32_1 = arith.constant 0 : i32
    %c0_i32_2 = arith.constant 0 : i32
    return %c0_i32, %c0_i32_0, %c0_i32_1 : i32, i32, i32
  }
  func.func @transform_12(%arg0: i32) -> (i32, i32, i32) {
    %c0_i32 = arith.constant 0 : i32
    %c0_i32_0 = arith.constant 0 : i32
    %c0_i32_1 = arith.constant 0 : i32
    %c0_i32_2 = arith.constant 0 : i32
    return %c0_i32, %c0_i32_0, %c0_i32_1 : i32, i32, i32
  }
  func.func @transform_13(%arg0: i32) -> (i32, i32, i32) {
    %c0_i32 = arith.constant 0 : i32
    %c0_i32_0 = arith.constant 0 : i32
    %c0_i32_1 = arith.constant 0 : i32
    %c0_i32_2 = arith.constant 0 : i32
    return %c0_i32, %c0_i32_0, %c0_i32_1 : i32, i32, i32
  }
  func.func @transform_14(%arg0: i32) -> (i32, i32, i32) {
    %c0_i32 = arith.constant 0 : i32
    %c0_i32_0 = arith.constant 0 : i32
    %c0_i32_1 = arith.constant 0 : i32
    %c0_i32_2 = arith.constant 0 : i32
    return %c0_i32, %c0_i32_0, %c0_i32_1 : i32, i32, i32
  }
  func.func @transform_15(%arg0: i32) -> (i32, i32, i32) {
    %c0_i32 = arith.constant 0 : i32
    %c0_i32_0 = arith.constant 0 : i32
    %c0_i32_1 = arith.constant 0 : i32
    %c0_i32_2 = arith.constant 0 : i32
    return %c0_i32, %c0_i32_0, %c0_i32_1 : i32, i32, i32
  }
  func.func @transform_16(%arg0: i32) -> (i32, i32, i32) {
    %c0_i32 = arith.constant 0 : i32
    %c0_i32_0 = arith.constant 0 : i32
    %c0_i32_1 = arith.constant 0 : i32
    %c0_i32_2 = arith.constant 0 : i32
    return %c0_i32, %c0_i32_0, %c0_i32_1 : i32, i32, i32
  }
  func.func @transform_17(%arg0: i32) -> (i32, i32, i32) {
    %c0_i32 = arith.constant 0 : i32
    %c0_i32_0 = arith.constant 0 : i32
    %c0_i32_1 = arith.constant 0 : i32
    %c0_i32_2 = arith.constant 0 : i32
    return %c0_i32, %c0_i32_0, %c0_i32_1 : i32, i32, i32
  }
  func.func @transform_18(%arg0: i32) -> (i32, i32, i32) {
    %c0_i32 = arith.constant 0 : i32
    %c0_i32_0 = arith.constant 0 : i32
    %c0_i32_1 = arith.constant 0 : i32
    %c0_i32_2 = arith.constant 0 : i32
    return %c0_i32, %c0_i32_0, %c0_i32_1 : i32, i32, i32
  }
  func.func @transform_19(%arg0: i32) -> (i32, i32, i32) {
    %c0_i32 = arith.constant 0 : i32
    %c0_i32_0 = arith.constant 0 : i32
    %c0_i32_1 = arith.constant 0 : i32
    %c0_i32_2 = arith.constant 0 : i32
    return %c0_i32, %c0_i32_0, %c0_i32_1 : i32, i32, i32
  }
  func.func @transform_20(%arg0: i32) -> (i32, i32, i32) {
    %c0_i32 = arith.constant 0 : i32
    %c0_i32_0 = arith.constant 0 : i32
    %c0_i32_1 = arith.constant 0 : i32
    %c0_i32_2 = arith.constant 0 : i32
    return %c0_i32, %c0_i32_0, %c0_i32_1 : i32, i32, i32
  }
  func.func @transform_21(%arg0: i32) -> (i32, i32, i32) {
    %c0_i32 = arith.constant 0 : i32
    %c0_i32_0 = arith.constant 0 : i32
    %c0_i32_1 = arith.constant 0 : i32
    %c0_i32_2 = arith.constant 0 : i32
    return %c0_i32, %c0_i32_0, %c0_i32_1 : i32, i32, i32
  }
  func.func @transform_22(%arg0: i32) -> (i32, i32, i32) {
    %c0_i32 = arith.constant 0 : i32
    %c0_i32_0 = arith.constant 0 : i32
    %c0_i32_1 = arith.constant 0 : i32
    %c0_i32_2 = arith.constant 0 : i32
    return %c0_i32, %c0_i32_0, %c0_i32_1 : i32, i32, i32
  }
  func.func @transform_23(%arg0: i32) -> (i32, i32, i32) {
    %c0_i32 = arith.constant 0 : i32
    %c0_i32_0 = arith.constant 0 : i32
    %c0_i32_1 = arith.constant 0 : i32
    %c0_i32_2 = arith.constant 0 : i32
    return %c0_i32, %c0_i32_0, %c0_i32_1 : i32, i32, i32
  }
  func.func @transform_24(%arg0: i32) -> (i32, i32, i32) {
    %c0_i32 = arith.constant 0 : i32
    %c0_i32_0 = arith.constant 0 : i32
    %c0_i32_1 = arith.constant 0 : i32
    %c0_i32_2 = arith.constant 0 : i32
    return %c0_i32, %c0_i32_0, %c0_i32_1 : i32, i32, i32
  }
  func.func @transform_25(%arg0: i32) -> (i32, i32, i32) {
    %c0_i32 = arith.constant 0 : i32
    %c0_i32_0 = arith.constant 0 : i32
    %c0_i32_1 = arith.constant 0 : i32
    %c0_i32_2 = arith.constant 0 : i32
    return %c0_i32, %c0_i32_0, %c0_i32_1 : i32, i32, i32
  }
  func.func @transform_26(%arg0: i32) -> (i32, i32, i32) {
    %c0_i32 = arith.constant 0 : i32
    %c0_i32_0 = arith.constant 0 : i32
    %c0_i32_1 = arith.constant 0 : i32
    %c0_i32_2 = arith.constant 0 : i32
    return %c0_i32, %c0_i32_0, %c0_i32_1 : i32, i32, i32
  }
  func.func @transform_27(%arg0: i32) -> (i32, i32) {
    %c0_i32 = arith.constant 0 : i32
    %c0_i32_0 = arith.constant 0 : i32
    %c0_i32_1 = arith.constant 0 : i32
    return %c0_i32, %c0_i32_0 : i32, i32
  }
  func.func @transform_28(%arg0: i32) -> (i32, i32) {
    %c0_i32 = arith.constant 0 : i32
    %c0_i32_0 = arith.constant 0 : i32
    %c0_i32_1 = arith.constant 0 : i32
    return %c0_i32, %c0_i32_0 : i32, i32
  }
  func.func @transform_29(%arg0: i32) -> (i32, i32) {
    %c0_i32 = arith.constant 0 : i32
    %c0_i32_0 = arith.constant 0 : i32
    return %arg0, %c0_i32 : i32, i32
  }
}

</mosaic_0001>

<llo_original>
// kernel: encoder_decoder_forward.1
$region0: #{encoder_decoder_forward.1}
  #allocation0 [shape = 'u32[]', space=smem, size = 0x4, offset = 0x4, fixed_abs, tag = 'smem constant byte address 0x4 - core index']
  #allocation1 [shape = 'u32[72,128]{1,0:T(1,128)}', space=vmem, size = 0x9000, scoped, tag = 'internal scratch']
  %s0 = inlined_call_operand.smem [shape: u32[30], index: -1, kind: input, shape index: {}]
  %s1 = sld [smem:[%s0]]
  %s2 = scalar_lea.smem %s0, 1
  %s3 = sld [smem:[%s2]]
  %s4 = scalar_lea.smem %s0, 2
  %s5 = sld [smem:[%s4]]
  %s6 = scalar_lea.smem %s0, 3
  %s7 = sld [smem:[%s6]]
  %s8 = scalar_lea.smem %s0, 4
  %s9 = sld [smem:[%s8]]
  %s10 = scalar_lea.smem %s0, 5
  %s11 = sld [smem:[%s10]]
  %s12 = scalar_lea.smem %s0, 6
  %s13 = sld [smem:[%s12]]
  %s14 = scalar_lea.smem %s0, 7
  %s15 = sld [smem:[%s14]]
  %s16 = scalar_lea.smem %s0, 8
  %s17 = sld [smem:[%s16]]
  %s18 = scalar_lea.smem %s0, 9
  %s19 = sld [smem:[%s18]]
  %s20 = scalar_lea.smem %s0, 10
  %s21 = sld [smem:[%s20]]
  %s22 = scalar_lea.smem %s0, 11
  %s23 = sld [smem:[%s22]]
  %s24 = scalar_lea.smem %s0, 12
  %s25 = sld [smem:[%s24]]
  %s26 = scalar_lea.smem %s0, 13
  %s27 = sld [smem:[%s26]]
  %s28 = scalar_lea.smem %s0, 14
  %s29 = sld [smem:[%s28]]
  %s30 = scalar_lea.smem %s0, 15
  %s31 = sld [smem:[%s30]]
  %s32 = scalar_lea.smem %s0, 16
  %s33 = sld [smem:[%s32]]
  %s34 = scalar_lea.smem %s0, 17
  %s35 = sld [smem:[%s34]]
  %s36 = scalar_lea.smem %s0, 18
  %s37 = sld [smem:[%s36]]
  %s38 = scalar_lea.smem %s0, 19
  %s39 = sld [smem:[%s38]]
  %s40 = scalar_lea.smem %s0, 20
  %s41 = sld [smem:[%s40]]
  %s42 = scalar_lea.smem %s0, 21
  %s43 = sld [smem:[%s42]]
  %s44 = scalar_lea.smem %s0, 22
  %s45 = sld [smem:[%s44]]
  %s46 = scalar_lea.smem %s0, 23
  %s47 = sld [smem:[%s46]]
  %s48 = scalar_lea.smem %s0, 24
  %s49 = sld [smem:[%s48]]
  %s50 = scalar_lea.smem %s0, 25
  %s51 = sld [smem:[%s50]]
  %s52 = scalar_lea.smem %s0, 26
  %s53 = sld [smem:[%s52]]
  %s54 = scalar_lea.smem %s0, 27
  %s55 = sld [smem:[%s54]]
  %s56 = scalar_lea.smem %s0, 28
  %s57 = sld [smem:[%s56]]
  %s58 = scalar_lea.smem %s0, 29
  %s59 = sld [smem:[%s58]]
  %s60 = sld [smem:[#allocation0]]
  $region149: #{encoder_decoder_forward.1} parent=0
    _
  %s62 = ssub.s32 1, %s60
  %s63 = scalar_select 0, %s62, %s60
  loop: start=0, step=1, limit=4
  $region2: #{encoder_decoder_forward.1} parent=0 // loop_pre_header
    _
  $region3: #{encoder_decoder_forward.1} parent=0 // loop_header
    %s65 = sphi 0, %s69
    %p66 = scmp.ge.s32.totalorder %s65, 4
    %s75 = sphi 0, %s77
    %s78 = sphi 0, %s75
    %s79 = sphi 0, %s78
    %s95 = sphi 0, %s79
    %s101 = sphi 0, %s103
    %s104 = sphi 0, %s101
    %s105 = sphi 0, %s104
    %s121 = sphi 0, %s105
    %s127 = sphi 0, %s129
    %s130 = sphi 0, %s127
    %s131 = sphi 0, %s130
    %s147 = sphi 0, %s131
    %s151 = sphi 0, %s151
    %s153 = sphi 0, %s151
    %s154 = sphi 0, %s153
    %s168 = sphi 0, %s154
    %s172 = sphi 0, %s172
    %s174 = sphi 0, %s172
    %s175 = sphi 0, %s174
    %s189 = sphi 0, %s175
    %s193 = sphi 0, %s193
    %s195 = sphi 0, %s193
    %s196 = sphi 0, %s195
    %s210 = sphi 0, %s196
    %s214 = sphi 0, %s214
    %s216 = sphi 0, %s214
    %s217 = sphi 0, %s216
    %s231 = sphi 0, %s217
    %s235 = sphi 0, %s235
    %s237 = sphi 0, %s235
    %s238 = sphi 0, %s237
    %s252 = sphi 0, %s238
    %s256 = sphi 0, %s256
    %s258 = sphi 0, %s256
    %s259 = sphi 0, %s258
    %s273 = sphi 0, %s259
    %s277 = sphi 0, %s277
    %s279 = sphi 0, %s277
    %s280 = sphi 0, %s279
    %s294 = sphi 0, %s280
    %s298 = sphi 0, %s298
    %s300 = sphi 0, %s298
    %s301 = sphi 0, %s300
    %s315 = sphi 0, %s301
    %s319 = sphi 0, %s319
    %s321 = sphi 0, %s319
    %s322 = sphi 0, %s321
    %s336 = sphi 0, %s322
    %s340 = sphi 0, %s340
    %s342 = sphi 0, %s340
    %s343 = sphi 0, %s342
    %s357 = sphi 0, %s343
    %s361 = sphi 0, %s361
    %s363 = sphi 0, %s361
    %s364 = sphi 0, %s363
    %s378 = sphi 0, %s364
    %s382 = sphi 0, %s382
    %s384 = sphi 0, %s382
    %s385 = sphi 0, %s384
    %s399 = sphi 0, %s385
    %s403 = sphi 0, %s403
    %s405 = sphi 0, %s403
    %s406 = sphi 0, %s405
    %s420 = sphi 0, %s406
    %s424 = sphi 0, %s424
    %s426 = sphi 0, %s424
    %s427 = sphi 0, %s426
    %s441 = sphi 0, %s427
    %s445 = sphi 0, %s445
    %s447 = sphi 0, %s445
    %s448 = sphi 0, %s447
    %s462 = sphi 0, %s448
    %s466 = sphi 0, %s466
    %s468 = sphi 0, %s466
    %s469 = sphi 0, %s468
    %s483 = sphi 0, %s469
    %s487 = sphi 0, %s487
    %s489 = sphi 0, %s487
    %s490 = sphi 0, %s489
    %s504 = sphi 0, %s490
    %s508 = sphi 0, %s508
    %s510 = sphi 0, %s508
    %s511 = sphi 0, %s510
    %s525 = sphi 0, %s511
    %s529 = sphi 0, %s529
    %s531 = sphi 0, %s529
    %s532 = sphi 0, %s531
    %s546 = sphi 0, %s532
    %s550 = sphi 0, %s550
    %s552 = sphi 0, %s550
    %s553 = sphi 0, %s552
    %s567 = sphi 0, %s553
    %s571 = sphi 0, %s571
    %s573 = sphi 0, %s571
    %s574 = sphi 0, %s573
    %s588 = sphi 0, %s574
    %s592 = sphi 0, %s592
    %s594 = sphi 0, %s592
    %s595 = sphi 0, %s594
    %s609 = sphi 0, %s595
    %s613 = sphi 0, %s613
    %s615 = sphi 0, %s613
    %s616 = sphi 0, %s615
    %s630 = sphi 0, %s616
    %s634 = sphi 0, %s634
    %s636 = sphi 0, %s634
    %s637 = sphi 0, %s636
    %s651 = sphi 0, %s637
    %s655 = sphi 0, %s655
    %s657 = sphi 0, %s655
    %s658 = sphi 0, %s657
    %s672 = sphi 0, %s658
    %s676 = sphi 0, %s676
    %s678 = sphi 0, %s676
    %s679 = sphi 0, %s678
    %s693 = sphi 0, %s679
    %s699 = sphi 0, %s701
    %s702 = sphi 0, %s699
    %s703 = sphi 0, %s702
    %s719 = sphi 0, %s703
  $region4: #{encoder_decoder_forward.1} parent=0 // loop_header_branch
    %68 = sbr.rel (%p66) target = $region8
  $region5: #{encoder_decoder_forward.1} parent=0 // loop_body
    %s70 = ssub.s32 %s65, 1
    %s71 = ssub.s32 %s65, 2
    %s72 = sadd.s32 %s65, 1
    %s73 = ssub.s32 %s65, %s72
    %p74 = scmp.eq.s32.totalorder %s73, 0
    %s76 = sadd.s32 %s75, 1
    %s77 = scalar_select %p74, %s75, %s76
    %p80 = pneg %p74
    %p81 = scmp.eq.s32.totalorder %s65, 1
    %p82 = por %p80, %p81
    %p83 = scmp.ne.s32.totalorder %s75, %s78
    %p84 = scmp.eq.s32.totalorder %s65, 0
    %p85 = por %p83, %p84
    %p86 = scmp.ne.s32.totalorder %s75, %s78
    %p87 = scmp.eq.s32.totalorder %s70, 1
    %p88 = por %p86, %p87
    %p89 = scmp.ne.s32.totalorder %s78, %s79
    %p90 = scmp.eq.s32.totalorder %s70, 0
    %p91 = por %p89, %p90
    %p92 = scmp.ne.s32.totalorder %s78, %s79
    %p93 = scmp.eq.s32.totalorder %s71, 1
    %p94 = por %p92, %p93
    %p96 = scmp.ne.s32.totalorder %s79, %s95
    %p97 = scmp.eq.s32.totalorder %s71, 0
    %p98 = por %p96, %p97
    %s99 = ssub.s32 %s65, %s72
    %p100 = scmp.eq.s32.totalorder %s99, 0
    %s102 = sadd.s32 %s101, 1
    %s103 = scalar_select %p100, %s101, %s102
    %p106 = pneg %p100
    %p107 = scmp.eq.s32.totalorder %s65, 1
    %p108 = por %p106, %p107
    %p109 = scmp.ne.s32.totalorder %s101, %s104
    %p110 = scmp.eq.s32.totalorder %s65, 0
    %p111 = por %p109, %p110
    %p112 = scmp.ne.s32.totalorder %s101, %s104
    %p113 = scmp.eq.s32.totalorder %s70, 1
    %p114 = por %p112, %p113
    %p115 = scmp.ne.s32.totalorder %s104, %s105
    %p116 = scmp.eq.s32.totalorder %s70, 0
    %p117 = por %p115, %p116
    %p118 = scmp.ne.s32.totalorder %s104, %s105
    %p119 = scmp.eq.s32.totalorder %s71, 1
    %p120 = por %p118, %p119
    %p122 = scmp.ne.s32.totalorder %s105, %s121
    %p123 = scmp.eq.s32.totalorder %s71, 0
    %p124 = por %p122, %p123
    %s125 = ssub.s32 %s65, %s72
    %p126 = scmp.eq.s32.totalorder %s125, 0
    %s128 = sadd.s32 %s127, 1
    %s129 = scalar_select %p126, %s127, %s128
    %p132 = pneg %p126
    %p133 = scmp.eq.s32.totalorder %s65, 1
    %p134 = por %p132, %p133
    %p135 = scmp.ne.s32.totalorder %s127, %s130
    %p136 = scmp.eq.s32.totalorder %s65, 0
    %p137 = por %p135, %p136
    %p138 = scmp.ne.s32.totalorder %s127, %s130
    %p139 = scmp.eq.s32.totalorder %s70, 1
    %p140 = por %p138, %p139
    %p141 = scmp.ne.s32.totalorder %s130, %s131
    %p142 = scmp.eq.s32.totalorder %s70, 0
    %p143 = por %p141, %p142
    %p144 = scmp.ne.s32.totalorder %s130, %s131
    %p145 = scmp.eq.s32.totalorder %s71, 1
    %p146 = por %p144, %p145
    %p148 = scmp.ne.s32.totalorder %s131, %s147
    %p149 = scmp.eq.s32.totalorder %s71, 0
    %p150 = por %p148, %p149
    %s152 = sadd.s32 %s151, 1
    %p155 = scmp.eq.s32.totalorder %s65, 1
    %p156 = scmp.ne.s32.totalorder %s151, %s153
    %p157 = scmp.eq.s32.totalorder %s65, 0
    %p158 = por %p156, %p157
    %p159 = scmp.ne.s32.totalorder %s151, %s153
    %p160 = scmp.eq.s32.totalorder %s70, 1
    %p161 = por %p159, %p160
    %p162 = scmp.ne.s32.totalorder %s153, %s154
    %p163 = scmp.eq.s32.totalorder %s70, 0
    %p164 = por %p162, %p163
    %p165 = scmp.ne.s32.totalorder %s153, %s154
    %p166 = scmp.eq.s32.totalorder %s71, 1
    %p167 = por %p165, %p166
    %p169 = scmp.ne.s32.totalorder %s154, %s168
    %p170 = scmp.eq.s32.totalorder %s71, 0
    %p171 = por %p169, %p170
    %s173 = sadd.s32 %s172, 1
    %p176 = scmp.eq.s32.totalorder %s65, 1
    %p177 = scmp.ne.s32.totalorder %s172, %s174
    %p178 = scmp.eq.s32.totalorder %s65, 0
    %p179 = por %p177, %p178
    %p180 = scmp.ne.s32.totalorder %s172, %s174
    %p181 = scmp.eq.s32.totalorder %s70, 1
    %p182 = por %p180, %p181
    %p183 = scmp.ne.s32.totalorder %s174, %s175
    %p184 = scmp.eq.s32.totalorder %s70, 0
    %p185 = por %p183, %p184
    %p186 = scmp.ne.s32.totalorder %s174, %s175
    %p187 = scmp.eq.s32.totalorder %s71, 1
    %p188 = por %p186, %p187
    %p190 = scmp.ne.s32.totalorder %s175, %s189
    %p191 = scmp.eq.s32.totalorder %s71, 0
    %p192 = por %p190, %p191
    %s194 = sadd.s32 %s193, 1
    %p197 = scmp.eq.s32.totalorder %s65, 1
    %p198 = scmp.ne.s32.totalorder %s193, %s195
    %p199 = scmp.eq.s32.totalorder %s65, 0
    %p200 = por %p198, %p199
    %p201 = scmp.ne.s32.totalorder %s193, %s195
    %p202 = scmp.eq.s32.totalorder %s70, 1
    %p203 = por %p201, %p202
    %p204 = scmp.ne.s32.totalorder %s195, %s196
    %p205 = scmp.eq.s32.totalorder %s70, 0
    %p206 = por %p204, %p205
    %p207 = scmp.ne.s32.totalorder %s195, %s196
    %p208 = scmp.eq.s32.totalorder %s71, 1
    %p209 = por %p207, %p208
    %p211 = scmp.ne.s32.totalorder %s196, %s210
    %p212 = scmp.eq.s32.totalorder %s71, 0
    %p213 = por %p211, %p212
    %s215 = sadd.s32 %s214, 1
    %p218 = scmp.eq.s32.totalorder %s65, 1
    %p219 = scmp.ne.s32.totalorder %s214, %s216
    %p220 = scmp.eq.s32.totalorder %s65, 0
    %p221 = por %p219, %p220
    %p222 = scmp.ne.s32.totalorder %s214, %s216
    %p223 = scmp.eq.s32.totalorder %s70, 1
    %p224 = por %p222, %p223
    %p225 = scmp.ne.s32.totalorder %s216, %s217
    %p226 = scmp.eq.s32.totalorder %s70, 0
    %p227 = por %p225, %p226
    %p228 = scmp.ne.s32.totalorder %s216, %s217
    %p229 = scmp.eq.s32.totalorder %s71, 1
    %p230 = por %p228, %p229
    %p232 = scmp.ne.s32.totalorder %s217, %s231
    %p233 = scmp.eq.s32.totalorder %s71, 0
    %p234 = por %p232, %p233
    %s236 = sadd.s32 %s235, 1
    %p239 = scmp.eq.s32.totalorder %s65, 1
    %p240 = scmp.ne.s32.totalorder %s235, %s237
    %p241 = scmp.eq.s32.totalorder %s65, 0
    %p242 = por %p240, %p241
    %p243 = scmp.ne.s32.totalorder %s235, %s237
    %p244 = scmp.eq.s32.totalorder %s70, 1
    %p245 = por %p243, %p244
    %p246 = scmp.ne.s32.totalorder %s237, %s238
    %p247 = scmp.eq.s32.totalorder %s70, 0
    %p248 = por %p246, %p247
    %p249 = scmp.ne.s32.totalorder %s237, %s238
    %p250 = scmp.eq.s32.totalorder %s71, 1
    %p251 = por %p249, %p250
    %p253 = scmp.ne.s32.totalorder %s238, %s252
    %p254 = scmp.eq.s32.totalorder %s71, 0
    %p255 = por %p253, %p254
    %s257 = sadd.s32 %s256, 1
    %p260 = scmp.eq.s32.totalorder %s65, 1
    %p261 = scmp.ne.s32.totalorder %s256, %s258
    %p262 = scmp.eq.s32.totalorder %s65, 0
    %p263 = por %p261, %p262
    %p264 = scmp.ne.s32.totalorder %s256, %s258
    %p265 = scmp.eq.s32.totalorder %s70, 1
    %p266 = por %p264, %p265
    %p267 = scmp.ne.s32.totalorder %s258, %s259
    %p268 = scmp.eq.s32.totalorder %s70, 0
    %p269 = por %p267, %p268
    %p270 = scmp.ne.s32.totalorder %s258, %s259
    %p271 = scmp.eq.s32.totalorder %s71, 1
    %p272 = por %p270, %p271
    %p274 = scmp.ne.s32.totalorder %s259, %s273
    %p275 = scmp.eq.s32.totalorder %s71, 0
    %p276 = por %p274, %p275
    %s278 = sadd.s32 %s277, 1
    %p281 = scmp.eq.s32.totalorder %s65, 1
    %p282 = scmp.ne.s32.totalorder %s277, %s279
    %p283 = scmp.eq.s32.totalorder %s65, 0
    %p284 = por %p282, %p283
    %p285 = scmp.ne.s32.totalorder %s277, %s279
    %p286 = scmp.eq.s32.totalorder %s70, 1
    %p287 = por %p285, %p286
    %p288 = scmp.ne.s32.totalorder %s279, %s280
    %p289 = scmp.eq.s32.totalorder %s70, 0
    %p290 = por %p288, %p289
    %p291 = scmp.ne.s32.totalorder %s279, %s280
    %p292 = scmp.eq.s32.totalorder %s71, 1
    %p293 = por %p291, %p292
    %p295 = scmp.ne.s32.totalorder %s280, %s294
    %p296 = scmp.eq.s32.totalorder %s71, 0
    %p297 = por %p295, %p296
    %s299 = sadd.s32 %s298, 1
    %p302 = scmp.eq.s32.totalorder %s65, 1
    %p303 = scmp.ne.s32.totalorder %s298, %s300
    %p304 = scmp.eq.s32.totalorder %s65, 0
    %p305 = por %p303, %p304
    %p306 = scmp.ne.s32.totalorder %s298, %s300
    %p307 = scmp.eq.s32.totalorder %s70, 1
    %p308 = por %p306, %p307
    %p309 = scmp.ne.s32.totalorder %s300, %s301
    %p310 = scmp.eq.s32.totalorder %s70, 0
    %p311 = por %p309, %p310
    %p312 = scmp.ne.s32.totalorder %s300, %s301
    %p313 = scmp.eq.s32.totalorder %s71, 1
    %p314 = por %p312, %p313
    %p316 = scmp.ne.s32.totalorder %s301, %s315
    %p317 = scmp.eq.s32.totalorder %s71, 0
    %p318 = por %p316, %p317
    %s320 = sadd.s32 %s319, 1
    %p323 = scmp.eq.s32.totalorder %s65, 1
    %p324 = scmp.ne.s32.totalorder %s319, %s321
    %p325 = scmp.eq.s32.totalorder %s65, 0
    %p326 = por %p324, %p325
    %p327 = scmp.ne.s32.totalorder %s319, %s321
    %p328 = scmp.eq.s32.totalorder %s70, 1
    %p329 = por %p327, %p328
    %p330 = scmp.ne.s32.totalorder %s321, %s322
    %p331 = scmp.eq.s32.totalorder %s70, 0
    %p332 = por %p330, %p331
    %p333 = scmp.ne.s32.totalorder %s321, %s322
    %p334 = scmp.eq.s32.totalorder %s71, 1
    %p335 = por %p333, %p334
    %p337 = scmp.ne.s32.totalorder %s322, %s336
    %p338 = scmp.eq.s32.totalorder %s71, 0
    %p339 = por %p337, %p338
    %s341 = sadd.s32 %s340, 1
    %p344 = scmp.eq.s32.totalorder %s65, 1
    %p345 = scmp.ne.s32.totalorder %s340, %s342
    %p346 = scmp.eq.s32.totalorder %s65, 0
    %p347 = por %p345, %p346
    %p348 = scmp.ne.s32.totalorder %s340, %s342
    %p349 = scmp.eq.s32.totalorder %s70, 1
    %p350 = por %p348, %p349
    %p351 = scmp.ne.s32.totalorder %s342, %s343
    %p352 = scmp.eq.s32.totalorder %s70, 0
    %p353 = por %p351, %p352
    %p354 = scmp.ne.s32.totalorder %s342, %s343
    %p355 = scmp.eq.s32.totalorder %s71, 1
    %p356 = por %p354, %p355
    %p358 = scmp.ne.s32.totalorder %s343, %s357
    %p359 = scmp.eq.s32.totalorder %s71, 0
    %p360 = por %p358, %p359
    %s362 = sadd.s32 %s361, 1
    %p365 = scmp.eq.s32.totalorder %s65, 1
    %p366 = scmp.ne.s32.totalorder %s361, %s363
    %p367 = scmp.eq.s32.totalorder %s65, 0
    %p368 = por %p366, %p367
    %p369 = scmp.ne.s32.totalorder %s361, %s363
    %p370 = scmp.eq.s32.totalorder %s70, 1
    %p371 = por %p369, %p370
    %p372 = scmp.ne.s32.totalorder %s363, %s364
    %p373 = scmp.eq.s32.totalorder %s70, 0
    %p374 = por %p372, %p373
    %p375 = scmp.ne.s32.totalorder %s363, %s364
    %p376 = scmp.eq.s32.totalorder %s71, 1
    %p377 = por %p375, %p376
    %p379 = scmp.ne.s32.totalorder %s364, %s378
    %p380 = scmp.eq.s32.totalorder %s71, 0
    %p381 = por %p379, %p380
    %s383 = sadd.s32 %s382, 1
    %p386 = scmp.eq.s32.totalorder %s65, 1
    %p387 = scmp.ne.s32.totalorder %s382, %s384
    %p388 = scmp.eq.s32.totalorder %s65, 0
    %p389 = por %p387, %p388
    %p390 = scmp.ne.s32.totalorder %s382, %s384
    %p391 = scmp.eq.s32.totalorder %s70, 1
    %p392 = por %p390, %p391
    %p393 = scmp.ne.s32.totalorder %s384, %s385
    %p394 = scmp.eq.s32.totalorder %s70, 0
    %p395 = por %p393, %p394
    %p396 = scmp.ne.s32.totalorder %s384, %s385
    %p397 = scmp.eq.s32.totalorder %s71, 1
    %p398 = por %p396, %p397
    %p400 = scmp.ne.s32.totalorder %s385, %s399
    %p401 = scmp.eq.s32.totalorder %s71, 0
    %p402 = por %p400, %p401
    %s404 = sadd.s32 %s403, 1
    %p407 = scmp.eq.s32.totalorder %s65, 1
    %p408 = scmp.ne.s32.totalorder %s403, %s405
    %p409 = scmp.eq.s32.totalorder %s65, 0
    %p410 = por %p408, %p409
    %p411 = scmp.ne.s32.totalorder %s403, %s405
    %p412 = scmp.eq.s32.totalorder %s70, 1
    %p413 = por %p411, %p412
    %p414 = scmp.ne.s32.totalorder %s405, %s406
    %p415 = scmp.eq.s32.totalorder %s70, 0
    %p416 = por %p414, %p415
    %p417 = scmp.ne.s32.totalorder %s405, %s406
    %p418 = scmp.eq.s32.totalorder %s71, 1
    %p419 = por %p417, %p418
    %p421 = scmp.ne.s32.totalorder %s406, %s420
    %p422 = scmp.eq.s32.totalorder %s71, 0
    %p423 = por %p421, %p422
    %s425 = sadd.s32 %s424, 1
    %p428 = scmp.eq.s32.totalorder %s65, 1
    %p429 = scmp.ne.s32.totalorder %s424, %s426
    %p430 = scmp.eq.s32.totalorder %s65, 0
    %p431 = por %p429, %p430
    %p432 = scmp.ne.s32.totalorder %s424, %s426
    %p433 = scmp.eq.s32.totalorder %s70, 1
    %p434 = por %p432, %p433
    %p435 = scmp.ne.s32.totalorder %s426, %s427
    %p436 = scmp.eq.s32.totalorder %s70, 0
    %p437 = por %p435, %p436
    %p438 = scmp.ne.s32.totalorder %s426, %s427
    %p439 = scmp.eq.s32.totalorder %s71, 1
    %p440 = por %p438, %p439
    %p442 = scmp.ne.s32.totalorder %s427, %s441
    %p443 = scmp.eq.s32.totalorder %s71, 0
    %p444 = por %p442, %p443
    %s446 = sadd.s32 %s445, 1
    %p449 = scmp.eq.s32.totalorder %s65, 1
    %p450 = scmp.ne.s32.totalorder %s445, %s447
    %p451 = scmp.eq.s32.totalorder %s65, 0
    %p452 = por %p450, %p451
    %p453 = scmp.ne.s32.totalorder %s445, %s447
    %p454 = scmp.eq.s32.totalorder %s70, 1
    %p455 = por %p453, %p454
    %p456 = scmp.ne.s32.totalorder %s447, %s448
    %p457 = scmp.eq.s32.totalorder %s70, 0
    %p458 = por %p456, %p457
    %p459 = scmp.ne.s32.totalorder %s447, %s448
    %p460 = scmp.eq.s32.totalorder %s71, 1
    %p461 = por %p459, %p460
    %p463 = scmp.ne.s32.totalorder %s448, %s462
    %p464 = scmp.eq.s32.totalorder %s71, 0
    %p465 = por %p463, %p464
    %s467 = sadd.s32 %s466, 1
    %p470 = scmp.eq.s32.totalorder %s65, 1
    %p471 = scmp.ne.s32.totalorder %s466, %s468
    %p472 = scmp.eq.s32.totalorder %s65, 0
    %p473 = por %p471, %p472
    %p474 = scmp.ne.s32.totalorder %s466, %s468
    %p475 = scmp.eq.s32.totalorder %s70, 1
    %p476 = por %p474, %p475
    %p477 = scmp.ne.s32.totalorder %s468, %s469
    %p478 = scmp.eq.s32.totalorder %s70, 0
    %p479 = por %p477, %p478
    %p480 = scmp.ne.s32.totalorder %s468, %s469
    %p481 = scmp.eq.s32.totalorder %s71, 1
    %p482 = por %p480, %p481
    %p484 = scmp.ne.s32.totalorder %s469, %s483
    %p485 = scmp.eq.s32.totalorder %s71, 0
    %p486 = por %p484, %p485
    %s488 = sadd.s32 %s487, 1
    %p491 = scmp.eq.s32.totalorder %s65, 1
    %p492 = scmp.ne.s32.totalorder %s487, %s489
    %p493 = scmp.eq.s32.totalorder %s65, 0
    %p494 = por %p492, %p493
    %p495 = scmp.ne.s32.totalorder %s487, %s489
    %p496 = scmp.eq.s32.totalorder %s70, 1
    %p497 = por %p495, %p496
    %p498 = scmp.ne.s32.totalorder %s489, %s490
    %p499 = scmp.eq.s32.totalorder %s70, 0
    %p500 = por %p498, %p499
    %p501 = scmp.ne.s32.totalorder %s489, %s490
    %p502 = scmp.eq.s32.totalorder %s71, 1
    %p503 = por %p501, %p502
    %p505 = scmp.ne.s32.totalorder %s490, %s504
    %p506 = scmp.eq.s32.totalorder %s71, 0
    %p507 = por %p505, %p506
    %s509 = sadd.s32 %s508, 1
    %p512 = scmp.eq.s32.totalorder %s65, 1
    %p513 = scmp.ne.s32.totalorder %s508, %s510
    %p514 = scmp.eq.s32.totalorder %s65, 0
    %p515 = por %p513, %p514
    %p516 = scmp.ne.s32.totalorder %s508, %s510
    %p517 = scmp.eq.s32.totalorder %s70, 1
    %p518 = por %p516, %p517
    %p519 = scmp.ne.s32.totalorder %s510, %s511
    %p520 = scmp.eq.s32.totalorder %s70, 0
    %p521 = por %p519, %p520
    %p522 = scmp.ne.s32.totalorder %s510, %s511
    %p523 = scmp.eq.s32.totalorder %s71, 1
    %p524 = por %p522, %p523
    %p526 = scmp.ne.s32.totalorder %s511, %s525
    %p527 = scmp.eq.s32.totalorder %s71, 0
    %p528 = por %p526, %p527
    %s530 = sadd.s32 %s529, 1
    %p533 = scmp.eq.s32.totalorder %s65, 1
    %p534 = scmp.ne.s32.totalorder %s529, %s531
    %p535 = scmp.eq.s32.totalorder %s65, 0
    %p536 = por %p534, %p535
    %p537 = scmp.ne.s32.totalorder %s529, %s531
    %p538 = scmp.eq.s32.totalorder %s70, 1
    %p539 = por %p537, %p538
    %p540 = scmp.ne.s32.totalorder %s531, %s532
    %p541 = scmp.eq.s32.totalorder %s70, 0
    %p542 = por %p540, %p541
    %p543 = scmp.ne.s32.totalorder %s531, %s532
    %p544 = scmp.eq.s32.totalorder %s71, 1
    %p545 = por %p543, %p544
    %p547 = scmp.ne.s32.totalorder %s532, %s546
    %p548 = scmp.eq.s32.totalorder %s71, 0
    %p549 = por %p547, %p548
    %s551 = sadd.s32 %s550, 1
    %p554 = scmp.eq.s32.totalorder %s65, 1
    %p555 = scmp.ne.s32.totalorder %s550, %s552
    %p556 = scmp.eq.s32.totalorder %s65, 0
    %p557 = por %p555, %p556
    %p558 = scmp.ne.s32.totalorder %s550, %s552
    %p559 = scmp.eq.s32.totalorder %s70, 1
    %p560 = por %p558, %p559
    %p561 = scmp.ne.s32.totalorder %s552, %s553
    %p562 = scmp.eq.s32.totalorder %s70, 0
    %p563 = por %p561, %p562
    %p564 = scmp.ne.s32.totalorder %s552, %s553
    %p565 = scmp.eq.s32.totalorder %s71, 1
    %p566 = por %p564, %p565
    %p568 = scmp.ne.s32.totalorder %s553, %s567
    %p569 = scmp.eq.s32.totalorder %s71, 0
    %p570 = por %p568, %p569
    %s572 = sadd.s32 %s571, 1
    %p575 = scmp.eq.s32.totalorder %s65, 1
    %p576 = scmp.ne.s32.totalorder %s571, %s573
    %p577 = scmp.eq.s32.totalorder %s65, 0
    %p578 = por %p576, %p577
    %p579 = scmp.ne.s32.totalorder %s571, %s573
    %p580 = scmp.eq.s32.totalorder %s70, 1
    %p581 = por %p579, %p580
    %p582 = scmp.ne.s32.totalorder %s573, %s574
    %p583 = scmp.eq.s32.totalorder %s70, 0
    %p584 = por %p582, %p583
    %p585 = scmp.ne.s32.totalorder %s573, %s574
    %p586 = scmp.eq.s32.totalorder %s71, 1
    %p587 = por %p585, %p586
    %p589 = scmp.ne.s32.totalorder %s574, %s588
    %p590 = scmp.eq.s32.totalorder %s71, 0
    %p591 = por %p589, %p590
    %s593 = sadd.s32 %s592, 1
    %p596 = scmp.eq.s32.totalorder %s65, 1
    %p597 = scmp.ne.s32.totalorder %s592, %s594
    %p598 = scmp.eq.s32.totalorder %s65, 0
    %p599 = por %p597, %p598
    %p600 = scmp.ne.s32.totalorder %s592, %s594
    %p601 = scmp.eq.s32.totalorder %s70, 1
    %p602 = por %p600, %p601
    %p603 = scmp.ne.s32.totalorder %s594, %s595
    %p604 = scmp.eq.s32.totalorder %s70, 0
    %p605 = por %p603, %p604
    %p606 = scmp.ne.s32.totalorder %s594, %s595
    %p607 = scmp.eq.s32.totalorder %s71, 1
    %p608 = por %p606, %p607
    %p610 = scmp.ne.s32.totalorder %s595, %s609
    %p611 = scmp.eq.s32.totalorder %s71, 0
    %p612 = por %p610, %p611
    %s614 = sadd.s32 %s613, 1
    %p617 = scmp.eq.s32.totalorder %s65, 1
    %p618 = scmp.ne.s32.totalorder %s613, %s615
    %p619 = scmp.eq.s32.totalorder %s65, 0
    %p620 = por %p618, %p619
    %p621 = scmp.ne.s32.totalorder %s613, %s615
    %p622 = scmp.eq.s32.totalorder %s70, 1
    %p623 = por %p621, %p622
    %p624 = scmp.ne.s32.totalorder %s615, %s616
    %p625 = scmp.eq.s32.totalorder %s70, 0
    %p626 = por %p624, %p625
    %p627 = scmp.ne.s32.totalorder %s615, %s616
    %p628 = scmp.eq.s32.totalorder %s71, 1
    %p629 = por %p627, %p628
    %p631 = scmp.ne.s32.totalorder %s616, %s630
    %p632 = scmp.eq.s32.totalorder %s71, 0
    %p633 = por %p631, %p632
    %s635 = sadd.s32 %s634, 1
    %p638 = scmp.eq.s32.totalorder %s65, 1
    %p639 = scmp.ne.s32.totalorder %s634, %s636
    %p640 = scmp.eq.s32.totalorder %s65, 0
    %p641 = por %p639, %p640
    %p642 = scmp.ne.s32.totalorder %s634, %s636
    %p643 = scmp.eq.s32.totalorder %s70, 1
    %p644 = por %p642, %p643
    %p645 = scmp.ne.s32.totalorder %s636, %s637
    %p646 = scmp.eq.s32.totalorder %s70, 0
    %p647 = por %p645, %p646
    %p648 = scmp.ne.s32.totalorder %s636, %s637
    %p649 = scmp.eq.s32.totalorder %s71, 1
    %p650 = por %p648, %p649
    %p652 = scmp.ne.s32.totalorder %s637, %s651
    %p653 = scmp.eq.s32.totalorder %s71, 0
    %p654 = por %p652, %p653
    %s656 = sadd.s32 %s655, 1
    %p659 = scmp.eq.s32.totalorder %s65, 1
    %p660 = scmp.ne.s32.totalorder %s655, %s657
    %p661 = scmp.eq.s32.totalorder %s65, 0
    %p662 = por %p660, %p661
    %p663 = scmp.ne.s32.totalorder %s655, %s657
    %p664 = scmp.eq.s32.totalorder %s70, 1
    %p665 = por %p663, %p664
    %p666 = scmp.ne.s32.totalorder %s657, %s658
    %p667 = scmp.eq.s32.totalorder %s70, 0
    %p668 = por %p666, %p667
    %p669 = scmp.ne.s32.totalorder %s657, %s658
    %p670 = scmp.eq.s32.totalorder %s71, 1
    %p671 = por %p669, %p670
    %p673 = scmp.ne.s32.totalorder %s658, %s672
    %p674 = scmp.eq.s32.totalorder %s71, 0
    %p675 = por %p673, %p674
    %s677 = sadd.s32 %s676, 1
    %p680 = scmp.eq.s32.totalorder %s65, 1
    %p681 = scmp.ne.s32.totalorder %s676, %s678
    %p682 = scmp.eq.s32.totalorder %s65, 0
    %p683 = por %p681, %p682
    %p684 = scmp.ne.s32.totalorder %s676, %s678
    %p685 = scmp.eq.s32.totalorder %s70, 1
    %p686 = por %p684, %p685
    %p687 = scmp.ne.s32.totalorder %s678, %s679
    %p688 = scmp.eq.s32.totalorder %s70, 0
    %p689 = por %p687, %p688
    %p690 = scmp.ne.s32.totalorder %s678, %s679
    %p691 = scmp.eq.s32.totalorder %s71, 1
    %p692 = por %p690, %p691
    %p694 = scmp.ne.s32.totalorder %s679, %s693
    %p695 = scmp.eq.s32.totalorder %s71, 0
    %p696 = por %p694, %p695
    %s697 = ssub.s32 %s65, %s72
    %p698 = scmp.eq.s32.totalorder %s697, 0
    %s700 = sadd.s32 %s699, 1
    %s701 = scalar_select %p698, %s699, %s700
    %p704 = pneg %p698
    %p705 = scmp.eq.s32.totalorder %s65, 1
    %p706 = por %p704, %p705
    %p707 = scmp.ne.s32.totalorder %s699, %s702
    %p708 = scmp.eq.s32.totalorder %s65, 0
    %p709 = por %p707, %p708
    %p710 = scmp.ne.s32.totalorder %s699, %s702
    %p711 = scmp.eq.s32.totalorder %s70, 1
    %p712 = por %p710, %p711
    %p713 = scmp.ne.s32.totalorder %s702, %s703
    %p714 = scmp.eq.s32.totalorder %s70, 0
    %p715 = por %p713, %p714
    %p716 = scmp.ne.s32.totalorder %s702, %s703
    %p717 = scmp.eq.s32.totalorder %s71, 1
    %p718 = por %p716, %p717
    %p720 = scmp.ne.s32.totalorder %s703, %s719
    %p721 = scmp.eq.s32.totalorder %s71, 0
    %p722 = por %p720, %p721
    %p723 = scmp.le.s32.totalorder 1, %s65
    %p724 = scmp.lt.s32.totalorder %s65, 3
    %p725 = pnand %p723, %p724
    %p726 = pneg %p725
    // Predicated region
    $region9: #{encoder_decoder_forward.1} parent=5 // pred_check
      _
    $region10: #{encoder_decoder_forward.1} parent=5 // pred_check_branch
      %728 = sbr.rel (%p725) target = $region12
    $region11: #{encoder_decoder_forward.1} parent=5 // pred_region
      %s729 = ssub.s32 %s65, 1
      // Predicated region
      $region13: #{encoder_decoder_forward.1} parent=11 // pred_check
        %p730 = pneg %p164
      $region14: #{encoder_decoder_forward.1} parent=11 // pred_check_branch
        %732 = sbr.rel (%p730) target = $region16
      $region15: #{encoder_decoder_forward.1} parent=11 // pred_region
        _
      $region16: #{encoder_decoder_forward.1} parent=11 // pred_fallthru
        _
      // Predicated region
      $region17: #{encoder_decoder_forward.1} parent=11 // pred_check
        %p733 = pneg %p185
      $region18: #{encoder_decoder_forward.1} parent=11 // pred_check_branch
        %735 = sbr.rel (%p733) target = $region20
      $region19: #{encoder_decoder_forward.1} parent=11 // pred_region
        _
      $region20: #{encoder_decoder_forward.1} parent=11 // pred_fallthru
        _
      // Predicated region
      $region21: #{encoder_decoder_forward.1} parent=11 // pred_check
        %p736 = pneg %p206
      $region22: #{encoder_decoder_forward.1} parent=11 // pred_check_branch
        %738 = sbr.rel (%p736) target = $region24
      $region23: #{encoder_decoder_forward.1} parent=11 // pred_region
        _
      $region24: #{encoder_decoder_forward.1} parent=11 // pred_fallthru
        _
      // Predicated region
      $region25: #{encoder_decoder_forward.1} parent=11 // pred_check
        %p739 = pneg %p227
      $region26: #{encoder_decoder_forward.1} parent=11 // pred_check_branch
        %741 = sbr.rel (%p739) target = $region28
      $region27: #{encoder_decoder_forward.1} parent=11 // pred_region
        _
      $region28: #{encoder_decoder_forward.1} parent=11 // pred_fallthru
        _
      // Predicated region
      $region29: #{encoder_decoder_forward.1} parent=11 // pred_check
        %p742 = pneg %p248
      $region30: #{encoder_decoder_forward.1} parent=11 // pred_check_branch
        %744 = sbr.rel (%p742) target = $region32
      $region31: #{encoder_decoder_forward.1} parent=11 // pred_region
        _
      $region32: #{encoder_decoder_forward.1} parent=11 // pred_fallthru
        _
      // Predicated region
      $region33: #{encoder_decoder_forward.1} parent=11 // pred_check
        %p745 = pneg %p269
      $region34: #{encoder_decoder_forward.1} parent=11 // pred_check_branch
        %747 = sbr.rel (%p745) target = $region36
      $region35: #{encoder_decoder_forward.1} parent=11 // pred_region
        _
      $region36: #{encoder_decoder_forward.1} parent=11 // pred_fallthru
        _
      // Predicated region
      $region37: #{encoder_decoder_forward.1} parent=11 // pred_check
        %p748 = pneg %p290
      $region38: #{encoder_decoder_forward.1} parent=11 // pred_check_branch
        %750 = sbr.rel (%p748) target = $region40
      $region39: #{encoder_decoder_forward.1} parent=11 // pred_region
        _
      $region40: #{encoder_decoder_forward.1} parent=11 // pred_fallthru
        _
      // Predicated region
      $region41: #{encoder_decoder_forward.1} parent=11 // pred_check
        %p751 = pneg %p311
      $region42: #{encoder_decoder_forward.1} parent=11 // pred_check_branch
        %753 = sbr.rel (%p751) target = $region44
      $region43: #{encoder_decoder_forward.1} parent=11 // pred_region
        _
      $region44: #{encoder_decoder_forward.1} parent=11 // pred_fallthru
        _
      // Predicated region
      $region45: #{encoder_decoder_forward.1} parent=11 // pred_check
        %p754 = pneg %p332
      $region46: #{encoder_decoder_forward.1} parent=11 // pred_check_branch
        %756 = sbr.rel (%p754) target = $region48
      $region47: #{encoder_decoder_forward.1} parent=11 // pred_region
        _
      $region48: #{encoder_decoder_forward.1} parent=11 // pred_fallthru
        _
      // Predicated region
      $region49: #{encoder_decoder_forward.1} parent=11 // pred_check
        %p757 = pneg %p353
      $region50: #{encoder_decoder_forward.1} parent=11 // pred_check_branch
        %759 = sbr.rel (%p757) target = $region52
      $region51: #{encoder_decoder_forward.1} parent=11 // pred_region
        _
      $region52: #{encoder_decoder_forward.1} parent=11 // pred_fallthru
        _
      // Predicated region
      $region53: #{encoder_decoder_forward.1} parent=11 // pred_check
        %p760 = pneg %p374
      $region54: #{encoder_decoder_forward.1} parent=11 // pred_check_branch
        %762 = sbr.rel (%p760) target = $region56
      $region55: #{encoder_decoder_forward.1} parent=11 // pred_region
        _
      $region56: #{encoder_decoder_forward.1} parent=11 // pred_fallthru
        _
      // Predicated region
      $region57: #{encoder_decoder_forward.1} parent=11 // pred_check
        %p763 = pneg %p395
      $region58: #{encoder_decoder_forward.1} parent=11 // pred_check_branch
        %765 = sbr.rel (%p763) target = $region60
      $region59: #{encoder_decoder_forward.1} parent=11 // pred_region
        _
      $region60: #{encoder_decoder_forward.1} parent=11 // pred_fallthru
        _
      // Predicated region
      $region61: #{encoder_decoder_forward.1} parent=11 // pred_check
        %p766 = pneg %p416
      $region62: #{encoder_decoder_forward.1} parent=11 // pred_check_branch
        %768 = sbr.rel (%p766) target = $region64
      $region63: #{encoder_decoder_forward.1} parent=11 // pred_region
        _
      $region64: #{encoder_decoder_forward.1} parent=11 // pred_fallthru
        _
      // Predicated region
      $region65: #{encoder_decoder_forward.1} parent=11 // pred_check
        %p769 = pneg %p437
      $region66: #{encoder_decoder_forward.1} parent=11 // pred_check_branch
        %771 = sbr.rel (%p769) target = $region68
      $region67: #{encoder_decoder_forward.1} parent=11 // pred_region
        _
      $region68: #{encoder_decoder_forward.1} parent=11 // pred_fallthru
        _
      // Predicated region
      $region69: #{encoder_decoder_forward.1} parent=11 // pred_check
        %p772 = pneg %p458
      $region70: #{encoder_decoder_forward.1} parent=11 // pred_check_branch
        %774 = sbr.rel (%p772) target = $region72
      $region71: #{encoder_decoder_forward.1} parent=11 // pred_region
        _
      $region72: #{encoder_decoder_forward.1} parent=11 // pred_fallthru
        _
      // Predicated region
      $region73: #{encoder_decoder_forward.1} parent=11 // pred_check
        %p775 = pneg %p479
      $region74: #{encoder_decoder_forward.1} parent=11 // pred_check_branch
        %777 = sbr.rel (%p775) target = $region76
      $region75: #{encoder_decoder_forward.1} parent=11 // pred_region
        _
      $region76: #{encoder_decoder_forward.1} parent=11 // pred_fallthru
        _
      // Predicated region
      $region77: #{encoder_decoder_forward.1} parent=11 // pred_check
        %p778 = pneg %p500
      $region78: #{encoder_decoder_forward.1} parent=11 // pred_check_branch
        %780 = sbr.rel (%p778) target = $region80
      $region79: #{encoder_decoder_forward.1} parent=11 // pred_region
        _
      $region80: #{encoder_decoder_forward.1} parent=11 // pred_fallthru
        _
      // Predicated region
      $region81: #{encoder_decoder_forward.1} parent=11 // pred_check
        %p781 = pneg %p521
      $region82: #{encoder_decoder_forward.1} parent=11 // pred_check_branch
        %783 = sbr.rel (%p781) target = $region84
      $region83: #{encoder_decoder_forward.1} parent=11 // pred_region
        _
      $region84: #{encoder_decoder_forward.1} parent=11 // pred_fallthru
        _
      // Predicated region
      $region85: #{encoder_decoder_forward.1} parent=11 // pred_check
        %p784 = pneg %p542
      $region86: #{encoder_decoder_forward.1} parent=11 // pred_check_branch
        %786 = sbr.rel (%p784) target = $region88
      $region87: #{encoder_decoder_forward.1} parent=11 // pred_region
        _
      $region88: #{encoder_decoder_forward.1} parent=11 // pred_fallthru
        _
      // Predicated region
      $region89: #{encoder_decoder_forward.1} parent=11 // pred_check
        %p787 = pneg %p563
      $region90: #{encoder_decoder_forward.1} parent=11 // pred_check_branch
        %789 = sbr.rel (%p787) target = $region92
      $region91: #{encoder_decoder_forward.1} parent=11 // pred_region
        _
      $region92: #{encoder_decoder_forward.1} parent=11 // pred_fallthru
        _
      // Predicated region
      $region93: #{encoder_decoder_forward.1} parent=11 // pred_check
        %p790 = pneg %p584
      $region94: #{encoder_decoder_forward.1} parent=11 // pred_check_branch
        %792 = sbr.rel (%p790) target = $region96
      $region95: #{encoder_decoder_forward.1} parent=11 // pred_region
        _
      $region96: #{encoder_decoder_forward.1} parent=11 // pred_fallthru
        _
      // Predicated region
      $region97: #{encoder_decoder_forward.1} parent=11 // pred_check
        %p793 = pneg %p605
      $region98: #{encoder_decoder_forward.1} parent=11 // pred_check_branch
        %795 = sbr.rel (%p793) target = $region100
      $region99: #{encoder_decoder_forward.1} parent=11 // pred_region
        _
      $region100: #{encoder_decoder_forward.1} parent=11 // pred_fallthru
        _
      // Predicated region
      $region101: #{encoder_decoder_forward.1} parent=11 // pred_check
        %p796 = pneg %p626
      $region102: #{encoder_decoder_forward.1} parent=11 // pred_check_branch
        %798 = sbr.rel (%p796) target = $region104
      $region103: #{encoder_decoder_forward.1} parent=11 // pred_region
        _
      $region104: #{encoder_decoder_forward.1} parent=11 // pred_fallthru
        _
      // Predicated region
      $region105: #{encoder_decoder_forward.1} parent=11 // pred_check
        %p799 = pneg %p647
      $region106: #{encoder_decoder_forward.1} parent=11 // pred_check_branch
        %801 = sbr.rel (%p799) target = $region108
      $region107: #{encoder_decoder_forward.1} parent=11 // pred_region
        _
      $region108: #{encoder_decoder_forward.1} parent=11 // pred_fallthru
        _
      // Predicated region
      $region109: #{encoder_decoder_forward.1} parent=11 // pred_check
        %p802 = pneg %p668
      $region110: #{encoder_decoder_forward.1} parent=11 // pred_check_branch
        %804 = sbr.rel (%p802) target = $region112
      $region111: #{encoder_decoder_forward.1} parent=11 // pred_region
        _
      $region112: #{encoder_decoder_forward.1} parent=11 // pred_fallthru
        _
      // Predicated region
      $region113: #{encoder_decoder_forward.1} parent=11 // pred_check
        %p805 = pneg %p689
      $region114: #{encoder_decoder_forward.1} parent=11 // pred_check_branch
        %807 = sbr.rel (%p805) target = $region116
      $region115: #{encoder_decoder_forward.1} parent=11 // pred_region
        _
      $region116: #{encoder_decoder_forward.1} parent=11 // pred_fallthru
        _
    $region12: #{encoder_decoder_forward.1} parent=5 // pred_fallthru
      _
    %p808 = scmp.lt.s32.totalorder %s65, 2
    // Predicated region
    $region117: #{encoder_decoder_forward.1} parent=5 // pred_check
      %p809 = pneg %p808
    $region118: #{encoder_decoder_forward.1} parent=5 // pred_check_branch
      %811 = sbr.rel (%p809) target = $region120
    $region119: #{encoder_decoder_forward.1} parent=5 // pred_region
      // Predicated region
      $region121: #{encoder_decoder_forward.1} parent=119 // pred_check
        %p812 = pneg %p85
      $region122: #{encoder_decoder_forward.1} parent=119 // pred_check_branch
        %814 = sbr.rel (%p812) target = $region124
      $region123: #{encoder_decoder_forward.1} parent=119 // pred_region
        %p815 = scmp.lt.s32.totalorder %s65, 1
        %s816 = scalar_select %p815, %s65, 1
        %s817 = smul.addr %s816, 2
        %s818 = smul.addr %s817, 8
        %s819 = scalar_lea.vmem %s1, %s818
      $region124: #{encoder_decoder_forward.1} parent=119 // pred_fallthru
        _
      // Predicated region
      $region125: #{encoder_decoder_forward.1} parent=119 // pred_check
        %p820 = pneg %p111
      $region126: #{encoder_decoder_forward.1} parent=119 // pred_check_branch
        %822 = sbr.rel (%p820) target = $region128
      $region127: #{encoder_decoder_forward.1} parent=119 // pred_region
        %p823 = scmp.lt.s32.totalorder %s65, 1
        %s824 = scalar_select %p823, %s65, 1
        %s825 = smul.addr %s824, 8
        %s826 = scalar_lea.vmem %s3, %s825
      $region128: #{encoder_decoder_forward.1} parent=119 // pred_fallthru
        _
      // Predicated region
      $region129: #{encoder_decoder_forward.1} parent=119 // pred_check
        %p827 = pneg %p137
      $region130: #{encoder_decoder_forward.1} parent=119 // pred_check_branch
        %829 = sbr.rel (%p827) target = $region132
      $region131: #{encoder_decoder_forward.1} parent=119 // pred_region
        %p830 = scmp.lt.s32.totalorder %s65, 1
        %s831 = scalar_select %p830, %s65, 1
        %s832 = smul.addr %s831, 8
        %s833 = scalar_lea.vmem %s5, %s832
      $region132: #{encoder_decoder_forward.1} parent=119 // pred_fallthru
        _
    $region120: #{encoder_decoder_forward.1} parent=5 // pred_fallthru
      _
    %p834 = scmp.le.s32.totalorder 1, %s65
    %p835 = scmp.lt.s32.totalorder %s65, 3
    %p836 = pnand %p834, %p835
    %p837 = pneg %p836
    // Predicated region
    $region133: #{encoder_decoder_forward.1} parent=5 // pred_check
      _
    $region134: #{encoder_decoder_forward.1} parent=5 // pred_check_branch
      %839 = sbr.rel (%p836) target = $region136
    $region135: #{encoder_decoder_forward.1} parent=5 // pred_region
      %s840 = ssub.s32 %s65, 1
      %p841 = scmp.lt.s32.totalorder %s70, 1
      %s842 = scalar_select %p841, %s70, 1
      %s843 = smul.addr %s842, 2
      %s844 = smul.addr %s843, 8
      %s845 = scalar_lea.vmem %s1, %s844
      %p846 = pneg %p91
      %p847 = pneg %p88
      %p848 = scmp.lt.s32.totalorder %s70, 1
      %s849 = scalar_select %p848, %s70, 1
      %s850 = smul.addr %s849, 8
      %s851 = scalar_lea.vmem %s3, %s850
      %p852 = pneg %p117
      %p853 = pneg %p114
      %p854 = scmp.lt.s32.totalorder %s70, 1
      %s855 = scalar_select %p854, %s70, 1
      %s856 = smul.addr %s855, 8
      %s857 = scalar_lea.vmem %s5, %s856
      %p858 = pneg %p143
      %p859 = pneg %p140
      %p860 = pneg %p164
      %p861 = pneg %p161
      %p862 = pneg %p185
      %p863 = pneg %p182
      %p864 = pneg %p206
      %p865 = pneg %p203
      %p866 = pneg %p227
      %p867 = pneg %p224
      %p868 = pneg %p248
      %p869 = pneg %p245
      %p870 = pneg %p269
      %p871 = pneg %p266
      %p872 = pneg %p290
      %p873 = pneg %p287
      %p874 = pneg %p311
      %p875 = pneg %p308
      %p876 = pneg %p332
      %p877 = pneg %p329
      %p878 = pneg %p353
      %p879 = pneg %p350
      %p880 = pneg %p374
      %p881 = pneg %p371
      %p882 = pneg %p395
      %p883 = pneg %p392
      %p884 = pneg %p416
      %p885 = pneg %p413
      %p886 = pneg %p437
      %p887 = pneg %p434
      %p888 = pneg %p458
      %p889 = pneg %p455
      %p890 = pneg %p479
      %p891 = pneg %p476
      %p892 = pneg %p500
      %p893 = pneg %p497
      %p894 = pneg %p521
      %p895 = pneg %p518
      %p896 = pneg %p542
      %p897 = pneg %p539
      %p898 = pneg %p563
      %p899 = pneg %p560
      %p900 = pneg %p584
      %p901 = pneg %p581
      %p902 = pneg %p605
      %p903 = pneg %p602
      %p904 = pneg %p626
      %p905 = pneg %p623
      %p906 = pneg %p647
      %p907 = pneg %p644
      %p908 = pneg %p668
      %p909 = pneg %p665
      %p910 = pneg %p689
      %p911 = pneg %p686
      %p912 = pneg %p715
      %p913 = pneg %p712
      %p914 = scmp.lt.s32.totalorder %s70, 1
      %s915 = scalar_select %p914, %s70, 1
      %s916 = smul.addr %s915, 8
      %s917 = scalar_lea.vmem %s59, %s916
      %p918 = scmp.lt.s32.totalorder %s70, 1
      %s919 = scalar_select %p918, %s70, 1
      %s920 = smul.addr %s919, 2
      %s921 = smul.addr %s920, 8
      %s922 = scalar_lea.vmem %s1, %s921
      %p923 = scmp.lt.s32.totalorder %s70, 1
      %s924 = scalar_select %p923, %s70, 1
      %s925 = smul.addr %s924, 8
      %s926 = scalar_lea.vmem %s3, %s925
      %p927 = scmp.lt.s32.totalorder %s70, 1
      %s928 = scalar_select %p927, %s70, 1
      %s929 = smul.addr %s928, 8
      %s930 = scalar_lea.vmem %s5, %s929
      %p931 = scmp.lt.s32.totalorder %s70, 1
      %s932 = scalar_select %p931, %s70, 1
      %s933 = smul.addr %s932, 8
      %s934 = scalar_lea.vmem %s59, %s933
      %v936 = vld [vmem:[%s922] sm:$0xff]
      %v937 = vld [vmem:[%s922 + $0x8] sm:$0xff]
      %vm938 = vcmask 416768
      %v939 = vsel %vm938, %v936, 0.0
      %v940 = vsel %vm938, %v937, 0.0
      %v941 = vadd.f32 %v939, %v940
      %v942 = vrot.slane %v941, 4
      %v943 = vadd.f32 %v941, %v942
      %v944 = vrot.slane %v943, 2
      %v945 = vadd.f32 %v943, %v944
      %v946 = vrot.slane %v945, 1
      %v947 = vadd.f32 %v945, %v946
      %v948 = vrcp.pop 16.0
      %v949 = vmul.f32 16.0, %v948
      %v950 = vsub.f32 1.0, %v949
      %v951 = vmul.f32 %v948, %v950
      %v952 = vadd.f32 %v948, %v951
      %vm953 = vweird.f32 %v948
      %v954 = vsel %vm953, %v948, %v952
      %v955 = vmul.f32 %v947, %v954
      %v956 = vld [vmem:[%s7] sm:$0xff]
      %v957 = vld [vmem:[%s7 + $0x8] sm:$0xff]
      %v958 = vld [vmem:[%s7 + $0x10] sm:$0xff]
      %v959 = vld [vmem:[%s7 + $0x18] sm:$0xff]
      %v960 = vld [vmem:[%s7 + $0x20] sm:$0xff]
      %v961 = vld [vmem:[%s7 + $0x28] sm:$0xff]
      %v962 = vld [vmem:[%s7 + $0x30] sm:$0x7]
      %v963 = vld [vmem:[%s9] sm:$0x1]
      %v965 = vsel %vm938, %v955, 0
      %vm967 = vcmask 1042432
      %v969 = vsel %vm967, %v962, 0
      %971 = vmatpush.msra.mxu0 0.0
      %972 = vmatpush.msra.mxu0 0.0
      %973 = vmatpush.msra.mxu0 0.0
      %974 = vmatpush.msra.mxu0 0.0
      %975 = vmatpush.msra.mxu0 0.0
      %976 = vmatpush.msra.mxu0 0.0
      %977 = vmatpush.msra.mxu0 0.0
      %978 = vmatpush.msra.mxu0 0.0
      %979 = vmatpush.msra.mxu0 0.0
      %980 = vmatpush.msra.mxu0 %v969
      %981 = vmatpush.msra.mxu0 %v961
      %982 = vmatpush.msra.mxu0 %v960
      %983 = vmatpush.msra.mxu0 %v959
      %984 = vmatpush.msra.mxu0 %v958
      %985 = vmatpush.msra.mxu0 %v957
      %986 = vmatpush.msra.mxu0 %v956
      %987 = vmatmul.f32.gmra.mxu0 %v965
      %v988 = vpop.f32.mrf.mxu0
      %v989 = vadd.f32 %v963, %v988
      %990 = vdwg.mxu0
      %v991 = vmul.f32 %v989, %v989
      %vm992 = vcmask 1040384
      %v993 = vsel %vm992, %v991, 0.0
      %994 = vadd.xlane.f32.xlu0 %v993
      %v995 = vpop.xlane.xlu0 %994
      %v996 = vrsqrt.pop %v995
      %v997 = vmul.f32 %v996, %v995
      %v998 = vmul.f32 %v997, %v996
      %v999 = vmul.f32 0.5, %v998
      %v1000 = vsub.f32 1.5, %v999
      %v1001 = vmul.f32 %v996, %v1000
      %v1002 = vmul.f32 %v995, %v1001
      %vm1003 = vcmp.eq.f32.partialorder %v995, inf
      %v1004 = vsel %vm1003, %v995, %v1002
      %vm1005 = vcmp.eq.f32.partialorder %v995, 0.0
      %v1006 = vand.u32 %v995, 2147483648
      %v1007 = vsel %vm1005, %v1006, %v1004
      %v1008 = vmax.f32 %v1007, 1e-12
      %v1009 = vrcp.pop %v1008
      %v1010 = vmul.f32 %v1008, %v1009
      %v1011 = vsub.f32 1.0, %v1010
      %v1012 = vmul.f32 %v1009, %v1011
      %v1013 = vadd.f32 %v1009, %v1012
      %vm1014 = vweird.f32 %v1008
      %vm1015 = vweird.f32 %v1009
      %vm1016 = vmor %vm1014, %vm1015
      %v1017 = vsel %vm1016, %v1009, %v1013
      %v1018 = vand.u32 2147483647, %v1008
      %vm1019 = vcmp.eq.f32.partialorder %v1018, 8.507059e+37
      %v1020 = vand.u32 %v1008, 2147483648
      %v1021 = vor.u32 1.1754944e-38, %v1020
      %v1022 = vsel %vm1019, %v1021, %v1017
      %v1023 = vmul.f32 %v989, %v1022
      %v1024 = vpack.c.bf16 %v1023, %v1023
      %v1025 = vld [vmem:[%s926] sm:$0xff]
      %v1026 = vld [vmem:[%s930] sm:$0xff]
      %v1027 = vpack.c.bf16 %v1025, %v1025
      %v1028 = vld [vmem:[%s11] sm:$0xf]
      %v1029 = vld [vmem:[%s11 + $0x4] sm:$0xf]
      %v1030 = vld [vmem:[%s11 + $0x8] sm:$0xf]
      %v1031 = vld [vmem:[%s11 + $0xc] sm:$0xf]
      %v1032 = vld [vmem:[%s11 + $0x10] sm:$0xf]
      %v1033 = vld [vmem:[%s11 + $0x14] sm:$0xf]
      %v1034 = vld [vmem:[%s11 + $0x18] sm:$0xf]
      %v1035 = vld [vmem:[%s11 + $0x1c] sm:$0xf]
      %v1036 = vld [vmem:[%s11 + $0x20] sm:$0xf]
      %v1037 = vld [vmem:[%s11 + $0x24] sm:$0xf]
      %v1038 = vld [vmem:[%s11 + $0x28] sm:$0xf]
      %v1039 = vld [vmem:[%s11 + $0x2c] sm:$0xf]
      %v1040 = vld [vmem:[%s11 + $0x30] sm:$0xf]
      %v1041 = vld [vmem:[%s11 + $0x34] sm:$0xf]
      %v1042 = vld [vmem:[%s11 + $0x38] sm:$0xf]
      %v1043 = vld [vmem:[%s11 + $0x3c] sm:$0xf]
      %v1044 = vld [vmem:[%s13] sm:$0x1]
      %v1046 = vperm.slane %v1044, 0
      %v1064 = vunpack.c.l.b16 %v1028
      %v1065 = vunpack.c.l.b16 %v1029
      %v1066 = vunpack.c.l.b16 %v1030
      %v1067 = vunpack.c.l.b16 %v1031
      %v1068 = vunpack.c.l.b16 %v1032
      %v1069 = vunpack.c.l.b16 %v1033
      %v1070 = vunpack.c.l.b16 %v1034
      %v1071 = vunpack.c.l.b16 %v1035
      %v1072 = vunpack.c.l.b16 %v1036
      %v1073 = vunpack.c.l.b16 %v1037
      %v1074 = vunpack.c.l.b16 %v1038
      %v1075 = vunpack.c.l.b16 %v1039
      %v1076 = vunpack.c.l.b16 %v1040
      %v1077 = vunpack.c.l.b16 %v1041
      %v1078 = vunpack.c.l.b16 %v1042
      %v1079 = vunpack.c.l.b16 %v1043
      %v1080 = vpack.c.b16 %v1065, %v1064
      %v1081 = vpack.c.b16 %v1067, %v1066
      %v1082 = vpack.c.b16 %v1069, %v1068
      %v1083 = vpack.c.b16 %v1071, %v1070
      %v1084 = vpack.c.b16 %v1073, %v1072
      %v1085 = vpack.c.b16 %v1075, %v1074
      %v1086 = vpack.c.b16 %v1077, %v1076
      %v1087 = vpack.c.b16 %v1079, %v1078
      %1096 = vmatpush.bf16.msra.mxu0 %v1087
      %1097 = vmatpush.bf16.msra.mxu0 %v1086
      %1098 = vmatpush.bf16.msra.mxu0 %v1085
      %1099 = vmatpush.bf16.msra.mxu0 %v1084
      %1100 = vmatpush.bf16.msra.mxu0 %v1083
      %1101 = vmatpush.bf16.msra.mxu0 %v1082
      %1102 = vmatpush.bf16.msra.mxu0 %v1081
      %1103 = vmatpush.bf16.msra.mxu0 %v1080
      %1104 = vmatmul.bf16.gmra.mxu0 %v1027
      %v1105 = vpop.f32.mrf.mxu0
      %v1106 = vadd.f32 %v1046, %v1105
      %v1107 = vpop.f32.mrf.mxu0
      %1108 = vdwg.mxu0
      %v1109 = vld [vmem:[%s15] sm:$0xf]
      %v1110 = vld [vmem:[%s15 + $0x4] sm:$0xf]
      %v1111 = vld [vmem:[%s15 + $0x8] sm:$0xf]
      %v1112 = vld [vmem:[%s15 + $0xc] sm:$0xf]
      %v1113 = vld [vmem:[%s15 + $0x10] sm:$0xf]
      %v1114 = vld [vmem:[%s15 + $0x14] sm:$0xf]
      %v1115 = vld [vmem:[%s15 + $0x18] sm:$0xf]
      %v1116 = vld [vmem:[%s15 + $0x1c] sm:$0xf]
      %v1117 = vld [vmem:[%s15 + $0x20] sm:$0xf]
      %v1118 = vld [vmem:[%s15 + $0x24] sm:$0xf]
      %v1119 = vld [vmem:[%s15 + $0x28] sm:$0xf]
      %v1120 = vld [vmem:[%s15 + $0x2c] sm:$0xf]
      %v1121 = vld [vmem:[%s15 + $0x30] sm:$0xf]
      %v1122 = vld [vmem:[%s15 + $0x34] sm:$0xf]
      %v1123 = vld [vmem:[%s15 + $0x38] sm:$0xf]
      %v1124 = vld [vmem:[%s15 + $0x3c] sm:$0xf]
      %v1125 = vld [vmem:[%s17] sm:$0x1]
      %v1127 = vperm.slane %v1125, 0
      %v1145 = vunpack.c.l.b16 %v1109
      %v1146 = vunpack.c.l.b16 %v1110
      %v1147 = vunpack.c.l.b16 %v1111
      %v1148 = vunpack.c.l.b16 %v1112
      %v1149 = vunpack.c.l.b16 %v1113
      %v1150 = vunpack.c.l.b16 %v1114
      %v1151 = vunpack.c.l.b16 %v1115
      %v1152 = vunpack.c.l.b16 %v1116
      %v1153 = vunpack.c.l.b16 %v1117
      %v1154 = vunpack.c.l.b16 %v1118
      %v1155 = vunpack.c.l.b16 %v1119
      %v1156 = vunpack.c.l.b16 %v1120
      %v1157 = vunpack.c.l.b16 %v1121
      %v1158 = vunpack.c.l.b16 %v1122
      %v1159 = vunpack.c.l.b16 %v1123
      %v1160 = vunpack.c.l.b16 %v1124
      %v1161 = vpack.c.b16 %v1146, %v1145
      %v1162 = vpack.c.b16 %v1148, %v1147
      %v1163 = vpack.c.b16 %v1150, %v1149
      %v1164 = vpack.c.b16 %v1152, %v1151
      %v1165 = vpack.c.b16 %v1154, %v1153
      %v1166 = vpack.c.b16 %v1156, %v1155
      %v1167 = vpack.c.b16 %v1158, %v1157
      %v1168 = vpack.c.b16 %v1160, %v1159
      %1177 = vmatpush.bf16.msra.mxu0 %v1168
      %1178 = vmatpush.bf16.msra.mxu0 %v1167
      %1179 = vmatpush.bf16.msra.mxu0 %v1166
      %1180 = vmatpush.bf16.msra.mxu0 %v1165
      %1181 = vmatpush.bf16.msra.mxu0 %v1164
      %1182 = vmatpush.bf16.msra.mxu0 %v1163
      %1183 = vmatpush.bf16.msra.mxu0 %v1162
      %1184 = vmatpush.bf16.msra.mxu0 %v1161
      %1185 = vmatmul.bf16.gmra.mxu0 %v1027
      %v1186 = vpop.f32.mrf.mxu0
      %v1187 = vadd.f32 %v1127, %v1186
      %v1188 = vpop.f32.mrf.mxu0
      %1189 = vdwg.mxu0
      %v1190 = vld [vmem:[%s19] sm:$0xf]
      %v1191 = vld [vmem:[%s19 + $0x4] sm:$0xf]
      %v1192 = vld [vmem:[%s19 + $0x8] sm:$0xf]
      %v1193 = vld [vmem:[%s19 + $0xc] sm:$0xf]
      %v1194 = vld [vmem:[%s19 + $0x10] sm:$0xf]
      %v1195 = vld [vmem:[%s19 + $0x14] sm:$0xf]
      %v1196 = vld [vmem:[%s19 + $0x18] sm:$0xf]
      %v1197 = vld [vmem:[%s19 + $0x1c] sm:$0xf]
      %v1198 = vld [vmem:[%s19 + $0x20] sm:$0xf]
      %v1199 = vld [vmem:[%s19 + $0x24] sm:$0xf]
      %v1200 = vld [vmem:[%s19 + $0x28] sm:$0xf]
      %v1201 = vld [vmem:[%s19 + $0x2c] sm:$0xf]
      %v1202 = vld [vmem:[%s19 + $0x30] sm:$0xf]
      %v1203 = vld [vmem:[%s19 + $0x34] sm:$0xf]
      %v1204 = vld [vmem:[%s19 + $0x38] sm:$0xf]
      %v1205 = vld [vmem:[%s19 + $0x3c] sm:$0xf]
      %v1206 = vld [vmem:[%s21] sm:$0x1]
      %v1208 = vperm.slane %v1206, 0
      %v1226 = vunpack.c.l.b16 %v1190
      %v1227 = vunpack.c.l.b16 %v1191
      %v1228 = vunpack.c.l.b16 %v1192
      %v1229 = vunpack.c.l.b16 %v1193
      %v1230 = vunpack.c.l.b16 %v1194
      %v1231 = vunpack.c.l.b16 %v1195
      %v1232 = vunpack.c.l.b16 %v1196
      %v1233 = vunpack.c.l.b16 %v1197
      %v1234 = vunpack.c.l.b16 %v1198
      %v1235 = vunpack.c.l.b16 %v1199
      %v1236 = vunpack.c.l.b16 %v1200
      %v1237 = vunpack.c.l.b16 %v1201
      %v1238 = vunpack.c.l.b16 %v1202
      %v1239 = vunpack.c.l.b16 %v1203
      %v1240 = vunpack.c.l.b16 %v1204
      %v1241 = vunpack.c.l.b16 %v1205
      %v1242 = vpack.c.b16 %v1227, %v1226
      %v1243 = vpack.c.b16 %v1229, %v1228
      %v1244 = vpack.c.b16 %v1231, %v1230
      %v1245 = vpack.c.b16 %v1233, %v1232
      %v1246 = vpack.c.b16 %v1235, %v1234
      %v1247 = vpack.c.b16 %v1237, %v1236
      %v1248 = vpack.c.b16 %v1239, %v1238
      %v1249 = vpack.c.b16 %v1241, %v1240
      %1258 = vmatpush.bf16.msra.mxu0 %v1249
      %1259 = vmatpush.bf16.msra.mxu0 %v1248
      %1260 = vmatpush.bf16.msra.mxu0 %v1247
      %1261 = vmatpush.bf16.msra.mxu0 %v1246
      %1262 = vmatpush.bf16.msra.mxu0 %v1245
      %1263 = vmatpush.bf16.msra.mxu0 %v1244
      %1264 = vmatpush.bf16.msra.mxu0 %v1243
      %1265 = vmatpush.bf16.msra.mxu0 %v1242
      %1266 = vmatmul.bf16.gmra.mxu0 %v1027
      %v1267 = vpop.f32.mrf.mxu0
      %v1268 = vadd.f32 %v1208, %v1267
      %v1269 = vpop.f32.mrf.mxu0
      %1270 = vdwg.mxu0
      %vm1271 = vcmask 261120
      %v1273 = vsel %vm1271, %v1106, 0
      %v1276 = vsel %vm1271, %v1187, 0
      %1278 = vmatpush.xpose.msra.mxu0 0.0
      %1279 = vmatpush.xpose.msra.mxu0 0.0
      %1280 = vmatpush.xpose.msra.mxu0 0.0
      %1281 = vmatpush.xpose.msra.mxu0 0.0
      %1282 = vmatpush.xpose.msra.mxu0 0.0
      %1283 = vmatpush.xpose.msra.mxu0 0.0
      %1284 = vmatpush.xpose.msra.mxu0 0.0
      %1285 = vmatpush.xpose.msra.mxu0 0.0
      %1286 = vmatpush.xpose.msra.mxu0 0.0
      %1287 = vmatpush.xpose.msra.mxu0 0.0
      %1288 = vmatpush.xpose.msra.mxu0 0.0
      %1289 = vmatpush.xpose.msra.mxu0 0.0
      %1290 = vmatpush.xpose.msra.mxu0 0.0
      %1291 = vmatpush.xpose.msra.mxu0 0.0
      %1292 = vmatpush.xpose.msra.mxu0 0.0
      %1293 = vmatpush.xpose.msra.mxu0 %v1276
      %1294 = vmatmul.f32.gmra.mxu0 %v1273
      %v1295 = vpop.f32.mrf.mxu0
      %v1296 = vadd.f32 0.0, %v1295
      %1297 = vdwg.mxu0
      %v1298 = vmul.f32 %v1296, 0.17677669
      %v1299 = vadd.f32 %v1298, %v1026
      %vm1300 = vcmask 64512
      %v1301 = vsel %vm1300, %v1299, -inf
      %1302 = vmax.xlane.f32.xlu0 %v1301
      %v1303 = vpop.xlane.xlu0 %1302
      %v1304 = vsub.f32 %v1299, %v1303
      %v1305 = vmul.f32 %v1304, 1.442695
      %v1306 = vpow.pop %v1305
      %v1307 = vsel %vm1300, %v1306, 0.0
      %1308 = vadd.xlane.f32.xlu0 %v1307
      %v1309 = vpop.xlane.xlu0 %1308
      %v1310 = vrcp.pop %v1309
      %v1311 = vmul.f32 %v1309, %v1310
      %v1312 = vsub.f32 1.0, %v1311
      %v1313 = vmul.f32 %v1310, %v1312
      %v1314 = vadd.f32 %v1310, %v1313
      %vm1315 = vweird.f32 %v1309
      %vm1316 = vweird.f32 %v1310
      %vm1317 = vmor %vm1315, %vm1316
      %v1318 = vsel %vm1317, %v1310, %v1314
      %v1319 = vand.u32 2147483647, %v1309
      %vm1320 = vcmp.eq.f32.partialorder %v1319, 8.507059e+37
      %v1321 = vand.u32 %v1309, 2147483648
      %v1322 = vor.u32 1.1754944e-38, %v1321
      %v1323 = vsel %vm1320, %v1322, %v1318
      %v1324 = vmul.f32 %v1306, %v1323
      %v1325 = vpack.c.bf16 %v1324, %v1324
      %v1326 = vpack.c.bf16 %v1268, %v1268
      %v1328 = vsel %vm1300, %v1325, 0
      %vm1330 = vcmask 1043456
      %v1332 = vsel %vm1330, %v1326, 0
      %1334 = vmatpush.bf16.msra.mxu0 0
      %1335 = vmatpush.bf16.msra.mxu0 0
      %1336 = vmatpush.bf16.msra.mxu0 0
      %1337 = vmatpush.bf16.msra.mxu0 0
      %1338 = vmatpush.bf16.msra.mxu0 0
      %1339 = vmatpush.bf16.msra.mxu0 0
      %1340 = vmatpush.bf16.msra.mxu0 0
      %1341 = vmatpush.bf16.msra.mxu0 %v1332
      %1342 = vmatmul.bf16.gmra.mxu0 %v1328
      %v1343 = vpop.f32.mrf.mxu0
      %v1344 = vadd.f32 0.0, %v1343
      %v1345 = vpop.f32.mrf.mxu0
      %1346 = vdwg.mxu0
      %v1347 = vpack.c.bf16 %v1344, %v1344
      %v1348 = vld [vmem:[%s23] sm:$0xf]
      %v1349 = vld [vmem:[%s23 + $0x4] sm:$0xf]
      %v1350 = vld [vmem:[%s23 + $0x8] sm:$0xf]
      %v1351 = vld [vmem:[%s23 + $0xc] sm:$0xf]
      %s1352 = scalar_lea.vmem %s11, 64
      %v1353 = vld [vmem:[%s1352] sm:$0xf]
      %v1354 = vld [vmem:[%s1352 + $0x4] sm:$0xf]
      %v1355 = vld [vmem:[%s1352 + $0x8] sm:$0xf]
      %v1356 = vld [vmem:[%s1352 + $0xc] sm:$0xf]
      %v1357 = vld [vmem:[%s1352 + $0x10] sm:$0xf]
      %v1358 = vld [vmem:[%s1352 + $0x14] sm:$0xf]
      %v1359 = vld [vmem:[%s1352 + $0x18] sm:$0xf]
      %v1360 = vld [vmem:[%s1352 + $0x1c] sm:$0xf]
      %v1361 = vld [vmem:[%s1352 + $0x20] sm:$0xf]
      %v1362 = vld [vmem:[%s1352 + $0x24] sm:$0xf]
      %v1363 = vld [vmem:[%s1352 + $0x28] sm:$0xf]
      %v1364 = vld [vmem:[%s1352 + $0x2c] sm:$0xf]
      %v1365 = vld [vmem:[%s1352 + $0x30] sm:$0xf]
      %v1366 = vld [vmem:[%s1352 + $0x34] sm:$0xf]
      %v1367 = vld [vmem:[%s1352 + $0x38] sm:$0xf]
      %v1368 = vld [vmem:[%s1352 + $0x3c] sm:$0xf]
      %s1369 = scalar_lea.vmem %s13, 1
      %v1370 = vld [vmem:[%s1369] sm:$0x1]
      %v1372 = vperm.slane %v1370, 0
      %v1390 = vunpack.c.l.b16 %v1353
      %v1391 = vunpack.c.l.b16 %v1354
      %v1392 = vunpack.c.l.b16 %v1355
      %v1393 = vunpack.c.l.b16 %v1356
      %v1394 = vunpack.c.l.b16 %v1357
      %v1395 = vunpack.c.l.b16 %v1358
      %v1396 = vunpack.c.l.b16 %v1359
      %v1397 = vunpack.c.l.b16 %v1360
      %v1398 = vunpack.c.l.b16 %v1361
      %v1399 = vunpack.c.l.b16 %v1362
      %v1400 = vunpack.c.l.b16 %v1363
      %v1401 = vunpack.c.l.b16 %v1364
      %v1402 = vunpack.c.l.b16 %v1365
      %v1403 = vunpack.c.l.b16 %v1366
      %v1404 = vunpack.c.l.b16 %v1367
      %v1405 = vunpack.c.l.b16 %v1368
      %v1406 = vpack.c.b16 %v1391, %v1390
      %v1407 = vpack.c.b16 %v1393, %v1392
      %v1408 = vpack.c.b16 %v1395, %v1394
      %v1409 = vpack.c.b16 %v1397, %v1396
      %v1410 = vpack.c.b16 %v1399, %v1398
      %v1411 = vpack.c.b16 %v1401, %v1400
      %v1412 = vpack.c.b16 %v1403, %v1402
      %v1413 = vpack.c.b16 %v1405, %v1404
      %1422 = vmatpush.bf16.msra.mxu0 %v1413
      %1423 = vmatpush.bf16.msra.mxu0 %v1412
      %1424 = vmatpush.bf16.msra.mxu0 %v1411
      %1425 = vmatpush.bf16.msra.mxu0 %v1410
      %1426 = vmatpush.bf16.msra.mxu0 %v1409
      %1427 = vmatpush.bf16.msra.mxu0 %v1408
      %1428 = vmatpush.bf16.msra.mxu0 %v1407
      %1429 = vmatpush.bf16.msra.mxu0 %v1406
      %1430 = vmatmul.bf16.gmra.mxu0 %v1027
      %v1431 = vpop.f32.mrf.mxu0
      %v1432 = vadd.f32 %v1372, %v1431
      %v1433 = vpop.f32.mrf.mxu0
      %1434 = vdwg.mxu0
      %s1435 = scalar_lea.vmem %s15, 64
      %v1436 = vld [vmem:[%s1435] sm:$0xf]
      %v1437 = vld [vmem:[%s1435 + $0x4] sm:$0xf]
      %v1438 = vld [vmem:[%s1435 + $0x8] sm:$0xf]
      %v1439 = vld [vmem:[%s1435 + $0xc] sm:$0xf]
      %v1440 = vld [vmem:[%s1435 + $0x10] sm:$0xf]
      %v1441 = vld [vmem:[%s1435 + $0x14] sm:$0xf]
      %v1442 = vld [vmem:[%s1435 + $0x18] sm:$0xf]
      %v1443 = vld [vmem:[%s1435 + $0x1c] sm:$0xf]
      %v1444 = vld [vmem:[%s1435 + $0x20] sm:$0xf]
      %v1445 = vld [vmem:[%s1435 + $0x24] sm:$0xf]
      %v1446 = vld [vmem:[%s1435 + $0x28] sm:$0xf]
      %v1447 = vld [vmem:[%s1435 + $0x2c] sm:$0xf]
      %v1448 = vld [vmem:[%s1435 + $0x30] sm:$0xf]
      %v1449 = vld [vmem:[%s1435 + $0x34] sm:$0xf]
      %v1450 = vld [vmem:[%s1435 + $0x38] sm:$0xf]
      %v1451 = vld [vmem:[%s1435 + $0x3c] sm:$0xf]
      %s1452 = scalar_lea.vmem %s17, 1
      %v1453 = vld [vmem:[%s1452] sm:$0x1]
      %v1455 = vperm.slane %v1453, 0
      %v1473 = vunpack.c.l.b16 %v1436
      %v1474 = vunpack.c.l.b16 %v1437
      %v1475 = vunpack.c.l.b16 %v1438
      %v1476 = vunpack.c.l.b16 %v1439
      %v1477 = vunpack.c.l.b16 %v1440
      %v1478 = vunpack.c.l.b16 %v1441
      %v1479 = vunpack.c.l.b16 %v1442
      %v1480 = vunpack.c.l.b16 %v1443
      %v1481 = vunpack.c.l.b16 %v1444
      %v1482 = vunpack.c.l.b16 %v1445
      %v1483 = vunpack.c.l.b16 %v1446
      %v1484 = vunpack.c.l.b16 %v1447
      %v1485 = vunpack.c.l.b16 %v1448
      %v1486 = vunpack.c.l.b16 %v1449
      %v1487 = vunpack.c.l.b16 %v1450
      %v1488 = vunpack.c.l.b16 %v1451
      %v1489 = vpack.c.b16 %v1474, %v1473
      %v1490 = vpack.c.b16 %v1476, %v1475
      %v1491 = vpack.c.b16 %v1478, %v1477
      %v1492 = vpack.c.b16 %v1480, %v1479
      %v1493 = vpack.c.b16 %v1482, %v1481
      %v1494 = vpack.c.b16 %v1484, %v1483
      %v1495 = vpack.c.b16 %v1486, %v1485
      %v1496 = vpack.c.b16 %v1488, %v1487
      %1505 = vmatpush.bf16.msra.mxu0 %v1496
      %1506 = vmatpush.bf16.msra.mxu0 %v1495
      %1507 = vmatpush.bf16.msra.mxu0 %v1494
      %1508 = vmatpush.bf16.msra.mxu0 %v1493
      %1509 = vmatpush.bf16.msra.mxu0 %v1492
      %1510 = vmatpush.bf16.msra.mxu0 %v1491
      %1511 = vmatpush.bf16.msra.mxu0 %v1490
      %1512 = vmatpush.bf16.msra.mxu0 %v1489
      %1513 = vmatmul.bf16.gmra.mxu0 %v1027
      %v1514 = vpop.f32.mrf.mxu0
      %v1515 = vadd.f32 %v1455, %v1514
      %v1516 = vpop.f32.mrf.mxu0
      %1517 = vdwg.mxu0
      %s1518 = scalar_lea.vmem %s19, 64
      %v1519 = vld [vmem:[%s1518] sm:$0xf]
      %v1520 = vld [vmem:[%s1518 + $0x4] sm:$0xf]
      %v1521 = vld [vmem:[%s1518 + $0x8] sm:$0xf]
      %v1522 = vld [vmem:[%s1518 + $0xc] sm:$0xf]
      %v1523 = vld [vmem:[%s1518 + $0x10] sm:$0xf]
      %v1524 = vld [vmem:[%s1518 + $0x14] sm:$0xf]
      %v1525 = vld [vmem:[%s1518 + $0x18] sm:$0xf]
      %v1526 = vld [vmem:[%s1518 + $0x1c] sm:$0xf]
      %v1527 = vld [vmem:[%s1518 + $0x20] sm:$0xf]
      %v1528 = vld [vmem:[%s1518 + $0x24] sm:$0xf]
      %v1529 = vld [vmem:[%s1518 + $0x28] sm:$0xf]
      %v1530 = vld [vmem:[%s1518 + $0x2c] sm:$0xf]
      %v1531 = vld [vmem:[%s1518 + $0x30] sm:$0xf]
      %v1532 = vld [vmem:[%s1518 + $0x34] sm:$0xf]
      %v1533 = vld [vmem:[%s1518 + $0x38] sm:$0xf]
      %v1534 = vld [vmem:[%s1518 + $0x3c] sm:$0xf]
      %s1535 = scalar_lea.vmem %s21, 1
      %v1536 = vld [vmem:[%s1535] sm:$0x1]
      %v1538 = vperm.slane %v1536, 0
      %v1556 = vunpack.c.l.b16 %v1519
      %v1557 = vunpack.c.l.b16 %v1520
      %v1558 = vunpack.c.l.b16 %v1521
      %v1559 = vunpack.c.l.b16 %v1522
      %v1560 = vunpack.c.l.b16 %v1523
      %v1561 = vunpack.c.l.b16 %v1524
      %v1562 = vunpack.c.l.b16 %v1525
      %v1563 = vunpack.c.l.b16 %v1526
      %v1564 = vunpack.c.l.b16 %v1527
      %v1565 = vunpack.c.l.b16 %v1528
      %v1566 = vunpack.c.l.b16 %v1529
      %v1567 = vunpack.c.l.b16 %v1530
      %v1568 = vunpack.c.l.b16 %v1531
      %v1569 = vunpack.c.l.b16 %v1532
      %v1570 = vunpack.c.l.b16 %v1533
      %v1571 = vunpack.c.l.b16 %v1534
      %v1572 = vpack.c.b16 %v1557, %v1556
      %v1573 = vpack.c.b16 %v1559, %v1558
      %v1574 = vpack.c.b16 %v1561, %v1560
      %v1575 = vpack.c.b16 %v1563, %v1562
      %v1576 = vpack.c.b16 %v1565, %v1564
      %v1577 = vpack.c.b16 %v1567, %v1566
      %v1578 = vpack.c.b16 %v1569, %v1568
      %v1579 = vpack.c.b16 %v1571, %v1570
      %1588 = vmatpush.bf16.msra.mxu0 %v1579
      %1589 = vmatpush.bf16.msra.mxu0 %v1578
      %1590 = vmatpush.bf16.msra.mxu0 %v1577
      %1591 = vmatpush.bf16.msra.mxu0 %v1576
      %1592 = vmatpush.bf16.msra.mxu0 %v1575
      %1593 = vmatpush.bf16.msra.mxu0 %v1574
      %1594 = vmatpush.bf16.msra.mxu0 %v1573
      %1595 = vmatpush.bf16.msra.mxu0 %v1572
      %1596 = vmatmul.bf16.gmra.mxu0 %v1027
      %v1597 = vpop.f32.mrf.mxu0
      %v1598 = vadd.f32 %v1538, %v1597
      %v1599 = vpop.f32.mrf.mxu0
      %1600 = vdwg.mxu0
      %v1602 = vsel %vm1271, %v1432, 0
      %v1605 = vsel %vm1271, %v1515, 0
      %1607 = vmatpush.xpose.msra.mxu0 0.0
      %1608 = vmatpush.xpose.msra.mxu0 0.0
      %1609 = vmatpush.xpose.msra.mxu0 0.0
      %1610 = vmatpush.xpose.msra.mxu0 0.0
      %1611 = vmatpush.xpose.msra.mxu0 0.0
      %1612 = vmatpush.xpose.msra.mxu0 0.0
      %1613 = vmatpush.xpose.msra.mxu0 0.0
      %1614 = vmatpush.xpose.msra.mxu0 0.0
      %1615 = vmatpush.xpose.msra.mxu0 0.0
      %1616 = vmatpush.xpose.msra.mxu0 0.0
      %1617 = vmatpush.xpose.msra.mxu0 0.0
      %1618 = vmatpush.xpose.msra.mxu0 0.0
      %1619 = vmatpush.xpose.msra.mxu0 0.0
      %1620 = vmatpush.xpose.msra.mxu0 0.0
      %1621 = vmatpush.xpose.msra.mxu0 0.0
      %1622 = vmatpush.xpose.msra.mxu0 %v1605
      %1623 = vmatmul.f32.gmra.mxu0 %v1602
      %v1624 = vpop.f32.mrf.mxu0
      %v1625 = vadd.f32 0.0, %v1624
      %1626 = vdwg.mxu0
      %v1627 = vmul.f32 %v1625, 0.17677669
      %v1628 = vadd.f32 %v1627, %v1026
      %v1629 = vsel %vm1300, %v1628, -inf
      %1630 = vmax.xlane.f32.xlu0 %v1629
      %v1631 = vpop.xlane.xlu0 %1630
      %v1632 = vsub.f32 %v1628, %v1631
      %v1633 = vmul.f32 %v1632, 1.442695
      %v1634 = vpow.pop %v1633
      %v1635 = vsel %vm1300, %v1634, 0.0
      %1636 = vadd.xlane.f32.xlu0 %v1635
      %v1637 = vpop.xlane.xlu0 %1636
      %v1638 = vrcp.pop %v1637
      %v1639 = vmul.f32 %v1637, %v1638
      %v1640 = vsub.f32 1.0, %v1639
      %v1641 = vmul.f32 %v1638, %v1640
      %v1642 = vadd.f32 %v1638, %v1641
      %vm1643 = vweird.f32 %v1637
      %vm1644 = vweird.f32 %v1638
      %vm1645 = vmor %vm1643, %vm1644
      %v1646 = vsel %vm1645, %v1638, %v1642
      %v1647 = vand.u32 2147483647, %v1637
      %vm1648 = vcmp.eq.f32.partialorder %v1647, 8.507059e+37
      %v1649 = vand.u32 %v1637, 2147483648
      %v1650 = vor.u32 1.1754944e-38, %v1649
      %v1651 = vsel %vm1648, %v1650, %v1646
      %v1652 = vmul.f32 %v1634, %v1651
      %v1653 = vpack.c.bf16 %v1652, %v1652
      %v1654 = vpack.c.bf16 %v1598, %v1598
      %v1656 = vsel %vm1300, %v1653, 0
      %v1659 = vsel %vm1330, %v1654, 0
      %1661 = vmatpush.bf16.msra.mxu0 0
      %1662 = vmatpush.bf16.msra.mxu0 0
      %1663 = vmatpush.bf16.msra.mxu0 0
      %1664 = vmatpush.bf16.msra.mxu0 0
      %1665 = vmatpush.bf16.msra.mxu0 0
      %1666 = vmatpush.bf16.msra.mxu0 0
      %1667 = vmatpush.bf16.msra.mxu0 0
      %1668 = vmatpush.bf16.msra.mxu0 %v1659
      %1669 = vmatmul.bf16.gmra.mxu0 %v1656
      %v1670 = vpop.f32.mrf.mxu0
      %v1671 = vadd.f32 0.0, %v1670
      %v1672 = vpop.f32.mrf.mxu0
      %1673 = vdwg.mxu0
      %v1674 = vpack.c.bf16 %v1671, %v1671
      %s1675 = scalar_lea.vmem %s23, 16
      %v1676 = vld [vmem:[%s1675] sm:$0xf]
      %v1677 = vld [vmem:[%s1675 + $0x4] sm:$0xf]
      %v1678 = vld [vmem:[%s1675 + $0x8] sm:$0xf]
      %v1679 = vld [vmem:[%s1675 + $0xc] sm:$0xf]
      %v1684 = vunpack.c.l.b16 %v1676
      %v1685 = vunpack.c.l.b16 %v1677
      %v1686 = vunpack.c.l.b16 %v1678
      %v1687 = vunpack.c.l.b16 %v1679
      %v1688 = vpack.c.b16 %v1685, %v1684
      %v1689 = vpack.c.b16 %v1687, %v1686
      %v1693 = vsel %vm1271, %v1674, 0
      %1695 = vmatpush.bf16.msra.mxu0 0
      %1696 = vmatpush.bf16.msra.mxu0 0
      %1697 = vmatpush.bf16.msra.mxu0 0
      %1698 = vmatpush.bf16.msra.mxu0 0
      %1699 = vmatpush.bf16.msra.mxu0 0
      %1700 = vmatpush.bf16.msra.mxu0 0
      %1701 = vmatpush.bf16.msra.mxu0 %v1689
      %1702 = vmatpush.bf16.msra.mxu0 %v1688
      %1703 = vmatmul.bf16.gmra.mxu0 %v1693
      %v1704 = vpop.f32.mrf.mxu0
      %v1705 = vadd.f32 0.0, %v1704
      %v1706 = vpop.f32.mrf.mxu0
      %1707 = vdwg.mxu0
      %v1712 = vunpack.c.l.b16 %v1348
      %v1713 = vunpack.c.l.b16 %v1349
      %v1714 = vunpack.c.l.b16 %v1350
      %v1715 = vunpack.c.l.b16 %v1351
      %v1716 = vpack.c.b16 %v1713, %v1712
      %v1717 = vpack.c.b16 %v1715, %v1714
      %v1721 = vsel %vm1271, %v1347, 0
      %1723 = vmatpush.bf16.msra.mxu0 0
      %1724 = vmatpush.bf16.msra.mxu0 0
      %1725 = vmatpush.bf16.msra.mxu0 0
      %1726 = vmatpush.bf16.msra.mxu0 0
      %1727 = vmatpush.bf16.msra.mxu0 0
      %1728 = vmatpush.bf16.msra.mxu0 0
      %1729 = vmatpush.bf16.msra.mxu0 %v1717
      %1730 = vmatpush.bf16.msra.mxu0 %v1716
      %1731 = vmatmul.bf16.gmra.mxu0 %v1721
      %v1732 = vpop.f32.mrf.mxu0
      %v1733 = vadd.f32 %v1705, %v1732
      %v1734 = vpop.f32.mrf.mxu0
      %1735 = vdwg.mxu0
      %s1736 = scalar_lea.vmem %s11, 128
      %v1737 = vld [vmem:[%s1736] sm:$0xf]
      %v1738 = vld [vmem:[%s1736 + $0x4] sm:$0xf]
      %v1739 = vld [vmem:[%s1736 + $0x8] sm:$0xf]
      %v1740 = vld [vmem:[%s1736 + $0xc] sm:$0xf]
      %v1741 = vld [vmem:[%s1736 + $0x10] sm:$0xf]
      %v1742 = vld [vmem:[%s1736 + $0x14] sm:$0xf]
      %v1743 = vld [vmem:[%s1736 + $0x18] sm:$0xf]
      %v1744 = vld [vmem:[%s1736 + $0x1c] sm:$0xf]
      %v1745 = vld [vmem:[%s1736 + $0x20] sm:$0xf]
      %v1746 = vld [vmem:[%s1736 + $0x24] sm:$0xf]
      %v1747 = vld [vmem:[%s1736 + $0x28] sm:$0xf]
      %v1748 = vld [vmem:[%s1736 + $0x2c] sm:$0xf]
      %v1749 = vld [vmem:[%s1736 + $0x30] sm:$0xf]
      %v1750 = vld [vmem:[%s1736 + $0x34] sm:$0xf]
      %v1751 = vld [vmem:[%s1736 + $0x38] sm:$0xf]
      %v1752 = vld [vmem:[%s1736 + $0x3c] sm:$0xf]
      %s1753 = scalar_lea.vmem %s13, 2
      %v1754 = vld [vmem:[%s1753] sm:$0x1]
      %v1756 = vperm.slane %v1754, 0
      %v1774 = vunpack.c.l.b16 %v1737
      %v1775 = vunpack.c.l.b16 %v1738
      %v1776 = vunpack.c.l.b16 %v1739
      %v1777 = vunpack.c.l.b16 %v1740
      %v1778 = vunpack.c.l.b16 %v1741
      %v1779 = vunpack.c.l.b16 %v1742
      %v1780 = vunpack.c.l.b16 %v1743
      %v1781 = vunpack.c.l.b16 %v1744
      %v1782 = vunpack.c.l.b16 %v1745
      %v1783 = vunpack.c.l.b16 %v1746
      %v1784 = vunpack.c.l.b16 %v1747
      %v1785 = vunpack.c.l.b16 %v1748
      %v1786 = vunpack.c.l.b16 %v1749
      %v1787 = vunpack.c.l.b16 %v1750
      %v1788 = vunpack.c.l.b16 %v1751
      %v1789 = vunpack.c.l.b16 %v1752
      %v1790 = vpack.c.b16 %v1775, %v1774
      %v1791 = vpack.c.b16 %v1777, %v1776
      %v1792 = vpack.c.b16 %v1779, %v1778
      %v1793 = vpack.c.b16 %v1781, %v1780
      %v1794 = vpack.c.b16 %v1783, %v1782
      %v1795 = vpack.c.b16 %v1785, %v1784
      %v1796 = vpack.c.b16 %v1787, %v1786
      %v1797 = vpack.c.b16 %v1789, %v1788
      %1806 = vmatpush.bf16.msra.mxu0 %v1797
      %1807 = vmatpush.bf16.msra.mxu0 %v1796
      %1808 = vmatpush.bf16.msra.mxu0 %v1795
      %1809 = vmatpush.bf16.msra.mxu0 %v1794
      %1810 = vmatpush.bf16.msra.mxu0 %v1793
      %1811 = vmatpush.bf16.msra.mxu0 %v1792
      %1812 = vmatpush.bf16.msra.mxu0 %v1791
      %1813 = vmatpush.bf16.msra.mxu0 %v1790
      %1814 = vmatmul.bf16.gmra.mxu0 %v1027
      %v1815 = vpop.f32.mrf.mxu0
      %v1816 = vadd.f32 %v1756, %v1815
      %v1817 = vpop.f32.mrf.mxu0
      %1818 = vdwg.mxu0
      %s1819 = scalar_lea.vmem %s15, 128
      %v1820 = vld [vmem:[%s1819] sm:$0xf]
      %v1821 = vld [vmem:[%s1819 + $0x4] sm:$0xf]
      %v1822 = vld [vmem:[%s1819 + $0x8] sm:$0xf]
      %v1823 = vld [vmem:[%s1819 + $0xc] sm:$0xf]
      %v1824 = vld [vmem:[%s1819 + $0x10] sm:$0xf]
      %v1825 = vld [vmem:[%s1819 + $0x14] sm:$0xf]
      %v1826 = vld [vmem:[%s1819 + $0x18] sm:$0xf]
      %v1827 = vld [vmem:[%s1819 + $0x1c] sm:$0xf]
      %v1828 = vld [vmem:[%s1819 + $0x20] sm:$0xf]
      %v1829 = vld [vmem:[%s1819 + $0x24] sm:$0xf]
      %v1830 = vld [vmem:[%s1819 + $0x28] sm:$0xf]
      %v1831 = vld [vmem:[%s1819 + $0x2c] sm:$0xf]
      %v1832 = vld [vmem:[%s1819 + $0x30] sm:$0xf]
      %v1833 = vld [vmem:[%s1819 + $0x34] sm:$0xf]
      %v1834 = vld [vmem:[%s1819 + $0x38] sm:$0xf]
      %v1835 = vld [vmem:[%s1819 + $0x3c] sm:$0xf]
      %s1836 = scalar_lea.vmem %s17, 2
      %v1837 = vld [vmem:[%s1836] sm:$0x1]
      %v1839 = vperm.slane %v1837, 0
      %v1857 = vunpack.c.l.b16 %v1820
      %v1858 = vunpack.c.l.b16 %v1821
      %v1859 = vunpack.c.l.b16 %v1822
      %v1860 = vunpack.c.l.b16 %v1823
      %v1861 = vunpack.c.l.b16 %v1824
      %v1862 = vunpack.c.l.b16 %v1825
      %v1863 = vunpack.c.l.b16 %v1826
      %v1864 = vunpack.c.l.b16 %v1827
      %v1865 = vunpack.c.l.b16 %v1828
      %v1866 = vunpack.c.l.b16 %v1829
      %v1867 = vunpack.c.l.b16 %v1830
      %v1868 = vunpack.c.l.b16 %v1831
      %v1869 = vunpack.c.l.b16 %v1832
      %v1870 = vunpack.c.l.b16 %v1833
      %v1871 = vunpack.c.l.b16 %v1834
      %v1872 = vunpack.c.l.b16 %v1835
      %v1873 = vpack.c.b16 %v1858, %v1857
      %v1874 = vpack.c.b16 %v1860, %v1859
      %v1875 = vpack.c.b16 %v1862, %v1861
      %v1876 = vpack.c.b16 %v1864, %v1863
      %v1877 = vpack.c.b16 %v1866, %v1865
      %v1878 = vpack.c.b16 %v1868, %v1867
      %v1879 = vpack.c.b16 %v1870, %v1869
      %v1880 = vpack.c.b16 %v1872, %v1871
      %1889 = vmatpush.bf16.msra.mxu0 %v1880
      %1890 = vmatpush.bf16.msra.mxu0 %v1879
      %1891 = vmatpush.bf16.msra.mxu0 %v1878
      %1892 = vmatpush.bf16.msra.mxu0 %v1877
      %1893 = vmatpush.bf16.msra.mxu0 %v1876
      %1894 = vmatpush.bf16.msra.mxu0 %v1875
      %1895 = vmatpush.bf16.msra.mxu0 %v1874
      %1896 = vmatpush.bf16.msra.mxu0 %v1873
      %1897 = vmatmul.bf16.gmra.mxu0 %v1027
      %v1898 = vpop.f32.mrf.mxu0
      %v1899 = vadd.f32 %v1839, %v1898
      %v1900 = vpop.f32.mrf.mxu0
      %1901 = vdwg.mxu0
      %s1902 = scalar_lea.vmem %s19, 128
      %v1903 = vld [vmem:[%s1902] sm:$0xf]
      %v1904 = vld [vmem:[%s1902 + $0x4] sm:$0xf]
      %v1905 = vld [vmem:[%s1902 + $0x8] sm:$0xf]
      %v1906 = vld [vmem:[%s1902 + $0xc] sm:$0xf]
      %v1907 = vld [vmem:[%s1902 + $0x10] sm:$0xf]
      %v1908 = vld [vmem:[%s1902 + $0x14] sm:$0xf]
      %v1909 = vld [vmem:[%s1902 + $0x18] sm:$0xf]
      %v1910 = vld [vmem:[%s1902 + $0x1c] sm:$0xf]
      %v1911 = vld [vmem:[%s1902 + $0x20] sm:$0xf]
      %v1912 = vld [vmem:[%s1902 + $0x24] sm:$0xf]
      %v1913 = vld [vmem:[%s1902 + $0x28] sm:$0xf]
      %v1914 = vld [vmem:[%s1902 + $0x2c] sm:$0xf]
      %v1915 = vld [vmem:[%s1902 + $0x30] sm:$0xf]
      %v1916 = vld [vmem:[%s1902 + $0x34] sm:$0xf]
      %v1917 = vld [vmem:[%s1902 + $0x38] sm:$0xf]
      %v1918 = vld [vmem:[%s1902 + $0x3c] sm:$0xf]
      %s1919 = scalar_lea.vmem %s21, 2
      %v1920 = vld [vmem:[%s1919] sm:$0x1]
      %v1922 = vperm.slane %v1920, 0
      %v1940 = vunpack.c.l.b16 %v1903
      %v1941 = vunpack.c.l.b16 %v1904
      %v1942 = vunpack.c.l.b16 %v1905
      %v1943 = vunpack.c.l.b16 %v1906
      %v1944 = vunpack.c.l.b16 %v1907
      %v1945 = vunpack.c.l.b16 %v1908
      %v1946 = vunpack.c.l.b16 %v1909
      %v1947 = vunpack.c.l.b16 %v1910
      %v1948 = vunpack.c.l.b16 %v1911
      %v1949 = vunpack.c.l.b16 %v1912
      %v1950 = vunpack.c.l.b16 %v1913
      %v1951 = vunpack.c.l.b16 %v1914
      %v1952 = vunpack.c.l.b16 %v1915
      %v1953 = vunpack.c.l.b16 %v1916
      %v1954 = vunpack.c.l.b16 %v1917
      %v1955 = vunpack.c.l.b16 %v1918
      %v1956 = vpack.c.b16 %v1941, %v1940
      %v1957 = vpack.c.b16 %v1943, %v1942
      %v1958 = vpack.c.b16 %v1945, %v1944
      %v1959 = vpack.c.b16 %v1947, %v1946
      %v1960 = vpack.c.b16 %v1949, %v1948
      %v1961 = vpack.c.b16 %v1951, %v1950
      %v1962 = vpack.c.b16 %v1953, %v1952
      %v1963 = vpack.c.b16 %v1955, %v1954
      %1972 = vmatpush.bf16.msra.mxu0 %v1963
      %1973 = vmatpush.bf16.msra.mxu0 %v1962
      %1974 = vmatpush.bf16.msra.mxu0 %v1961
      %1975 = vmatpush.bf16.msra.mxu0 %v1960
      %1976 = vmatpush.bf16.msra.mxu0 %v1959
      %1977 = vmatpush.bf16.msra.mxu0 %v1958
      %1978 = vmatpush.bf16.msra.mxu0 %v1957
      %1979 = vmatpush.bf16.msra.mxu0 %v1956
      %1980 = vmatmul.bf16.gmra.mxu0 %v1027
      %v1981 = vpop.f32.mrf.mxu0
      %v1982 = vadd.f32 %v1922, %v1981
      %v1983 = vpop.f32.mrf.mxu0
      %1984 = vdwg.mxu0
      %v1986 = vsel %vm1271, %v1816, 0
      %v1989 = vsel %vm1271, %v1899, 0
      %1991 = vmatpush.xpose.msra.mxu0 0.0
      %1992 = vmatpush.xpose.msra.mxu0 0.0
      %1993 = vmatpush.xpose.msra.mxu0 0.0
      %1994 = vmatpush.xpose.msra.mxu0 0.0
      %1995 = vmatpush.xpose.msra.mxu0 0.0
      %1996 = vmatpush.xpose.msra.mxu0 0.0
      %1997 = vmatpush.xpose.msra.mxu0 0.0
      %1998 = vmatpush.xpose.msra.mxu0 0.0
      %1999 = vmatpush.xpose.msra.mxu0 0.0
      %2000 = vmatpush.xpose.msra.mxu0 0.0
      %2001 = vmatpush.xpose.msra.mxu0 0.0
      %2002 = vmatpush.xpose.msra.mxu0 0.0
      %2003 = vmatpush.xpose.msra.mxu0 0.0
      %2004 = vmatpush.xpose.msra.mxu0 0.0
      %2005 = vmatpush.xpose.msra.mxu0 0.0
      %2006 = vmatpush.xpose.msra.mxu0 %v1989
      %2007 = vmatmul.f32.gmra.mxu0 %v1986
      %v2008 = vpop.f32.mrf.mxu0
      %v2009 = vadd.f32 0.0, %v2008
      %2010 = vdwg.mxu0
      %v2011 = vmul.f32 %v2009, 0.17677669
      %v2012 = vadd.f32 %v2011, %v1026
      %v2013 = vsel %vm1300, %v2012, -inf
      %2014 = vmax.xlane.f32.xlu0 %v2013
      %v2015 = vpop.xlane.xlu0 %2014
      %v2016 = vsub.f32 %v2012, %v2015
      %v2017 = vmul.f32 %v2016, 1.442695
      %v2018 = vpow.pop %v2017
      %v2019 = vsel %vm1300, %v2018, 0.0
      %2020 = vadd.xlane.f32.xlu0 %v2019
      %v2021 = vpop.xlane.xlu0 %2020
      %v2022 = vrcp.pop %v2021
      %v2023 = vmul.f32 %v2021, %v2022
      %v2024 = vsub.f32 1.0, %v2023
      %v2025 = vmul.f32 %v2022, %v2024
      %v2026 = vadd.f32 %v2022, %v2025
      %vm2027 = vweird.f32 %v2021
      %vm2028 = vweird.f32 %v2022
      %vm2029 = vmor %vm2027, %vm2028
      %v2030 = vsel %vm2029, %v2022, %v2026
      %v2031 = vand.u32 2147483647, %v2021
      %vm2032 = vcmp.eq.f32.partialorder %v2031, 8.507059e+37
      %v2033 = vand.u32 %v2021, 2147483648
      %v2034 = vor.u32 1.1754944e-38, %v2033
      %v2035 = vsel %vm2032, %v2034, %v2030
      %v2036 = vmul.f32 %v2018, %v2035
      %v2037 = vpack.c.bf16 %v2036, %v2036
      %v2038 = vpack.c.bf16 %v1982, %v1982
      %v2040 = vsel %vm1300, %v2037, 0
      %v2043 = vsel %vm1330, %v2038, 0
      %2045 = vmatpush.bf16.msra.mxu0 0
      %2046 = vmatpush.bf16.msra.mxu0 0
      %2047 = vmatpush.bf16.msra.mxu0 0
      %2048 = vmatpush.bf16.msra.mxu0 0
      %2049 = vmatpush.bf16.msra.mxu0 0
      %2050 = vmatpush.bf16.msra.mxu0 0
      %2051 = vmatpush.bf16.msra.mxu0 0
      %2052 = vmatpush.bf16.msra.mxu0 %v2043
      %2053 = vmatmul.bf16.gmra.mxu0 %v2040
      %v2054 = vpop.f32.mrf.mxu0
      %v2055 = vadd.f32 0.0, %v2054
      %v2056 = vpop.f32.mrf.mxu0
      %2057 = vdwg.mxu0
      %v2058 = vpack.c.bf16 %v2055, %v2055
      %s2059 = scalar_lea.vmem %s23, 32
      %v2060 = vld [vmem:[%s2059] sm:$0xf]
      %v2061 = vld [vmem:[%s2059 + $0x4] sm:$0xf]
      %v2062 = vld [vmem:[%s2059 + $0x8] sm:$0xf]
      %v2063 = vld [vmem:[%s2059 + $0xc] sm:$0xf]
      %v2068 = vunpack.c.l.b16 %v2060
      %v2069 = vunpack.c.l.b16 %v2061
      %v2070 = vunpack.c.l.b16 %v2062
      %v2071 = vunpack.c.l.b16 %v2063
      %v2072 = vpack.c.b16 %v2069, %v2068
      %v2073 = vpack.c.b16 %v2071, %v2070
      %v2077 = vsel %vm1271, %v2058, 0
      %2079 = vmatpush.bf16.msra.mxu0 0
      %2080 = vmatpush.bf16.msra.mxu0 0
      %2081 = vmatpush.bf16.msra.mxu0 0
      %2082 = vmatpush.bf16.msra.mxu0 0
      %2083 = vmatpush.bf16.msra.mxu0 0
      %2084 = vmatpush.bf16.msra.mxu0 0
      %2085 = vmatpush.bf16.msra.mxu0 %v2073
      %2086 = vmatpush.bf16.msra.mxu0 %v2072
      %2087 = vmatmul.bf16.gmra.mxu0 %v2077
      %v2088 = vpop.f32.mrf.mxu0
      %v2089 = vadd.f32 0.0, %v2088
      %v2090 = vpop.f32.mrf.mxu0
      %2091 = vdwg.mxu0
      %v2092 = vadd.f32 %v1733, %v2089
      %s2093 = scalar_lea.vmem %s11, 192
      %v2094 = vld [vmem:[%s2093] sm:$0xf]
      %v2095 = vld [vmem:[%s2093 + $0x4] sm:$0xf]
      %v2096 = vld [vmem:[%s2093 + $0x8] sm:$0xf]
      %v2097 = vld [vmem:[%s2093 + $0xc] sm:$0xf]
      %v2098 = vld [vmem:[%s2093 + $0x10] sm:$0xf]
      %v2099 = vld [vmem:[%s2093 + $0x14] sm:$0xf]
      %v2100 = vld [vmem:[%s2093 + $0x18] sm:$0xf]
      %v2101 = vld [vmem:[%s2093 + $0x1c] sm:$0xf]
      %v2102 = vld [vmem:[%s2093 + $0x20] sm:$0xf]
      %v2103 = vld [vmem:[%s2093 + $0x24] sm:$0xf]
      %v2104 = vld [vmem:[%s2093 + $0x28] sm:$0xf]
      %v2105 = vld [vmem:[%s2093 + $0x2c] sm:$0xf]
      %v2106 = vld [vmem:[%s2093 + $0x30] sm:$0xf]
      %v2107 = vld [vmem:[%s2093 + $0x34] sm:$0xf]
      %v2108 = vld [vmem:[%s2093 + $0x38] sm:$0xf]
      %v2109 = vld [vmem:[%s2093 + $0x3c] sm:$0xf]
      %s2110 = scalar_lea.vmem %s13, 3
      %v2111 = vld [vmem:[%s2110] sm:$0x1]
      %v2113 = vperm.slane %v2111, 0
      %v2131 = vunpack.c.l.b16 %v2094
      %v2132 = vunpack.c.l.b16 %v2095
      %v2133 = vunpack.c.l.b16 %v2096
      %v2134 = vunpack.c.l.b16 %v2097
      %v2135 = vunpack.c.l.b16 %v2098
      %v2136 = vunpack.c.l.b16 %v2099
      %v2137 = vunpack.c.l.b16 %v2100
      %v2138 = vunpack.c.l.b16 %v2101
      %v2139 = vunpack.c.l.b16 %v2102
      %v2140 = vunpack.c.l.b16 %v2103
      %v2141 = vunpack.c.l.b16 %v2104
      %v2142 = vunpack.c.l.b16 %v2105
      %v2143 = vunpack.c.l.b16 %v2106
      %v2144 = vunpack.c.l.b16 %v2107
      %v2145 = vunpack.c.l.b16 %v2108
      %v2146 = vunpack.c.l.b16 %v2109
      %v2147 = vpack.c.b16 %v2132, %v2131
      %v2148 = vpack.c.b16 %v2134, %v2133
      %v2149 = vpack.c.b16 %v2136, %v2135
      %v2150 = vpack.c.b16 %v2138, %v2137
      %v2151 = vpack.c.b16 %v2140, %v2139
      %v2152 = vpack.c.b16 %v2142, %v2141
      %v2153 = vpack.c.b16 %v2144, %v2143
      %v2154 = vpack.c.b16 %v2146, %v2145
      %2163 = vmatpush.bf16.msra.mxu0 %v2154
      %2164 = vmatpush.bf16.msra.mxu0 %v2153
      %2165 = vmatpush.bf16.msra.mxu0 %v2152
      %2166 = vmatpush.bf16.msra.mxu0 %v2151
      %2167 = vmatpush.bf16.msra.mxu0 %v2150
      %2168 = vmatpush.bf16.msra.mxu0 %v2149
      %2169 = vmatpush.bf16.msra.mxu0 %v2148
      %2170 = vmatpush.bf16.msra.mxu0 %v2147
      %2171 = vmatmul.bf16.gmra.mxu0 %v1027
      %v2172 = vpop.f32.mrf.mxu0
      %v2173 = vadd.f32 %v2113, %v2172
      %v2174 = vpop.f32.mrf.mxu0
      %2175 = vdwg.mxu0
      %s2176 = scalar_lea.vmem %s15, 192
      %v2177 = vld [vmem:[%s2176] sm:$0xf]
      %v2178 = vld [vmem:[%s2176 + $0x4] sm:$0xf]
      %v2179 = vld [vmem:[%s2176 + $0x8] sm:$0xf]
      %v2180 = vld [vmem:[%s2176 + $0xc] sm:$0xf]
      %v2181 = vld [vmem:[%s2176 + $0x10] sm:$0xf]
      %v2182 = vld [vmem:[%s2176 + $0x14] sm:$0xf]
      %v2183 = vld [vmem:[%s2176 + $0x18] sm:$0xf]
      %v2184 = vld [vmem:[%s2176 + $0x1c] sm:$0xf]
      %v2185 = vld [vmem:[%s2176 + $0x20] sm:$0xf]
      %v2186 = vld [vmem:[%s2176 + $0x24] sm:$0xf]
      %v2187 = vld [vmem:[%s2176 + $0x28] sm:$0xf]
      %v2188 = vld [vmem:[%s2176 + $0x2c] sm:$0xf]
      %v2189 = vld [vmem:[%s2176 + $0x30] sm:$0xf]
      %v2190 = vld [vmem:[%s2176 + $0x34] sm:$0xf]
      %v2191 = vld [vmem:[%s2176 + $0x38] sm:$0xf]
      %v2192 = vld [vmem:[%s2176 + $0x3c] sm:$0xf]
      %s2193 = scalar_lea.vmem %s17, 3
      %v2194 = vld [vmem:[%s2193] sm:$0x1]
      %v2196 = vperm.slane %v2194, 0
      %v2214 = vunpack.c.l.b16 %v2177
      %v2215 = vunpack.c.l.b16 %v2178
      %v2216 = vunpack.c.l.b16 %v2179
      %v2217 = vunpack.c.l.b16 %v2180
      %v2218 = vunpack.c.l.b16 %v2181
      %v2219 = vunpack.c.l.b16 %v2182
      %v2220 = vunpack.c.l.b16 %v2183
      %v2221 = vunpack.c.l.b16 %v2184
      %v2222 = vunpack.c.l.b16 %v2185
      %v2223 = vunpack.c.l.b16 %v2186
      %v2224 = vunpack.c.l.b16 %v2187
      %v2225 = vunpack.c.l.b16 %v2188
      %v2226 = vunpack.c.l.b16 %v2189
      %v2227 = vunpack.c.l.b16 %v2190
      %v2228 = vunpack.c.l.b16 %v2191
      %v2229 = vunpack.c.l.b16 %v2192
      %v2230 = vpack.c.b16 %v2215, %v2214
      %v2231 = vpack.c.b16 %v2217, %v2216
      %v2232 = vpack.c.b16 %v2219, %v2218
      %v2233 = vpack.c.b16 %v2221, %v2220
      %v2234 = vpack.c.b16 %v2223, %v2222
      %v2235 = vpack.c.b16 %v2225, %v2224
      %v2236 = vpack.c.b16 %v2227, %v2226
      %v2237 = vpack.c.b16 %v2229, %v2228
      %2246 = vmatpush.bf16.msra.mxu0 %v2237
      %2247 = vmatpush.bf16.msra.mxu0 %v2236
      %2248 = vmatpush.bf16.msra.mxu0 %v2235
      %2249 = vmatpush.bf16.msra.mxu0 %v2234
      %2250 = vmatpush.bf16.msra.mxu0 %v2233
      %2251 = vmatpush.bf16.msra.mxu0 %v2232
      %2252 = vmatpush.bf16.msra.mxu0 %v2231
      %2253 = vmatpush.bf16.msra.mxu0 %v2230
      %2254 = vmatmul.bf16.gmra.mxu0 %v1027
      %v2255 = vpop.f32.mrf.mxu0
      %v2256 = vadd.f32 %v2196, %v2255
      %v2257 = vpop.f32.mrf.mxu0
      %2258 = vdwg.mxu0
      %s2259 = scalar_lea.vmem %s19, 192
      %v2260 = vld [vmem:[%s2259] sm:$0xf]
      %v2261 = vld [vmem:[%s2259 + $0x4] sm:$0xf]
      %v2262 = vld [vmem:[%s2259 + $0x8] sm:$0xf]
      %v2263 = vld [vmem:[%s2259 + $0xc] sm:$0xf]
      %v2264 = vld [vmem:[%s2259 + $0x10] sm:$0xf]
      %v2265 = vld [vmem:[%s2259 + $0x14] sm:$0xf]
      %v2266 = vld [vmem:[%s2259 + $0x18] sm:$0xf]
      %v2267 = vld [vmem:[%s2259 + $0x1c] sm:$0xf]
      %v2268 = vld [vmem:[%s2259 + $0x20] sm:$0xf]
      %v2269 = vld [vmem:[%s2259 + $0x24] sm:$0xf]
      %v2270 = vld [vmem:[%s2259 + $0x28] sm:$0xf]
      %v2271 = vld [vmem:[%s2259 + $0x2c] sm:$0xf]
      %v2272 = vld [vmem:[%s2259 + $0x30] sm:$0xf]
      %v2273 = vld [vmem:[%s2259 + $0x34] sm:$0xf]
      %v2274 = vld [vmem:[%s2259 + $0x38] sm:$0xf]
      %v2275 = vld [vmem:[%s2259 + $0x3c] sm:$0xf]
      %s2276 = scalar_lea.vmem %s21, 3
      %v2277 = vld [vmem:[%s2276] sm:$0x1]
      %v2279 = vperm.slane %v2277, 0
      %v2297 = vunpack.c.l.b16 %v2260
      %v2298 = vunpack.c.l.b16 %v2261
      %v2299 = vunpack.c.l.b16 %v2262
      %v2300 = vunpack.c.l.b16 %v2263
      %v2301 = vunpack.c.l.b16 %v2264
      %v2302 = vunpack.c.l.b16 %v2265
      %v2303 = vunpack.c.l.b16 %v2266
      %v2304 = vunpack.c.l.b16 %v2267
      %v2305 = vunpack.c.l.b16 %v2268
      %v2306 = vunpack.c.l.b16 %v2269
      %v2307 = vunpack.c.l.b16 %v2270
      %v2308 = vunpack.c.l.b16 %v2271
      %v2309 = vunpack.c.l.b16 %v2272
      %v2310 = vunpack.c.l.b16 %v2273
      %v2311 = vunpack.c.l.b16 %v2274
      %v2312 = vunpack.c.l.b16 %v2275
      %v2313 = vpack.c.b16 %v2298, %v2297
      %v2314 = vpack.c.b16 %v2300, %v2299
      %v2315 = vpack.c.b16 %v2302, %v2301
      %v2316 = vpack.c.b16 %v2304, %v2303
      %v2317 = vpack.c.b16 %v2306, %v2305
      %v2318 = vpack.c.b16 %v2308, %v2307
      %v2319 = vpack.c.b16 %v2310, %v2309
      %v2320 = vpack.c.b16 %v2312, %v2311
      %2329 = vmatpush.bf16.msra.mxu0 %v2320
      %2330 = vmatpush.bf16.msra.mxu0 %v2319
      %2331 = vmatpush.bf16.msra.mxu0 %v2318
      %2332 = vmatpush.bf16.msra.mxu0 %v2317
      %2333 = vmatpush.bf16.msra.mxu0 %v2316
      %2334 = vmatpush.bf16.msra.mxu0 %v2315
      %2335 = vmatpush.bf16.msra.mxu0 %v2314
      %2336 = vmatpush.bf16.msra.mxu0 %v2313
      %2337 = vmatmul.bf16.gmra.mxu0 %v1027
      %v2338 = vpop.f32.mrf.mxu0
      %v2339 = vadd.f32 %v2279, %v2338
      %v2340 = vpop.f32.mrf.mxu0
      %2341 = vdwg.mxu0
      %v2343 = vsel %vm1271, %v2173, 0
      %v2346 = vsel %vm1271, %v2256, 0
      %2348 = vmatpush.xpose.msra.mxu0 0.0
      %2349 = vmatpush.xpose.msra.mxu0 0.0
      %2350 = vmatpush.xpose.msra.mxu0 0.0
      %2351 = vmatpush.xpose.msra.mxu0 0.0
      %2352 = vmatpush.xpose.msra.mxu0 0.0
      %2353 = vmatpush.xpose.msra.mxu0 0.0
      %2354 = vmatpush.xpose.msra.mxu0 0.0
      %2355 = vmatpush.xpose.msra.mxu0 0.0
      %2356 = vmatpush.xpose.msra.mxu0 0.0
      %2357 = vmatpush.xpose.msra.mxu0 0.0
      %2358 = vmatpush.xpose.msra.mxu0 0.0
      %2359 = vmatpush.xpose.msra.mxu0 0.0
      %2360 = vmatpush.xpose.msra.mxu0 0.0
      %2361 = vmatpush.xpose.msra.mxu0 0.0
      %2362 = vmatpush.xpose.msra.mxu0 0.0
      %2363 = vmatpush.xpose.msra.mxu0 %v2346
      %2364 = vmatmul.f32.gmra.mxu0 %v2343
      %v2365 = vpop.f32.mrf.mxu0
      %v2366 = vadd.f32 0.0, %v2365
      %2367 = vdwg.mxu0
      %v2368 = vmul.f32 %v2366, 0.17677669
      %v2369 = vadd.f32 %v2368, %v1026
      %v2370 = vsel %vm1300, %v2369, -inf
      %2371 = vmax.xlane.f32.xlu0 %v2370
      %v2372 = vpop.xlane.xlu0 %2371
      %v2373 = vsub.f32 %v2369, %v2372
      %v2374 = vmul.f32 %v2373, 1.442695
      %v2375 = vpow.pop %v2374
      %v2376 = vsel %vm1300, %v2375, 0.0
      %2377 = vadd.xlane.f32.xlu0 %v2376
      %v2378 = vpop.xlane.xlu0 %2377
      %v2379 = vrcp.pop %v2378
      %v2380 = vmul.f32 %v2378, %v2379
      %v2381 = vsub.f32 1.0, %v2380
      %v2382 = vmul.f32 %v2379, %v2381
      %v2383 = vadd.f32 %v2379, %v2382
      %vm2384 = vweird.f32 %v2378
      %vm2385 = vweird.f32 %v2379
      %vm2386 = vmor %vm2384, %vm2385
      %v2387 = vsel %vm2386, %v2379, %v2383
      %v2388 = vand.u32 2147483647, %v2378
      %vm2389 = vcmp.eq.f32.partialorder %v2388, 8.507059e+37
      %v2390 = vand.u32 %v2378, 2147483648
      %v2391 = vor.u32 1.1754944e-38, %v2390
      %v2392 = vsel %vm2389, %v2391, %v2387
      %v2393 = vmul.f32 %v2375, %v2392
      %v2394 = vpack.c.bf16 %v2393, %v2393
      %v2395 = vpack.c.bf16 %v2339, %v2339
      %v2397 = vsel %vm1300, %v2394, 0
      %v2400 = vsel %vm1330, %v2395, 0
      %2402 = vmatpush.bf16.msra.mxu0 0
      %2403 = vmatpush.bf16.msra.mxu0 0
      %2404 = vmatpush.bf16.msra.mxu0 0
      %2405 = vmatpush.bf16.msra.mxu0 0
      %2406 = vmatpush.bf16.msra.mxu0 0
      %2407 = vmatpush.bf16.msra.mxu0 0
      %2408 = vmatpush.bf16.msra.mxu0 0
      %2409 = vmatpush.bf16.msra.mxu0 %v2400
      %2410 = vmatmul.bf16.gmra.mxu0 %v2397
      %v2411 = vpop.f32.mrf.mxu0
      %v2412 = vadd.f32 0.0, %v2411
      %v2413 = vpop.f32.mrf.mxu0
      %2414 = vdwg.mxu0
      %v2415 = vpack.c.bf16 %v2412, %v2412
      %s2416 = scalar_lea.vmem %s23, 48
      %v2417 = vld [vmem:[%s2416] sm:$0xf]
      %v2418 = vld [vmem:[%s2416 + $0x4] sm:$0xf]
      %v2419 = vld [vmem:[%s2416 + $0x8] sm:$0xf]
      %v2420 = vld [vmem:[%s2416 + $0xc] sm:$0xf]
      %v2425 = vunpack.c.l.b16 %v2417
      %v2426 = vunpack.c.l.b16 %v2418
      %v2427 = vunpack.c.l.b16 %v2419
      %v2428 = vunpack.c.l.b16 %v2420
      %v2429 = vpack.c.b16 %v2426, %v2425
      %v2430 = vpack.c.b16 %v2428, %v2427
      %v2434 = vsel %vm1271, %v2415, 0
      %2436 = vmatpush.bf16.msra.mxu0 0
      %2437 = vmatpush.bf16.msra.mxu0 0
      %2438 = vmatpush.bf16.msra.mxu0 0
      %2439 = vmatpush.bf16.msra.mxu0 0
      %2440 = vmatpush.bf16.msra.mxu0 0
      %2441 = vmatpush.bf16.msra.mxu0 0
      %2442 = vmatpush.bf16.msra.mxu0 %v2430
      %2443 = vmatpush.bf16.msra.mxu0 %v2429
      %2444 = vmatmul.bf16.gmra.mxu0 %v2434
      %v2445 = vpop.f32.mrf.mxu0
      %v2446 = vadd.f32 0.0, %v2445
      %v2447 = vpop.f32.mrf.mxu0
      %2448 = vdwg.mxu0
      %v2449 = vadd.f32 %v2092, %v2446
      %v2450 = vld [vmem:[%s25] sm:$0x1]
      %v2452 = vperm.slane %v2450, 0
      %v2454 = vadd.f32 %v2449, %v2452
      %v2455 = vadd.f32 %v1025, %v2454
      %v2456 = vld [vmem:[%s43] sm:$0x1]
      %v2457 = vld [vmem:[%s45] sm:$0x1]
      %2458 = vadd.xlane.f32.xlu0 %v2455
      %v2459 = vpop.xlane.xlu0 %2458
      %v2460 = vrcp.pop 128.0
      %v2461 = vmul.f32 128.0, %v2460
      %v2462 = vsub.f32 1.0, %v2461
      %v2463 = vmul.f32 %v2460, %v2462
      %v2464 = vadd.f32 %v2460, %v2463
      %vm2465 = vweird.f32 %v2460
      %v2466 = vsel %vm2465, %v2460, %v2464
      %v2467 = vmul.f32 %v2459, %v2466
      %v2468 = vsub.f32 %v2455, %v2467
      %v2469 = vmul.f32 %v2468, %v2468
      %2470 = vadd.xlane.f32.xlu0 %v2469
      %v2471 = vpop.xlane.xlu0 %2470
      %v2472 = vmul.f32 %v2471, %v2466
      %v2473 = vadd.f32 %v2472, 1e-05
      %v2474 = vrsqrt.pop %v2473
      %v2475 = vmul.f32 %v2474, %v2473
      %v2476 = vmul.f32 %v2475, %v2474
      %v2477 = vmul.f32 0.5, %v2476
      %v2478 = vsub.f32 1.5, %v2477
      %v2479 = vmul.f32 %v2474, %v2478
      %vm2480 = vweird.f32 %v2473
      %vm2481 = vweird.f32 %v2474
      %vm2482 = vmor %vm2480, %vm2481
      %v2483 = vsel %vm2482, %v2474, %v2479
      %v2484 = vmul.f32 %v2468, %v2483
      %v2486 = vperm.slane %v2456, 0
      %v2488 = vmul.f32 %v2484, %v2486
      %v2490 = vperm.slane %v2457, 0
      %v2492 = vadd.f32 %v2488, %v2490
      %v2493 = vld [vmem:[%s27] sm:$0xf]
      %v2494 = vld [vmem:[%s27 + $0x4] sm:$0xf]
      %v2495 = vld [vmem:[%s27 + $0x8] sm:$0xf]
      %v2496 = vld [vmem:[%s27 + $0xc] sm:$0xf]
      %v2497 = vld [vmem:[%s27 + $0x10] sm:$0xf]
      %v2498 = vld [vmem:[%s27 + $0x14] sm:$0xf]
      %v2499 = vld [vmem:[%s27 + $0x18] sm:$0xf]
      %v2500 = vld [vmem:[%s27 + $0x1c] sm:$0xf]
      %v2501 = vld [vmem:[%s27 + $0x20] sm:$0xf]
      %v2502 = vld [vmem:[%s27 + $0x24] sm:$0xf]
      %v2503 = vld [vmem:[%s27 + $0x28] sm:$0xf]
      %v2504 = vld [vmem:[%s27 + $0x2c] sm:$0xf]
      %v2505 = vld [vmem:[%s27 + $0x30] sm:$0xf]
      %v2506 = vld [vmem:[%s27 + $0x34] sm:$0xf]
      %v2507 = vld [vmem:[%s27 + $0x38] sm:$0xf]
      %v2508 = vld [vmem:[%s27 + $0x3c] sm:$0xf]
      %v2509 = vld [vmem:[%s29] sm:$0x1]
      %v2526 = vunpack.c.l.b16 %v2493
      %v2527 = vunpack.c.l.b16 %v2494
      %v2528 = vunpack.c.l.b16 %v2495
      %v2529 = vunpack.c.l.b16 %v2496
      %v2530 = vunpack.c.l.b16 %v2497
      %v2531 = vunpack.c.l.b16 %v2498
      %v2532 = vunpack.c.l.b16 %v2499
      %v2533 = vunpack.c.l.b16 %v2500
      %v2534 = vunpack.c.l.b16 %v2501
      %v2535 = vunpack.c.l.b16 %v2502
      %v2536 = vunpack.c.l.b16 %v2503
      %v2537 = vunpack.c.l.b16 %v2504
      %v2538 = vunpack.c.l.b16 %v2505
      %v2539 = vunpack.c.l.b16 %v2506
      %v2540 = vunpack.c.l.b16 %v2507
      %v2541 = vunpack.c.l.b16 %v2508
      %v2542 = vpack.c.b16 %v2527, %v2526
      %v2543 = vpack.c.b16 %v2529, %v2528
      %v2544 = vpack.c.b16 %v2531, %v2530
      %v2545 = vpack.c.b16 %v2533, %v2532
      %v2546 = vpack.c.b16 %v2535, %v2534
      %v2547 = vpack.c.b16 %v2537, %v2536
      %v2548 = vpack.c.b16 %v2539, %v2538
      %v2549 = vpack.c.b16 %v2541, %v2540
      %2558 = vmatpush.bf16.msra.mxu0 %v2549
      %2559 = vmatpush.bf16.msra.mxu0 %v2548
      %2560 = vmatpush.bf16.msra.mxu0 %v2547
      %2561 = vmatpush.bf16.msra.mxu0 %v2546
      %2562 = vmatpush.bf16.msra.mxu0 %v2545
      %2563 = vmatpush.bf16.msra.mxu0 %v2544
      %2564 = vmatpush.bf16.msra.mxu0 %v2543
      %2565 = vmatpush.bf16.msra.mxu0 %v2542
      %2566 = vmatmul.bf16.gmra.mxu0 %v1024
      %v2567 = vpop.f32.mrf.mxu0
      %v2568 = vadd.f32 %v2509, %v2567
      %v2569 = vpop.f32.mrf.mxu0
      %2570 = vdwg.mxu0
      %v2571 = vpack.c.bf16 %v2568, %v2568
      %v2572 = vld [vmem:[%s31] sm:$0xf]
      %v2573 = vld [vmem:[%s31 + $0x4] sm:$0xf]
      %v2574 = vld [vmem:[%s31 + $0x8] sm:$0xf]
      %v2575 = vld [vmem:[%s31 + $0xc] sm:$0xf]
      %v2576 = vld [vmem:[%s31 + $0x10] sm:$0xf]
      %v2577 = vld [vmem:[%s31 + $0x14] sm:$0xf]
      %v2578 = vld [vmem:[%s31 + $0x18] sm:$0xf]
      %v2579 = vld [vmem:[%s31 + $0x1c] sm:$0xf]
      %v2580 = vld [vmem:[%s31 + $0x20] sm:$0xf]
      %v2581 = vld [vmem:[%s31 + $0x24] sm:$0xf]
      %v2582 = vld [vmem:[%s31 + $0x28] sm:$0xf]
      %v2583 = vld [vmem:[%s31 + $0x2c] sm:$0xf]
      %v2584 = vld [vmem:[%s31 + $0x30] sm:$0xf]
      %v2585 = vld [vmem:[%s31 + $0x34] sm:$0xf]
      %v2586 = vld [vmem:[%s31 + $0x38] sm:$0xf]
      %v2587 = vld [vmem:[%s31 + $0x3c] sm:$0xf]
      %v2588 = vld [vmem:[%s33] sm:$0x1]
      %v2605 = vunpack.c.l.b16 %v2572
      %v2606 = vunpack.c.l.b16 %v2573
      %v2607 = vunpack.c.l.b16 %v2574
      %v2608 = vunpack.c.l.b16 %v2575
      %v2609 = vunpack.c.l.b16 %v2576
      %v2610 = vunpack.c.l.b16 %v2577
      %v2611 = vunpack.c.l.b16 %v2578
      %v2612 = vunpack.c.l.b16 %v2579
      %v2613 = vunpack.c.l.b16 %v2580
      %v2614 = vunpack.c.l.b16 %v2581
      %v2615 = vunpack.c.l.b16 %v2582
      %v2616 = vunpack.c.l.b16 %v2583
      %v2617 = vunpack.c.l.b16 %v2584
      %v2618 = vunpack.c.l.b16 %v2585
      %v2619 = vunpack.c.l.b16 %v2586
      %v2620 = vunpack.c.l.b16 %v2587
      %v2621 = vpack.c.b16 %v2606, %v2605
      %v2622 = vpack.c.b16 %v2608, %v2607
      %v2623 = vpack.c.b16 %v2610, %v2609
      %v2624 = vpack.c.b16 %v2612, %v2611
      %v2625 = vpack.c.b16 %v2614, %v2613
      %v2626 = vpack.c.b16 %v2616, %v2615
      %v2627 = vpack.c.b16 %v2618, %v2617
      %v2628 = vpack.c.b16 %v2620, %v2619
      %2637 = vmatpush.bf16.msra.mxu0 %v2628
      %2638 = vmatpush.bf16.msra.mxu0 %v2627
      %2639 = vmatpush.bf16.msra.mxu0 %v2626
      %2640 = vmatpush.bf16.msra.mxu0 %v2625
      %2641 = vmatpush.bf16.msra.mxu0 %v2624
      %2642 = vmatpush.bf16.msra.mxu0 %v2623
      %2643 = vmatpush.bf16.msra.mxu0 %v2622
      %2644 = vmatpush.bf16.msra.mxu0 %v2621
      %2645 = vmatmul.bf16.gmra.mxu0 %v2571
      %v2646 = vpop.f32.mrf.mxu0
      %v2647 = vadd.f32 %v2588, %v2646
      %v2648 = vpop.f32.mrf.mxu0
      %2649 = vdwg.mxu0
      %v2650 = vperm.slane %v2647, 0
      %v2651 = vadd.f32 %v2492, %v2650
      %v2652 = vld [vmem:[%s47] sm:$0x1]
      %v2653 = vld [vmem:[%s49] sm:$0x1]
      %2654 = vadd.xlane.f32.xlu0 %v2651
      %v2655 = vpop.xlane.xlu0 %2654
      %v2656 = vmul.f32 %v2655, %v2466
      %v2657 = vsub.f32 %v2651, %v2656
      %v2658 = vmul.f32 %v2657, %v2657
      %2659 = vadd.xlane.f32.xlu0 %v2658
      %v2660 = vpop.xlane.xlu0 %2659
      %v2661 = vmul.f32 %v2660, %v2466
      %v2662 = vadd.f32 %v2661, 1e-05
      %v2663 = vrsqrt.pop %v2662
      %v2664 = vmul.f32 %v2663, %v2662
      %v2665 = vmul.f32 %v2664, %v2663
      %v2666 = vmul.f32 0.5, %v2665
      %v2667 = vsub.f32 1.5, %v2666
      %v2668 = vmul.f32 %v2663, %v2667
      %vm2669 = vweird.f32 %v2662
      %vm2670 = vweird.f32 %v2663
      %vm2671 = vmor %vm2669, %vm2670
      %v2672 = vsel %vm2671, %v2663, %v2668
      %v2673 = vmul.f32 %v2657, %v2672
      %v2675 = vperm.slane %v2652, 0
      %v2677 = vmul.f32 %v2673, %v2675
      %v2679 = vperm.slane %v2653, 0
      %v2681 = vadd.f32 %v2677, %v2679
      %v2682 = vpack.c.bf16 %v2681, %v2681
      %v2683 = vld [vmem:[%s35] sm:$0xff]
      %v2684 = vld [vmem:[%s35 + $0x8] sm:$0xff]
      %v2685 = vld [vmem:[%s35 + $0x10] sm:$0xff]
      %v2686 = vld [vmem:[%s35 + $0x18] sm:$0xff]
      %v2687 = vld [vmem:[%s35 + $0x20] sm:$0xff]
      %v2688 = vld [vmem:[%s35 + $0x28] sm:$0xff]
      %v2689 = vld [vmem:[%s35 + $0x30] sm:$0xff]
      %v2690 = vld [vmem:[%s35 + $0x38] sm:$0xff]
      %v2691 = vld [vmem:[%s35 + $0x40] sm:$0xff]
      %v2692 = vld [vmem:[%s35 + $0x48] sm:$0xff]
      %v2693 = vld [vmem:[%s35 + $0x50] sm:$0xff]
      %v2694 = vld [vmem:[%s35 + $0x58] sm:$0xff]
      %v2695 = vld [vmem:[%s35 + $0x60] sm:$0xff]
      %v2696 = vld [vmem:[%s35 + $0x68] sm:$0xff]
      %v2697 = vld [vmem:[%s35 + $0x70] sm:$0xff]
      %v2698 = vld [vmem:[%s35 + $0x78] sm:$0xff]
      %v2699 = vld [vmem:[%s35 + $0x80] sm:$0xff]
      %v2700 = vld [vmem:[%s35 + $0x88] sm:$0xff]
      %v2701 = vld [vmem:[%s35 + $0x90] sm:$0xff]
      %v2702 = vld [vmem:[%s35 + $0x98] sm:$0xff]
      %v2703 = vld [vmem:[%s35 + $0xa0] sm:$0xff]
      %v2704 = vld [vmem:[%s35 + $0xa8] sm:$0xff]
      %v2705 = vld [vmem:[%s35 + $0xb0] sm:$0xff]
      %v2706 = vld [vmem:[%s35 + $0xb8] sm:$0xff]
      %v2707 = vld [vmem:[%s35 + $0xc0] sm:$0xff]
      %v2708 = vld [vmem:[%s35 + $0xc8] sm:$0xff]
      %v2709 = vld [vmem:[%s35 + $0xd0] sm:$0xff]
      %v2710 = vld [vmem:[%s35 + $0xd8] sm:$0xff]
      %v2711 = vld [vmem:[%s35 + $0xe0] sm:$0xff]
      %v2712 = vld [vmem:[%s35 + $0xe8] sm:$0xff]
      %v2713 = vld [vmem:[%s35 + $0xf0] sm:$0xff]
      %v2714 = vld [vmem:[%s35 + $0xf8] sm:$0xff]
      %v2715 = vld [vmem:[%s37] sm:$0xf]
      %v2717 = vperm.slane %v2715, 0
      %v2718 = vperm.slane %v2715, 1
      %v2719 = vperm.slane %v2715, 2
      %v2720 = vperm.slane %v2715, 3
      %v2757 = vunpack.c.l.b16 %v2683
      %v2758 = vunpack.c.h.b16 %v2683
      %v2759 = vunpack.c.l.b16 %v2684
      %v2760 = vunpack.c.h.b16 %v2684
      %v2761 = vunpack.c.l.b16 %v2685
      %v2762 = vunpack.c.h.b16 %v2685
      %v2763 = vunpack.c.l.b16 %v2686
      %v2764 = vunpack.c.h.b16 %v2686
      %v2765 = vunpack.c.l.b16 %v2687
      %v2766 = vunpack.c.h.b16 %v2687
      %v2767 = vunpack.c.l.b16 %v2688
      %v2768 = vunpack.c.h.b16 %v2688
      %v2769 = vunpack.c.l.b16 %v2689
      %v2770 = vunpack.c.h.b16 %v2689
      %v2771 = vunpack.c.l.b16 %v2690
      %v2772 = vunpack.c.h.b16 %v2690
      %v2773 = vunpack.c.l.b16 %v2691
      %v2774 = vunpack.c.h.b16 %v2691
      %v2775 = vunpack.c.l.b16 %v2692
      %v2776 = vunpack.c.h.b16 %v2692
      %v2777 = vunpack.c.l.b16 %v2693
      %v2778 = vunpack.c.h.b16 %v2693
      %v2779 = vunpack.c.l.b16 %v2694
      %v2780 = vunpack.c.h.b16 %v2694
      %v2781 = vunpack.c.l.b16 %v2695
      %v2782 = vunpack.c.h.b16 %v2695
      %v2783 = vunpack.c.l.b16 %v2696
      %v2784 = vunpack.c.h.b16 %v2696
      %v2785 = vunpack.c.l.b16 %v2697
      %v2786 = vunpack.c.h.b16 %v2697
      %v2787 = vunpack.c.l.b16 %v2698
      %v2788 = vunpack.c.h.b16 %v2698
      %v2789 = vunpack.c.l.b16 %v2699
      %v2790 = vunpack.c.h.b16 %v2699
      %v2791 = vunpack.c.l.b16 %v2700
      %v2792 = vunpack.c.h.b16 %v2700
      %v2793 = vunpack.c.l.b16 %v2701
      %v2794 = vunpack.c.h.b16 %v2701
      %v2795 = vunpack.c.l.b16 %v2702
      %v2796 = vunpack.c.h.b16 %v2702
      %v2797 = vunpack.c.l.b16 %v2703
      %v2798 = vunpack.c.h.b16 %v2703
      %v2799 = vunpack.c.l.b16 %v2704
      %v2800 = vunpack.c.h.b16 %v2704
      %v2801 = vunpack.c.l.b16 %v2705
      %v2802 = vunpack.c.h.b16 %v2705
      %v2803 = vunpack.c.l.b16 %v2706
      %v2804 = vunpack.c.h.b16 %v2706
      %v2805 = vunpack.c.l.b16 %v2707
      %v2806 = vunpack.c.h.b16 %v2707
      %v2807 = vunpack.c.l.b16 %v2708
      %v2808 = vunpack.c.h.b16 %v2708
      %v2809 = vunpack.c.l.b16 %v2709
      %v2810 = vunpack.c.h.b16 %v2709
      %v2811 = vunpack.c.l.b16 %v2710
      %v2812 = vunpack.c.h.b16 %v2710
      %v2813 = vunpack.c.l.b16 %v2711
      %v2814 = vunpack.c.h.b16 %v2711
      %v2815 = vunpack.c.l.b16 %v2712
      %v2816 = vunpack.c.h.b16 %v2712
      %v2817 = vunpack.c.l.b16 %v2713
      %v2818 = vunpack.c.h.b16 %v2713
      %v2819 = vunpack.c.l.b16 %v2714
      %v2820 = vunpack.c.h.b16 %v2714
      %v2821 = vpack.c.b16 %v2761, %v2757
      %v2822 = vpack.c.b16 %v2762, %v2758
      %v2823 = vpack.c.b16 %v2763, %v2759
      %v2824 = vpack.c.b16 %v2764, %v2760
      %v2825 = vpack.c.b16 %v2769, %v2765
      %v2826 = vpack.c.b16 %v2770, %v2766
      %v2827 = vpack.c.b16 %v2771, %v2767
      %v2828 = vpack.c.b16 %v2772, %v2768
      %v2829 = vpack.c.b16 %v2777, %v2773
      %v2830 = vpack.c.b16 %v2778, %v2774
      %v2831 = vpack.c.b16 %v2779, %v2775
      %v2832 = vpack.c.b16 %v2780, %v2776
      %v2833 = vpack.c.b16 %v2785, %v2781
      %v2834 = vpack.c.b16 %v2786, %v2782
      %v2835 = vpack.c.b16 %v2787, %v2783
      %v2836 = vpack.c.b16 %v2788, %v2784
      %v2837 = vpack.c.b16 %v2793, %v2789
      %v2838 = vpack.c.b16 %v2794, %v2790
      %v2839 = vpack.c.b16 %v2795, %v2791
      %v2840 = vpack.c.b16 %v2796, %v2792
      %v2841 = vpack.c.b16 %v2801, %v2797
      %v2842 = vpack.c.b16 %v2802, %v2798
      %v2843 = vpack.c.b16 %v2803, %v2799
      %v2844 = vpack.c.b16 %v2804, %v2800
      %v2845 = vpack.c.b16 %v2809, %v2805
      %v2846 = vpack.c.b16 %v2810, %v2806
      %v2847 = vpack.c.b16 %v2811, %v2807
      %v2848 = vpack.c.b16 %v2812, %v2808
      %v2849 = vpack.c.b16 %v2817, %v2813
      %v2850 = vpack.c.b16 %v2818, %v2814
      %v2851 = vpack.c.b16 %v2819, %v2815
      %v2852 = vpack.c.b16 %v2820, %v2816
      %2885 = vmatpush.bf16.msra.mxu0 %v2849
      %2886 = vmatpush.bf16.msra.mxu0 %v2845
      %2887 = vmatpush.bf16.msra.mxu0 %v2841
      %2888 = vmatpush.bf16.msra.mxu0 %v2837
      %2889 = vmatpush.bf16.msra.mxu0 %v2833
      %2890 = vmatpush.bf16.msra.mxu0 %v2829
      %2891 = vmatpush.bf16.msra.mxu0 %v2825
      %2892 = vmatpush.bf16.msra.mxu0 %v2821
      %2893 = vmatmul.bf16.gmra.mxu0 %v2682
      %v2894 = vpop.f32.mrf.mxu0
      %v2895 = vadd.f32 %v2717, %v2894
      %v2896 = vpop.f32.mrf.mxu0
      %2897 = vdwg.mxu0
      %2898 = vmatpush.bf16.msra.mxu0 %v2850
      %2899 = vmatpush.bf16.msra.mxu0 %v2846
      %2900 = vmatpush.bf16.msra.mxu0 %v2842
      %2901 = vmatpush.bf16.msra.mxu0 %v2838
      %2902 = vmatpush.bf16.msra.mxu0 %v2834
      %2903 = vmatpush.bf16.msra.mxu0 %v2830
      %2904 = vmatpush.bf16.msra.mxu0 %v2826
      %2905 = vmatpush.bf16.msra.mxu0 %v2822
      %2906 = vmatmul.bf16.gmra.mxu0 %v2682
      %v2907 = vpop.f32.mrf.mxu0
      %v2908 = vadd.f32 %v2718, %v2907
      %v2909 = vpop.f32.mrf.mxu0
      %2910 = vdwg.mxu0
      %2911 = vmatpush.bf16.msra.mxu0 %v2851
      %2912 = vmatpush.bf16.msra.mxu0 %v2847
      %2913 = vmatpush.bf16.msra.mxu0 %v2843
      %2914 = vmatpush.bf16.msra.mxu0 %v2839
      %2915 = vmatpush.bf16.msra.mxu0 %v2835
      %2916 = vmatpush.bf16.msra.mxu0 %v2831
      %2917 = vmatpush.bf16.msra.mxu0 %v2827
      %2918 = vmatpush.bf16.msra.mxu0 %v2823
      %2919 = vmatmul.bf16.gmra.mxu0 %v2682
      %v2920 = vpop.f32.mrf.mxu0
      %v2921 = vadd.f32 %v2719, %v2920
      %v2922 = vpop.f32.mrf.mxu0
      %2923 = vdwg.mxu0
      %2924 = vmatpush.bf16.msra.mxu0 %v2852
      %2925 = vmatpush.bf16.msra.mxu0 %v2848
      %2926 = vmatpush.bf16.msra.mxu0 %v2844
      %2927 = vmatpush.bf16.msra.mxu0 %v2840
      %2928 = vmatpush.bf16.msra.mxu0 %v2836
      %2929 = vmatpush.bf16.msra.mxu0 %v2832
      %2930 = vmatpush.bf16.msra.mxu0 %v2828
      %2931 = vmatpush.bf16.msra.mxu0 %v2824
      %2932 = vmatmul.bf16.gmra.mxu0 %v2682
      %v2933 = vpop.f32.mrf.mxu0
      %v2934 = vadd.f32 %v2720, %v2933
      %v2935 = vpop.f32.mrf.mxu0
      %2936 = vdwg.mxu0
      %v2937 = vmax.f32 %v2895, 0.0
      %v2938 = vmax.f32 %v2908, 0.0
      %v2939 = vmax.f32 %v2921, 0.0
      %v2940 = vmax.f32 %v2934, 0.0
      %v2941 = vpack.c.bf16 %v2937, %v2937
      %v2942 = vpack.c.bf16 %v2938, %v2938
      %v2943 = vpack.c.bf16 %v2939, %v2939
      %v2944 = vpack.c.bf16 %v2940, %v2940
      %v2945 = vld [vmem:[%s39] sm:$0xf]
      %v2946 = vld [vmem:[%s39 + $0x4] sm:$0xf]
      %v2947 = vld [vmem:[%s39 + $0x8] sm:$0xf]
      %v2948 = vld [vmem:[%s39 + $0xc] sm:$0xf]
      %v2949 = vld [vmem:[%s39 + $0x10] sm:$0xf]
      %v2950 = vld [vmem:[%s39 + $0x14] sm:$0xf]
      %v2951 = vld [vmem:[%s39 + $0x18] sm:$0xf]
      %v2952 = vld [vmem:[%s39 + $0x1c] sm:$0xf]
      %v2953 = vld [vmem:[%s39 + $0x20] sm:$0xf]
      %v2954 = vld [vmem:[%s39 + $0x24] sm:$0xf]
      %v2955 = vld [vmem:[%s39 + $0x28] sm:$0xf]
      %v2956 = vld [vmem:[%s39 + $0x2c] sm:$0xf]
      %v2957 = vld [vmem:[%s39 + $0x30] sm:$0xf]
      %v2958 = vld [vmem:[%s39 + $0x34] sm:$0xf]
      %v2959 = vld [vmem:[%s39 + $0x38] sm:$0xf]
      %v2960 = vld [vmem:[%s39 + $0x3c] sm:$0xf]
      %v2961 = vld [vmem:[%s39 + $0x40] sm:$0xf]
      %v2962 = vld [vmem:[%s39 + $0x44] sm:$0xf]
      %v2963 = vld [vmem:[%s39 + $0x48] sm:$0xf]
      %v2964 = vld [vmem:[%s39 + $0x4c] sm:$0xf]
      %v2965 = vld [vmem:[%s39 + $0x50] sm:$0xf]
      %v2966 = vld [vmem:[%s39 + $0x54] sm:$0xf]
      %v2967 = vld [vmem:[%s39 + $0x58] sm:$0xf]
      %v2968 = vld [vmem:[%s39 + $0x5c] sm:$0xf]
      %v2969 = vld [vmem:[%s39 + $0x60] sm:$0xf]
      %v2970 = vld [vmem:[%s39 + $0x64] sm:$0xf]
      %v2971 = vld [vmem:[%s39 + $0x68] sm:$0xf]
      %v2972 = vld [vmem:[%s39 + $0x6c] sm:$0xf]
      %v2973 = vld [vmem:[%s39 + $0x70] sm:$0xf]
      %v2974 = vld [vmem:[%s39 + $0x74] sm:$0xf]
      %v2975 = vld [vmem:[%s39 + $0x78] sm:$0xf]
      %v2976 = vld [vmem:[%s39 + $0x7c] sm:$0xf]
      %v2977 = vld [vmem:[%s39 + $0x80] sm:$0xf]
      %v2978 = vld [vmem:[%s39 + $0x84] sm:$0xf]
      %v2979 = vld [vmem:[%s39 + $0x88] sm:$0xf]
      %v2980 = vld [vmem:[%s39 + $0x8c] sm:$0xf]
      %v2981 = vld [vmem:[%s39 + $0x90] sm:$0xf]
      %v2982 = vld [vmem:[%s39 + $0x94] sm:$0xf]
      %v2983 = vld [vmem:[%s39 + $0x98] sm:$0xf]
      %v2984 = vld [vmem:[%s39 + $0x9c] sm:$0xf]
      %v2985 = vld [vmem:[%s39 + $0xa0] sm:$0xf]
      %v2986 = vld [vmem:[%s39 + $0xa4] sm:$0xf]
      %v2987 = vld [vmem:[%s39 + $0xa8] sm:$0xf]
      %v2988 = vld [vmem:[%s39 + $0xac] sm:$0xf]
      %v2989 = vld [vmem:[%s39 + $0xb0] sm:$0xf]
      %v2990 = vld [vmem:[%s39 + $0xb4] sm:$0xf]
      %v2991 = vld [vmem:[%s39 + $0xb8] sm:$0xf]
      %v2992 = vld [vmem:[%s39 + $0xbc] sm:$0xf]
      %v2993 = vld [vmem:[%s39 + $0xc0] sm:$0xf]
      %v2994 = vld [vmem:[%s39 + $0xc4] sm:$0xf]
      %v2995 = vld [vmem:[%s39 + $0xc8] sm:$0xf]
      %v2996 = vld [vmem:[%s39 + $0xcc] sm:$0xf]
      %v2997 = vld [vmem:[%s39 + $0xd0] sm:$0xf]
      %v2998 = vld [vmem:[%s39 + $0xd4] sm:$0xf]
      %v2999 = vld [vmem:[%s39 + $0xd8] sm:$0xf]
      %v3000 = vld [vmem:[%s39 + $0xdc] sm:$0xf]
      %v3001 = vld [vmem:[%s39 + $0xe0] sm:$0xf]
      %v3002 = vld [vmem:[%s39 + $0xe4] sm:$0xf]
      %v3003 = vld [vmem:[%s39 + $0xe8] sm:$0xf]
      %v3004 = vld [vmem:[%s39 + $0xec] sm:$0xf]
      %v3005 = vld [vmem:[%s39 + $0xf0] sm:$0xf]
      %v3006 = vld [vmem:[%s39 + $0xf4] sm:$0xf]
      %v3007 = vld [vmem:[%s39 + $0xf8] sm:$0xf]
      %v3008 = vld [vmem:[%s39 + $0xfc] sm:$0xf]
      %v3009 = vld [vmem:[%s41] sm:$0x1]
      %v3011 = vperm.slane %v3009, 0
      %v3077 = vunpack.c.l.b16 %v2945
      %v3078 = vunpack.c.l.b16 %v2946
      %v3079 = vunpack.c.l.b16 %v2947
      %v3080 = vunpack.c.l.b16 %v2948
      %v3081 = vunpack.c.l.b16 %v2949
      %v3082 = vunpack.c.l.b16 %v2950
      %v3083 = vunpack.c.l.b16 %v2951
      %v3084 = vunpack.c.l.b16 %v2952
      %v3085 = vunpack.c.l.b16 %v2953
      %v3086 = vunpack.c.l.b16 %v2954
      %v3087 = vunpack.c.l.b16 %v2955
      %v3088 = vunpack.c.l.b16 %v2956
      %v3089 = vunpack.c.l.b16 %v2957
      %v3090 = vunpack.c.l.b16 %v2958
      %v3091 = vunpack.c.l.b16 %v2959
      %v3092 = vunpack.c.l.b16 %v2960
      %v3093 = vunpack.c.l.b16 %v2961
      %v3094 = vunpack.c.l.b16 %v2962
      %v3095 = vunpack.c.l.b16 %v2963
      %v3096 = vunpack.c.l.b16 %v2964
      %v3097 = vunpack.c.l.b16 %v2965
      %v3098 = vunpack.c.l.b16 %v2966
      %v3099 = vunpack.c.l.b16 %v2967
      %v3100 = vunpack.c.l.b16 %v2968
      %v3101 = vunpack.c.l.b16 %v2969
      %v3102 = vunpack.c.l.b16 %v2970
      %v3103 = vunpack.c.l.b16 %v2971
      %v3104 = vunpack.c.l.b16 %v2972
      %v3105 = vunpack.c.l.b16 %v2973
      %v3106 = vunpack.c.l.b16 %v2974
      %v3107 = vunpack.c.l.b16 %v2975
      %v3108 = vunpack.c.l.b16 %v2976
      %v3109 = vunpack.c.l.b16 %v2977
      %v3110 = vunpack.c.l.b16 %v2978
      %v3111 = vunpack.c.l.b16 %v2979
      %v3112 = vunpack.c.l.b16 %v2980
      %v3113 = vunpack.c.l.b16 %v2981
      %v3114 = vunpack.c.l.b16 %v2982
      %v3115 = vunpack.c.l.b16 %v2983
      %v3116 = vunpack.c.l.b16 %v2984
      %v3117 = vunpack.c.l.b16 %v2985
      %v3118 = vunpack.c.l.b16 %v2986
      %v3119 = vunpack.c.l.b16 %v2987
      %v3120 = vunpack.c.l.b16 %v2988
      %v3121 = vunpack.c.l.b16 %v2989
      %v3122 = vunpack.c.l.b16 %v2990
      %v3123 = vunpack.c.l.b16 %v2991
      %v3124 = vunpack.c.l.b16 %v2992
      %v3125 = vunpack.c.l.b16 %v2993
      %v3126 = vunpack.c.l.b16 %v2994
      %v3127 = vunpack.c.l.b16 %v2995
      %v3128 = vunpack.c.l.b16 %v2996
      %v3129 = vunpack.c.l.b16 %v2997
      %v3130 = vunpack.c.l.b16 %v2998
      %v3131 = vunpack.c.l.b16 %v2999
      %v3132 = vunpack.c.l.b16 %v3000
      %v3133 = vunpack.c.l.b16 %v3001
      %v3134 = vunpack.c.l.b16 %v3002
      %v3135 = vunpack.c.l.b16 %v3003
      %v3136 = vunpack.c.l.b16 %v3004
      %v3137 = vunpack.c.l.b16 %v3005
      %v3138 = vunpack.c.l.b16 %v3006
      %v3139 = vunpack.c.l.b16 %v3007
      %v3140 = vunpack.c.l.b16 %v3008
      %v3141 = vpack.c.b16 %v3078, %v3077
      %v3142 = vpack.c.b16 %v3080, %v3079
      %v3143 = vpack.c.b16 %v3082, %v3081
      %v3144 = vpack.c.b16 %v3084, %v3083
      %v3145 = vpack.c.b16 %v3086, %v3085
      %v3146 = vpack.c.b16 %v3088, %v3087
      %v3147 = vpack.c.b16 %v3090, %v3089
      %v3148 = vpack.c.b16 %v3092, %v3091
      %v3149 = vpack.c.b16 %v3094, %v3093
      %v3150 = vpack.c.b16 %v3096, %v3095
      %v3151 = vpack.c.b16 %v3098, %v3097
      %v3152 = vpack.c.b16 %v3100, %v3099
      %v3153 = vpack.c.b16 %v3102, %v3101
      %v3154 = vpack.c.b16 %v3104, %v3103
      %v3155 = vpack.c.b16 %v3106, %v3105
      %v3156 = vpack.c.b16 %v3108, %v3107
      %v3157 = vpack.c.b16 %v3110, %v3109
      %v3158 = vpack.c.b16 %v3112, %v3111
      %v3159 = vpack.c.b16 %v3114, %v3113
      %v3160 = vpack.c.b16 %v3116, %v3115
      %v3161 = vpack.c.b16 %v3118, %v3117
      %v3162 = vpack.c.b16 %v3120, %v3119
      %v3163 = vpack.c.b16 %v3122, %v3121
      %v3164 = vpack.c.b16 %v3124, %v3123
      %v3165 = vpack.c.b16 %v3126, %v3125
      %v3166 = vpack.c.b16 %v3128, %v3127
      %v3167 = vpack.c.b16 %v3130, %v3129
      %v3168 = vpack.c.b16 %v3132, %v3131
      %v3169 = vpack.c.b16 %v3134, %v3133
      %v3170 = vpack.c.b16 %v3136, %v3135
      %v3171 = vpack.c.b16 %v3138, %v3137
      %v3172 = vpack.c.b16 %v3140, %v3139
      %3205 = vmatpush.bf16.msra.mxu0 %v3148
      %3206 = vmatpush.bf16.msra.mxu0 %v3147
      %3207 = vmatpush.bf16.msra.mxu0 %v3146
      %3208 = vmatpush.bf16.msra.mxu0 %v3145
      %3209 = vmatpush.bf16.msra.mxu0 %v3144
      %3210 = vmatpush.bf16.msra.mxu0 %v3143
      %3211 = vmatpush.bf16.msra.mxu0 %v3142
      %3212 = vmatpush.bf16.msra.mxu0 %v3141
      %3213 = vmatmul.bf16.gmra.mxu0 %v2941
      %v3214 = vpop.f32.mrf.mxu0
      %v3215 = vadd.f32 %v3011, %v3214
      %v3216 = vpop.f32.mrf.mxu0
      %3217 = vdwg.mxu0
      %3218 = vmatpush.bf16.msra.mxu0 %v3156
      %3219 = vmatpush.bf16.msra.mxu0 %v3155
      %3220 = vmatpush.bf16.msra.mxu0 %v3154
      %3221 = vmatpush.bf16.msra.mxu0 %v3153
      %3222 = vmatpush.bf16.msra.mxu0 %v3152
      %3223 = vmatpush.bf16.msra.mxu0 %v3151
      %3224 = vmatpush.bf16.msra.mxu0 %v3150
      %3225 = vmatpush.bf16.msra.mxu0 %v3149
      %3226 = vmatmul.bf16.gmra.mxu0 %v2942
      %v3227 = vpop.f32.mrf.mxu0
      %v3228 = vadd.f32 %v3215, %v3227
      %v3229 = vpop.f32.mrf.mxu0
      %3230 = vdwg.mxu0
      %3231 = vmatpush.bf16.msra.mxu0 %v3164
      %3232 = vmatpush.bf16.msra.mxu0 %v3163
      %3233 = vmatpush.bf16.msra.mxu0 %v3162
      %3234 = vmatpush.bf16.msra.mxu0 %v3161
      %3235 = vmatpush.bf16.msra.mxu0 %v3160
      %3236 = vmatpush.bf16.msra.mxu0 %v3159
      %3237 = vmatpush.bf16.msra.mxu0 %v3158
      %3238 = vmatpush.bf16.msra.mxu0 %v3157
      %3239 = vmatmul.bf16.gmra.mxu0 %v2943
      %v3240 = vpop.f32.mrf.mxu0
      %v3241 = vadd.f32 %v3228, %v3240
      %v3242 = vpop.f32.mrf.mxu0
      %3243 = vdwg.mxu0
      %3244 = vmatpush.bf16.msra.mxu0 %v3172
      %3245 = vmatpush.bf16.msra.mxu0 %v3171
      %3246 = vmatpush.bf16.msra.mxu0 %v3170
      %3247 = vmatpush.bf16.msra.mxu0 %v3169
      %3248 = vmatpush.bf16.msra.mxu0 %v3168
      %3249 = vmatpush.bf16.msra.mxu0 %v3167
      %3250 = vmatpush.bf16.msra.mxu0 %v3166
      %3251 = vmatpush.bf16.msra.mxu0 %v3165
      %3252 = vmatmul.bf16.gmra.mxu0 %v2944
      %v3253 = vpop.f32.mrf.mxu0
      %v3254 = vadd.f32 %v3241, %v3253
      %v3255 = vpop.f32.mrf.mxu0
      %3256 = vdwg.mxu0
      %v3257 = vadd.f32 %v2681, %v3254
      %v3258 = vld [vmem:[%s51] sm:$0x1]
      %v3259 = vld [vmem:[%s53] sm:$0x1]
      %3260 = vadd.xlane.f32.xlu0 %v3257
      %v3261 = vpop.xlane.xlu0 %3260
      %v3262 = vmul.f32 %v3261, %v2466
      %v3263 = vsub.f32 %v3257, %v3262
      %v3264 = vmul.f32 %v3263, %v3263
      %3265 = vadd.xlane.f32.xlu0 %v3264
      %v3266 = vpop.xlane.xlu0 %3265
      %v3267 = vmul.f32 %v3266, %v2466
      %v3268 = vadd.f32 %v3267, 1e-05
      %v3269 = vrsqrt.pop %v3268
      %v3270 = vmul.f32 %v3269, %v3268
      %v3271 = vmul.f32 %v3270, %v3269
      %v3272 = vmul.f32 0.5, %v3271
      %v3273 = vsub.f32 1.5, %v3272
      %v3274 = vmul.f32 %v3269, %v3273
      %vm3275 = vweird.f32 %v3268
      %vm3276 = vweird.f32 %v3269
      %vm3277 = vmor %vm3275, %vm3276
      %v3278 = vsel %vm3277, %v3269, %v3274
      %v3279 = vmul.f32 %v3263, %v3278
      %v3281 = vperm.slane %v3258, 0
      %v3283 = vmul.f32 %v3279, %v3281
      %v3285 = vperm.slane %v3259, 0
      %v3287 = vadd.f32 %v3283, %v3285
      %v3288 = vpack.c.bf16 %v3287, %v3287
      %s3289 = scalar_lea.vmem %s11, 256
      %v3290 = vld [vmem:[%s3289] sm:$0xf]
      %v3291 = vld [vmem:[%s3289 + $0x4] sm:$0xf]
      %v3292 = vld [vmem:[%s3289 + $0x8] sm:$0xf]
      %v3293 = vld [vmem:[%s3289 + $0xc] sm:$0xf]
      %v3294 = vld [vmem:[%s3289 + $0x10] sm:$0xf]
      %v3295 = vld [vmem:[%s3289 + $0x14] sm:$0xf]
      %v3296 = vld [vmem:[%s3289 + $0x18] sm:$0xf]
      %v3297 = vld [vmem:[%s3289 + $0x1c] sm:$0xf]
      %v3298 = vld [vmem:[%s3289 + $0x20] sm:$0xf]
      %v3299 = vld [vmem:[%s3289 + $0x24] sm:$0xf]
      %v3300 = vld [vmem:[%s3289 + $0x28] sm:$0xf]
      %v3301 = vld [vmem:[%s3289 + $0x2c] sm:$0xf]
      %v3302 = vld [vmem:[%s3289 + $0x30] sm:$0xf]
      %v3303 = vld [vmem:[%s3289 + $0x34] sm:$0xf]
      %v3304 = vld [vmem:[%s3289 + $0x38] sm:$0xf]
      %v3305 = vld [vmem:[%s3289 + $0x3c] sm:$0xf]
      %s3306 = scalar_lea.vmem %s13, 4
      %v3307 = vld [vmem:[%s3306] sm:$0x1]
      %v3309 = vperm.slane %v3307, 0
      %v3327 = vunpack.c.l.b16 %v3290
      %v3328 = vunpack.c.l.b16 %v3291
      %v3329 = vunpack.c.l.b16 %v3292
      %v3330 = vunpack.c.l.b16 %v3293
      %v3331 = vunpack.c.l.b16 %v3294
      %v3332 = vunpack.c.l.b16 %v3295
      %v3333 = vunpack.c.l.b16 %v3296
      %v3334 = vunpack.c.l.b16 %v3297
      %v3335 = vunpack.c.l.b16 %v3298
      %v3336 = vunpack.c.l.b16 %v3299
      %v3337 = vunpack.c.l.b16 %v3300
      %v3338 = vunpack.c.l.b16 %v3301
      %v3339 = vunpack.c.l.b16 %v3302
      %v3340 = vunpack.c.l.b16 %v3303
      %v3341 = vunpack.c.l.b16 %v3304
      %v3342 = vunpack.c.l.b16 %v3305
      %v3343 = vpack.c.b16 %v3328, %v3327
      %v3344 = vpack.c.b16 %v3330, %v3329
      %v3345 = vpack.c.b16 %v3332, %v3331
      %v3346 = vpack.c.b16 %v3334, %v3333
      %v3347 = vpack.c.b16 %v3336, %v3335
      %v3348 = vpack.c.b16 %v3338, %v3337
      %v3349 = vpack.c.b16 %v3340, %v3339
      %v3350 = vpack.c.b16 %v3342, %v3341
      %3359 = vmatpush.bf16.msra.mxu0 %v3350
      %3360 = vmatpush.bf16.msra.mxu0 %v3349
      %3361 = vmatpush.bf16.msra.mxu0 %v3348
      %3362 = vmatpush.bf16.msra.mxu0 %v3347
      %3363 = vmatpush.bf16.msra.mxu0 %v3346
      %3364 = vmatpush.bf16.msra.mxu0 %v3345
      %3365 = vmatpush.bf16.msra.mxu0 %v3344
      %3366 = vmatpush.bf16.msra.mxu0 %v3343
      %3367 = vmatmul.bf16.gmra.mxu0 %v3288
      %v3368 = vpop.f32.mrf.mxu0
      %v3369 = vadd.f32 %v3309, %v3368
      %v3370 = vpop.f32.mrf.mxu0
      %3371 = vdwg.mxu0
      %s3372 = scalar_lea.vmem %s15, 256
      %v3373 = vld [vmem:[%s3372] sm:$0xf]
      %v3374 = vld [vmem:[%s3372 + $0x4] sm:$0xf]
      %v3375 = vld [vmem:[%s3372 + $0x8] sm:$0xf]
      %v3376 = vld [vmem:[%s3372 + $0xc] sm:$0xf]
      %v3377 = vld [vmem:[%s3372 + $0x10] sm:$0xf]
      %v3378 = vld [vmem:[%s3372 + $0x14] sm:$0xf]
      %v3379 = vld [vmem:[%s3372 + $0x18] sm:$0xf]
      %v3380 = vld [vmem:[%s3372 + $0x1c] sm:$0xf]
      %v3381 = vld [vmem:[%s3372 + $0x20] sm:$0xf]
      %v3382 = vld [vmem:[%s3372 + $0x24] sm:$0xf]
      %v3383 = vld [vmem:[%s3372 + $0x28] sm:$0xf]
      %v3384 = vld [vmem:[%s3372 + $0x2c] sm:$0xf]
      %v3385 = vld [vmem:[%s3372 + $0x30] sm:$0xf]
      %v3386 = vld [vmem:[%s3372 + $0x34] sm:$0xf]
      %v3387 = vld [vmem:[%s3372 + $0x38] sm:$0xf]
      %v3388 = vld [vmem:[%s3372 + $0x3c] sm:$0xf]
      %s3389 = scalar_lea.vmem %s17, 4
      %v3390 = vld [vmem:[%s3389] sm:$0x1]
      %v3392 = vperm.slane %v3390, 0
      %v3410 = vunpack.c.l.b16 %v3373
      %v3411 = vunpack.c.l.b16 %v3374
      %v3412 = vunpack.c.l.b16 %v3375
      %v3413 = vunpack.c.l.b16 %v3376
      %v3414 = vunpack.c.l.b16 %v3377
      %v3415 = vunpack.c.l.b16 %v3378
      %v3416 = vunpack.c.l.b16 %v3379
      %v3417 = vunpack.c.l.b16 %v3380
      %v3418 = vunpack.c.l.b16 %v3381
      %v3419 = vunpack.c.l.b16 %v3382
      %v3420 = vunpack.c.l.b16 %v3383
      %v3421 = vunpack.c.l.b16 %v3384
      %v3422 = vunpack.c.l.b16 %v3385
      %v3423 = vunpack.c.l.b16 %v3386
      %v3424 = vunpack.c.l.b16 %v3387
      %v3425 = vunpack.c.l.b16 %v3388
      %v3426 = vpack.c.b16 %v3411, %v3410
      %v3427 = vpack.c.b16 %v3413, %v3412
      %v3428 = vpack.c.b16 %v3415, %v3414
      %v3429 = vpack.c.b16 %v3417, %v3416
      %v3430 = vpack.c.b16 %v3419, %v3418
      %v3431 = vpack.c.b16 %v3421, %v3420
      %v3432 = vpack.c.b16 %v3423, %v3422
      %v3433 = vpack.c.b16 %v3425, %v3424
      %3442 = vmatpush.bf16.msra.mxu0 %v3433
      %3443 = vmatpush.bf16.msra.mxu0 %v3432
      %3444 = vmatpush.bf16.msra.mxu0 %v3431
      %3445 = vmatpush.bf16.msra.mxu0 %v3430
      %3446 = vmatpush.bf16.msra.mxu0 %v3429
      %3447 = vmatpush.bf16.msra.mxu0 %v3428
      %3448 = vmatpush.bf16.msra.mxu0 %v3427
      %3449 = vmatpush.bf16.msra.mxu0 %v3426
      %3450 = vmatmul.bf16.gmra.mxu0 %v3288
      %v3451 = vpop.f32.mrf.mxu0
      %v3452 = vadd.f32 %v3392, %v3451
      %v3453 = vpop.f32.mrf.mxu0
      %3454 = vdwg.mxu0
      %s3455 = scalar_lea.vmem %s19, 256
      %v3456 = vld [vmem:[%s3455] sm:$0xf]
      %v3457 = vld [vmem:[%s3455 + $0x4] sm:$0xf]
      %v3458 = vld [vmem:[%s3455 + $0x8] sm:$0xf]
      %v3459 = vld [vmem:[%s3455 + $0xc] sm:$0xf]
      %v3460 = vld [vmem:[%s3455 + $0x10] sm:$0xf]
      %v3461 = vld [vmem:[%s3455 + $0x14] sm:$0xf]
      %v3462 = vld [vmem:[%s3455 + $0x18] sm:$0xf]
      %v3463 = vld [vmem:[%s3455 + $0x1c] sm:$0xf]
      %v3464 = vld [vmem:[%s3455 + $0x20] sm:$0xf]
      %v3465 = vld [vmem:[%s3455 + $0x24] sm:$0xf]
      %v3466 = vld [vmem:[%s3455 + $0x28] sm:$0xf]
      %v3467 = vld [vmem:[%s3455 + $0x2c] sm:$0xf]
      %v3468 = vld [vmem:[%s3455 + $0x30] sm:$0xf]
      %v3469 = vld [vmem:[%s3455 + $0x34] sm:$0xf]
      %v3470 = vld [vmem:[%s3455 + $0x38] sm:$0xf]
      %v3471 = vld [vmem:[%s3455 + $0x3c] sm:$0xf]
      %s3472 = scalar_lea.vmem %s21, 4
      %v3473 = vld [vmem:[%s3472] sm:$0x1]
      %v3475 = vperm.slane %v3473, 0
      %v3493 = vunpack.c.l.b16 %v3456
      %v3494 = vunpack.c.l.b16 %v3457
      %v3495 = vunpack.c.l.b16 %v3458
      %v3496 = vunpack.c.l.b16 %v3459
      %v3497 = vunpack.c.l.b16 %v3460
      %v3498 = vunpack.c.l.b16 %v3461
      %v3499 = vunpack.c.l.b16 %v3462
      %v3500 = vunpack.c.l.b16 %v3463
      %v3501 = vunpack.c.l.b16 %v3464
      %v3502 = vunpack.c.l.b16 %v3465
      %v3503 = vunpack.c.l.b16 %v3466
      %v3504 = vunpack.c.l.b16 %v3467
      %v3505 = vunpack.c.l.b16 %v3468
      %v3506 = vunpack.c.l.b16 %v3469
      %v3507 = vunpack.c.l.b16 %v3470
      %v3508 = vunpack.c.l.b16 %v3471
      %v3509 = vpack.c.b16 %v3494, %v3493
      %v3510 = vpack.c.b16 %v3496, %v3495
      %v3511 = vpack.c.b16 %v3498, %v3497
      %v3512 = vpack.c.b16 %v3500, %v3499
      %v3513 = vpack.c.b16 %v3502, %v3501
      %v3514 = vpack.c.b16 %v3504, %v3503
      %v3515 = vpack.c.b16 %v3506, %v3505
      %v3516 = vpack.c.b16 %v3508, %v3507
      %3525 = vmatpush.bf16.msra.mxu0 %v3516
      %3526 = vmatpush.bf16.msra.mxu0 %v3515
      %3527 = vmatpush.bf16.msra.mxu0 %v3514
      %3528 = vmatpush.bf16.msra.mxu0 %v3513
      %3529 = vmatpush.bf16.msra.mxu0 %v3512
      %3530 = vmatpush.bf16.msra.mxu0 %v3511
      %3531 = vmatpush.bf16.msra.mxu0 %v3510
      %3532 = vmatpush.bf16.msra.mxu0 %v3509
      %3533 = vmatmul.bf16.gmra.mxu0 %v3288
      %v3534 = vpop.f32.mrf.mxu0
      %v3535 = vadd.f32 %v3475, %v3534
      %v3536 = vpop.f32.mrf.mxu0
      %3537 = vdwg.mxu0
      %v3539 = vsel %vm1271, %v3369, 0
      %v3542 = vsel %vm1271, %v3452, 0
      %3544 = vmatpush.xpose.msra.mxu0 0.0
      %3545 = vmatpush.xpose.msra.mxu0 0.0
      %3546 = vmatpush.xpose.msra.mxu0 0.0
      %3547 = vmatpush.xpose.msra.mxu0 0.0
      %3548 = vmatpush.xpose.msra.mxu0 0.0
      %3549 = vmatpush.xpose.msra.mxu0 0.0
      %3550 = vmatpush.xpose.msra.mxu0 0.0
      %3551 = vmatpush.xpose.msra.mxu0 0.0
      %3552 = vmatpush.xpose.msra.mxu0 0.0
      %3553 = vmatpush.xpose.msra.mxu0 0.0
      %3554 = vmatpush.xpose.msra.mxu0 0.0
      %3555 = vmatpush.xpose.msra.mxu0 0.0
      %3556 = vmatpush.xpose.msra.mxu0 0.0
      %3557 = vmatpush.xpose.msra.mxu0 0.0
      %3558 = vmatpush.xpose.msra.mxu0 0.0
      %3559 = vmatpush.xpose.msra.mxu0 %v3542
      %3560 = vmatmul.f32.gmra.mxu0 %v3539
      %v3561 = vpop.f32.mrf.mxu0
      %v3562 = vadd.f32 0.0, %v3561
      %3563 = vdwg.mxu0
      %v3564 = vmul.f32 %v3562, 0.17677669
      %v3565 = vadd.f32 %v3564, %v1026
      %v3566 = vsel %vm1300, %v3565, -inf
      %3567 = vmax.xlane.f32.xlu0 %v3566
      %v3568 = vpop.xlane.xlu0 %3567
      %v3569 = vsub.f32 %v3565, %v3568
      %v3570 = vmul.f32 %v3569, 1.442695
      %v3571 = vpow.pop %v3570
      %v3572 = vsel %vm1300, %v3571, 0.0
      %3573 = vadd.xlane.f32.xlu0 %v3572
      %v3574 = vpop.xlane.xlu0 %3573
      %v3575 = vrcp.pop %v3574
      %v3576 = vmul.f32 %v3574, %v3575
      %v3577 = vsub.f32 1.0, %v3576
      %v3578 = vmul.f32 %v3575, %v3577
      %v3579 = vadd.f32 %v3575, %v3578
      %vm3580 = vweird.f32 %v3574
      %vm3581 = vweird.f32 %v3575
      %vm3582 = vmor %vm3580, %vm3581
      %v3583 = vsel %vm3582, %v3575, %v3579
      %v3584 = vand.u32 2147483647, %v3574
      %vm3585 = vcmp.eq.f32.partialorder %v3584, 8.507059e+37
      %v3586 = vand.u32 %v3574, 2147483648
      %v3587 = vor.u32 1.1754944e-38, %v3586
      %v3588 = vsel %vm3585, %v3587, %v3583
      %v3589 = vmul.f32 %v3571, %v3588
      %v3590 = vpack.c.bf16 %v3589, %v3589
      %v3591 = vpack.c.bf16 %v3535, %v3535
      %v3593 = vsel %vm1300, %v3590, 0
      %v3596 = vsel %vm1330, %v3591, 0
      %3598 = vmatpush.bf16.msra.mxu0 0
      %3599 = vmatpush.bf16.msra.mxu0 0
      %3600 = vmatpush.bf16.msra.mxu0 0
      %3601 = vmatpush.bf16.msra.mxu0 0
      %3602 = vmatpush.bf16.msra.mxu0 0
      %3603 = vmatpush.bf16.msra.mxu0 0
      %3604 = vmatpush.bf16.msra.mxu0 0
      %3605 = vmatpush.bf16.msra.mxu0 %v3596
      %3606 = vmatmul.bf16.gmra.mxu0 %v3593
      %v3607 = vpop.f32.mrf.mxu0
      %v3608 = vadd.f32 0.0, %v3607
      %v3609 = vpop.f32.mrf.mxu0
      %3610 = vdwg.mxu0
      %v3611 = vpack.c.bf16 %v3608, %v3608
      %s3612 = scalar_lea.vmem %s23, 64
      %v3613 = vld [vmem:[%s3612] sm:$0xf]
      %v3614 = vld [vmem:[%s3612 + $0x4] sm:$0xf]
      %v3615 = vld [vmem:[%s3612 + $0x8] sm:$0xf]
      %v3616 = vld [vmem:[%s3612 + $0xc] sm:$0xf]
      %s3617 = scalar_lea.vmem %s11, 320
      %v3618 = vld [vmem:[%s3617] sm:$0xf]
      %v3619 = vld [vmem:[%s3617 + $0x4] sm:$0xf]
      %v3620 = vld [vmem:[%s3617 + $0x8] sm:$0xf]
      %v3621 = vld [vmem:[%s3617 + $0xc] sm:$0xf]
      %v3622 = vld [vmem:[%s3617 + $0x10] sm:$0xf]
      %v3623 = vld [vmem:[%s3617 + $0x14] sm:$0xf]
      %v3624 = vld [vmem:[%s3617 + $0x18] sm:$0xf]
      %v3625 = vld [vmem:[%s3617 + $0x1c] sm:$0xf]
      %v3626 = vld [vmem:[%s3617 + $0x20] sm:$0xf]
      %v3627 = vld [vmem:[%s3617 + $0x24] sm:$0xf]
      %v3628 = vld [vmem:[%s3617 + $0x28] sm:$0xf]
      %v3629 = vld [vmem:[%s3617 + $0x2c] sm:$0xf]
      %v3630 = vld [vmem:[%s3617 + $0x30] sm:$0xf]
      %v3631 = vld [vmem:[%s3617 + $0x34] sm:$0xf]
      %v3632 = vld [vmem:[%s3617 + $0x38] sm:$0xf]
      %v3633 = vld [vmem:[%s3617 + $0x3c] sm:$0xf]
      %s3634 = scalar_lea.vmem %s13, 5
      %v3635 = vld [vmem:[%s3634] sm:$0x1]
      %v3637 = vperm.slane %v3635, 0
      %v3655 = vunpack.c.l.b16 %v3618
      %v3656 = vunpack.c.l.b16 %v3619
      %v3657 = vunpack.c.l.b16 %v3620
      %v3658 = vunpack.c.l.b16 %v3621
      %v3659 = vunpack.c.l.b16 %v3622
      %v3660 = vunpack.c.l.b16 %v3623
      %v3661 = vunpack.c.l.b16 %v3624
      %v3662 = vunpack.c.l.b16 %v3625
      %v3663 = vunpack.c.l.b16 %v3626
      %v3664 = vunpack.c.l.b16 %v3627
      %v3665 = vunpack.c.l.b16 %v3628
      %v3666 = vunpack.c.l.b16 %v3629
      %v3667 = vunpack.c.l.b16 %v3630
      %v3668 = vunpack.c.l.b16 %v3631
      %v3669 = vunpack.c.l.b16 %v3632
      %v3670 = vunpack.c.l.b16 %v3633
      %v3671 = vpack.c.b16 %v3656, %v3655
      %v3672 = vpack.c.b16 %v3658, %v3657
      %v3673 = vpack.c.b16 %v3660, %v3659
      %v3674 = vpack.c.b16 %v3662, %v3661
      %v3675 = vpack.c.b16 %v3664, %v3663
      %v3676 = vpack.c.b16 %v3666, %v3665
      %v3677 = vpack.c.b16 %v3668, %v3667
      %v3678 = vpack.c.b16 %v3670, %v3669
      %3687 = vmatpush.bf16.msra.mxu0 %v3678
      %3688 = vmatpush.bf16.msra.mxu0 %v3677
      %3689 = vmatpush.bf16.msra.mxu0 %v3676
      %3690 = vmatpush.bf16.msra.mxu0 %v3675
      %3691 = vmatpush.bf16.msra.mxu0 %v3674
      %3692 = vmatpush.bf16.msra.mxu0 %v3673
      %3693 = vmatpush.bf16.msra.mxu0 %v3672
      %3694 = vmatpush.bf16.msra.mxu0 %v3671
      %3695 = vmatmul.bf16.gmra.mxu0 %v3288
      %v3696 = vpop.f32.mrf.mxu0
      %v3697 = vadd.f32 %v3637, %v3696
      %v3698 = vpop.f32.mrf.mxu0
      %3699 = vdwg.mxu0
      %s3700 = scalar_lea.vmem %s15, 320
      %v3701 = vld [vmem:[%s3700] sm:$0xf]
      %v3702 = vld [vmem:[%s3700 + $0x4] sm:$0xf]
      %v3703 = vld [vmem:[%s3700 + $0x8] sm:$0xf]
      %v3704 = vld [vmem:[%s3700 + $0xc] sm:$0xf]
      %v3705 = vld [vmem:[%s3700 + $0x10] sm:$0xf]
      %v3706 = vld [vmem:[%s3700 + $0x14] sm:$0xf]
      %v3707 = vld [vmem:[%s3700 + $0x18] sm:$0xf]
      %v3708 = vld [vmem:[%s3700 + $0x1c] sm:$0xf]
      %v3709 = vld [vmem:[%s3700 + $0x20] sm:$0xf]
      %v3710 = vld [vmem:[%s3700 + $0x24] sm:$0xf]
      %v3711 = vld [vmem:[%s3700 + $0x28] sm:$0xf]
      %v3712 = vld [vmem:[%s3700 + $0x2c] sm:$0xf]
      %v3713 = vld [vmem:[%s3700 + $0x30] sm:$0xf]
      %v3714 = vld [vmem:[%s3700 + $0x34] sm:$0xf]
      %v3715 = vld [vmem:[%s3700 + $0x38] sm:$0xf]
      %v3716 = vld [vmem:[%s3700 + $0x3c] sm:$0xf]
      %s3717 = scalar_lea.vmem %s17, 5
      %v3718 = vld [vmem:[%s3717] sm:$0x1]
      %v3720 = vperm.slane %v3718, 0
      %v3738 = vunpack.c.l.b16 %v3701
      %v3739 = vunpack.c.l.b16 %v3702
      %v3740 = vunpack.c.l.b16 %v3703
      %v3741 = vunpack.c.l.b16 %v3704
      %v3742 = vunpack.c.l.b16 %v3705
      %v3743 = vunpack.c.l.b16 %v3706
      %v3744 = vunpack.c.l.b16 %v3707
      %v3745 = vunpack.c.l.b16 %v3708
      %v3746 = vunpack.c.l.b16 %v3709
      %v3747 = vunpack.c.l.b16 %v3710
      %v3748 = vunpack.c.l.b16 %v3711
      %v3749 = vunpack.c.l.b16 %v3712
      %v3750 = vunpack.c.l.b16 %v3713
      %v3751 = vunpack.c.l.b16 %v3714
      %v3752 = vunpack.c.l.b16 %v3715
      %v3753 = vunpack.c.l.b16 %v3716
      %v3754 = vpack.c.b16 %v3739, %v3738
      %v3755 = vpack.c.b16 %v3741, %v3740
      %v3756 = vpack.c.b16 %v3743, %v3742
      %v3757 = vpack.c.b16 %v3745, %v3744
      %v3758 = vpack.c.b16 %v3747, %v3746
      %v3759 = vpack.c.b16 %v3749, %v3748
      %v3760 = vpack.c.b16 %v3751, %v3750
      %v3761 = vpack.c.b16 %v3753, %v3752
      %3770 = vmatpush.bf16.msra.mxu0 %v3761
      %3771 = vmatpush.bf16.msra.mxu0 %v3760
      %3772 = vmatpush.bf16.msra.mxu0 %v3759
      %3773 = vmatpush.bf16.msra.mxu0 %v3758
      %3774 = vmatpush.bf16.msra.mxu0 %v3757
      %3775 = vmatpush.bf16.msra.mxu0 %v3756
      %3776 = vmatpush.bf16.msra.mxu0 %v3755
      %3777 = vmatpush.bf16.msra.mxu0 %v3754
      %3778 = vmatmul.bf16.gmra.mxu0 %v3288
      %v3779 = vpop.f32.mrf.mxu0
      %v3780 = vadd.f32 %v3720, %v3779
      %v3781 = vpop.f32.mrf.mxu0
      %3782 = vdwg.mxu0
      %s3783 = scalar_lea.vmem %s19, 320
      %v3784 = vld [vmem:[%s3783] sm:$0xf]
      %v3785 = vld [vmem:[%s3783 + $0x4] sm:$0xf]
      %v3786 = vld [vmem:[%s3783 + $0x8] sm:$0xf]
      %v3787 = vld [vmem:[%s3783 + $0xc] sm:$0xf]
      %v3788 = vld [vmem:[%s3783 + $0x10] sm:$0xf]
      %v3789 = vld [vmem:[%s3783 + $0x14] sm:$0xf]
      %v3790 = vld [vmem:[%s3783 + $0x18] sm:$0xf]
      %v3791 = vld [vmem:[%s3783 + $0x1c] sm:$0xf]
      %v3792 = vld [vmem:[%s3783 + $0x20] sm:$0xf]
      %v3793 = vld [vmem:[%s3783 + $0x24] sm:$0xf]
      %v3794 = vld [vmem:[%s3783 + $0x28] sm:$0xf]
      %v3795 = vld [vmem:[%s3783 + $0x2c] sm:$0xf]
      %v3796 = vld [vmem:[%s3783 + $0x30] sm:$0xf]
      %v3797 = vld [vmem:[%s3783 + $0x34] sm:$0xf]
      %v3798 = vld [vmem:[%s3783 + $0x38] sm:$0xf]
      %v3799 = vld [vmem:[%s3783 + $0x3c] sm:$0xf]
      %s3800 = scalar_lea.vmem %s21, 5
      %v3801 = vld [vmem:[%s3800] sm:$0x1]
      %v3803 = vperm.slane %v3801, 0
      %v3821 = vunpack.c.l.b16 %v3784
      %v3822 = vunpack.c.l.b16 %v3785
      %v3823 = vunpack.c.l.b16 %v3786
      %v3824 = vunpack.c.l.b16 %v3787
      %v3825 = vunpack.c.l.b16 %v3788
      %v3826 = vunpack.c.l.b16 %v3789
      %v3827 = vunpack.c.l.b16 %v3790
      %v3828 = vunpack.c.l.b16 %v3791
      %v3829 = vunpack.c.l.b16 %v3792
      %v3830 = vunpack.c.l.b16 %v3793
      %v3831 = vunpack.c.l.b16 %v3794
      %v3832 = vunpack.c.l.b16 %v3795
      %v3833 = vunpack.c.l.b16 %v3796
      %v3834 = vunpack.c.l.b16 %v3797
      %v3835 = vunpack.c.l.b16 %v3798
      %v3836 = vunpack.c.l.b16 %v3799
      %v3837 = vpack.c.b16 %v3822, %v3821
      %v3838 = vpack.c.b16 %v3824, %v3823
      %v3839 = vpack.c.b16 %v3826, %v3825
      %v3840 = vpack.c.b16 %v3828, %v3827
      %v3841 = vpack.c.b16 %v3830, %v3829
      %v3842 = vpack.c.b16 %v3832, %v3831
      %v3843 = vpack.c.b16 %v3834, %v3833
      %v3844 = vpack.c.b16 %v3836, %v3835
      %3853 = vmatpush.bf16.msra.mxu0 %v3844
      %3854 = vmatpush.bf16.msra.mxu0 %v3843
      %3855 = vmatpush.bf16.msra.mxu0 %v3842
      %3856 = vmatpush.bf16.msra.mxu0 %v3841
      %3857 = vmatpush.bf16.msra.mxu0 %v3840
      %3858 = vmatpush.bf16.msra.mxu0 %v3839
      %3859 = vmatpush.bf16.msra.mxu0 %v3838
      %3860 = vmatpush.bf16.msra.mxu0 %v3837
      %3861 = vmatmul.bf16.gmra.mxu0 %v3288
      %v3862 = vpop.f32.mrf.mxu0
      %v3863 = vadd.f32 %v3803, %v3862
      %v3864 = vpop.f32.mrf.mxu0
      %3865 = vdwg.mxu0
      %v3867 = vsel %vm1271, %v3697, 0
      %v3870 = vsel %vm1271, %v3780, 0
      %3872 = vmatpush.xpose.msra.mxu0 0.0
      %3873 = vmatpush.xpose.msra.mxu0 0.0
      %3874 = vmatpush.xpose.msra.mxu0 0.0
      %3875 = vmatpush.xpose.msra.mxu0 0.0
      %3876 = vmatpush.xpose.msra.mxu0 0.0
      %3877 = vmatpush.xpose.msra.mxu0 0.0
      %3878 = vmatpush.xpose.msra.mxu0 0.0
      %3879 = vmatpush.xpose.msra.mxu0 0.0
      %3880 = vmatpush.xpose.msra.mxu0 0.0
      %3881 = vmatpush.xpose.msra.mxu0 0.0
      %3882 = vmatpush.xpose.msra.mxu0 0.0
      %3883 = vmatpush.xpose.msra.mxu0 0.0
      %3884 = vmatpush.xpose.msra.mxu0 0.0
      %3885 = vmatpush.xpose.msra.mxu0 0.0
      %3886 = vmatpush.xpose.msra.mxu0 0.0
      %3887 = vmatpush.xpose.msra.mxu0 %v3870
      %3888 = vmatmul.f32.gmra.mxu0 %v3867
      %v3889 = vpop.f32.mrf.mxu0
      %v3890 = vadd.f32 0.0, %v3889
      %3891 = vdwg.mxu0
      %v3892 = vmul.f32 %v3890, 0.17677669
      %v3893 = vadd.f32 %v3892, %v1026
      %v3894 = vsel %vm1300, %v3893, -inf
      %3895 = vmax.xlane.f32.xlu0 %v3894
      %v3896 = vpop.xlane.xlu0 %3895
      %v3897 = vsub.f32 %v3893, %v3896
      %v3898 = vmul.f32 %v3897, 1.442695
      %v3899 = vpow.pop %v3898
      %v3900 = vsel %vm1300, %v3899, 0.0
      %3901 = vadd.xlane.f32.xlu0 %v3900
      %v3902 = vpop.xlane.xlu0 %3901
      %v3903 = vrcp.pop %v3902
      %v3904 = vmul.f32 %v3902, %v3903
      %v3905 = vsub.f32 1.0, %v3904
      %v3906 = vmul.f32 %v3903, %v3905
      %v3907 = vadd.f32 %v3903, %v3906
      %vm3908 = vweird.f32 %v3902
      %vm3909 = vweird.f32 %v3903
      %vm3910 = vmor %vm3908, %vm3909
      %v3911 = vsel %vm3910, %v3903, %v3907
      %v3912 = vand.u32 2147483647, %v3902
      %vm3913 = vcmp.eq.f32.partialorder %v3912, 8.507059e+37
      %v3914 = vand.u32 %v3902, 2147483648
      %v3915 = vor.u32 1.1754944e-38, %v3914
      %v3916 = vsel %vm3913, %v3915, %v3911
      %v3917 = vmul.f32 %v3899, %v3916
      %v3918 = vpack.c.bf16 %v3917, %v3917
      %v3919 = vpack.c.bf16 %v3863, %v3863
      %v3921 = vsel %vm1300, %v3918, 0
      %v3924 = vsel %vm1330, %v3919, 0
      %3926 = vmatpush.bf16.msra.mxu0 0
      %3927 = vmatpush.bf16.msra.mxu0 0
      %3928 = vmatpush.bf16.msra.mxu0 0
      %3929 = vmatpush.bf16.msra.mxu0 0
      %3930 = vmatpush.bf16.msra.mxu0 0
      %3931 = vmatpush.bf16.msra.mxu0 0
      %3932 = vmatpush.bf16.msra.mxu0 0
      %3933 = vmatpush.bf16.msra.mxu0 %v3924
      %3934 = vmatmul.bf16.gmra.mxu0 %v3921
      %v3935 = vpop.f32.mrf.mxu0
      %v3936 = vadd.f32 0.0, %v3935
      %v3937 = vpop.f32.mrf.mxu0
      %3938 = vdwg.mxu0
      %v3939 = vpack.c.bf16 %v3936, %v3936
      %s3940 = scalar_lea.vmem %s23, 80
      %v3941 = vld [vmem:[%s3940] sm:$0xf]
      %v3942 = vld [vmem:[%s3940 + $0x4] sm:$0xf]
      %v3943 = vld [vmem:[%s3940 + $0x8] sm:$0xf]
      %v3944 = vld [vmem:[%s3940 + $0xc] sm:$0xf]
      %v3949 = vunpack.c.l.b16 %v3941
      %v3950 = vunpack.c.l.b16 %v3942
      %v3951 = vunpack.c.l.b16 %v3943
      %v3952 = vunpack.c.l.b16 %v3944
      %v3953 = vpack.c.b16 %v3950, %v3949
      %v3954 = vpack.c.b16 %v3952, %v3951
      %v3958 = vsel %vm1271, %v3939, 0
      %3960 = vmatpush.bf16.msra.mxu0 0
      %3961 = vmatpush.bf16.msra.mxu0 0
      %3962 = vmatpush.bf16.msra.mxu0 0
      %3963 = vmatpush.bf16.msra.mxu0 0
      %3964 = vmatpush.bf16.msra.mxu0 0
      %3965 = vmatpush.bf16.msra.mxu0 0
      %3966 = vmatpush.bf16.msra.mxu0 %v3954
      %3967 = vmatpush.bf16.msra.mxu0 %v3953
      %3968 = vmatmul.bf16.gmra.mxu0 %v3958
      %v3969 = vpop.f32.mrf.mxu0
      %v3970 = vadd.f32 0.0, %v3969
      %v3971 = vpop.f32.mrf.mxu0
      %3972 = vdwg.mxu0
      %v3977 = vunpack.c.l.b16 %v3613
      %v3978 = vunpack.c.l.b16 %v3614
      %v3979 = vunpack.c.l.b16 %v3615
      %v3980 = vunpack.c.l.b16 %v3616
      %v3981 = vpack.c.b16 %v3978, %v3977
      %v3982 = vpack.c.b16 %v3980, %v3979
      %v3986 = vsel %vm1271, %v3611, 0
      %3988 = vmatpush.bf16.msra.mxu0 0
      %3989 = vmatpush.bf16.msra.mxu0 0
      %3990 = vmatpush.bf16.msra.mxu0 0
      %3991 = vmatpush.bf16.msra.mxu0 0
      %3992 = vmatpush.bf16.msra.mxu0 0
      %3993 = vmatpush.bf16.msra.mxu0 0
      %3994 = vmatpush.bf16.msra.mxu0 %v3982
      %3995 = vmatpush.bf16.msra.mxu0 %v3981
      %3996 = vmatmul.bf16.gmra.mxu0 %v3986
      %v3997 = vpop.f32.mrf.mxu0
      %v3998 = vadd.f32 %v3970, %v3997
      %v3999 = vpop.f32.mrf.mxu0
      %4000 = vdwg.mxu0
      %s4001 = scalar_lea.vmem %s11, 384
      %v4002 = vld [vmem:[%s4001] sm:$0xf]
      %v4003 = vld [vmem:[%s4001 + $0x4] sm:$0xf]
      %v4004 = vld [vmem:[%s4001 + $0x8] sm:$0xf]
      %v4005 = vld [vmem:[%s4001 + $0xc] sm:$0xf]
      %v4006 = vld [vmem:[%s4001 + $0x10] sm:$0xf]
      %v4007 = vld [vmem:[%s4001 + $0x14] sm:$0xf]
      %v4008 = vld [vmem:[%s4001 + $0x18] sm:$0xf]
      %v4009 = vld [vmem:[%s4001 + $0x1c] sm:$0xf]
      %v4010 = vld [vmem:[%s4001 + $0x20] sm:$0xf]
      %v4011 = vld [vmem:[%s4001 + $0x24] sm:$0xf]
      %v4012 = vld [vmem:[%s4001 + $0x28] sm:$0xf]
      %v4013 = vld [vmem:[%s4001 + $0x2c] sm:$0xf]
      %v4014 = vld [vmem:[%s4001 + $0x30] sm:$0xf]
      %v4015 = vld [vmem:[%s4001 + $0x34] sm:$0xf]
      %v4016 = vld [vmem:[%s4001 + $0x38] sm:$0xf]
      %v4017 = vld [vmem:[%s4001 + $0x3c] sm:$0xf]
      %s4018 = scalar_lea.vmem %s13, 6
      %v4019 = vld [vmem:[%s4018] sm:$0x1]
      %v4021 = vperm.slane %v4019, 0
      %v4039 = vunpack.c.l.b16 %v4002
      %v4040 = vunpack.c.l.b16 %v4003
      %v4041 = vunpack.c.l.b16 %v4004
      %v4042 = vunpack.c.l.b16 %v4005
      %v4043 = vunpack.c.l.b16 %v4006
      %v4044 = vunpack.c.l.b16 %v4007
      %v4045 = vunpack.c.l.b16 %v4008
      %v4046 = vunpack.c.l.b16 %v4009
      %v4047 = vunpack.c.l.b16 %v4010
      %v4048 = vunpack.c.l.b16 %v4011
      %v4049 = vunpack.c.l.b16 %v4012
      %v4050 = vunpack.c.l.b16 %v4013
      %v4051 = vunpack.c.l.b16 %v4014
      %v4052 = vunpack.c.l.b16 %v4015
      %v4053 = vunpack.c.l.b16 %v4016
      %v4054 = vunpack.c.l.b16 %v4017
      %v4055 = vpack.c.b16 %v4040, %v4039
      %v4056 = vpack.c.b16 %v4042, %v4041
      %v4057 = vpack.c.b16 %v4044, %v4043
      %v4058 = vpack.c.b16 %v4046, %v4045
      %v4059 = vpack.c.b16 %v4048, %v4047
      %v4060 = vpack.c.b16 %v4050, %v4049
      %v4061 = vpack.c.b16 %v4052, %v4051
      %v4062 = vpack.c.b16 %v4054, %v4053
      %4071 = vmatpush.bf16.msra.mxu0 %v4062
      %4072 = vmatpush.bf16.msra.mxu0 %v4061
      %4073 = vmatpush.bf16.msra.mxu0 %v4060
      %4074 = vmatpush.bf16.msra.mxu0 %v4059
      %4075 = vmatpush.bf16.msra.mxu0 %v4058
      %4076 = vmatpush.bf16.msra.mxu0 %v4057
      %4077 = vmatpush.bf16.msra.mxu0 %v4056
      %4078 = vmatpush.bf16.msra.mxu0 %v4055
      %4079 = vmatmul.bf16.gmra.mxu0 %v3288
      %v4080 = vpop.f32.mrf.mxu0
      %v4081 = vadd.f32 %v4021, %v4080
      %v4082 = vpop.f32.mrf.mxu0
      %4083 = vdwg.mxu0
      %s4084 = scalar_lea.vmem %s15, 384
      %v4085 = vld [vmem:[%s4084] sm:$0xf]
      %v4086 = vld [vmem:[%s4084 + $0x4] sm:$0xf]
      %v4087 = vld [vmem:[%s4084 + $0x8] sm:$0xf]
      %v4088 = vld [vmem:[%s4084 + $0xc] sm:$0xf]
      %v4089 = vld [vmem:[%s4084 + $0x10] sm:$0xf]
      %v4090 = vld [vmem:[%s4084 + $0x14] sm:$0xf]
      %v4091 = vld [vmem:[%s4084 + $0x18] sm:$0xf]
      %v4092 = vld [vmem:[%s4084 + $0x1c] sm:$0xf]
      %v4093 = vld [vmem:[%s4084 + $0x20] sm:$0xf]
      %v4094 = vld [vmem:[%s4084 + $0x24] sm:$0xf]
      %v4095 = vld [vmem:[%s4084 + $0x28] sm:$0xf]
      %v4096 = vld [vmem:[%s4084 + $0x2c] sm:$0xf]
      %v4097 = vld [vmem:[%s4084 + $0x30] sm:$0xf]
      %v4098 = vld [vmem:[%s4084 + $0x34] sm:$0xf]
      %v4099 = vld [vmem:[%s4084 + $0x38] sm:$0xf]
      %v4100 = vld [vmem:[%s4084 + $0x3c] sm:$0xf]
      %s4101 = scalar_lea.vmem %s17, 6
      %v4102 = vld [vmem:[%s4101] sm:$0x1]
      %v4104 = vperm.slane %v4102, 0
      %v4122 = vunpack.c.l.b16 %v4085
      %v4123 = vunpack.c.l.b16 %v4086
      %v4124 = vunpack.c.l.b16 %v4087
      %v4125 = vunpack.c.l.b16 %v4088
      %v4126 = vunpack.c.l.b16 %v4089
      %v4127 = vunpack.c.l.b16 %v4090
      %v4128 = vunpack.c.l.b16 %v4091
      %v4129 = vunpack.c.l.b16 %v4092
      %v4130 = vunpack.c.l.b16 %v4093
      %v4131 = vunpack.c.l.b16 %v4094
      %v4132 = vunpack.c.l.b16 %v4095
      %v4133 = vunpack.c.l.b16 %v4096
      %v4134 = vunpack.c.l.b16 %v4097
      %v4135 = vunpack.c.l.b16 %v4098
      %v4136 = vunpack.c.l.b16 %v4099
      %v4137 = vunpack.c.l.b16 %v4100
      %v4138 = vpack.c.b16 %v4123, %v4122
      %v4139 = vpack.c.b16 %v4125, %v4124
      %v4140 = vpack.c.b16 %v4127, %v4126
      %v4141 = vpack.c.b16 %v4129, %v4128
      %v4142 = vpack.c.b16 %v4131, %v4130
      %v4143 = vpack.c.b16 %v4133, %v4132
      %v4144 = vpack.c.b16 %v4135, %v4134
      %v4145 = vpack.c.b16 %v4137, %v4136
      %4154 = vmatpush.bf16.msra.mxu0 %v4145
      %4155 = vmatpush.bf16.msra.mxu0 %v4144
      %4156 = vmatpush.bf16.msra.mxu0 %v4143
      %4157 = vmatpush.bf16.msra.mxu0 %v4142
      %4158 = vmatpush.bf16.msra.mxu0 %v4141
      %4159 = vmatpush.bf16.msra.mxu0 %v4140
      %4160 = vmatpush.bf16.msra.mxu0 %v4139
      %4161 = vmatpush.bf16.msra.mxu0 %v4138
      %4162 = vmatmul.bf16.gmra.mxu0 %v3288
      %v4163 = vpop.f32.mrf.mxu0
      %v4164 = vadd.f32 %v4104, %v4163
      %v4165 = vpop.f32.mrf.mxu0
      %4166 = vdwg.mxu0
      %s4167 = scalar_lea.vmem %s19, 384
      %v4168 = vld [vmem:[%s4167] sm:$0xf]
      %v4169 = vld [vmem:[%s4167 + $0x4] sm:$0xf]
      %v4170 = vld [vmem:[%s4167 + $0x8] sm:$0xf]
      %v4171 = vld [vmem:[%s4167 + $0xc] sm:$0xf]
      %v4172 = vld [vmem:[%s4167 + $0x10] sm:$0xf]
      %v4173 = vld [vmem:[%s4167 + $0x14] sm:$0xf]
      %v4174 = vld [vmem:[%s4167 + $0x18] sm:$0xf]
      %v4175 = vld [vmem:[%s4167 + $0x1c] sm:$0xf]
      %v4176 = vld [vmem:[%s4167 + $0x20] sm:$0xf]
      %v4177 = vld [vmem:[%s4167 + $0x24] sm:$0xf]
      %v4178 = vld [vmem:[%s4167 + $0x28] sm:$0xf]
      %v4179 = vld [vmem:[%s4167 + $0x2c] sm:$0xf]
      %v4180 = vld [vmem:[%s4167 + $0x30] sm:$0xf]
      %v4181 = vld [vmem:[%s4167 + $0x34] sm:$0xf]
      %v4182 = vld [vmem:[%s4167 + $0x38] sm:$0xf]
      %v4183 = vld [vmem:[%s4167 + $0x3c] sm:$0xf]
      %s4184 = scalar_lea.vmem %s21, 6
      %v4185 = vld [vmem:[%s4184] sm:$0x1]
      %v4187 = vperm.slane %v4185, 0
      %v4205 = vunpack.c.l.b16 %v4168
      %v4206 = vunpack.c.l.b16 %v4169
      %v4207 = vunpack.c.l.b16 %v4170
      %v4208 = vunpack.c.l.b16 %v4171
      %v4209 = vunpack.c.l.b16 %v4172
      %v4210 = vunpack.c.l.b16 %v4173
      %v4211 = vunpack.c.l.b16 %v4174
      %v4212 = vunpack.c.l.b16 %v4175
      %v4213 = vunpack.c.l.b16 %v4176
      %v4214 = vunpack.c.l.b16 %v4177
      %v4215 = vunpack.c.l.b16 %v4178
      %v4216 = vunpack.c.l.b16 %v4179
      %v4217 = vunpack.c.l.b16 %v4180
      %v4218 = vunpack.c.l.b16 %v4181
      %v4219 = vunpack.c.l.b16 %v4182
      %v4220 = vunpack.c.l.b16 %v4183
      %v4221 = vpack.c.b16 %v4206, %v4205
      %v4222 = vpack.c.b16 %v4208, %v4207
      %v4223 = vpack.c.b16 %v4210, %v4209
      %v4224 = vpack.c.b16 %v4212, %v4211
      %v4225 = vpack.c.b16 %v4214, %v4213
      %v4226 = vpack.c.b16 %v4216, %v4215
      %v4227 = vpack.c.b16 %v4218, %v4217
      %v4228 = vpack.c.b16 %v4220, %v4219
      %4237 = vmatpush.bf16.msra.mxu0 %v4228
      %4238 = vmatpush.bf16.msra.mxu0 %v4227
      %4239 = vmatpush.bf16.msra.mxu0 %v4226
      %4240 = vmatpush.bf16.msra.mxu0 %v4225
      %4241 = vmatpush.bf16.msra.mxu0 %v4224
      %4242 = vmatpush.bf16.msra.mxu0 %v4223
      %4243 = vmatpush.bf16.msra.mxu0 %v4222
      %4244 = vmatpush.bf16.msra.mxu0 %v4221
      %4245 = vmatmul.bf16.gmra.mxu0 %v3288
      %v4246 = vpop.f32.mrf.mxu0
      %v4247 = vadd.f32 %v4187, %v4246
      %v4248 = vpop.f32.mrf.mxu0
      %4249 = vdwg.mxu0
      %v4251 = vsel %vm1271, %v4081, 0
      %v4254 = vsel %vm1271, %v4164, 0
      %4256 = vmatpush.xpose.msra.mxu0 0.0
      %4257 = vmatpush.xpose.msra.mxu0 0.0
      %4258 = vmatpush.xpose.msra.mxu0 0.0
      %4259 = vmatpush.xpose.msra.mxu0 0.0
      %4260 = vmatpush.xpose.msra.mxu0 0.0
      %4261 = vmatpush.xpose.msra.mxu0 0.0
      %4262 = vmatpush.xpose.msra.mxu0 0.0
      %4263 = vmatpush.xpose.msra.mxu0 0.0
      %4264 = vmatpush.xpose.msra.mxu0 0.0
      %4265 = vmatpush.xpose.msra.mxu0 0.0
      %4266 = vmatpush.xpose.msra.mxu0 0.0
      %4267 = vmatpush.xpose.msra.mxu0 0.0
      %4268 = vmatpush.xpose.msra.mxu0 0.0
      %4269 = vmatpush.xpose.msra.mxu0 0.0
      %4270 = vmatpush.xpose.msra.mxu0 0.0
      %4271 = vmatpush.xpose.msra.mxu0 %v4254
      %4272 = vmatmul.f32.gmra.mxu0 %v4251
      %v4273 = vpop.f32.mrf.mxu0
      %v4274 = vadd.f32 0.0, %v4273
      %4275 = vdwg.mxu0
      %v4276 = vmul.f32 %v4274, 0.17677669
      %v4277 = vadd.f32 %v4276, %v1026
      %v4278 = vsel %vm1300, %v4277, -inf
      %4279 = vmax.xlane.f32.xlu0 %v4278
      %v4280 = vpop.xlane.xlu0 %4279
      %v4281 = vsub.f32 %v4277, %v4280
      %v4282 = vmul.f32 %v4281, 1.442695
      %v4283 = vpow.pop %v4282
      %v4284 = vsel %vm1300, %v4283, 0.0
      %4285 = vadd.xlane.f32.xlu0 %v4284
      %v4286 = vpop.xlane.xlu0 %4285
      %v4287 = vrcp.pop %v4286
      %v4288 = vmul.f32 %v4286, %v4287
      %v4289 = vsub.f32 1.0, %v4288
      %v4290 = vmul.f32 %v4287, %v4289
      %v4291 = vadd.f32 %v4287, %v4290
      %vm4292 = vweird.f32 %v4286
      %vm4293 = vweird.f32 %v4287
      %vm4294 = vmor %vm4292, %vm4293
      %v4295 = vsel %vm4294, %v4287, %v4291
      %v4296 = vand.u32 2147483647, %v4286
      %vm4297 = vcmp.eq.f32.partialorder %v4296, 8.507059e+37
      %v4298 = vand.u32 %v4286, 2147483648
      %v4299 = vor.u32 1.1754944e-38, %v4298
      %v4300 = vsel %vm4297, %v4299, %v4295
      %v4301 = vmul.f32 %v4283, %v4300
      %v4302 = vpack.c.bf16 %v4301, %v4301
      %v4303 = vpack.c.bf16 %v4247, %v4247
      %v4305 = vsel %vm1300, %v4302, 0
      %v4308 = vsel %vm1330, %v4303, 0
      %4310 = vmatpush.bf16.msra.mxu0 0
      %4311 = vmatpush.bf16.msra.mxu0 0
      %4312 = vmatpush.bf16.msra.mxu0 0
      %4313 = vmatpush.bf16.msra.mxu0 0
      %4314 = vmatpush.bf16.msra.mxu0 0
      %4315 = vmatpush.bf16.msra.mxu0 0
      %4316 = vmatpush.bf16.msra.mxu0 0
      %4317 = vmatpush.bf16.msra.mxu0 %v4308
      %4318 = vmatmul.bf16.gmra.mxu0 %v4305
      %v4319 = vpop.f32.mrf.mxu0
      %v4320 = vadd.f32 0.0, %v4319
      %v4321 = vpop.f32.mrf.mxu0
      %4322 = vdwg.mxu0
      %v4323 = vpack.c.bf16 %v4320, %v4320
      %s4324 = scalar_lea.vmem %s23, 96
      %v4325 = vld [vmem:[%s4324] sm:$0xf]
      %v4326 = vld [vmem:[%s4324 + $0x4] sm:$0xf]
      %v4327 = vld [vmem:[%s4324 + $0x8] sm:$0xf]
      %v4328 = vld [vmem:[%s4324 + $0xc] sm:$0xf]
      %v4333 = vunpack.c.l.b16 %v4325
      %v4334 = vunpack.c.l.b16 %v4326
      %v4335 = vunpack.c.l.b16 %v4327
      %v4336 = vunpack.c.l.b16 %v4328
      %v4337 = vpack.c.b16 %v4334, %v4333
      %v4338 = vpack.c.b16 %v4336, %v4335
      %v4342 = vsel %vm1271, %v4323, 0
      %4344 = vmatpush.bf16.msra.mxu0 0
      %4345 = vmatpush.bf16.msra.mxu0 0
      %4346 = vmatpush.bf16.msra.mxu0 0
      %4347 = vmatpush.bf16.msra.mxu0 0
      %4348 = vmatpush.bf16.msra.mxu0 0
      %4349 = vmatpush.bf16.msra.mxu0 0
      %4350 = vmatpush.bf16.msra.mxu0 %v4338
      %4351 = vmatpush.bf16.msra.mxu0 %v4337
      %4352 = vmatmul.bf16.gmra.mxu0 %v4342
      %v4353 = vpop.f32.mrf.mxu0
      %v4354 = vadd.f32 0.0, %v4353
      %v4355 = vpop.f32.mrf.mxu0
      %4356 = vdwg.mxu0
      %v4357 = vadd.f32 %v3998, %v4354
      %s4358 = scalar_lea.vmem %s11, 448
      %v4359 = vld [vmem:[%s4358] sm:$0xf]
      %v4360 = vld [vmem:[%s4358 + $0x4] sm:$0xf]
      %v4361 = vld [vmem:[%s4358 + $0x8] sm:$0xf]
      %v4362 = vld [vmem:[%s4358 + $0xc] sm:$0xf]
      %v4363 = vld [vmem:[%s4358 + $0x10] sm:$0xf]
      %v4364 = vld [vmem:[%s4358 + $0x14] sm:$0xf]
      %v4365 = vld [vmem:[%s4358 + $0x18] sm:$0xf]
      %v4366 = vld [vmem:[%s4358 + $0x1c] sm:$0xf]
      %v4367 = vld [vmem:[%s4358 + $0x20] sm:$0xf]
      %v4368 = vld [vmem:[%s4358 + $0x24] sm:$0xf]
      %v4369 = vld [vmem:[%s4358 + $0x28] sm:$0xf]
      %v4370 = vld [vmem:[%s4358 + $0x2c] sm:$0xf]
      %v4371 = vld [vmem:[%s4358 + $0x30] sm:$0xf]
      %v4372 = vld [vmem:[%s4358 + $0x34] sm:$0xf]
      %v4373 = vld [vmem:[%s4358 + $0x38] sm:$0xf]
      %v4374 = vld [vmem:[%s4358 + $0x3c] sm:$0xf]
      %s4375 = scalar_lea.vmem %s13, 7
      %v4376 = vld [vmem:[%s4375] sm:$0x1]
      %v4378 = vperm.slane %v4376, 0
      %v4396 = vunpack.c.l.b16 %v4359
      %v4397 = vunpack.c.l.b16 %v4360
      %v4398 = vunpack.c.l.b16 %v4361
      %v4399 = vunpack.c.l.b16 %v4362
      %v4400 = vunpack.c.l.b16 %v4363
      %v4401 = vunpack.c.l.b16 %v4364
      %v4402 = vunpack.c.l.b16 %v4365
      %v4403 = vunpack.c.l.b16 %v4366
      %v4404 = vunpack.c.l.b16 %v4367
      %v4405 = vunpack.c.l.b16 %v4368
      %v4406 = vunpack.c.l.b16 %v4369
      %v4407 = vunpack.c.l.b16 %v4370
      %v4408 = vunpack.c.l.b16 %v4371
      %v4409 = vunpack.c.l.b16 %v4372
      %v4410 = vunpack.c.l.b16 %v4373
      %v4411 = vunpack.c.l.b16 %v4374
      %v4412 = vpack.c.b16 %v4397, %v4396
      %v4413 = vpack.c.b16 %v4399, %v4398
      %v4414 = vpack.c.b16 %v4401, %v4400
      %v4415 = vpack.c.b16 %v4403, %v4402
      %v4416 = vpack.c.b16 %v4405, %v4404
      %v4417 = vpack.c.b16 %v4407, %v4406
      %v4418 = vpack.c.b16 %v4409, %v4408
      %v4419 = vpack.c.b16 %v4411, %v4410
      %4428 = vmatpush.bf16.msra.mxu0 %v4419
      %4429 = vmatpush.bf16.msra.mxu0 %v4418
      %4430 = vmatpush.bf16.msra.mxu0 %v4417
      %4431 = vmatpush.bf16.msra.mxu0 %v4416
      %4432 = vmatpush.bf16.msra.mxu0 %v4415
      %4433 = vmatpush.bf16.msra.mxu0 %v4414
      %4434 = vmatpush.bf16.msra.mxu0 %v4413
      %4435 = vmatpush.bf16.msra.mxu0 %v4412
      %4436 = vmatmul.bf16.gmra.mxu0 %v3288
      %v4437 = vpop.f32.mrf.mxu0
      %v4438 = vadd.f32 %v4378, %v4437
      %v4439 = vpop.f32.mrf.mxu0
      %4440 = vdwg.mxu0
      %s4441 = scalar_lea.vmem %s15, 448
      %v4442 = vld [vmem:[%s4441] sm:$0xf]
      %v4443 = vld [vmem:[%s4441 + $0x4] sm:$0xf]
      %v4444 = vld [vmem:[%s4441 + $0x8] sm:$0xf]
      %v4445 = vld [vmem:[%s4441 + $0xc] sm:$0xf]
      %v4446 = vld [vmem:[%s4441 + $0x10] sm:$0xf]
      %v4447 = vld [vmem:[%s4441 + $0x14] sm:$0xf]
      %v4448 = vld [vmem:[%s4441 + $0x18] sm:$0xf]
      %v4449 = vld [vmem:[%s4441 + $0x1c] sm:$0xf]
      %v4450 = vld [vmem:[%s4441 + $0x20] sm:$0xf]
      %v4451 = vld [vmem:[%s4441 + $0x24] sm:$0xf]
      %v4452 = vld [vmem:[%s4441 + $0x28] sm:$0xf]
      %v4453 = vld [vmem:[%s4441 + $0x2c] sm:$0xf]
      %v4454 = vld [vmem:[%s4441 + $0x30] sm:$0xf]
      %v4455 = vld [vmem:[%s4441 + $0x34] sm:$0xf]
      %v4456 = vld [vmem:[%s4441 + $0x38] sm:$0xf]
      %v4457 = vld [vmem:[%s4441 + $0x3c] sm:$0xf]
      %s4458 = scalar_lea.vmem %s17, 7
      %v4459 = vld [vmem:[%s4458] sm:$0x1]
      %v4461 = vperm.slane %v4459, 0
      %v4479 = vunpack.c.l.b16 %v4442
      %v4480 = vunpack.c.l.b16 %v4443
      %v4481 = vunpack.c.l.b16 %v4444
      %v4482 = vunpack.c.l.b16 %v4445
      %v4483 = vunpack.c.l.b16 %v4446
      %v4484 = vunpack.c.l.b16 %v4447
      %v4485 = vunpack.c.l.b16 %v4448
      %v4486 = vunpack.c.l.b16 %v4449
      %v4487 = vunpack.c.l.b16 %v4450
      %v4488 = vunpack.c.l.b16 %v4451
      %v4489 = vunpack.c.l.b16 %v4452
      %v4490 = vunpack.c.l.b16 %v4453
      %v4491 = vunpack.c.l.b16 %v4454
      %v4492 = vunpack.c.l.b16 %v4455
      %v4493 = vunpack.c.l.b16 %v4456
      %v4494 = vunpack.c.l.b16 %v4457
      %v4495 = vpack.c.b16 %v4480, %v4479
      %v4496 = vpack.c.b16 %v4482, %v4481
      %v4497 = vpack.c.b16 %v4484, %v4483
      %v4498 = vpack.c.b16 %v4486, %v4485
      %v4499 = vpack.c.b16 %v4488, %v4487
      %v4500 = vpack.c.b16 %v4490, %v4489
      %v4501 = vpack.c.b16 %v4492, %v4491
      %v4502 = vpack.c.b16 %v4494, %v4493
      %4511 = vmatpush.bf16.msra.mxu0 %v4502
      %4512 = vmatpush.bf16.msra.mxu0 %v4501
      %4513 = vmatpush.bf16.msra.mxu0 %v4500
      %4514 = vmatpush.bf16.msra.mxu0 %v4499
      %4515 = vmatpush.bf16.msra.mxu0 %v4498
      %4516 = vmatpush.bf16.msra.mxu0 %v4497
      %4517 = vmatpush.bf16.msra.mxu0 %v4496
      %4518 = vmatpush.bf16.msra.mxu0 %v4495
      %4519 = vmatmul.bf16.gmra.mxu0 %v3288
      %v4520 = vpop.f32.mrf.mxu0
      %v4521 = vadd.f32 %v4461, %v4520
      %v4522 = vpop.f32.mrf.mxu0
      %4523 = vdwg.mxu0
      %s4524 = scalar_lea.vmem %s19, 448
      %v4525 = vld [vmem:[%s4524] sm:$0xf]
      %v4526 = vld [vmem:[%s4524 + $0x4] sm:$0xf]
      %v4527 = vld [vmem:[%s4524 + $0x8] sm:$0xf]
      %v4528 = vld [vmem:[%s4524 + $0xc] sm:$0xf]
      %v4529 = vld [vmem:[%s4524 + $0x10] sm:$0xf]
      %v4530 = vld [vmem:[%s4524 + $0x14] sm:$0xf]
      %v4531 = vld [vmem:[%s4524 + $0x18] sm:$0xf]
      %v4532 = vld [vmem:[%s4524 + $0x1c] sm:$0xf]
      %v4533 = vld [vmem:[%s4524 + $0x20] sm:$0xf]
      %v4534 = vld [vmem:[%s4524 + $0x24] sm:$0xf]
      %v4535 = vld [vmem:[%s4524 + $0x28] sm:$0xf]
      %v4536 = vld [vmem:[%s4524 + $0x2c] sm:$0xf]
      %v4537 = vld [vmem:[%s4524 + $0x30] sm:$0xf]
      %v4538 = vld [vmem:[%s4524 + $0x34] sm:$0xf]
      %v4539 = vld [vmem:[%s4524 + $0x38] sm:$0xf]
      %v4540 = vld [vmem:[%s4524 + $0x3c] sm:$0xf]
      %s4541 = scalar_lea.vmem %s21, 7
      %v4542 = vld [vmem:[%s4541] sm:$0x1]
      %v4544 = vperm.slane %v4542, 0
      %v4562 = vunpack.c.l.b16 %v4525
      %v4563 = vunpack.c.l.b16 %v4526
      %v4564 = vunpack.c.l.b16 %v4527
      %v4565 = vunpack.c.l.b16 %v4528
      %v4566 = vunpack.c.l.b16 %v4529
      %v4567 = vunpack.c.l.b16 %v4530
      %v4568 = vunpack.c.l.b16 %v4531
      %v4569 = vunpack.c.l.b16 %v4532
      %v4570 = vunpack.c.l.b16 %v4533
      %v4571 = vunpack.c.l.b16 %v4534
      %v4572 = vunpack.c.l.b16 %v4535
      %v4573 = vunpack.c.l.b16 %v4536
      %v4574 = vunpack.c.l.b16 %v4537
      %v4575 = vunpack.c.l.b16 %v4538
      %v4576 = vunpack.c.l.b16 %v4539
      %v4577 = vunpack.c.l.b16 %v4540
      %v4578 = vpack.c.b16 %v4563, %v4562
      %v4579 = vpack.c.b16 %v4565, %v4564
      %v4580 = vpack.c.b16 %v4567, %v4566
      %v4581 = vpack.c.b16 %v4569, %v4568
      %v4582 = vpack.c.b16 %v4571, %v4570
      %v4583 = vpack.c.b16 %v4573, %v4572
      %v4584 = vpack.c.b16 %v4575, %v4574
      %v4585 = vpack.c.b16 %v4577, %v4576
      %4594 = vmatpush.bf16.msra.mxu0 %v4585
      %4595 = vmatpush.bf16.msra.mxu0 %v4584
      %4596 = vmatpush.bf16.msra.mxu0 %v4583
      %4597 = vmatpush.bf16.msra.mxu0 %v4582
      %4598 = vmatpush.bf16.msra.mxu0 %v4581
      %4599 = vmatpush.bf16.msra.mxu0 %v4580
      %4600 = vmatpush.bf16.msra.mxu0 %v4579
      %4601 = vmatpush.bf16.msra.mxu0 %v4578
      %4602 = vmatmul.bf16.gmra.mxu0 %v3288
      %v4603 = vpop.f32.mrf.mxu0
      %v4604 = vadd.f32 %v4544, %v4603
      %v4605 = vpop.f32.mrf.mxu0
      %4606 = vdwg.mxu0
      %v4608 = vsel %vm1271, %v4438, 0
      %v4611 = vsel %vm1271, %v4521, 0
      %4613 = vmatpush.xpose.msra.mxu0 0.0
      %4614 = vmatpush.xpose.msra.mxu0 0.0
      %4615 = vmatpush.xpose.msra.mxu0 0.0
      %4616 = vmatpush.xpose.msra.mxu0 0.0
      %4617 = vmatpush.xpose.msra.mxu0 0.0
      %4618 = vmatpush.xpose.msra.mxu0 0.0
      %4619 = vmatpush.xpose.msra.mxu0 0.0
      %4620 = vmatpush.xpose.msra.mxu0 0.0
      %4621 = vmatpush.xpose.msra.mxu0 0.0
      %4622 = vmatpush.xpose.msra.mxu0 0.0
      %4623 = vmatpush.xpose.msra.mxu0 0.0
      %4624 = vmatpush.xpose.msra.mxu0 0.0
      %4625 = vmatpush.xpose.msra.mxu0 0.0
      %4626 = vmatpush.xpose.msra.mxu0 0.0
      %4627 = vmatpush.xpose.msra.mxu0 0.0
      %4628 = vmatpush.xpose.msra.mxu0 %v4611
      %4629 = vmatmul.f32.gmra.mxu0 %v4608
      %v4630 = vpop.f32.mrf.mxu0
      %v4631 = vadd.f32 0.0, %v4630
      %4632 = vdwg.mxu0
      %v4633 = vmul.f32 %v4631, 0.17677669
      %v4634 = vadd.f32 %v4633, %v1026
      %v4635 = vsel %vm1300, %v4634, -inf
      %4636 = vmax.xlane.f32.xlu0 %v4635
      %v4637 = vpop.xlane.xlu0 %4636
      %v4638 = vsub.f32 %v4634, %v4637
      %v4639 = vmul.f32 %v4638, 1.442695
      %v4640 = vpow.pop %v4639
      %v4641 = vsel %vm1300, %v4640, 0.0
      %4642 = vadd.xlane.f32.xlu0 %v4641
      %v4643 = vpop.xlane.xlu0 %4642
      %v4644 = vrcp.pop %v4643
      %v4645 = vmul.f32 %v4643, %v4644
      %v4646 = vsub.f32 1.0, %v4645
      %v4647 = vmul.f32 %v4644, %v4646
      %v4648 = vadd.f32 %v4644, %v4647
      %vm4649 = vweird.f32 %v4643
      %vm4650 = vweird.f32 %v4644
      %vm4651 = vmor %vm4649, %vm4650
      %v4652 = vsel %vm4651, %v4644, %v4648
      %v4653 = vand.u32 2147483647, %v4643
      %vm4654 = vcmp.eq.f32.partialorder %v4653, 8.507059e+37
      %v4655 = vand.u32 %v4643, 2147483648
      %v4656 = vor.u32 1.1754944e-38, %v4655
      %v4657 = vsel %vm4654, %v4656, %v4652
      %v4658 = vmul.f32 %v4640, %v4657
      %v4659 = vpack.c.bf16 %v4658, %v4658
      %v4660 = vpack.c.bf16 %v4604, %v4604
      %v4662 = vsel %vm1300, %v4659, 0
      %v4665 = vsel %vm1330, %v4660, 0
      %4667 = vmatpush.bf16.msra.mxu0 0
      %4668 = vmatpush.bf16.msra.mxu0 0
      %4669 = vmatpush.bf16.msra.mxu0 0
      %4670 = vmatpush.bf16.msra.mxu0 0
      %4671 = vmatpush.bf16.msra.mxu0 0
      %4672 = vmatpush.bf16.msra.mxu0 0
      %4673 = vmatpush.bf16.msra.mxu0 0
      %4674 = vmatpush.bf16.msra.mxu0 %v4665
      %4675 = vmatmul.bf16.gmra.mxu0 %v4662
      %v4676 = vpop.f32.mrf.mxu0
      %v4677 = vadd.f32 0.0, %v4676
      %v4678 = vpop.f32.mrf.mxu0
      %4679 = vdwg.mxu0
      %v4680 = vpack.c.bf16 %v4677, %v4677
      %s4681 = scalar_lea.vmem %s23, 112
      %v4682 = vld [vmem:[%s4681] sm:$0xf]
      %v4683 = vld [vmem:[%s4681 + $0x4] sm:$0xf]
      %v4684 = vld [vmem:[%s4681 + $0x8] sm:$0xf]
      %v4685 = vld [vmem:[%s4681 + $0xc] sm:$0xf]
      %v4690 = vunpack.c.l.b16 %v4682
      %v4691 = vunpack.c.l.b16 %v4683
      %v4692 = vunpack.c.l.b16 %v4684
      %v4693 = vunpack.c.l.b16 %v4685
      %v4694 = vpack.c.b16 %v4691, %v4690
      %v4695 = vpack.c.b16 %v4693, %v4692
      %v4699 = vsel %vm1271, %v4680, 0
      %4701 = vmatpush.bf16.msra.mxu0 0
      %4702 = vmatpush.bf16.msra.mxu0 0
      %4703 = vmatpush.bf16.msra.mxu0 0
      %4704 = vmatpush.bf16.msra.mxu0 0
      %4705 = vmatpush.bf16.msra.mxu0 0
      %4706 = vmatpush.bf16.msra.mxu0 0
      %4707 = vmatpush.bf16.msra.mxu0 %v4695
      %4708 = vmatpush.bf16.msra.mxu0 %v4694
      %4709 = vmatmul.bf16.gmra.mxu0 %v4699
      %v4710 = vpop.f32.mrf.mxu0
      %v4711 = vadd.f32 0.0, %v4710
      %v4712 = vpop.f32.mrf.mxu0
      %4713 = vdwg.mxu0
      %v4714 = vadd.f32 %v4357, %v4711
      %s4715 = scalar_lea.vmem %s25, 1
      %v4716 = vld [vmem:[%s4715] sm:$0x1]
      %v4718 = vperm.slane %v4716, 0
      %v4720 = vadd.f32 %v4714, %v4718
      %v4721 = vadd.f32 %v3287, %v4720
      %s4722 = scalar_lea.vmem %s43, 1
      %v4723 = vld [vmem:[%s4722] sm:$0x1]
      %s4724 = scalar_lea.vmem %s45, 1
      %v4725 = vld [vmem:[%s4724] sm:$0x1]
      %4726 = vadd.xlane.f32.xlu0 %v4721
      %v4727 = vpop.xlane.xlu0 %4726
      %v4728 = vmul.f32 %v4727, %v2466
      %v4729 = vsub.f32 %v4721, %v4728
      %v4730 = vmul.f32 %v4729, %v4729
      %4731 = vadd.xlane.f32.xlu0 %v4730
      %v4732 = vpop.xlane.xlu0 %4731
      %v4733 = vmul.f32 %v4732, %v2466
      %v4734 = vadd.f32 %v4733, 1e-05
      %v4735 = vrsqrt.pop %v4734
      %v4736 = vmul.f32 %v4735, %v4734
      %v4737 = vmul.f32 %v4736, %v4735
      %v4738 = vmul.f32 0.5, %v4737
      %v4739 = vsub.f32 1.5, %v4738
      %v4740 = vmul.f32 %v4735, %v4739
      %vm4741 = vweird.f32 %v4734
      %vm4742 = vweird.f32 %v4735
      %vm4743 = vmor %vm4741, %vm4742
      %v4744 = vsel %vm4743, %v4735, %v4740
      %v4745 = vmul.f32 %v4729, %v4744
      %v4747 = vperm.slane %v4723, 0
      %v4749 = vmul.f32 %v4745, %v4747
      %v4751 = vperm.slane %v4725, 0
      %v4753 = vadd.f32 %v4749, %v4751
      %s4754 = scalar_lea.vmem %s27, 64
      %v4755 = vld [vmem:[%s4754] sm:$0xf]
      %v4756 = vld [vmem:[%s4754 + $0x4] sm:$0xf]
      %v4757 = vld [vmem:[%s4754 + $0x8] sm:$0xf]
      %v4758 = vld [vmem:[%s4754 + $0xc] sm:$0xf]
      %v4759 = vld [vmem:[%s4754 + $0x10] sm:$0xf]
      %v4760 = vld [vmem:[%s4754 + $0x14] sm:$0xf]
      %v4761 = vld [vmem:[%s4754 + $0x18] sm:$0xf]
      %v4762 = vld [vmem:[%s4754 + $0x1c] sm:$0xf]
      %v4763 = vld [vmem:[%s4754 + $0x20] sm:$0xf]
      %v4764 = vld [vmem:[%s4754 + $0x24] sm:$0xf]
      %v4765 = vld [vmem:[%s4754 + $0x28] sm:$0xf]
      %v4766 = vld [vmem:[%s4754 + $0x2c] sm:$0xf]
      %v4767 = vld [vmem:[%s4754 + $0x30] sm:$0xf]
      %v4768 = vld [vmem:[%s4754 + $0x34] sm:$0xf]
      %v4769 = vld [vmem:[%s4754 + $0x38] sm:$0xf]
      %v4770 = vld [vmem:[%s4754 + $0x3c] sm:$0xf]
      %s4771 = scalar_lea.vmem %s29, 1
      %v4772 = vld [vmem:[%s4771] sm:$0x1]
      %v4789 = vunpack.c.l.b16 %v4755
      %v4790 = vunpack.c.l.b16 %v4756
      %v4791 = vunpack.c.l.b16 %v4757
      %v4792 = vunpack.c.l.b16 %v4758
      %v4793 = vunpack.c.l.b16 %v4759
      %v4794 = vunpack.c.l.b16 %v4760
      %v4795 = vunpack.c.l.b16 %v4761
      %v4796 = vunpack.c.l.b16 %v4762
      %v4797 = vunpack.c.l.b16 %v4763
      %v4798 = vunpack.c.l.b16 %v4764
      %v4799 = vunpack.c.l.b16 %v4765
      %v4800 = vunpack.c.l.b16 %v4766
      %v4801 = vunpack.c.l.b16 %v4767
      %v4802 = vunpack.c.l.b16 %v4768
      %v4803 = vunpack.c.l.b16 %v4769
      %v4804 = vunpack.c.l.b16 %v4770
      %v4805 = vpack.c.b16 %v4790, %v4789
      %v4806 = vpack.c.b16 %v4792, %v4791
      %v4807 = vpack.c.b16 %v4794, %v4793
      %v4808 = vpack.c.b16 %v4796, %v4795
      %v4809 = vpack.c.b16 %v4798, %v4797
      %v4810 = vpack.c.b16 %v4800, %v4799
      %v4811 = vpack.c.b16 %v4802, %v4801
      %v4812 = vpack.c.b16 %v4804, %v4803
      %4821 = vmatpush.bf16.msra.mxu0 %v4812
      %4822 = vmatpush.bf16.msra.mxu0 %v4811
      %4823 = vmatpush.bf16.msra.mxu0 %v4810
      %4824 = vmatpush.bf16.msra.mxu0 %v4809
      %4825 = vmatpush.bf16.msra.mxu0 %v4808
      %4826 = vmatpush.bf16.msra.mxu0 %v4807
      %4827 = vmatpush.bf16.msra.mxu0 %v4806
      %4828 = vmatpush.bf16.msra.mxu0 %v4805
      %4829 = vmatmul.bf16.gmra.mxu0 %v1024
      %v4830 = vpop.f32.mrf.mxu0
      %v4831 = vadd.f32 %v4772, %v4830
      %v4832 = vpop.f32.mrf.mxu0
      %4833 = vdwg.mxu0
      %v4834 = vpack.c.bf16 %v4831, %v4831
      %s4835 = scalar_lea.vmem %s31, 64
      %v4836 = vld [vmem:[%s4835] sm:$0xf]
      %v4837 = vld [vmem:[%s4835 + $0x4] sm:$0xf]
      %v4838 = vld [vmem:[%s4835 + $0x8] sm:$0xf]
      %v4839 = vld [vmem:[%s4835 + $0xc] sm:$0xf]
      %v4840 = vld [vmem:[%s4835 + $0x10] sm:$0xf]
      %v4841 = vld [vmem:[%s4835 + $0x14] sm:$0xf]
      %v4842 = vld [vmem:[%s4835 + $0x18] sm:$0xf]
      %v4843 = vld [vmem:[%s4835 + $0x1c] sm:$0xf]
      %v4844 = vld [vmem:[%s4835 + $0x20] sm:$0xf]
      %v4845 = vld [vmem:[%s4835 + $0x24] sm:$0xf]
      %v4846 = vld [vmem:[%s4835 + $0x28] sm:$0xf]
      %v4847 = vld [vmem:[%s4835 + $0x2c] sm:$0xf]
      %v4848 = vld [vmem:[%s4835 + $0x30] sm:$0xf]
      %v4849 = vld [vmem:[%s4835 + $0x34] sm:$0xf]
      %v4850 = vld [vmem:[%s4835 + $0x38] sm:$0xf]
      %v4851 = vld [vmem:[%s4835 + $0x3c] sm:$0xf]
      %s4852 = scalar_lea.vmem %s33, 1
      %v4853 = vld [vmem:[%s4852] sm:$0x1]
      %v4870 = vunpack.c.l.b16 %v4836
      %v4871 = vunpack.c.l.b16 %v4837
      %v4872 = vunpack.c.l.b16 %v4838
      %v4873 = vunpack.c.l.b16 %v4839
      %v4874 = vunpack.c.l.b16 %v4840
      %v4875 = vunpack.c.l.b16 %v4841
      %v4876 = vunpack.c.l.b16 %v4842
      %v4877 = vunpack.c.l.b16 %v4843
      %v4878 = vunpack.c.l.b16 %v4844
      %v4879 = vunpack.c.l.b16 %v4845
      %v4880 = vunpack.c.l.b16 %v4846
      %v4881 = vunpack.c.l.b16 %v4847
      %v4882 = vunpack.c.l.b16 %v4848
      %v4883 = vunpack.c.l.b16 %v4849
      %v4884 = vunpack.c.l.b16 %v4850
      %v4885 = vunpack.c.l.b16 %v4851
      %v4886 = vpack.c.b16 %v4871, %v4870
      %v4887 = vpack.c.b16 %v4873, %v4872
      %v4888 = vpack.c.b16 %v4875, %v4874
      %v4889 = vpack.c.b16 %v4877, %v4876
      %v4890 = vpack.c.b16 %v4879, %v4878
      %v4891 = vpack.c.b16 %v4881, %v4880
      %v4892 = vpack.c.b16 %v4883, %v4882
      %v4893 = vpack.c.b16 %v4885, %v4884
      %4902 = vmatpush.bf16.msra.mxu0 %v4893
      %4903 = vmatpush.bf16.msra.mxu0 %v4892
      %4904 = vmatpush.bf16.msra.mxu0 %v4891
      %4905 = vmatpush.bf16.msra.mxu0 %v4890
      %4906 = vmatpush.bf16.msra.mxu0 %v4889
      %4907 = vmatpush.bf16.msra.mxu0 %v4888
      %4908 = vmatpush.bf16.msra.mxu0 %v4887
      %4909 = vmatpush.bf16.msra.mxu0 %v4886
      %4910 = vmatmul.bf16.gmra.mxu0 %v4834
      %v4911 = vpop.f32.mrf.mxu0
      %v4912 = vadd.f32 %v4853, %v4911
      %v4913 = vpop.f32.mrf.mxu0
      %4914 = vdwg.mxu0
      %v4915 = vperm.slane %v4912, 0
      %v4916 = vadd.f32 %v4753, %v4915
      %s4917 = scalar_lea.vmem %s47, 1
      %v4918 = vld [vmem:[%s4917] sm:$0x1]
      %s4919 = scalar_lea.vmem %s49, 1
      %v4920 = vld [vmem:[%s4919] sm:$0x1]
      %4921 = vadd.xlane.f32.xlu0 %v4916
      %v4922 = vpop.xlane.xlu0 %4921
      %v4923 = vmul.f32 %v4922, %v2466
      %v4924 = vsub.f32 %v4916, %v4923
      %v4925 = vmul.f32 %v4924, %v4924
      %4926 = vadd.xlane.f32.xlu0 %v4925
      %v4927 = vpop.xlane.xlu0 %4926
      %v4928 = vmul.f32 %v4927, %v2466
      %v4929 = vadd.f32 %v4928, 1e-05
      %v4930 = vrsqrt.pop %v4929
      %v4931 = vmul.f32 %v4930, %v4929
      %v4932 = vmul.f32 %v4931, %v4930
      %v4933 = vmul.f32 0.5, %v4932
      %v4934 = vsub.f32 1.5, %v4933
      %v4935 = vmul.f32 %v4930, %v4934
      %vm4936 = vweird.f32 %v4929
      %vm4937 = vweird.f32 %v4930
      %vm4938 = vmor %vm4936, %vm4937
      %v4939 = vsel %vm4938, %v4930, %v4935
      %v4940 = vmul.f32 %v4924, %v4939
      %v4942 = vperm.slane %v4918, 0
      %v4944 = vmul.f32 %v4940, %v4942
      %v4946 = vperm.slane %v4920, 0
      %v4948 = vadd.f32 %v4944, %v4946
      %v4949 = vpack.c.bf16 %v4948, %v4948
      %s4950 = scalar_lea.vmem %s35, 256
      %v4951 = vld [vmem:[%s4950] sm:$0xff]
      %v4952 = vld [vmem:[%s4950 + $0x8] sm:$0xff]
      %v4953 = vld [vmem:[%s4950 + $0x10] sm:$0xff]
      %v4954 = vld [vmem:[%s4950 + $0x18] sm:$0xff]
      %v4955 = vld [vmem:[%s4950 + $0x20] sm:$0xff]
      %v4956 = vld [vmem:[%s4950 + $0x28] sm:$0xff]
      %v4957 = vld [vmem:[%s4950 + $0x30] sm:$0xff]
      %v4958 = vld [vmem:[%s4950 + $0x38] sm:$0xff]
      %v4959 = vld [vmem:[%s4950 + $0x40] sm:$0xff]
      %v4960 = vld [vmem:[%s4950 + $0x48] sm:$0xff]
      %v4961 = vld [vmem:[%s4950 + $0x50] sm:$0xff]
      %v4962 = vld [vmem:[%s4950 + $0x58] sm:$0xff]
      %v4963 = vld [vmem:[%s4950 + $0x60] sm:$0xff]
      %v4964 = vld [vmem:[%s4950 + $0x68] sm:$0xff]
      %v4965 = vld [vmem:[%s4950 + $0x70] sm:$0xff]
      %v4966 = vld [vmem:[%s4950 + $0x78] sm:$0xff]
      %v4967 = vld [vmem:[%s4950 + $0x80] sm:$0xff]
      %v4968 = vld [vmem:[%s4950 + $0x88] sm:$0xff]
      %v4969 = vld [vmem:[%s4950 + $0x90] sm:$0xff]
      %v4970 = vld [vmem:[%s4950 + $0x98] sm:$0xff]
      %v4971 = vld [vmem:[%s4950 + $0xa0] sm:$0xff]
      %v4972 = vld [vmem:[%s4950 + $0xa8] sm:$0xff]
      %v4973 = vld [vmem:[%s4950 + $0xb0] sm:$0xff]
      %v4974 = vld [vmem:[%s4950 + $0xb8] sm:$0xff]
      %v4975 = vld [vmem:[%s4950 + $0xc0] sm:$0xff]
      %v4976 = vld [vmem:[%s4950 + $0xc8] sm:$0xff]
      %v4977 = vld [vmem:[%s4950 + $0xd0] sm:$0xff]
      %v4978 = vld [vmem:[%s4950 + $0xd8] sm:$0xff]
      %v4979 = vld [vmem:[%s4950 + $0xe0] sm:$0xff]
      %v4980 = vld [vmem:[%s4950 + $0xe8] sm:$0xff]
      %v4981 = vld [vmem:[%s4950 + $0xf0] sm:$0xff]
      %v4982 = vld [vmem:[%s4950 + $0xf8] sm:$0xff]
      %s4983 = scalar_lea.vmem %s37, 4
      %v4984 = vld [vmem:[%s4983] sm:$0xf]
      %v4986 = vperm.slane %v4984, 0
      %v4987 = vperm.slane %v4984, 1
      %v4988 = vperm.slane %v4984, 2
      %v4989 = vperm.slane %v4984, 3
      %v5026 = vunpack.c.l.b16 %v4951
      %v5027 = vunpack.c.h.b16 %v4951
      %v5028 = vunpack.c.l.b16 %v4952
      %v5029 = vunpack.c.h.b16 %v4952
      %v5030 = vunpack.c.l.b16 %v4953
      %v5031 = vunpack.c.h.b16 %v4953
      %v5032 = vunpack.c.l.b16 %v4954
      %v5033 = vunpack.c.h.b16 %v4954
      %v5034 = vunpack.c.l.b16 %v4955
      %v5035 = vunpack.c.h.b16 %v4955
      %v5036 = vunpack.c.l.b16 %v4956
      %v5037 = vunpack.c.h.b16 %v4956
      %v5038 = vunpack.c.l.b16 %v4957
      %v5039 = vunpack.c.h.b16 %v4957
      %v5040 = vunpack.c.l.b16 %v4958
      %v5041 = vunpack.c.h.b16 %v4958
      %v5042 = vunpack.c.l.b16 %v4959
      %v5043 = vunpack.c.h.b16 %v4959
      %v5044 = vunpack.c.l.b16 %v4960
      %v5045 = vunpack.c.h.b16 %v4960
      %v5046 = vunpack.c.l.b16 %v4961
      %v5047 = vunpack.c.h.b16 %v4961
      %v5048 = vunpack.c.l.b16 %v4962
      %v5049 = vunpack.c.h.b16 %v4962
      %v5050 = vunpack.c.l.b16 %v4963
      %v5051 = vunpack.c.h.b16 %v4963
      %v5052 = vunpack.c.l.b16 %v4964
      %v5053 = vunpack.c.h.b16 %v4964
      %v5054 = vunpack.c.l.b16 %v4965
      %v5055 = vunpack.c.h.b16 %v4965
      %v5056 = vunpack.c.l.b16 %v4966
      %v5057 = vunpack.c.h.b16 %v4966
      %v5058 = vunpack.c.l.b16 %v4967
      %v5059 = vunpack.c.h.b16 %v4967
      %v5060 = vunpack.c.l.b16 %v4968
      %v5061 = vunpack.c.h.b16 %v4968
      %v5062 = vunpack.c.l.b16 %v4969
      %v5063 = vunpack.c.h.b16 %v4969
      %v5064 = vunpack.c.l.b16 %v4970
      %v5065 = vunpack.c.h.b16 %v4970
      %v5066 = vunpack.c.l.b16 %v4971
      %v5067 = vunpack.c.h.b16 %v4971
      %v5068 = vunpack.c.l.b16 %v4972
      %v5069 = vunpack.c.h.b16 %v4972
      %v5070 = vunpack.c.l.b16 %v4973
      %v5071 = vunpack.c.h.b16 %v4973
      %v5072 = vunpack.c.l.b16 %v4974
      %v5073 = vunpack.c.h.b16 %v4974
      %v5074 = vunpack.c.l.b16 %v4975
      %v5075 = vunpack.c.h.b16 %v4975
      %v5076 = vunpack.c.l.b16 %v4976
      %v5077 = vunpack.c.h.b16 %v4976
      %v5078 = vunpack.c.l.b16 %v4977
      %v5079 = vunpack.c.h.b16 %v4977
      %v5080 = vunpack.c.l.b16 %v4978
      %v5081 = vunpack.c.h.b16 %v4978
      %v5082 = vunpack.c.l.b16 %v4979
      %v5083 = vunpack.c.h.b16 %v4979
      %v5084 = vunpack.c.l.b16 %v4980
      %v5085 = vunpack.c.h.b16 %v4980
      %v5086 = vunpack.c.l.b16 %v4981
      %v5087 = vunpack.c.h.b16 %v4981
      %v5088 = vunpack.c.l.b16 %v4982
      %v5089 = vunpack.c.h.b16 %v4982
      %v5090 = vpack.c.b16 %v5030, %v5026
      %v5091 = vpack.c.b16 %v5031, %v5027
      %v5092 = vpack.c.b16 %v5032, %v5028
      %v5093 = vpack.c.b16 %v5033, %v5029
      %v5094 = vpack.c.b16 %v5038, %v5034
      %v5095 = vpack.c.b16 %v5039, %v5035
      %v5096 = vpack.c.b16 %v5040, %v5036
      %v5097 = vpack.c.b16 %v5041, %v5037
      %v5098 = vpack.c.b16 %v5046, %v5042
      %v5099 = vpack.c.b16 %v5047, %v5043
      %v5100 = vpack.c.b16 %v5048, %v5044
      %v5101 = vpack.c.b16 %v5049, %v5045
      %v5102 = vpack.c.b16 %v5054, %v5050
      %v5103 = vpack.c.b16 %v5055, %v5051
      %v5104 = vpack.c.b16 %v5056, %v5052
      %v5105 = vpack.c.b16 %v5057, %v5053
      %v5106 = vpack.c.b16 %v5062, %v5058
      %v5107 = vpack.c.b16 %v5063, %v5059
      %v5108 = vpack.c.b16 %v5064, %v5060
      %v5109 = vpack.c.b16 %v5065, %v5061
      %v5110 = vpack.c.b16 %v5070, %v5066
      %v5111 = vpack.c.b16 %v5071, %v5067
      %v5112 = vpack.c.b16 %v5072, %v5068
      %v5113 = vpack.c.b16 %v5073, %v5069
      %v5114 = vpack.c.b16 %v5078, %v5074
      %v5115 = vpack.c.b16 %v5079, %v5075
      %v5116 = vpack.c.b16 %v5080, %v5076
      %v5117 = vpack.c.b16 %v5081, %v5077
      %v5118 = vpack.c.b16 %v5086, %v5082
      %v5119 = vpack.c.b16 %v5087, %v5083
      %v5120 = vpack.c.b16 %v5088, %v5084
      %v5121 = vpack.c.b16 %v5089, %v5085
      %5154 = vmatpush.bf16.msra.mxu0 %v5118
      %5155 = vmatpush.bf16.msra.mxu0 %v5114
      %5156 = vmatpush.bf16.msra.mxu0 %v5110
      %5157 = vmatpush.bf16.msra.mxu0 %v5106
      %5158 = vmatpush.bf16.msra.mxu0 %v5102
      %5159 = vmatpush.bf16.msra.mxu0 %v5098
      %5160 = vmatpush.bf16.msra.mxu0 %v5094
      %5161 = vmatpush.bf16.msra.mxu0 %v5090
      %5162 = vmatmul.bf16.gmra.mxu0 %v4949
      %v5163 = vpop.f32.mrf.mxu0
      %v5164 = vadd.f32 %v4986, %v5163
      %v5165 = vpop.f32.mrf.mxu0
      %5166 = vdwg.mxu0
      %5167 = vmatpush.bf16.msra.mxu0 %v5119
      %5168 = vmatpush.bf16.msra.mxu0 %v5115
      %5169 = vmatpush.bf16.msra.mxu0 %v5111
      %5170 = vmatpush.bf16.msra.mxu0 %v5107
      %5171 = vmatpush.bf16.msra.mxu0 %v5103
      %5172 = vmatpush.bf16.msra.mxu0 %v5099
      %5173 = vmatpush.bf16.msra.mxu0 %v5095
      %5174 = vmatpush.bf16.msra.mxu0 %v5091
      %5175 = vmatmul.bf16.gmra.mxu0 %v4949
      %v5176 = vpop.f32.mrf.mxu0
      %v5177 = vadd.f32 %v4987, %v5176
      %v5178 = vpop.f32.mrf.mxu0
      %5179 = vdwg.mxu0
      %5180 = vmatpush.bf16.msra.mxu0 %v5120
      %5181 = vmatpush.bf16.msra.mxu0 %v5116
      %5182 = vmatpush.bf16.msra.mxu0 %v5112
      %5183 = vmatpush.bf16.msra.mxu0 %v5108
      %5184 = vmatpush.bf16.msra.mxu0 %v5104
      %5185 = vmatpush.bf16.msra.mxu0 %v5100
      %5186 = vmatpush.bf16.msra.mxu0 %v5096
      %5187 = vmatpush.bf16.msra.mxu0 %v5092
      %5188 = vmatmul.bf16.gmra.mxu0 %v4949
      %v5189 = vpop.f32.mrf.mxu0
      %v5190 = vadd.f32 %v4988, %v5189
      %v5191 = vpop.f32.mrf.mxu0
      %5192 = vdwg.mxu0
      %5193 = vmatpush.bf16.msra.mxu0 %v5121
      %5194 = vmatpush.bf16.msra.mxu0 %v5117
      %5195 = vmatpush.bf16.msra.mxu0 %v5113
      %5196 = vmatpush.bf16.msra.mxu0 %v5109
      %5197 = vmatpush.bf16.msra.mxu0 %v5105
      %5198 = vmatpush.bf16.msra.mxu0 %v5101
      %5199 = vmatpush.bf16.msra.mxu0 %v5097
      %5200 = vmatpush.bf16.msra.mxu0 %v5093
      %5201 = vmatmul.bf16.gmra.mxu0 %v4949
      %v5202 = vpop.f32.mrf.mxu0
      %v5203 = vadd.f32 %v4989, %v5202
      %v5204 = vpop.f32.mrf.mxu0
      %5205 = vdwg.mxu0
      %v5206 = vmax.f32 %v5164, 0.0
      %v5207 = vmax.f32 %v5177, 0.0
      %v5208 = vmax.f32 %v5190, 0.0
      %v5209 = vmax.f32 %v5203, 0.0
      %v5210 = vpack.c.bf16 %v5206, %v5206
      %v5211 = vpack.c.bf16 %v5207, %v5207
      %v5212 = vpack.c.bf16 %v5208, %v5208
      %v5213 = vpack.c.bf16 %v5209, %v5209
      %s5214 = scalar_lea.vmem %s39, 256
      %v5215 = vld [vmem:[%s5214] sm:$0xf]
      %v5216 = vld [vmem:[%s5214 + $0x4] sm:$0xf]
      %v5217 = vld [vmem:[%s5214 + $0x8] sm:$0xf]
      %v5218 = vld [vmem:[%s5214 + $0xc] sm:$0xf]
      %v5219 = vld [vmem:[%s5214 + $0x10] sm:$0xf]
      %v5220 = vld [vmem:[%s5214 + $0x14] sm:$0xf]
      %v5221 = vld [vmem:[%s5214 + $0x18] sm:$0xf]
      %v5222 = vld [vmem:[%s5214 + $0x1c] sm:$0xf]
      %v5223 = vld [vmem:[%s5214 + $0x20] sm:$0xf]
      %v5224 = vld [vmem:[%s5214 + $0x24] sm:$0xf]
      %v5225 = vld [vmem:[%s5214 + $0x28] sm:$0xf]
      %v5226 = vld [vmem:[%s5214 + $0x2c] sm:$0xf]
      %v5227 = vld [vmem:[%s5214 + $0x30] sm:$0xf]
      %v5228 = vld [vmem:[%s5214 + $0x34] sm:$0xf]
      %v5229 = vld [vmem:[%s5214 + $0x38] sm:$0xf]
      %v5230 = vld [vmem:[%s5214 + $0x3c] sm:$0xf]
      %v5231 = vld [vmem:[%s5214 + $0x40] sm:$0xf]
      %v5232 = vld [vmem:[%s5214 + $0x44] sm:$0xf]
      %v5233 = vld [vmem:[%s5214 + $0x48] sm:$0xf]
      %v5234 = vld [vmem:[%s5214 + $0x4c] sm:$0xf]
      %v5235 = vld [vmem:[%s5214 + $0x50] sm:$0xf]
      %v5236 = vld [vmem:[%s5214 + $0x54] sm:$0xf]
      %v5237 = vld [vmem:[%s5214 + $0x58] sm:$0xf]
      %v5238 = vld [vmem:[%s5214 + $0x5c] sm:$0xf]
      %v5239 = vld [vmem:[%s5214 + $0x60] sm:$0xf]
      %v5240 = vld [vmem:[%s5214 + $0x64] sm:$0xf]
      %v5241 = vld [vmem:[%s5214 + $0x68] sm:$0xf]
      %v5242 = vld [vmem:[%s5214 + $0x6c] sm:$0xf]
      %v5243 = vld [vmem:[%s5214 + $0x70] sm:$0xf]
      %v5244 = vld [vmem:[%s5214 + $0x74] sm:$0xf]
      %v5245 = vld [vmem:[%s5214 + $0x78] sm:$0xf]
      %v5246 = vld [vmem:[%s5214 + $0x7c] sm:$0xf]
      %v5247 = vld [vmem:[%s5214 + $0x80] sm:$0xf]
      %v5248 = vld [vmem:[%s5214 + $0x84] sm:$0xf]
      %v5249 = vld [vmem:[%s5214 + $0x88] sm:$0xf]
      %v5250 = vld [vmem:[%s5214 + $0x8c] sm:$0xf]
      %v5251 = vld [vmem:[%s5214 + $0x90] sm:$0xf]
      %v5252 = vld [vmem:[%s5214 + $0x94] sm:$0xf]
      %v5253 = vld [vmem:[%s5214 + $0x98] sm:$0xf]
      %v5254 = vld [vmem:[%s5214 + $0x9c] sm:$0xf]
      %v5255 = vld [vmem:[%s5214 + $0xa0] sm:$0xf]
      %v5256 = vld [vmem:[%s5214 + $0xa4] sm:$0xf]
      %v5257 = vld [vmem:[%s5214 + $0xa8] sm:$0xf]
      %v5258 = vld [vmem:[%s5214 + $0xac] sm:$0xf]
      %v5259 = vld [vmem:[%s5214 + $0xb0] sm:$0xf]
      %v5260 = vld [vmem:[%s5214 + $0xb4] sm:$0xf]
      %v5261 = vld [vmem:[%s5214 + $0xb8] sm:$0xf]
      %v5262 = vld [vmem:[%s5214 + $0xbc] sm:$0xf]
      %v5263 = vld [vmem:[%s5214 + $0xc0] sm:$0xf]
      %v5264 = vld [vmem:[%s5214 + $0xc4] sm:$0xf]
      %v5265 = vld [vmem:[%s5214 + $0xc8] sm:$0xf]
      %v5266 = vld [vmem:[%s5214 + $0xcc] sm:$0xf]
      %v5267 = vld [vmem:[%s5214 + $0xd0] sm:$0xf]
      %v5268 = vld [vmem:[%s5214 + $0xd4] sm:$0xf]
      %v5269 = vld [vmem:[%s5214 + $0xd8] sm:$0xf]
      %v5270 = vld [vmem:[%s5214 + $0xdc] sm:$0xf]
      %v5271 = vld [vmem:[%s5214 + $0xe0] sm:$0xf]
      %v5272 = vld [vmem:[%s5214 + $0xe4] sm:$0xf]
      %v5273 = vld [vmem:[%s5214 + $0xe8] sm:$0xf]
      %v5274 = vld [vmem:[%s5214 + $0xec] sm:$0xf]
      %v5275 = vld [vmem:[%s5214 + $0xf0] sm:$0xf]
      %v5276 = vld [vmem:[%s5214 + $0xf4] sm:$0xf]
      %v5277 = vld [vmem:[%s5214 + $0xf8] sm:$0xf]
      %v5278 = vld [vmem:[%s5214 + $0xfc] sm:$0xf]
      %s5279 = scalar_lea.vmem %s41, 1
      %v5280 = vld [vmem:[%s5279] sm:$0x1]
      %v5282 = vperm.slane %v5280, 0
      %v5348 = vunpack.c.l.b16 %v5215
      %v5349 = vunpack.c.l.b16 %v5216
      %v5350 = vunpack.c.l.b16 %v5217
      %v5351 = vunpack.c.l.b16 %v5218
      %v5352 = vunpack.c.l.b16 %v5219
      %v5353 = vunpack.c.l.b16 %v5220
      %v5354 = vunpack.c.l.b16 %v5221
      %v5355 = vunpack.c.l.b16 %v5222
      %v5356 = vunpack.c.l.b16 %v5223
      %v5357 = vunpack.c.l.b16 %v5224
      %v5358 = vunpack.c.l.b16 %v5225
      %v5359 = vunpack.c.l.b16 %v5226
      %v5360 = vunpack.c.l.b16 %v5227
      %v5361 = vunpack.c.l.b16 %v5228
      %v5362 = vunpack.c.l.b16 %v5229
      %v5363 = vunpack.c.l.b16 %v5230
      %v5364 = vunpack.c.l.b16 %v5231
      %v5365 = vunpack.c.l.b16 %v5232
      %v5366 = vunpack.c.l.b16 %v5233
      %v5367 = vunpack.c.l.b16 %v5234
      %v5368 = vunpack.c.l.b16 %v5235
      %v5369 = vunpack.c.l.b16 %v5236
      %v5370 = vunpack.c.l.b16 %v5237
      %v5371 = vunpack.c.l.b16 %v5238
      %v5372 = vunpack.c.l.b16 %v5239
      %v5373 = vunpack.c.l.b16 %v5240
      %v5374 = vunpack.c.l.b16 %v5241
      %v5375 = vunpack.c.l.b16 %v5242
      %v5376 = vunpack.c.l.b16 %v5243
      %v5377 = vunpack.c.l.b16 %v5244
      %v5378 = vunpack.c.l.b16 %v5245
      %v5379 = vunpack.c.l.b16 %v5246
      %v5380 = vunpack.c.l.b16 %v5247
      %v5381 = vunpack.c.l.b16 %v5248
      %v5382 = vunpack.c.l.b16 %v5249
      %v5383 = vunpack.c.l.b16 %v5250
      %v5384 = vunpack.c.l.b16 %v5251
      %v5385 = vunpack.c.l.b16 %v5252
      %v5386 = vunpack.c.l.b16 %v5253
      %v5387 = vunpack.c.l.b16 %v5254
      %v5388 = vunpack.c.l.b16 %v5255
      %v5389 = vunpack.c.l.b16 %v5256
      %v5390 = vunpack.c.l.b16 %v5257
      %v5391 = vunpack.c.l.b16 %v5258
      %v5392 = vunpack.c.l.b16 %v5259
      %v5393 = vunpack.c.l.b16 %v5260
      %v5394 = vunpack.c.l.b16 %v5261
      %v5395 = vunpack.c.l.b16 %v5262
      %v5396 = vunpack.c.l.b16 %v5263
      %v5397 = vunpack.c.l.b16 %v5264
      %v5398 = vunpack.c.l.b16 %v5265
      %v5399 = vunpack.c.l.b16 %v5266
      %v5400 = vunpack.c.l.b16 %v5267
      %v5401 = vunpack.c.l.b16 %v5268
      %v5402 = vunpack.c.l.b16 %v5269
      %v5403 = vunpack.c.l.b16 %v5270
      %v5404 = vunpack.c.l.b16 %v5271
      %v5405 = vunpack.c.l.b16 %v5272
      %v5406 = vunpack.c.l.b16 %v5273
      %v5407 = vunpack.c.l.b16 %v5274
      %v5408 = vunpack.c.l.b16 %v5275
      %v5409 = vunpack.c.l.b16 %v5276
      %v5410 = vunpack.c.l.b16 %v5277
      %v5411 = vunpack.c.l.b16 %v5278
      %v5412 = vpack.c.b16 %v5349, %v5348
      %v5413 = vpack.c.b16 %v5351, %v5350
      %v5414 = vpack.c.b16 %v5353, %v5352
      %v5415 = vpack.c.b16 %v5355, %v5354
      %v5416 = vpack.c.b16 %v5357, %v5356
      %v5417 = vpack.c.b16 %v5359, %v5358
      %v5418 = vpack.c.b16 %v5361, %v5360
      %v5419 = vpack.c.b16 %v5363, %v5362
      %v5420 = vpack.c.b16 %v5365, %v5364
      %v5421 = vpack.c.b16 %v5367, %v5366
      %v5422 = vpack.c.b16 %v5369, %v5368
      %v5423 = vpack.c.b16 %v5371, %v5370
      %v5424 = vpack.c.b16 %v5373, %v5372
      %v5425 = vpack.c.b16 %v5375, %v5374
      %v5426 = vpack.c.b16 %v5377, %v5376
      %v5427 = vpack.c.b16 %v5379, %v5378
      %v5428 = vpack.c.b16 %v5381, %v5380
      %v5429 = vpack.c.b16 %v5383, %v5382
      %v5430 = vpack.c.b16 %v5385, %v5384
      %v5431 = vpack.c.b16 %v5387, %v5386
      %v5432 = vpack.c.b16 %v5389, %v5388
      %v5433 = vpack.c.b16 %v5391, %v5390
      %v5434 = vpack.c.b16 %v5393, %v5392
      %v5435 = vpack.c.b16 %v5395, %v5394
      %v5436 = vpack.c.b16 %v5397, %v5396
      %v5437 = vpack.c.b16 %v5399, %v5398
      %v5438 = vpack.c.b16 %v5401, %v5400
      %v5439 = vpack.c.b16 %v5403, %v5402
      %v5440 = vpack.c.b16 %v5405, %v5404
      %v5441 = vpack.c.b16 %v5407, %v5406
      %v5442 = vpack.c.b16 %v5409, %v5408
      %v5443 = vpack.c.b16 %v5411, %v5410
      %5476 = vmatpush.bf16.msra.mxu0 %v5419
      %5477 = vmatpush.bf16.msra.mxu0 %v5418
      %5478 = vmatpush.bf16.msra.mxu0 %v5417
      %5479 = vmatpush.bf16.msra.mxu0 %v5416
      %5480 = vmatpush.bf16.msra.mxu0 %v5415
      %5481 = vmatpush.bf16.msra.mxu0 %v5414
      %5482 = vmatpush.bf16.msra.mxu0 %v5413
      %5483 = vmatpush.bf16.msra.mxu0 %v5412
      %5484 = vmatmul.bf16.gmra.mxu0 %v5210
      %v5485 = vpop.f32.mrf.mxu0
      %v5486 = vadd.f32 %v5282, %v5485
      %v5487 = vpop.f32.mrf.mxu0
      %5488 = vdwg.mxu0
      %5489 = vmatpush.bf16.msra.mxu0 %v5427
      %5490 = vmatpush.bf16.msra.mxu0 %v5426
      %5491 = vmatpush.bf16.msra.mxu0 %v5425
      %5492 = vmatpush.bf16.msra.mxu0 %v5424
      %5493 = vmatpush.bf16.msra.mxu0 %v5423
      %5494 = vmatpush.bf16.msra.mxu0 %v5422
      %5495 = vmatpush.bf16.msra.mxu0 %v5421
      %5496 = vmatpush.bf16.msra.mxu0 %v5420
      %5497 = vmatmul.bf16.gmra.mxu0 %v5211
      %v5498 = vpop.f32.mrf.mxu0
      %v5499 = vadd.f32 %v5486, %v5498
      %v5500 = vpop.f32.mrf.mxu0
      %5501 = vdwg.mxu0
      %5502 = vmatpush.bf16.msra.mxu0 %v5435
      %5503 = vmatpush.bf16.msra.mxu0 %v5434
      %5504 = vmatpush.bf16.msra.mxu0 %v5433
      %5505 = vmatpush.bf16.msra.mxu0 %v5432
      %5506 = vmatpush.bf16.msra.mxu0 %v5431
      %5507 = vmatpush.bf16.msra.mxu0 %v5430
      %5508 = vmatpush.bf16.msra.mxu0 %v5429
      %5509 = vmatpush.bf16.msra.mxu0 %v5428
      %5510 = vmatmul.bf16.gmra.mxu0 %v5212
      %v5511 = vpop.f32.mrf.mxu0
      %v5512 = vadd.f32 %v5499, %v5511
      %v5513 = vpop.f32.mrf.mxu0
      %5514 = vdwg.mxu0
      %5515 = vmatpush.bf16.msra.mxu0 %v5443
      %5516 = vmatpush.bf16.msra.mxu0 %v5442
      %5517 = vmatpush.bf16.msra.mxu0 %v5441
      %5518 = vmatpush.bf16.msra.mxu0 %v5440
      %5519 = vmatpush.bf16.msra.mxu0 %v5439
      %5520 = vmatpush.bf16.msra.mxu0 %v5438
      %5521 = vmatpush.bf16.msra.mxu0 %v5437
      %5522 = vmatpush.bf16.msra.mxu0 %v5436
      %5523 = vmatmul.bf16.gmra.mxu0 %v5213
      %v5524 = vpop.f32.mrf.mxu0
      %v5525 = vadd.f32 %v5512, %v5524
      %v5526 = vpop.f32.mrf.mxu0
      %5527 = vdwg.mxu0
      %v5528 = vadd.f32 %v4948, %v5525
      %s5529 = scalar_lea.vmem %s51, 1
      %v5530 = vld [vmem:[%s5529] sm:$0x1]
      %s5531 = scalar_lea.vmem %s53, 1
      %v5532 = vld [vmem:[%s5531] sm:$0x1]
      %5533 = vadd.xlane.f32.xlu0 %v5528
      %v5534 = vpop.xlane.xlu0 %5533
      %v5535 = vmul.f32 %v5534, %v2466
      %v5536 = vsub.f32 %v5528, %v5535
      %v5537 = vmul.f32 %v5536, %v5536
      %5538 = vadd.xlane.f32.xlu0 %v5537
      %v5539 = vpop.xlane.xlu0 %5538
      %v5540 = vmul.f32 %v5539, %v2466
      %v5541 = vadd.f32 %v5540, 1e-05
      %v5542 = vrsqrt.pop %v5541
      %v5543 = vmul.f32 %v5542, %v5541
      %v5544 = vmul.f32 %v5543, %v5542
      %v5545 = vmul.f32 0.5, %v5544
      %v5546 = vsub.f32 1.5, %v5545
      %v5547 = vmul.f32 %v5542, %v5546
      %vm5548 = vweird.f32 %v5541
      %vm5549 = vweird.f32 %v5542
      %vm5550 = vmor %vm5548, %vm5549
      %v5551 = vsel %vm5550, %v5542, %v5547
      %v5552 = vmul.f32 %v5536, %v5551
      %v5554 = vperm.slane %v5530, 0
      %v5556 = vmul.f32 %v5552, %v5554
      %v5558 = vperm.slane %v5532, 0
      %v5560 = vadd.f32 %v5556, %v5558
      %v5561 = vpack.c.bf16 %v5560, %v5560
      %s5562 = scalar_lea.vmem %s11, 512
      %v5563 = vld [vmem:[%s5562] sm:$0xf]
      %v5564 = vld [vmem:[%s5562 + $0x4] sm:$0xf]
      %v5565 = vld [vmem:[%s5562 + $0x8] sm:$0xf]
      %v5566 = vld [vmem:[%s5562 + $0xc] sm:$0xf]
      %v5567 = vld [vmem:[%s5562 + $0x10] sm:$0xf]
      %v5568 = vld [vmem:[%s5562 + $0x14] sm:$0xf]
      %v5569 = vld [vmem:[%s5562 + $0x18] sm:$0xf]
      %v5570 = vld [vmem:[%s5562 + $0x1c] sm:$0xf]
      %v5571 = vld [vmem:[%s5562 + $0x20] sm:$0xf]
      %v5572 = vld [vmem:[%s5562 + $0x24] sm:$0xf]
      %v5573 = vld [vmem:[%s5562 + $0x28] sm:$0xf]
      %v5574 = vld [vmem:[%s5562 + $0x2c] sm:$0xf]
      %v5575 = vld [vmem:[%s5562 + $0x30] sm:$0xf]
      %v5576 = vld [vmem:[%s5562 + $0x34] sm:$0xf]
      %v5577 = vld [vmem:[%s5562 + $0x38] sm:$0xf]
      %v5578 = vld [vmem:[%s5562 + $0x3c] sm:$0xf]
      %s5579 = scalar_lea.vmem %s13, 8
      %v5580 = vld [vmem:[%s5579] sm:$0x1]
      %v5582 = vperm.slane %v5580, 0
      %v5600 = vunpack.c.l.b16 %v5563
      %v5601 = vunpack.c.l.b16 %v5564
      %v5602 = vunpack.c.l.b16 %v5565
      %v5603 = vunpack.c.l.b16 %v5566
      %v5604 = vunpack.c.l.b16 %v5567
      %v5605 = vunpack.c.l.b16 %v5568
      %v5606 = vunpack.c.l.b16 %v5569
      %v5607 = vunpack.c.l.b16 %v5570
      %v5608 = vunpack.c.l.b16 %v5571
      %v5609 = vunpack.c.l.b16 %v5572
      %v5610 = vunpack.c.l.b16 %v5573
      %v5611 = vunpack.c.l.b16 %v5574
      %v5612 = vunpack.c.l.b16 %v5575
      %v5613 = vunpack.c.l.b16 %v5576
      %v5614 = vunpack.c.l.b16 %v5577
      %v5615 = vunpack.c.l.b16 %v5578
      %v5616 = vpack.c.b16 %v5601, %v5600
      %v5617 = vpack.c.b16 %v5603, %v5602
      %v5618 = vpack.c.b16 %v5605, %v5604
      %v5619 = vpack.c.b16 %v5607, %v5606
      %v5620 = vpack.c.b16 %v5609, %v5608
      %v5621 = vpack.c.b16 %v5611, %v5610
      %v5622 = vpack.c.b16 %v5613, %v5612
      %v5623 = vpack.c.b16 %v5615, %v5614
      %5632 = vmatpush.bf16.msra.mxu0 %v5623
      %5633 = vmatpush.bf16.msra.mxu0 %v5622
      %5634 = vmatpush.bf16.msra.mxu0 %v5621
      %5635 = vmatpush.bf16.msra.mxu0 %v5620
      %5636 = vmatpush.bf16.msra.mxu0 %v5619
      %5637 = vmatpush.bf16.msra.mxu0 %v5618
      %5638 = vmatpush.bf16.msra.mxu0 %v5617
      %5639 = vmatpush.bf16.msra.mxu0 %v5616
      %5640 = vmatmul.bf16.gmra.mxu0 %v5561
      %v5641 = vpop.f32.mrf.mxu0
      %v5642 = vadd.f32 %v5582, %v5641
      %v5643 = vpop.f32.mrf.mxu0
      %5644 = vdwg.mxu0
      %s5645 = scalar_lea.vmem %s15, 512
      %v5646 = vld [vmem:[%s5645] sm:$0xf]
      %v5647 = vld [vmem:[%s5645 + $0x4] sm:$0xf]
      %v5648 = vld [vmem:[%s5645 + $0x8] sm:$0xf]
      %v5649 = vld [vmem:[%s5645 + $0xc] sm:$0xf]
      %v5650 = vld [vmem:[%s5645 + $0x10] sm:$0xf]
      %v5651 = vld [vmem:[%s5645 + $0x14] sm:$0xf]
      %v5652 = vld [vmem:[%s5645 + $0x18] sm:$0xf]
      %v5653 = vld [vmem:[%s5645 + $0x1c] sm:$0xf]
      %v5654 = vld [vmem:[%s5645 + $0x20] sm:$0xf]
      %v5655 = vld [vmem:[%s5645 + $0x24] sm:$0xf]
      %v5656 = vld [vmem:[%s5645 + $0x28] sm:$0xf]
      %v5657 = vld [vmem:[%s5645 + $0x2c] sm:$0xf]
      %v5658 = vld [vmem:[%s5645 + $0x30] sm:$0xf]
      %v5659 = vld [vmem:[%s5645 + $0x34] sm:$0xf]
      %v5660 = vld [vmem:[%s5645 + $0x38] sm:$0xf]
      %v5661 = vld [vmem:[%s5645 + $0x3c] sm:$0xf]
      %s5662 = scalar_lea.vmem %s17, 8
      %v5663 = vld [vmem:[%s5662] sm:$0x1]
      %v5665 = vperm.slane %v5663, 0
      %v5683 = vunpack.c.l.b16 %v5646
      %v5684 = vunpack.c.l.b16 %v5647
      %v5685 = vunpack.c.l.b16 %v5648
      %v5686 = vunpack.c.l.b16 %v5649
      %v5687 = vunpack.c.l.b16 %v5650
      %v5688 = vunpack.c.l.b16 %v5651
      %v5689 = vunpack.c.l.b16 %v5652
      %v5690 = vunpack.c.l.b16 %v5653
      %v5691 = vunpack.c.l.b16 %v5654
      %v5692 = vunpack.c.l.b16 %v5655
      %v5693 = vunpack.c.l.b16 %v5656
      %v5694 = vunpack.c.l.b16 %v5657
      %v5695 = vunpack.c.l.b16 %v5658
      %v5696 = vunpack.c.l.b16 %v5659
      %v5697 = vunpack.c.l.b16 %v5660
      %v5698 = vunpack.c.l.b16 %v5661
      %v5699 = vpack.c.b16 %v5684, %v5683
      %v5700 = vpack.c.b16 %v5686, %v5685
      %v5701 = vpack.c.b16 %v5688, %v5687
      %v5702 = vpack.c.b16 %v5690, %v5689
      %v5703 = vpack.c.b16 %v5692, %v5691
      %v5704 = vpack.c.b16 %v5694, %v5693
      %v5705 = vpack.c.b16 %v5696, %v5695
      %v5706 = vpack.c.b16 %v5698, %v5697
      %5715 = vmatpush.bf16.msra.mxu0 %v5706
      %5716 = vmatpush.bf16.msra.mxu0 %v5705
      %5717 = vmatpush.bf16.msra.mxu0 %v5704
      %5718 = vmatpush.bf16.msra.mxu0 %v5703
      %5719 = vmatpush.bf16.msra.mxu0 %v5702
      %5720 = vmatpush.bf16.msra.mxu0 %v5701
      %5721 = vmatpush.bf16.msra.mxu0 %v5700
      %5722 = vmatpush.bf16.msra.mxu0 %v5699
      %5723 = vmatmul.bf16.gmra.mxu0 %v5561
      %v5724 = vpop.f32.mrf.mxu0
      %v5725 = vadd.f32 %v5665, %v5724
      %v5726 = vpop.f32.mrf.mxu0
      %5727 = vdwg.mxu0
      %s5728 = scalar_lea.vmem %s19, 512
      %v5729 = vld [vmem:[%s5728] sm:$0xf]
      %v5730 = vld [vmem:[%s5728 + $0x4] sm:$0xf]
      %v5731 = vld [vmem:[%s5728 + $0x8] sm:$0xf]
      %v5732 = vld [vmem:[%s5728 + $0xc] sm:$0xf]
      %v5733 = vld [vmem:[%s5728 + $0x10] sm:$0xf]
      %v5734 = vld [vmem:[%s5728 + $0x14] sm:$0xf]
      %v5735 = vld [vmem:[%s5728 + $0x18] sm:$0xf]
      %v5736 = vld [vmem:[%s5728 + $0x1c] sm:$0xf]
      %v5737 = vld [vmem:[%s5728 + $0x20] sm:$0xf]
      %v5738 = vld [vmem:[%s5728 + $0x24] sm:$0xf]
      %v5739 = vld [vmem:[%s5728 + $0x28] sm:$0xf]
      %v5740 = vld [vmem:[%s5728 + $0x2c] sm:$0xf]
      %v5741 = vld [vmem:[%s5728 + $0x30] sm:$0xf]
      %v5742 = vld [vmem:[%s5728 + $0x34] sm:$0xf]
      %v5743 = vld [vmem:[%s5728 + $0x38] sm:$0xf]
      %v5744 = vld [vmem:[%s5728 + $0x3c] sm:$0xf]
      %s5745 = scalar_lea.vmem %s21, 8
      %v5746 = vld [vmem:[%s5745] sm:$0x1]
      %v5748 = vperm.slane %v5746, 0
      %v5766 = vunpack.c.l.b16 %v5729
      %v5767 = vunpack.c.l.b16 %v5730
      %v5768 = vunpack.c.l.b16 %v5731
      %v5769 = vunpack.c.l.b16 %v5732
      %v5770 = vunpack.c.l.b16 %v5733
      %v5771 = vunpack.c.l.b16 %v5734
      %v5772 = vunpack.c.l.b16 %v5735
      %v5773 = vunpack.c.l.b16 %v5736
      %v5774 = vunpack.c.l.b16 %v5737
      %v5775 = vunpack.c.l.b16 %v5738
      %v5776 = vunpack.c.l.b16 %v5739
      %v5777 = vunpack.c.l.b16 %v5740
      %v5778 = vunpack.c.l.b16 %v5741
      %v5779 = vunpack.c.l.b16 %v5742
      %v5780 = vunpack.c.l.b16 %v5743
      %v5781 = vunpack.c.l.b16 %v5744
      %v5782 = vpack.c.b16 %v5767, %v5766
      %v5783 = vpack.c.b16 %v5769, %v5768
      %v5784 = vpack.c.b16 %v5771, %v5770
      %v5785 = vpack.c.b16 %v5773, %v5772
      %v5786 = vpack.c.b16 %v5775, %v5774
      %v5787 = vpack.c.b16 %v5777, %v5776
      %v5788 = vpack.c.b16 %v5779, %v5778
      %v5789 = vpack.c.b16 %v5781, %v5780
      %5798 = vmatpush.bf16.msra.mxu0 %v5789
      %5799 = vmatpush.bf16.msra.mxu0 %v5788
      %5800 = vmatpush.bf16.msra.mxu0 %v5787
      %5801 = vmatpush.bf16.msra.mxu0 %v5786
      %5802 = vmatpush.bf16.msra.mxu0 %v5785
      %5803 = vmatpush.bf16.msra.mxu0 %v5784
      %5804 = vmatpush.bf16.msra.mxu0 %v5783
      %5805 = vmatpush.bf16.msra.mxu0 %v5782
      %5806 = vmatmul.bf16.gmra.mxu0 %v5561
      %v5807 = vpop.f32.mrf.mxu0
      %v5808 = vadd.f32 %v5748, %v5807
      %v5809 = vpop.f32.mrf.mxu0
      %5810 = vdwg.mxu0
      %v5812 = vsel %vm1271, %v5642, 0
      %v5815 = vsel %vm1271, %v5725, 0
      %5817 = vmatpush.xpose.msra.mxu0 0.0
      %5818 = vmatpush.xpose.msra.mxu0 0.0
      %5819 = vmatpush.xpose.msra.mxu0 0.0
      %5820 = vmatpush.xpose.msra.mxu0 0.0
      %5821 = vmatpush.xpose.msra.mxu0 0.0
      %5822 = vmatpush.xpose.msra.mxu0 0.0
      %5823 = vmatpush.xpose.msra.mxu0 0.0
      %5824 = vmatpush.xpose.msra.mxu0 0.0
      %5825 = vmatpush.xpose.msra.mxu0 0.0
      %5826 = vmatpush.xpose.msra.mxu0 0.0
      %5827 = vmatpush.xpose.msra.mxu0 0.0
      %5828 = vmatpush.xpose.msra.mxu0 0.0
      %5829 = vmatpush.xpose.msra.mxu0 0.0
      %5830 = vmatpush.xpose.msra.mxu0 0.0
      %5831 = vmatpush.xpose.msra.mxu0 0.0
      %5832 = vmatpush.xpose.msra.mxu0 %v5815
      %5833 = vmatmul.f32.gmra.mxu0 %v5812
      %v5834 = vpop.f32.mrf.mxu0
      %v5835 = vadd.f32 0.0, %v5834
      %5836 = vdwg.mxu0
      %v5837 = vmul.f32 %v5835, 0.17677669
      %v5838 = vadd.f32 %v5837, %v1026
      %v5839 = vsel %vm1300, %v5838, -inf
      %5840 = vmax.xlane.f32.xlu0 %v5839
      %v5841 = vpop.xlane.xlu0 %5840
      %v5842 = vsub.f32 %v5838, %v5841
      %v5843 = vmul.f32 %v5842, 1.442695
      %v5844 = vpow.pop %v5843
      %v5845 = vsel %vm1300, %v5844, 0.0
      %5846 = vadd.xlane.f32.xlu0 %v5845
      %v5847 = vpop.xlane.xlu0 %5846
      %v5848 = vrcp.pop %v5847
      %v5849 = vmul.f32 %v5847, %v5848
      %v5850 = vsub.f32 1.0, %v5849
      %v5851 = vmul.f32 %v5848, %v5850
      %v5852 = vadd.f32 %v5848, %v5851
      %vm5853 = vweird.f32 %v5847
      %vm5854 = vweird.f32 %v5848
      %vm5855 = vmor %vm5853, %vm5854
      %v5856 = vsel %vm5855, %v5848, %v5852
      %v5857 = vand.u32 2147483647, %v5847
      %vm5858 = vcmp.eq.f32.partialorder %v5857, 8.507059e+37
      %v5859 = vand.u32 %v5847, 2147483648
      %v5860 = vor.u32 1.1754944e-38, %v5859
      %v5861 = vsel %vm5858, %v5860, %v5856
      %v5862 = vmul.f32 %v5844, %v5861
      %v5863 = vpack.c.bf16 %v5862, %v5862
      %v5864 = vpack.c.bf16 %v5808, %v5808
      %v5866 = vsel %vm1300, %v5863, 0
      %v5869 = vsel %vm1330, %v5864, 0
      %5871 = vmatpush.bf16.msra.mxu0 0
      %5872 = vmatpush.bf16.msra.mxu0 0
      %5873 = vmatpush.bf16.msra.mxu0 0
      %5874 = vmatpush.bf16.msra.mxu0 0
      %5875 = vmatpush.bf16.msra.mxu0 0
      %5876 = vmatpush.bf16.msra.mxu0 0
      %5877 = vmatpush.bf16.msra.mxu0 0
      %5878 = vmatpush.bf16.msra.mxu0 %v5869
      %5879 = vmatmul.bf16.gmra.mxu0 %v5866
      %v5880 = vpop.f32.mrf.mxu0
      %v5881 = vadd.f32 0.0, %v5880
      %v5882 = vpop.f32.mrf.mxu0
      %5883 = vdwg.mxu0
      %v5884 = vpack.c.bf16 %v5881, %v5881
      %s5885 = scalar_lea.vmem %s23, 128
      %v5886 = vld [vmem:[%s5885] sm:$0xf]
      %v5887 = vld [vmem:[%s5885 + $0x4] sm:$0xf]
      %v5888 = vld [vmem:[%s5885 + $0x8] sm:$0xf]
      %v5889 = vld [vmem:[%s5885 + $0xc] sm:$0xf]
      %s5890 = scalar_lea.vmem %s11, 576
      %v5891 = vld [vmem:[%s5890] sm:$0xf]
      %v5892 = vld [vmem:[%s5890 + $0x4] sm:$0xf]
      %v5893 = vld [vmem:[%s5890 + $0x8] sm:$0xf]
      %v5894 = vld [vmem:[%s5890 + $0xc] sm:$0xf]
      %v5895 = vld [vmem:[%s5890 + $0x10] sm:$0xf]
      %v5896 = vld [vmem:[%s5890 + $0x14] sm:$0xf]
      %v5897 = vld [vmem:[%s5890 + $0x18] sm:$0xf]
      %v5898 = vld [vmem:[%s5890 + $0x1c] sm:$0xf]
      %v5899 = vld [vmem:[%s5890 + $0x20] sm:$0xf]
      %v5900 = vld [vmem:[%s5890 + $0x24] sm:$0xf]
      %v5901 = vld [vmem:[%s5890 + $0x28] sm:$0xf]
      %v5902 = vld [vmem:[%s5890 + $0x2c] sm:$0xf]
      %v5903 = vld [vmem:[%s5890 + $0x30] sm:$0xf]
      %v5904 = vld [vmem:[%s5890 + $0x34] sm:$0xf]
      %v5905 = vld [vmem:[%s5890 + $0x38] sm:$0xf]
      %v5906 = vld [vmem:[%s5890 + $0x3c] sm:$0xf]
      %s5907 = scalar_lea.vmem %s13, 9
      %v5908 = vld [vmem:[%s5907] sm:$0x1]
      %v5910 = vperm.slane %v5908, 0
      %v5928 = vunpack.c.l.b16 %v5891
      %v5929 = vunpack.c.l.b16 %v5892
      %v5930 = vunpack.c.l.b16 %v5893
      %v5931 = vunpack.c.l.b16 %v5894
      %v5932 = vunpack.c.l.b16 %v5895
      %v5933 = vunpack.c.l.b16 %v5896
      %v5934 = vunpack.c.l.b16 %v5897
      %v5935 = vunpack.c.l.b16 %v5898
      %v5936 = vunpack.c.l.b16 %v5899
      %v5937 = vunpack.c.l.b16 %v5900
      %v5938 = vunpack.c.l.b16 %v5901
      %v5939 = vunpack.c.l.b16 %v5902
      %v5940 = vunpack.c.l.b16 %v5903
      %v5941 = vunpack.c.l.b16 %v5904
      %v5942 = vunpack.c.l.b16 %v5905
      %v5943 = vunpack.c.l.b16 %v5906
      %v5944 = vpack.c.b16 %v5929, %v5928
      %v5945 = vpack.c.b16 %v5931, %v5930
      %v5946 = vpack.c.b16 %v5933, %v5932
      %v5947 = vpack.c.b16 %v5935, %v5934
      %v5948 = vpack.c.b16 %v5937, %v5936
      %v5949 = vpack.c.b16 %v5939, %v5938
      %v5950 = vpack.c.b16 %v5941, %v5940
      %v5951 = vpack.c.b16 %v5943, %v5942
      %5960 = vmatpush.bf16.msra.mxu0 %v5951
      %5961 = vmatpush.bf16.msra.mxu0 %v5950
      %5962 = vmatpush.bf16.msra.mxu0 %v5949
      %5963 = vmatpush.bf16.msra.mxu0 %v5948
      %5964 = vmatpush.bf16.msra.mxu0 %v5947
      %5965 = vmatpush.bf16.msra.mxu0 %v5946
      %5966 = vmatpush.bf16.msra.mxu0 %v5945
      %5967 = vmatpush.bf16.msra.mxu0 %v5944
      %5968 = vmatmul.bf16.gmra.mxu0 %v5561
      %v5969 = vpop.f32.mrf.mxu0
      %v5970 = vadd.f32 %v5910, %v5969
      %v5971 = vpop.f32.mrf.mxu0
      %5972 = vdwg.mxu0
      %s5973 = scalar_lea.vmem %s15, 576
      %v5974 = vld [vmem:[%s5973] sm:$0xf]
      %v5975 = vld [vmem:[%s5973 + $0x4] sm:$0xf]
      %v5976 = vld [vmem:[%s5973 + $0x8] sm:$0xf]
      %v5977 = vld [vmem:[%s5973 + $0xc] sm:$0xf]
      %v5978 = vld [vmem:[%s5973 + $0x10] sm:$0xf]
      %v5979 = vld [vmem:[%s5973 + $0x14] sm:$0xf]
      %v5980 = vld [vmem:[%s5973 + $0x18] sm:$0xf]
      %v5981 = vld [vmem:[%s5973 + $0x1c] sm:$0xf]
      %v5982 = vld [vmem:[%s5973 + $0x20] sm:$0xf]
      %v5983 = vld [vmem:[%s5973 + $0x24] sm:$0xf]
      %v5984 = vld [vmem:[%s5973 + $0x28] sm:$0xf]
      %v5985 = vld [vmem:[%s5973 + $0x2c] sm:$0xf]
      %v5986 = vld [vmem:[%s5973 + $0x30] sm:$0xf]
      %v5987 = vld [vmem:[%s5973 + $0x34] sm:$0xf]
      %v5988 = vld [vmem:[%s5973 + $0x38] sm:$0xf]
      %v5989 = vld [vmem:[%s5973 + $0x3c] sm:$0xf]
      %s5990 = scalar_lea.vmem %s17, 9
      %v5991 = vld [vmem:[%s5990] sm:$0x1]
      %v5993 = vperm.slane %v5991, 0
      %v6011 = vunpack.c.l.b16 %v5974
      %v6012 = vunpack.c.l.b16 %v5975
      %v6013 = vunpack.c.l.b16 %v5976
      %v6014 = vunpack.c.l.b16 %v5977
      %v6015 = vunpack.c.l.b16 %v5978
      %v6016 = vunpack.c.l.b16 %v5979
      %v6017 = vunpack.c.l.b16 %v5980
      %v6018 = vunpack.c.l.b16 %v5981
      %v6019 = vunpack.c.l.b16 %v5982
      %v6020 = vunpack.c.l.b16 %v5983
      %v6021 = vunpack.c.l.b16 %v5984
      %v6022 = vunpack.c.l.b16 %v5985
      %v6023 = vunpack.c.l.b16 %v5986
      %v6024 = vunpack.c.l.b16 %v5987
      %v6025 = vunpack.c.l.b16 %v5988
      %v6026 = vunpack.c.l.b16 %v5989
      %v6027 = vpack.c.b16 %v6012, %v6011
      %v6028 = vpack.c.b16 %v6014, %v6013
      %v6029 = vpack.c.b16 %v6016, %v6015
      %v6030 = vpack.c.b16 %v6018, %v6017
      %v6031 = vpack.c.b16 %v6020, %v6019
      %v6032 = vpack.c.b16 %v6022, %v6021
      %v6033 = vpack.c.b16 %v6024, %v6023
      %v6034 = vpack.c.b16 %v6026, %v6025
      %6043 = vmatpush.bf16.msra.mxu0 %v6034
      %6044 = vmatpush.bf16.msra.mxu0 %v6033
      %6045 = vmatpush.bf16.msra.mxu0 %v6032
      %6046 = vmatpush.bf16.msra.mxu0 %v6031
      %6047 = vmatpush.bf16.msra.mxu0 %v6030
      %6048 = vmatpush.bf16.msra.mxu0 %v6029
      %6049 = vmatpush.bf16.msra.mxu0 %v6028
      %6050 = vmatpush.bf16.msra.mxu0 %v6027
      %6051 = vmatmul.bf16.gmra.mxu0 %v5561
      %v6052 = vpop.f32.mrf.mxu0
      %v6053 = vadd.f32 %v5993, %v6052
      %v6054 = vpop.f32.mrf.mxu0
      %6055 = vdwg.mxu0
      %s6056 = scalar_lea.vmem %s19, 576
      %v6057 = vld [vmem:[%s6056] sm:$0xf]
      %v6058 = vld [vmem:[%s6056 + $0x4] sm:$0xf]
      %v6059 = vld [vmem:[%s6056 + $0x8] sm:$0xf]
      %v6060 = vld [vmem:[%s6056 + $0xc] sm:$0xf]
      %v6061 = vld [vmem:[%s6056 + $0x10] sm:$0xf]
      %v6062 = vld [vmem:[%s6056 + $0x14] sm:$0xf]
      %v6063 = vld [vmem:[%s6056 + $0x18] sm:$0xf]
      %v6064 = vld [vmem:[%s6056 + $0x1c] sm:$0xf]
      %v6065 = vld [vmem:[%s6056 + $0x20] sm:$0xf]
      %v6066 = vld [vmem:[%s6056 + $0x24] sm:$0xf]
      %v6067 = vld [vmem:[%s6056 + $0x28] sm:$0xf]
      %v6068 = vld [vmem:[%s6056 + $0x2c] sm:$0xf]
      %v6069 = vld [vmem:[%s6056 + $0x30] sm:$0xf]
      %v6070 = vld [vmem:[%s6056 + $0x34] sm:$0xf]
      %v6071 = vld [vmem:[%s6056 + $0x38] sm:$0xf]
      %v6072 = vld [vmem:[%s6056 + $0x3c] sm:$0xf]
      %s6073 = scalar_lea.vmem %s21, 9
      %v6074 = vld [vmem:[%s6073] sm:$0x1]
      %v6076 = vperm.slane %v6074, 0
      %v6094 = vunpack.c.l.b16 %v6057
      %v6095 = vunpack.c.l.b16 %v6058
      %v6096 = vunpack.c.l.b16 %v6059
      %v6097 = vunpack.c.l.b16 %v6060
      %v6098 = vunpack.c.l.b16 %v6061
      %v6099 = vunpack.c.l.b16 %v6062
      %v6100 = vunpack.c.l.b16 %v6063
      %v6101 = vunpack.c.l.b16 %v6064
      %v6102 = vunpack.c.l.b16 %v6065
      %v6103 = vunpack.c.l.b16 %v6066
      %v6104 = vunpack.c.l.b16 %v6067
      %v6105 = vunpack.c.l.b16 %v6068
      %v6106 = vunpack.c.l.b16 %v6069
      %v6107 = vunpack.c.l.b16 %v6070
      %v6108 = vunpack.c.l.b16 %v6071
      %v6109 = vunpack.c.l.b16 %v6072
      %v6110 = vpack.c.b16 %v6095, %v6094
      %v6111 = vpack.c.b16 %v6097, %v6096
      %v6112 = vpack.c.b16 %v6099, %v6098
      %v6113 = vpack.c.b16 %v6101, %v6100
      %v6114 = vpack.c.b16 %v6103, %v6102
      %v6115 = vpack.c.b16 %v6105, %v6104
      %v6116 = vpack.c.b16 %v6107, %v6106
      %v6117 = vpack.c.b16 %v6109, %v6108
      %6126 = vmatpush.bf16.msra.mxu0 %v6117
      %6127 = vmatpush.bf16.msra.mxu0 %v6116
      %6128 = vmatpush.bf16.msra.mxu0 %v6115
      %6129 = vmatpush.bf16.msra.mxu0 %v6114
      %6130 = vmatpush.bf16.msra.mxu0 %v6113
      %6131 = vmatpush.bf16.msra.mxu0 %v6112
      %6132 = vmatpush.bf16.msra.mxu0 %v6111
      %6133 = vmatpush.bf16.msra.mxu0 %v6110
      %6134 = vmatmul.bf16.gmra.mxu0 %v5561
      %v6135 = vpop.f32.mrf.mxu0
      %v6136 = vadd.f32 %v6076, %v6135
      %v6137 = vpop.f32.mrf.mxu0
      %6138 = vdwg.mxu0
      %v6140 = vsel %vm1271, %v5970, 0
      %v6143 = vsel %vm1271, %v6053, 0
      %6145 = vmatpush.xpose.msra.mxu0 0.0
      %6146 = vmatpush.xpose.msra.mxu0 0.0
      %6147 = vmatpush.xpose.msra.mxu0 0.0
      %6148 = vmatpush.xpose.msra.mxu0 0.0
      %6149 = vmatpush.xpose.msra.mxu0 0.0
      %6150 = vmatpush.xpose.msra.mxu0 0.0
      %6151 = vmatpush.xpose.msra.mxu0 0.0
      %6152 = vmatpush.xpose.msra.mxu0 0.0
      %6153 = vmatpush.xpose.msra.mxu0 0.0
      %6154 = vmatpush.xpose.msra.mxu0 0.0
      %6155 = vmatpush.xpose.msra.mxu0 0.0
      %6156 = vmatpush.xpose.msra.mxu0 0.0
      %6157 = vmatpush.xpose.msra.mxu0 0.0
      %6158 = vmatpush.xpose.msra.mxu0 0.0
      %6159 = vmatpush.xpose.msra.mxu0 0.0
      %6160 = vmatpush.xpose.msra.mxu0 %v6143
      %6161 = vmatmul.f32.gmra.mxu0 %v6140
      %v6162 = vpop.f32.mrf.mxu0
      %v6163 = vadd.f32 0.0, %v6162
      %6164 = vdwg.mxu0
      %v6165 = vmul.f32 %v6163, 0.17677669
      %v6166 = vadd.f32 %v6165, %v1026
      %v6167 = vsel %vm1300, %v6166, -inf
      %6168 = vmax.xlane.f32.xlu0 %v6167
      %v6169 = vpop.xlane.xlu0 %6168
      %v6170 = vsub.f32 %v6166, %v6169
      %v6171 = vmul.f32 %v6170, 1.442695
      %v6172 = vpow.pop %v6171
      %v6173 = vsel %vm1300, %v6172, 0.0
      %6174 = vadd.xlane.f32.xlu0 %v6173
      %v6175 = vpop.xlane.xlu0 %6174
      %v6176 = vrcp.pop %v6175
      %v6177 = vmul.f32 %v6175, %v6176
      %v6178 = vsub.f32 1.0, %v6177
      %v6179 = vmul.f32 %v6176, %v6178
      %v6180 = vadd.f32 %v6176, %v6179
      %vm6181 = vweird.f32 %v6175
      %vm6182 = vweird.f32 %v6176
      %vm6183 = vmor %vm6181, %vm6182
      %v6184 = vsel %vm6183, %v6176, %v6180
      %v6185 = vand.u32 2147483647, %v6175
      %vm6186 = vcmp.eq.f32.partialorder %v6185, 8.507059e+37
      %v6187 = vand.u32 %v6175, 2147483648
      %v6188 = vor.u32 1.1754944e-38, %v6187
      %v6189 = vsel %vm6186, %v6188, %v6184
      %v6190 = vmul.f32 %v6172, %v6189
      %v6191 = vpack.c.bf16 %v6190, %v6190
      %v6192 = vpack.c.bf16 %v6136, %v6136
      %v6194 = vsel %vm1300, %v6191, 0
      %v6197 = vsel %vm1330, %v6192, 0
      %6199 = vmatpush.bf16.msra.mxu0 0
      %6200 = vmatpush.bf16.msra.mxu0 0
      %6201 = vmatpush.bf16.msra.mxu0 0
      %6202 = vmatpush.bf16.msra.mxu0 0
      %6203 = vmatpush.bf16.msra.mxu0 0
      %6204 = vmatpush.bf16.msra.mxu0 0
      %6205 = vmatpush.bf16.msra.mxu0 0
      %6206 = vmatpush.bf16.msra.mxu0 %v6197
      %6207 = vmatmul.bf16.gmra.mxu0 %v6194
      %v6208 = vpop.f32.mrf.mxu0
      %v6209 = vadd.f32 0.0, %v6208
      %v6210 = vpop.f32.mrf.mxu0
      %6211 = vdwg.mxu0
      %v6212 = vpack.c.bf16 %v6209, %v6209
      %s6213 = scalar_lea.vmem %s23, 144
      %v6214 = vld [vmem:[%s6213] sm:$0xf]
      %v6215 = vld [vmem:[%s6213 + $0x4] sm:$0xf]
      %v6216 = vld [vmem:[%s6213 + $0x8] sm:$0xf]
      %v6217 = vld [vmem:[%s6213 + $0xc] sm:$0xf]
      %v6222 = vunpack.c.l.b16 %v6214
      %v6223 = vunpack.c.l.b16 %v6215
      %v6224 = vunpack.c.l.b16 %v6216
      %v6225 = vunpack.c.l.b16 %v6217
      %v6226 = vpack.c.b16 %v6223, %v6222
      %v6227 = vpack.c.b16 %v6225, %v6224
      %v6231 = vsel %vm1271, %v6212, 0
      %6233 = vmatpush.bf16.msra.mxu0 0
      %6234 = vmatpush.bf16.msra.mxu0 0
      %6235 = vmatpush.bf16.msra.mxu0 0
      %6236 = vmatpush.bf16.msra.mxu0 0
      %6237 = vmatpush.bf16.msra.mxu0 0
      %6238 = vmatpush.bf16.msra.mxu0 0
      %6239 = vmatpush.bf16.msra.mxu0 %v6227
      %6240 = vmatpush.bf16.msra.mxu0 %v6226
      %6241 = vmatmul.bf16.gmra.mxu0 %v6231
      %v6242 = vpop.f32.mrf.mxu0
      %v6243 = vadd.f32 0.0, %v6242
      %v6244 = vpop.f32.mrf.mxu0
      %6245 = vdwg.mxu0
      %v6250 = vunpack.c.l.b16 %v5886
      %v6251 = vunpack.c.l.b16 %v5887
      %v6252 = vunpack.c.l.b16 %v5888
      %v6253 = vunpack.c.l.b16 %v5889
      %v6254 = vpack.c.b16 %v6251, %v6250
      %v6255 = vpack.c.b16 %v6253, %v6252
      %v6259 = vsel %vm1271, %v5884, 0
      %6261 = vmatpush.bf16.msra.mxu0 0
      %6262 = vmatpush.bf16.msra.mxu0 0
      %6263 = vmatpush.bf16.msra.mxu0 0
      %6264 = vmatpush.bf16.msra.mxu0 0
      %6265 = vmatpush.bf16.msra.mxu0 0
      %6266 = vmatpush.bf16.msra.mxu0 0
      %6267 = vmatpush.bf16.msra.mxu0 %v6255
      %6268 = vmatpush.bf16.msra.mxu0 %v6254
      %6269 = vmatmul.bf16.gmra.mxu0 %v6259
      %v6270 = vpop.f32.mrf.mxu0
      %v6271 = vadd.f32 %v6243, %v6270
      %v6272 = vpop.f32.mrf.mxu0
      %6273 = vdwg.mxu0
      %s6274 = scalar_lea.vmem %s11, 640
      %v6275 = vld [vmem:[%s6274] sm:$0xf]
      %v6276 = vld [vmem:[%s6274 + $0x4] sm:$0xf]
      %v6277 = vld [vmem:[%s6274 + $0x8] sm:$0xf]
      %v6278 = vld [vmem:[%s6274 + $0xc] sm:$0xf]
      %v6279 = vld [vmem:[%s6274 + $0x10] sm:$0xf]
      %v6280 = vld [vmem:[%s6274 + $0x14] sm:$0xf]
      %v6281 = vld [vmem:[%s6274 + $0x18] sm:$0xf]
      %v6282 = vld [vmem:[%s6274 + $0x1c] sm:$0xf]
      %v6283 = vld [vmem:[%s6274 + $0x20] sm:$0xf]
      %v6284 = vld [vmem:[%s6274 + $0x24] sm:$0xf]
      %v6285 = vld [vmem:[%s6274 + $0x28] sm:$0xf]
      %v6286 = vld [vmem:[%s6274 + $0x2c] sm:$0xf]
      %v6287 = vld [vmem:[%s6274 + $0x30] sm:$0xf]
      %v6288 = vld [vmem:[%s6274 + $0x34] sm:$0xf]
      %v6289 = vld [vmem:[%s6274 + $0x38] sm:$0xf]
      %v6290 = vld [vmem:[%s6274 + $0x3c] sm:$0xf]
      %s6291 = scalar_lea.vmem %s13, 10
      %v6292 = vld [vmem:[%s6291] sm:$0x1]
      %v6294 = vperm.slane %v6292, 0
      %v6312 = vunpack.c.l.b16 %v6275
      %v6313 = vunpack.c.l.b16 %v6276
      %v6314 = vunpack.c.l.b16 %v6277
      %v6315 = vunpack.c.l.b16 %v6278
      %v6316 = vunpack.c.l.b16 %v6279
      %v6317 = vunpack.c.l.b16 %v6280
      %v6318 = vunpack.c.l.b16 %v6281
      %v6319 = vunpack.c.l.b16 %v6282
      %v6320 = vunpack.c.l.b16 %v6283
      %v6321 = vunpack.c.l.b16 %v6284
      %v6322 = vunpack.c.l.b16 %v6285
      %v6323 = vunpack.c.l.b16 %v6286
      %v6324 = vunpack.c.l.b16 %v6287
      %v6325 = vunpack.c.l.b16 %v6288
      %v6326 = vunpack.c.l.b16 %v6289
      %v6327 = vunpack.c.l.b16 %v6290
      %v6328 = vpack.c.b16 %v6313, %v6312
      %v6329 = vpack.c.b16 %v6315, %v6314
      %v6330 = vpack.c.b16 %v6317, %v6316
      %v6331 = vpack.c.b16 %v6319, %v6318
      %v6332 = vpack.c.b16 %v6321, %v6320
      %v6333 = vpack.c.b16 %v6323, %v6322
      %v6334 = vpack.c.b16 %v6325, %v6324
      %v6335 = vpack.c.b16 %v6327, %v6326
      %6344 = vmatpush.bf16.msra.mxu0 %v6335
      %6345 = vmatpush.bf16.msra.mxu0 %v6334
      %6346 = vmatpush.bf16.msra.mxu0 %v6333
      %6347 = vmatpush.bf16.msra.mxu0 %v6332
      %6348 = vmatpush.bf16.msra.mxu0 %v6331
      %6349 = vmatpush.bf16.msra.mxu0 %v6330
      %6350 = vmatpush.bf16.msra.mxu0 %v6329
      %6351 = vmatpush.bf16.msra.mxu0 %v6328
      %6352 = vmatmul.bf16.gmra.mxu0 %v5561
      %v6353 = vpop.f32.mrf.mxu0
      %v6354 = vadd.f32 %v6294, %v6353
      %v6355 = vpop.f32.mrf.mxu0
      %6356 = vdwg.mxu0
      %s6357 = scalar_lea.vmem %s15, 640
      %v6358 = vld [vmem:[%s6357] sm:$0xf]
      %v6359 = vld [vmem:[%s6357 + $0x4] sm:$0xf]
      %v6360 = vld [vmem:[%s6357 + $0x8] sm:$0xf]
      %v6361 = vld [vmem:[%s6357 + $0xc] sm:$0xf]
      %v6362 = vld [vmem:[%s6357 + $0x10] sm:$0xf]
      %v6363 = vld [vmem:[%s6357 + $0x14] sm:$0xf]
      %v6364 = vld [vmem:[%s6357 + $0x18] sm:$0xf]
      %v6365 = vld [vmem:[%s6357 + $0x1c] sm:$0xf]
      %v6366 = vld [vmem:[%s6357 + $0x20] sm:$0xf]
      %v6367 = vld [vmem:[%s6357 + $0x24] sm:$0xf]
      %v6368 = vld [vmem:[%s6357 + $0x28] sm:$0xf]
      %v6369 = vld [vmem:[%s6357 + $0x2c] sm:$0xf]
      %v6370 = vld [vmem:[%s6357 + $0x30] sm:$0xf]
      %v6371 = vld [vmem:[%s6357 + $0x34] sm:$0xf]
      %v6372 = vld [vmem:[%s6357 + $0x38] sm:$0xf]
      %v6373 = vld [vmem:[%s6357 + $0x3c] sm:$0xf]
      %s6374 = scalar_lea.vmem %s17, 10
      %v6375 = vld [vmem:[%s6374] sm:$0x1]
      %v6377 = vperm.slane %v6375, 0
      %v6395 = vunpack.c.l.b16 %v6358
      %v6396 = vunpack.c.l.b16 %v6359
      %v6397 = vunpack.c.l.b16 %v6360
      %v6398 = vunpack.c.l.b16 %v6361
      %v6399 = vunpack.c.l.b16 %v6362
      %v6400 = vunpack.c.l.b16 %v6363
      %v6401 = vunpack.c.l.b16 %v6364
      %v6402 = vunpack.c.l.b16 %v6365
      %v6403 = vunpack.c.l.b16 %v6366
      %v6404 = vunpack.c.l.b16 %v6367
      %v6405 = vunpack.c.l.b16 %v6368
      %v6406 = vunpack.c.l.b16 %v6369
      %v6407 = vunpack.c.l.b16 %v6370
      %v6408 = vunpack.c.l.b16 %v6371
      %v6409 = vunpack.c.l.b16 %v6372
      %v6410 = vunpack.c.l.b16 %v6373
      %v6411 = vpack.c.b16 %v6396, %v6395
      %v6412 = vpack.c.b16 %v6398, %v6397
      %v6413 = vpack.c.b16 %v6400, %v6399
      %v6414 = vpack.c.b16 %v6402, %v6401
      %v6415 = vpack.c.b16 %v6404, %v6403
      %v6416 = vpack.c.b16 %v6406, %v6405
      %v6417 = vpack.c.b16 %v6408, %v6407
      %v6418 = vpack.c.b16 %v6410, %v6409
      %6427 = vmatpush.bf16.msra.mxu0 %v6418
      %6428 = vmatpush.bf16.msra.mxu0 %v6417
      %6429 = vmatpush.bf16.msra.mxu0 %v6416
      %6430 = vmatpush.bf16.msra.mxu0 %v6415
      %6431 = vmatpush.bf16.msra.mxu0 %v6414
      %6432 = vmatpush.bf16.msra.mxu0 %v6413
      %6433 = vmatpush.bf16.msra.mxu0 %v6412
      %6434 = vmatpush.bf16.msra.mxu0 %v6411
      %6435 = vmatmul.bf16.gmra.mxu0 %v5561
      %v6436 = vpop.f32.mrf.mxu0
      %v6437 = vadd.f32 %v6377, %v6436
      %v6438 = vpop.f32.mrf.mxu0
      %6439 = vdwg.mxu0
      %s6440 = scalar_lea.vmem %s19, 640
      %v6441 = vld [vmem:[%s6440] sm:$0xf]
      %v6442 = vld [vmem:[%s6440 + $0x4] sm:$0xf]
      %v6443 = vld [vmem:[%s6440 + $0x8] sm:$0xf]
      %v6444 = vld [vmem:[%s6440 + $0xc] sm:$0xf]
      %v6445 = vld [vmem:[%s6440 + $0x10] sm:$0xf]
      %v6446 = vld [vmem:[%s6440 + $0x14] sm:$0xf]
      %v6447 = vld [vmem:[%s6440 + $0x18] sm:$0xf]
      %v6448 = vld [vmem:[%s6440 + $0x1c] sm:$0xf]
      %v6449 = vld [vmem:[%s6440 + $0x20] sm:$0xf]
      %v6450 = vld [vmem:[%s6440 + $0x24] sm:$0xf]
      %v6451 = vld [vmem:[%s6440 + $0x28] sm:$0xf]
      %v6452 = vld [vmem:[%s6440 + $0x2c] sm:$0xf]
      %v6453 = vld [vmem:[%s6440 + $0x30] sm:$0xf]
      %v6454 = vld [vmem:[%s6440 + $0x34] sm:$0xf]
      %v6455 = vld [vmem:[%s6440 + $0x38] sm:$0xf]
      %v6456 = vld [vmem:[%s6440 + $0x3c] sm:$0xf]
      %s6457 = scalar_lea.vmem %s21, 10
      %v6458 = vld [vmem:[%s6457] sm:$0x1]
      %v6460 = vperm.slane %v6458, 0
      %v6478 = vunpack.c.l.b16 %v6441
      %v6479 = vunpack.c.l.b16 %v6442
      %v6480 = vunpack.c.l.b16 %v6443
      %v6481 = vunpack.c.l.b16 %v6444
      %v6482 = vunpack.c.l.b16 %v6445
      %v6483 = vunpack.c.l.b16 %v6446
      %v6484 = vunpack.c.l.b16 %v6447
      %v6485 = vunpack.c.l.b16 %v6448
      %v6486 = vunpack.c.l.b16 %v6449
      %v6487 = vunpack.c.l.b16 %v6450
      %v6488 = vunpack.c.l.b16 %v6451
      %v6489 = vunpack.c.l.b16 %v6452
      %v6490 = vunpack.c.l.b16 %v6453
      %v6491 = vunpack.c.l.b16 %v6454
      %v6492 = vunpack.c.l.b16 %v6455
      %v6493 = vunpack.c.l.b16 %v6456
      %v6494 = vpack.c.b16 %v6479, %v6478
      %v6495 = vpack.c.b16 %v6481, %v6480
      %v6496 = vpack.c.b16 %v6483, %v6482
      %v6497 = vpack.c.b16 %v6485, %v6484
      %v6498 = vpack.c.b16 %v6487, %v6486
      %v6499 = vpack.c.b16 %v6489, %v6488
      %v6500 = vpack.c.b16 %v6491, %v6490
      %v6501 = vpack.c.b16 %v6493, %v6492
      %6510 = vmatpush.bf16.msra.mxu0 %v6501
      %6511 = vmatpush.bf16.msra.mxu0 %v6500
      %6512 = vmatpush.bf16.msra.mxu0 %v6499
      %6513 = vmatpush.bf16.msra.mxu0 %v6498
      %6514 = vmatpush.bf16.msra.mxu0 %v6497
      %6515 = vmatpush.bf16.msra.mxu0 %v6496
      %6516 = vmatpush.bf16.msra.mxu0 %v6495
      %6517 = vmatpush.bf16.msra.mxu0 %v6494
      %6518 = vmatmul.bf16.gmra.mxu0 %v5561
      %v6519 = vpop.f32.mrf.mxu0
      %v6520 = vadd.f32 %v6460, %v6519
      %v6521 = vpop.f32.mrf.mxu0
      %6522 = vdwg.mxu0
      %v6524 = vsel %vm1271, %v6354, 0
      %v6527 = vsel %vm1271, %v6437, 0
      %6529 = vmatpush.xpose.msra.mxu0 0.0
      %6530 = vmatpush.xpose.msra.mxu0 0.0
      %6531 = vmatpush.xpose.msra.mxu0 0.0
      %6532 = vmatpush.xpose.msra.mxu0 0.0
      %6533 = vmatpush.xpose.msra.mxu0 0.0
      %6534 = vmatpush.xpose.msra.mxu0 0.0
      %6535 = vmatpush.xpose.msra.mxu0 0.0
      %6536 = vmatpush.xpose.msra.mxu0 0.0
      %6537 = vmatpush.xpose.msra.mxu0 0.0
      %6538 = vmatpush.xpose.msra.mxu0 0.0
      %6539 = vmatpush.xpose.msra.mxu0 0.0
      %6540 = vmatpush.xpose.msra.mxu0 0.0
      %6541 = vmatpush.xpose.msra.mxu0 0.0
      %6542 = vmatpush.xpose.msra.mxu0 0.0
      %6543 = vmatpush.xpose.msra.mxu0 0.0
      %6544 = vmatpush.xpose.msra.mxu0 %v6527
      %6545 = vmatmul.f32.gmra.mxu0 %v6524
      %v6546 = vpop.f32.mrf.mxu0
      %v6547 = vadd.f32 0.0, %v6546
      %6548 = vdwg.mxu0
      %v6549 = vmul.f32 %v6547, 0.17677669
      %v6550 = vadd.f32 %v6549, %v1026
      %v6551 = vsel %vm1300, %v6550, -inf
      %6552 = vmax.xlane.f32.xlu0 %v6551
      %v6553 = vpop.xlane.xlu0 %6552
      %v6554 = vsub.f32 %v6550, %v6553
      %v6555 = vmul.f32 %v6554, 1.442695
      %v6556 = vpow.pop %v6555
      %v6557 = vsel %vm1300, %v6556, 0.0
      %6558 = vadd.xlane.f32.xlu0 %v6557
      %v6559 = vpop.xlane.xlu0 %6558
      %v6560 = vrcp.pop %v6559
      %v6561 = vmul.f32 %v6559, %v6560
      %v6562 = vsub.f32 1.0, %v6561
      %v6563 = vmul.f32 %v6560, %v6562
      %v6564 = vadd.f32 %v6560, %v6563
      %vm6565 = vweird.f32 %v6559
      %vm6566 = vweird.f32 %v6560
      %vm6567 = vmor %vm6565, %vm6566
      %v6568 = vsel %vm6567, %v6560, %v6564
      %v6569 = vand.u32 2147483647, %v6559
      %vm6570 = vcmp.eq.f32.partialorder %v6569, 8.507059e+37
      %v6571 = vand.u32 %v6559, 2147483648
      %v6572 = vor.u32 1.1754944e-38, %v6571
      %v6573 = vsel %vm6570, %v6572, %v6568
      %v6574 = vmul.f32 %v6556, %v6573
      %v6575 = vpack.c.bf16 %v6574, %v6574
      %v6576 = vpack.c.bf16 %v6520, %v6520
      %v6578 = vsel %vm1300, %v6575, 0
      %v6581 = vsel %vm1330, %v6576, 0
      %6583 = vmatpush.bf16.msra.mxu0 0
      %6584 = vmatpush.bf16.msra.mxu0 0
      %6585 = vmatpush.bf16.msra.mxu0 0
      %6586 = vmatpush.bf16.msra.mxu0 0
      %6587 = vmatpush.bf16.msra.mxu0 0
      %6588 = vmatpush.bf16.msra.mxu0 0
      %6589 = vmatpush.bf16.msra.mxu0 0
      %6590 = vmatpush.bf16.msra.mxu0 %v6581
      %6591 = vmatmul.bf16.gmra.mxu0 %v6578
      %v6592 = vpop.f32.mrf.mxu0
      %v6593 = vadd.f32 0.0, %v6592
      %v6594 = vpop.f32.mrf.mxu0
      %6595 = vdwg.mxu0
      %v6596 = vpack.c.bf16 %v6593, %v6593
      %s6597 = scalar_lea.vmem %s23, 160
      %v6598 = vld [vmem:[%s6597] sm:$0xf]
      %v6599 = vld [vmem:[%s6597 + $0x4] sm:$0xf]
      %v6600 = vld [vmem:[%s6597 + $0x8] sm:$0xf]
      %v6601 = vld [vmem:[%s6597 + $0xc] sm:$0xf]
      %v6606 = vunpack.c.l.b16 %v6598
      %v6607 = vunpack.c.l.b16 %v6599
      %v6608 = vunpack.c.l.b16 %v6600
      %v6609 = vunpack.c.l.b16 %v6601
      %v6610 = vpack.c.b16 %v6607, %v6606
      %v6611 = vpack.c.b16 %v6609, %v6608
      %v6615 = vsel %vm1271, %v6596, 0
      %6617 = vmatpush.bf16.msra.mxu0 0
      %6618 = vmatpush.bf16.msra.mxu0 0
      %6619 = vmatpush.bf16.msra.mxu0 0
      %6620 = vmatpush.bf16.msra.mxu0 0
      %6621 = vmatpush.bf16.msra.mxu0 0
      %6622 = vmatpush.bf16.msra.mxu0 0
      %6623 = vmatpush.bf16.msra.mxu0 %v6611
      %6624 = vmatpush.bf16.msra.mxu0 %v6610
      %6625 = vmatmul.bf16.gmra.mxu0 %v6615
      %v6626 = vpop.f32.mrf.mxu0
      %v6627 = vadd.f32 0.0, %v6626
      %v6628 = vpop.f32.mrf.mxu0
      %6629 = vdwg.mxu0
      %v6630 = vadd.f32 %v6271, %v6627
      %s6631 = scalar_lea.vmem %s11, 704
      %v6632 = vld [vmem:[%s6631] sm:$0xf]
      %v6633 = vld [vmem:[%s6631 + $0x4] sm:$0xf]
      %v6634 = vld [vmem:[%s6631 + $0x8] sm:$0xf]
      %v6635 = vld [vmem:[%s6631 + $0xc] sm:$0xf]
      %v6636 = vld [vmem:[%s6631 + $0x10] sm:$0xf]
      %v6637 = vld [vmem:[%s6631 + $0x14] sm:$0xf]
      %v6638 = vld [vmem:[%s6631 + $0x18] sm:$0xf]
      %v6639 = vld [vmem:[%s6631 + $0x1c] sm:$0xf]
      %v6640 = vld [vmem:[%s6631 + $0x20] sm:$0xf]
      %v6641 = vld [vmem:[%s6631 + $0x24] sm:$0xf]
      %v6642 = vld [vmem:[%s6631 + $0x28] sm:$0xf]
      %v6643 = vld [vmem:[%s6631 + $0x2c] sm:$0xf]
      %v6644 = vld [vmem:[%s6631 + $0x30] sm:$0xf]
      %v6645 = vld [vmem:[%s6631 + $0x34] sm:$0xf]
      %v6646 = vld [vmem:[%s6631 + $0x38] sm:$0xf]
      %v6647 = vld [vmem:[%s6631 + $0x3c] sm:$0xf]
      %s6648 = scalar_lea.vmem %s13, 11
      %v6649 = vld [vmem:[%s6648] sm:$0x1]
      %v6651 = vperm.slane %v6649, 0
      %v6669 = vunpack.c.l.b16 %v6632
      %v6670 = vunpack.c.l.b16 %v6633
      %v6671 = vunpack.c.l.b16 %v6634
      %v6672 = vunpack.c.l.b16 %v6635
      %v6673 = vunpack.c.l.b16 %v6636
      %v6674 = vunpack.c.l.b16 %v6637
      %v6675 = vunpack.c.l.b16 %v6638
      %v6676 = vunpack.c.l.b16 %v6639
      %v6677 = vunpack.c.l.b16 %v6640
      %v6678 = vunpack.c.l.b16 %v6641
      %v6679 = vunpack.c.l.b16 %v6642
      %v6680 = vunpack.c.l.b16 %v6643
      %v6681 = vunpack.c.l.b16 %v6644
      %v6682 = vunpack.c.l.b16 %v6645
      %v6683 = vunpack.c.l.b16 %v6646
      %v6684 = vunpack.c.l.b16 %v6647
      %v6685 = vpack.c.b16 %v6670, %v6669
      %v6686 = vpack.c.b16 %v6672, %v6671
      %v6687 = vpack.c.b16 %v6674, %v6673
      %v6688 = vpack.c.b16 %v6676, %v6675
      %v6689 = vpack.c.b16 %v6678, %v6677
      %v6690 = vpack.c.b16 %v6680, %v6679
      %v6691 = vpack.c.b16 %v6682, %v6681
      %v6692 = vpack.c.b16 %v6684, %v6683
      %6701 = vmatpush.bf16.msra.mxu0 %v6692
      %6702 = vmatpush.bf16.msra.mxu0 %v6691
      %6703 = vmatpush.bf16.msra.mxu0 %v6690
      %6704 = vmatpush.bf16.msra.mxu0 %v6689
      %6705 = vmatpush.bf16.msra.mxu0 %v6688
      %6706 = vmatpush.bf16.msra.mxu0 %v6687
      %6707 = vmatpush.bf16.msra.mxu0 %v6686
      %6708 = vmatpush.bf16.msra.mxu0 %v6685
      %6709 = vmatmul.bf16.gmra.mxu0 %v5561
      %v6710 = vpop.f32.mrf.mxu0
      %v6711 = vadd.f32 %v6651, %v6710
      %v6712 = vpop.f32.mrf.mxu0
      %6713 = vdwg.mxu0
      %s6714 = scalar_lea.vmem %s15, 704
      %v6715 = vld [vmem:[%s6714] sm:$0xf]
      %v6716 = vld [vmem:[%s6714 + $0x4] sm:$0xf]
      %v6717 = vld [vmem:[%s6714 + $0x8] sm:$0xf]
      %v6718 = vld [vmem:[%s6714 + $0xc] sm:$0xf]
      %v6719 = vld [vmem:[%s6714 + $0x10] sm:$0xf]
      %v6720 = vld [vmem:[%s6714 + $0x14] sm:$0xf]
      %v6721 = vld [vmem:[%s6714 + $0x18] sm:$0xf]
      %v6722 = vld [vmem:[%s6714 + $0x1c] sm:$0xf]
      %v6723 = vld [vmem:[%s6714 + $0x20] sm:$0xf]
      %v6724 = vld [vmem:[%s6714 + $0x24] sm:$0xf]
      %v6725 = vld [vmem:[%s6714 + $0x28] sm:$0xf]
      %v6726 = vld [vmem:[%s6714 + $0x2c] sm:$0xf]
      %v6727 = vld [vmem:[%s6714 + $0x30] sm:$0xf]
      %v6728 = vld [vmem:[%s6714 + $0x34] sm:$0xf]
      %v6729 = vld [vmem:[%s6714 + $0x38] sm:$0xf]
      %v6730 = vld [vmem:[%s6714 + $0x3c] sm:$0xf]
      %s6731 = scalar_lea.vmem %s17, 11
      %v6732 = vld [vmem:[%s6731] sm:$0x1]
      %v6734 = vperm.slane %v6732, 0
      %v6752 = vunpack.c.l.b16 %v6715
      %v6753 = vunpack.c.l.b16 %v6716
      %v6754 = vunpack.c.l.b16 %v6717
      %v6755 = vunpack.c.l.b16 %v6718
      %v6756 = vunpack.c.l.b16 %v6719
      %v6757 = vunpack.c.l.b16 %v6720
      %v6758 = vunpack.c.l.b16 %v6721
      %v6759 = vunpack.c.l.b16 %v6722
      %v6760 = vunpack.c.l.b16 %v6723
      %v6761 = vunpack.c.l.b16 %v6724
      %v6762 = vunpack.c.l.b16 %v6725
      %v6763 = vunpack.c.l.b16 %v6726
      %v6764 = vunpack.c.l.b16 %v6727
      %v6765 = vunpack.c.l.b16 %v6728
      %v6766 = vunpack.c.l.b16 %v6729
      %v6767 = vunpack.c.l.b16 %v6730
      %v6768 = vpack.c.b16 %v6753, %v6752
      %v6769 = vpack.c.b16 %v6755, %v6754
      %v6770 = vpack.c.b16 %v6757, %v6756
      %v6771 = vpack.c.b16 %v6759, %v6758
      %v6772 = vpack.c.b16 %v6761, %v6760
      %v6773 = vpack.c.b16 %v6763, %v6762
      %v6774 = vpack.c.b16 %v6765, %v6764
      %v6775 = vpack.c.b16 %v6767, %v6766
      %6784 = vmatpush.bf16.msra.mxu0 %v6775
      %6785 = vmatpush.bf16.msra.mxu0 %v6774
      %6786 = vmatpush.bf16.msra.mxu0 %v6773
      %6787 = vmatpush.bf16.msra.mxu0 %v6772
      %6788 = vmatpush.bf16.msra.mxu0 %v6771
      %6789 = vmatpush.bf16.msra.mxu0 %v6770
      %6790 = vmatpush.bf16.msra.mxu0 %v6769
      %6791 = vmatpush.bf16.msra.mxu0 %v6768
      %6792 = vmatmul.bf16.gmra.mxu0 %v5561
      %v6793 = vpop.f32.mrf.mxu0
      %v6794 = vadd.f32 %v6734, %v6793
      %v6795 = vpop.f32.mrf.mxu0
      %6796 = vdwg.mxu0
      %s6797 = scalar_lea.vmem %s19, 704
      %v6798 = vld [vmem:[%s6797] sm:$0xf]
      %v6799 = vld [vmem:[%s6797 + $0x4] sm:$0xf]
      %v6800 = vld [vmem:[%s6797 + $0x8] sm:$0xf]
      %v6801 = vld [vmem:[%s6797 + $0xc] sm:$0xf]
      %v6802 = vld [vmem:[%s6797 + $0x10] sm:$0xf]
      %v6803 = vld [vmem:[%s6797 + $0x14] sm:$0xf]
      %v6804 = vld [vmem:[%s6797 + $0x18] sm:$0xf]
      %v6805 = vld [vmem:[%s6797 + $0x1c] sm:$0xf]
      %v6806 = vld [vmem:[%s6797 + $0x20] sm:$0xf]
      %v6807 = vld [vmem:[%s6797 + $0x24] sm:$0xf]
      %v6808 = vld [vmem:[%s6797 + $0x28] sm:$0xf]
      %v6809 = vld [vmem:[%s6797 + $0x2c] sm:$0xf]
      %v6810 = vld [vmem:[%s6797 + $0x30] sm:$0xf]
      %v6811 = vld [vmem:[%s6797 + $0x34] sm:$0xf]
      %v6812 = vld [vmem:[%s6797 + $0x38] sm:$0xf]
      %v6813 = vld [vmem:[%s6797 + $0x3c] sm:$0xf]
      %s6814 = scalar_lea.vmem %s21, 11
      %v6815 = vld [vmem:[%s6814] sm:$0x1]
      %v6817 = vperm.slane %v6815, 0
      %v6835 = vunpack.c.l.b16 %v6798
      %v6836 = vunpack.c.l.b16 %v6799
      %v6837 = vunpack.c.l.b16 %v6800
      %v6838 = vunpack.c.l.b16 %v6801
      %v6839 = vunpack.c.l.b16 %v6802
      %v6840 = vunpack.c.l.b16 %v6803
      %v6841 = vunpack.c.l.b16 %v6804
      %v6842 = vunpack.c.l.b16 %v6805
      %v6843 = vunpack.c.l.b16 %v6806
      %v6844 = vunpack.c.l.b16 %v6807
      %v6845 = vunpack.c.l.b16 %v6808
      %v6846 = vunpack.c.l.b16 %v6809
      %v6847 = vunpack.c.l.b16 %v6810
      %v6848 = vunpack.c.l.b16 %v6811
      %v6849 = vunpack.c.l.b16 %v6812
      %v6850 = vunpack.c.l.b16 %v6813
      %v6851 = vpack.c.b16 %v6836, %v6835
      %v6852 = vpack.c.b16 %v6838, %v6837
      %v6853 = vpack.c.b16 %v6840, %v6839
      %v6854 = vpack.c.b16 %v6842, %v6841
      %v6855 = vpack.c.b16 %v6844, %v6843
      %v6856 = vpack.c.b16 %v6846, %v6845
      %v6857 = vpack.c.b16 %v6848, %v6847
      %v6858 = vpack.c.b16 %v6850, %v6849
      %6867 = vmatpush.bf16.msra.mxu0 %v6858
      %6868 = vmatpush.bf16.msra.mxu0 %v6857
      %6869 = vmatpush.bf16.msra.mxu0 %v6856
      %6870 = vmatpush.bf16.msra.mxu0 %v6855
      %6871 = vmatpush.bf16.msra.mxu0 %v6854
      %6872 = vmatpush.bf16.msra.mxu0 %v6853
      %6873 = vmatpush.bf16.msra.mxu0 %v6852
      %6874 = vmatpush.bf16.msra.mxu0 %v6851
      %6875 = vmatmul.bf16.gmra.mxu0 %v5561
      %v6876 = vpop.f32.mrf.mxu0
      %v6877 = vadd.f32 %v6817, %v6876
      %v6878 = vpop.f32.mrf.mxu0
      %6879 = vdwg.mxu0
      %v6881 = vsel %vm1271, %v6711, 0
      %v6884 = vsel %vm1271, %v6794, 0
      %6886 = vmatpush.xpose.msra.mxu0 0.0
      %6887 = vmatpush.xpose.msra.mxu0 0.0
      %6888 = vmatpush.xpose.msra.mxu0 0.0
      %6889 = vmatpush.xpose.msra.mxu0 0.0
      %6890 = vmatpush.xpose.msra.mxu0 0.0
      %6891 = vmatpush.xpose.msra.mxu0 0.0
      %6892 = vmatpush.xpose.msra.mxu0 0.0
      %6893 = vmatpush.xpose.msra.mxu0 0.0
      %6894 = vmatpush.xpose.msra.mxu0 0.0
      %6895 = vmatpush.xpose.msra.mxu0 0.0
      %6896 = vmatpush.xpose.msra.mxu0 0.0
      %6897 = vmatpush.xpose.msra.mxu0 0.0
      %6898 = vmatpush.xpose.msra.mxu0 0.0
      %6899 = vmatpush.xpose.msra.mxu0 0.0
      %6900 = vmatpush.xpose.msra.mxu0 0.0
      %6901 = vmatpush.xpose.msra.mxu0 %v6884
      %6902 = vmatmul.f32.gmra.mxu0 %v6881
      %v6903 = vpop.f32.mrf.mxu0
      %v6904 = vadd.f32 0.0, %v6903
      %6905 = vdwg.mxu0
      %v6906 = vmul.f32 %v6904, 0.17677669
      %v6907 = vadd.f32 %v6906, %v1026
      %v6908 = vsel %vm1300, %v6907, -inf
      %6909 = vmax.xlane.f32.xlu0 %v6908
      %v6910 = vpop.xlane.xlu0 %6909
      %v6911 = vsub.f32 %v6907, %v6910
      %v6912 = vmul.f32 %v6911, 1.442695
      %v6913 = vpow.pop %v6912
      %v6914 = vsel %vm1300, %v6913, 0.0
      %6915 = vadd.xlane.f32.xlu0 %v6914
      %v6916 = vpop.xlane.xlu0 %6915
      %v6917 = vrcp.pop %v6916
      %v6918 = vmul.f32 %v6916, %v6917
      %v6919 = vsub.f32 1.0, %v6918
      %v6920 = vmul.f32 %v6917, %v6919
      %v6921 = vadd.f32 %v6917, %v6920
      %vm6922 = vweird.f32 %v6916
      %vm6923 = vweird.f32 %v6917
      %vm6924 = vmor %vm6922, %vm6923
      %v6925 = vsel %vm6924, %v6917, %v6921
      %v6926 = vand.u32 2147483647, %v6916
      %vm6927 = vcmp.eq.f32.partialorder %v6926, 8.507059e+37
      %v6928 = vand.u32 %v6916, 2147483648
      %v6929 = vor.u32 1.1754944e-38, %v6928
      %v6930 = vsel %vm6927, %v6929, %v6925
      %v6931 = vmul.f32 %v6913, %v6930
      %v6932 = vpack.c.bf16 %v6931, %v6931
      %v6933 = vpack.c.bf16 %v6877, %v6877
      %v6935 = vsel %vm1300, %v6932, 0
      %v6938 = vsel %vm1330, %v6933, 0
      %6940 = vmatpush.bf16.msra.mxu0 0
      %6941 = vmatpush.bf16.msra.mxu0 0
      %6942 = vmatpush.bf16.msra.mxu0 0
      %6943 = vmatpush.bf16.msra.mxu0 0
      %6944 = vmatpush.bf16.msra.mxu0 0
      %6945 = vmatpush.bf16.msra.mxu0 0
      %6946 = vmatpush.bf16.msra.mxu0 0
      %6947 = vmatpush.bf16.msra.mxu0 %v6938
      %6948 = vmatmul.bf16.gmra.mxu0 %v6935
      %v6949 = vpop.f32.mrf.mxu0
      %v6950 = vadd.f32 0.0, %v6949
      %v6951 = vpop.f32.mrf.mxu0
      %6952 = vdwg.mxu0
      %v6953 = vpack.c.bf16 %v6950, %v6950
      %s6954 = scalar_lea.vmem %s23, 176
      %v6955 = vld [vmem:[%s6954] sm:$0xf]
      %v6956 = vld [vmem:[%s6954 + $0x4] sm:$0xf]
      %v6957 = vld [vmem:[%s6954 + $0x8] sm:$0xf]
      %v6958 = vld [vmem:[%s6954 + $0xc] sm:$0xf]
      %v6963 = vunpack.c.l.b16 %v6955
      %v6964 = vunpack.c.l.b16 %v6956
      %v6965 = vunpack.c.l.b16 %v6957
      %v6966 = vunpack.c.l.b16 %v6958
      %v6967 = vpack.c.b16 %v6964, %v6963
      %v6968 = vpack.c.b16 %v6966, %v6965
      %v6972 = vsel %vm1271, %v6953, 0
      %6974 = vmatpush.bf16.msra.mxu0 0
      %6975 = vmatpush.bf16.msra.mxu0 0
      %6976 = vmatpush.bf16.msra.mxu0 0
      %6977 = vmatpush.bf16.msra.mxu0 0
      %6978 = vmatpush.bf16.msra.mxu0 0
      %6979 = vmatpush.bf16.msra.mxu0 0
      %6980 = vmatpush.bf16.msra.mxu0 %v6968
      %6981 = vmatpush.bf16.msra.mxu0 %v6967
      %6982 = vmatmul.bf16.gmra.mxu0 %v6972
      %v6983 = vpop.f32.mrf.mxu0
      %v6984 = vadd.f32 0.0, %v6983
      %v6985 = vpop.f32.mrf.mxu0
      %6986 = vdwg.mxu0
      %v6987 = vadd.f32 %v6630, %v6984
      %s6988 = scalar_lea.vmem %s25, 2
      %v6989 = vld [vmem:[%s6988] sm:$0x1]
      %v6991 = vperm.slane %v6989, 0
      %v6993 = vadd.f32 %v6987, %v6991
      %v6994 = vadd.f32 %v5560, %v6993
      %s6995 = scalar_lea.vmem %s43, 2
      %v6996 = vld [vmem:[%s6995] sm:$0x1]
      %s6997 = scalar_lea.vmem %s45, 2
      %v6998 = vld [vmem:[%s6997] sm:$0x1]
      %6999 = vadd.xlane.f32.xlu0 %v6994
      %v7000 = vpop.xlane.xlu0 %6999
      %v7001 = vmul.f32 %v7000, %v2466
      %v7002 = vsub.f32 %v6994, %v7001
      %v7003 = vmul.f32 %v7002, %v7002
      %7004 = vadd.xlane.f32.xlu0 %v7003
      %v7005 = vpop.xlane.xlu0 %7004
      %v7006 = vmul.f32 %v7005, %v2466
      %v7007 = vadd.f32 %v7006, 1e-05
      %v7008 = vrsqrt.pop %v7007
      %v7009 = vmul.f32 %v7008, %v7007
      %v7010 = vmul.f32 %v7009, %v7008
      %v7011 = vmul.f32 0.5, %v7010
      %v7012 = vsub.f32 1.5, %v7011
      %v7013 = vmul.f32 %v7008, %v7012
      %vm7014 = vweird.f32 %v7007
      %vm7015 = vweird.f32 %v7008
      %vm7016 = vmor %vm7014, %vm7015
      %v7017 = vsel %vm7016, %v7008, %v7013
      %v7018 = vmul.f32 %v7002, %v7017
      %v7020 = vperm.slane %v6996, 0
      %v7022 = vmul.f32 %v7018, %v7020
      %v7024 = vperm.slane %v6998, 0
      %v7026 = vadd.f32 %v7022, %v7024
      %s7027 = scalar_lea.vmem %s27, 128
      %v7028 = vld [vmem:[%s7027] sm:$0xf]
      %v7029 = vld [vmem:[%s7027 + $0x4] sm:$0xf]
      %v7030 = vld [vmem:[%s7027 + $0x8] sm:$0xf]
      %v7031 = vld [vmem:[%s7027 + $0xc] sm:$0xf]
      %v7032 = vld [vmem:[%s7027 + $0x10] sm:$0xf]
      %v7033 = vld [vmem:[%s7027 + $0x14] sm:$0xf]
      %v7034 = vld [vmem:[%s7027 + $0x18] sm:$0xf]
      %v7035 = vld [vmem:[%s7027 + $0x1c] sm:$0xf]
      %v7036 = vld [vmem:[%s7027 + $0x20] sm:$0xf]
      %v7037 = vld [vmem:[%s7027 + $0x24] sm:$0xf]
      %v7038 = vld [vmem:[%s7027 + $0x28] sm:$0xf]
      %v7039 = vld [vmem:[%s7027 + $0x2c] sm:$0xf]
      %v7040 = vld [vmem:[%s7027 + $0x30] sm:$0xf]
      %v7041 = vld [vmem:[%s7027 + $0x34] sm:$0xf]
      %v7042 = vld [vmem:[%s7027 + $0x38] sm:$0xf]
      %v7043 = vld [vmem:[%s7027 + $0x3c] sm:$0xf]
      %s7044 = scalar_lea.vmem %s29, 2
      %v7045 = vld [vmem:[%s7044] sm:$0x1]
      %v7062 = vunpack.c.l.b16 %v7028
      %v7063 = vunpack.c.l.b16 %v7029
      %v7064 = vunpack.c.l.b16 %v7030
      %v7065 = vunpack.c.l.b16 %v7031
      %v7066 = vunpack.c.l.b16 %v7032
      %v7067 = vunpack.c.l.b16 %v7033
      %v7068 = vunpack.c.l.b16 %v7034
      %v7069 = vunpack.c.l.b16 %v7035
      %v7070 = vunpack.c.l.b16 %v7036
      %v7071 = vunpack.c.l.b16 %v7037
      %v7072 = vunpack.c.l.b16 %v7038
      %v7073 = vunpack.c.l.b16 %v7039
      %v7074 = vunpack.c.l.b16 %v7040
      %v7075 = vunpack.c.l.b16 %v7041
      %v7076 = vunpack.c.l.b16 %v7042
      %v7077 = vunpack.c.l.b16 %v7043
      %v7078 = vpack.c.b16 %v7063, %v7062
      %v7079 = vpack.c.b16 %v7065, %v7064
      %v7080 = vpack.c.b16 %v7067, %v7066
      %v7081 = vpack.c.b16 %v7069, %v7068
      %v7082 = vpack.c.b16 %v7071, %v7070
      %v7083 = vpack.c.b16 %v7073, %v7072
      %v7084 = vpack.c.b16 %v7075, %v7074
      %v7085 = vpack.c.b16 %v7077, %v7076
      %7094 = vmatpush.bf16.msra.mxu0 %v7085
      %7095 = vmatpush.bf16.msra.mxu0 %v7084
      %7096 = vmatpush.bf16.msra.mxu0 %v7083
      %7097 = vmatpush.bf16.msra.mxu0 %v7082
      %7098 = vmatpush.bf16.msra.mxu0 %v7081
      %7099 = vmatpush.bf16.msra.mxu0 %v7080
      %7100 = vmatpush.bf16.msra.mxu0 %v7079
      %7101 = vmatpush.bf16.msra.mxu0 %v7078
      %7102 = vmatmul.bf16.gmra.mxu0 %v1024
      %v7103 = vpop.f32.mrf.mxu0
      %v7104 = vadd.f32 %v7045, %v7103
      %v7105 = vpop.f32.mrf.mxu0
      %7106 = vdwg.mxu0
      %v7107 = vpack.c.bf16 %v7104, %v7104
      %s7108 = scalar_lea.vmem %s31, 128
      %v7109 = vld [vmem:[%s7108] sm:$0xf]
      %v7110 = vld [vmem:[%s7108 + $0x4] sm:$0xf]
      %v7111 = vld [vmem:[%s7108 + $0x8] sm:$0xf]
      %v7112 = vld [vmem:[%s7108 + $0xc] sm:$0xf]
      %v7113 = vld [vmem:[%s7108 + $0x10] sm:$0xf]
      %v7114 = vld [vmem:[%s7108 + $0x14] sm:$0xf]
      %v7115 = vld [vmem:[%s7108 + $0x18] sm:$0xf]
      %v7116 = vld [vmem:[%s7108 + $0x1c] sm:$0xf]
      %v7117 = vld [vmem:[%s7108 + $0x20] sm:$0xf]
      %v7118 = vld [vmem:[%s7108 + $0x24] sm:$0xf]
      %v7119 = vld [vmem:[%s7108 + $0x28] sm:$0xf]
      %v7120 = vld [vmem:[%s7108 + $0x2c] sm:$0xf]
      %v7121 = vld [vmem:[%s7108 + $0x30] sm:$0xf]
      %v7122 = vld [vmem:[%s7108 + $0x34] sm:$0xf]
      %v7123 = vld [vmem:[%s7108 + $0x38] sm:$0xf]
      %v7124 = vld [vmem:[%s7108 + $0x3c] sm:$0xf]
      %s7125 = scalar_lea.vmem %s33, 2
      %v7126 = vld [vmem:[%s7125] sm:$0x1]
      %v7143 = vunpack.c.l.b16 %v7109
      %v7144 = vunpack.c.l.b16 %v7110
      %v7145 = vunpack.c.l.b16 %v7111
      %v7146 = vunpack.c.l.b16 %v7112
      %v7147 = vunpack.c.l.b16 %v7113
      %v7148 = vunpack.c.l.b16 %v7114
      %v7149 = vunpack.c.l.b16 %v7115
      %v7150 = vunpack.c.l.b16 %v7116
      %v7151 = vunpack.c.l.b16 %v7117
      %v7152 = vunpack.c.l.b16 %v7118
      %v7153 = vunpack.c.l.b16 %v7119
      %v7154 = vunpack.c.l.b16 %v7120
      %v7155 = vunpack.c.l.b16 %v7121
      %v7156 = vunpack.c.l.b16 %v7122
      %v7157 = vunpack.c.l.b16 %v7123
      %v7158 = vunpack.c.l.b16 %v7124
      %v7159 = vpack.c.b16 %v7144, %v7143
      %v7160 = vpack.c.b16 %v7146, %v7145
      %v7161 = vpack.c.b16 %v7148, %v7147
      %v7162 = vpack.c.b16 %v7150, %v7149
      %v7163 = vpack.c.b16 %v7152, %v7151
      %v7164 = vpack.c.b16 %v7154, %v7153
      %v7165 = vpack.c.b16 %v7156, %v7155
      %v7166 = vpack.c.b16 %v7158, %v7157
      %7175 = vmatpush.bf16.msra.mxu0 %v7166
      %7176 = vmatpush.bf16.msra.mxu0 %v7165
      %7177 = vmatpush.bf16.msra.mxu0 %v7164
      %7178 = vmatpush.bf16.msra.mxu0 %v7163
      %7179 = vmatpush.bf16.msra.mxu0 %v7162
      %7180 = vmatpush.bf16.msra.mxu0 %v7161
      %7181 = vmatpush.bf16.msra.mxu0 %v7160
      %7182 = vmatpush.bf16.msra.mxu0 %v7159
      %7183 = vmatmul.bf16.gmra.mxu0 %v7107
      %v7184 = vpop.f32.mrf.mxu0
      %v7185 = vadd.f32 %v7126, %v7184
      %v7186 = vpop.f32.mrf.mxu0
      %7187 = vdwg.mxu0
      %v7188 = vperm.slane %v7185, 0
      %v7189 = vadd.f32 %v7026, %v7188
      %s7190 = scalar_lea.vmem %s47, 2
      %v7191 = vld [vmem:[%s7190] sm:$0x1]
      %s7192 = scalar_lea.vmem %s49, 2
      %v7193 = vld [vmem:[%s7192] sm:$0x1]
      %7194 = vadd.xlane.f32.xlu0 %v7189
      %v7195 = vpop.xlane.xlu0 %7194
      %v7196 = vmul.f32 %v7195, %v2466
      %v7197 = vsub.f32 %v7189, %v7196
      %v7198 = vmul.f32 %v7197, %v7197
      %7199 = vadd.xlane.f32.xlu0 %v7198
      %v7200 = vpop.xlane.xlu0 %7199
      %v7201 = vmul.f32 %v7200, %v2466
      %v7202 = vadd.f32 %v7201, 1e-05
      %v7203 = vrsqrt.pop %v7202
      %v7204 = vmul.f32 %v7203, %v7202
      %v7205 = vmul.f32 %v7204, %v7203
      %v7206 = vmul.f32 0.5, %v7205
      %v7207 = vsub.f32 1.5, %v7206
      %v7208 = vmul.f32 %v7203, %v7207
      %vm7209 = vweird.f32 %v7202
      %vm7210 = vweird.f32 %v7203
      %vm7211 = vmor %vm7209, %vm7210
      %v7212 = vsel %vm7211, %v7203, %v7208
      %v7213 = vmul.f32 %v7197, %v7212
      %v7215 = vperm.slane %v7191, 0
      %v7217 = vmul.f32 %v7213, %v7215
      %v7219 = vperm.slane %v7193, 0
      %v7221 = vadd.f32 %v7217, %v7219
      %v7222 = vpack.c.bf16 %v7221, %v7221
      %s7223 = scalar_lea.vmem %s35, 512
      %v7224 = vld [vmem:[%s7223] sm:$0xff]
      %v7225 = vld [vmem:[%s7223 + $0x8] sm:$0xff]
      %v7226 = vld [vmem:[%s7223 + $0x10] sm:$0xff]
      %v7227 = vld [vmem:[%s7223 + $0x18] sm:$0xff]
      %v7228 = vld [vmem:[%s7223 + $0x20] sm:$0xff]
      %v7229 = vld [vmem:[%s7223 + $0x28] sm:$0xff]
      %v7230 = vld [vmem:[%s7223 + $0x30] sm:$0xff]
      %v7231 = vld [vmem:[%s7223 + $0x38] sm:$0xff]
      %v7232 = vld [vmem:[%s7223 + $0x40] sm:$0xff]
      %v7233 = vld [vmem:[%s7223 + $0x48] sm:$0xff]
      %v7234 = vld [vmem:[%s7223 + $0x50] sm:$0xff]
      %v7235 = vld [vmem:[%s7223 + $0x58] sm:$0xff]
      %v7236 = vld [vmem:[%s7223 + $0x60] sm:$0xff]
      %v7237 = vld [vmem:[%s7223 + $0x68] sm:$0xff]
      %v7238 = vld [vmem:[%s7223 + $0x70] sm:$0xff]
      %v7239 = vld [vmem:[%s7223 + $0x78] sm:$0xff]
      %v7240 = vld [vmem:[%s7223 + $0x80] sm:$0xff]
      %v7241 = vld [vmem:[%s7223 + $0x88] sm:$0xff]
      %v7242 = vld [vmem:[%s7223 + $0x90] sm:$0xff]
      %v7243 = vld [vmem:[%s7223 + $0x98] sm:$0xff]
      %v7244 = vld [vmem:[%s7223 + $0xa0] sm:$0xff]
      %v7245 = vld [vmem:[%s7223 + $0xa8] sm:$0xff]
      %v7246 = vld [vmem:[%s7223 + $0xb0] sm:$0xff]
      %v7247 = vld [vmem:[%s7223 + $0xb8] sm:$0xff]
      %v7248 = vld [vmem:[%s7223 + $0xc0] sm:$0xff]
      %v7249 = vld [vmem:[%s7223 + $0xc8] sm:$0xff]
      %v7250 = vld [vmem:[%s7223 + $0xd0] sm:$0xff]
      %v7251 = vld [vmem:[%s7223 + $0xd8] sm:$0xff]
      %v7252 = vld [vmem:[%s7223 + $0xe0] sm:$0xff]
      %v7253 = vld [vmem:[%s7223 + $0xe8] sm:$0xff]
      %v7254 = vld [vmem:[%s7223 + $0xf0] sm:$0xff]
      %v7255 = vld [vmem:[%s7223 + $0xf8] sm:$0xff]
      %s7256 = scalar_lea.vmem %s37, 8
      %v7257 = vld [vmem:[%s7256] sm:$0xf]
      %v7259 = vperm.slane %v7257, 0
      %v7260 = vperm.slane %v7257, 1
      %v7261 = vperm.slane %v7257, 2
      %v7262 = vperm.slane %v7257, 3
      %v7299 = vunpack.c.l.b16 %v7224
      %v7300 = vunpack.c.h.b16 %v7224
      %v7301 = vunpack.c.l.b16 %v7225
      %v7302 = vunpack.c.h.b16 %v7225
      %v7303 = vunpack.c.l.b16 %v7226
      %v7304 = vunpack.c.h.b16 %v7226
      %v7305 = vunpack.c.l.b16 %v7227
      %v7306 = vunpack.c.h.b16 %v7227
      %v7307 = vunpack.c.l.b16 %v7228
      %v7308 = vunpack.c.h.b16 %v7228
      %v7309 = vunpack.c.l.b16 %v7229
      %v7310 = vunpack.c.h.b16 %v7229
      %v7311 = vunpack.c.l.b16 %v7230
      %v7312 = vunpack.c.h.b16 %v7230
      %v7313 = vunpack.c.l.b16 %v7231
      %v7314 = vunpack.c.h.b16 %v7231
      %v7315 = vunpack.c.l.b16 %v7232
      %v7316 = vunpack.c.h.b16 %v7232
      %v7317 = vunpack.c.l.b16 %v7233
      %v7318 = vunpack.c.h.b16 %v7233
      %v7319 = vunpack.c.l.b16 %v7234
      %v7320 = vunpack.c.h.b16 %v7234
      %v7321 = vunpack.c.l.b16 %v7235
      %v7322 = vunpack.c.h.b16 %v7235
      %v7323 = vunpack.c.l.b16 %v7236
      %v7324 = vunpack.c.h.b16 %v7236
      %v7325 = vunpack.c.l.b16 %v7237
      %v7326 = vunpack.c.h.b16 %v7237
      %v7327 = vunpack.c.l.b16 %v7238
      %v7328 = vunpack.c.h.b16 %v7238
      %v7329 = vunpack.c.l.b16 %v7239
      %v7330 = vunpack.c.h.b16 %v7239
      %v7331 = vunpack.c.l.b16 %v7240
      %v7332 = vunpack.c.h.b16 %v7240
      %v7333 = vunpack.c.l.b16 %v7241
      %v7334 = vunpack.c.h.b16 %v7241
      %v7335 = vunpack.c.l.b16 %v7242
      %v7336 = vunpack.c.h.b16 %v7242
      %v7337 = vunpack.c.l.b16 %v7243
      %v7338 = vunpack.c.h.b16 %v7243
      %v7339 = vunpack.c.l.b16 %v7244
      %v7340 = vunpack.c.h.b16 %v7244
      %v7341 = vunpack.c.l.b16 %v7245
      %v7342 = vunpack.c.h.b16 %v7245
      %v7343 = vunpack.c.l.b16 %v7246
      %v7344 = vunpack.c.h.b16 %v7246
      %v7345 = vunpack.c.l.b16 %v7247
      %v7346 = vunpack.c.h.b16 %v7247
      %v7347 = vunpack.c.l.b16 %v7248
      %v7348 = vunpack.c.h.b16 %v7248
      %v7349 = vunpack.c.l.b16 %v7249
      %v7350 = vunpack.c.h.b16 %v7249
      %v7351 = vunpack.c.l.b16 %v7250
      %v7352 = vunpack.c.h.b16 %v7250
      %v7353 = vunpack.c.l.b16 %v7251
      %v7354 = vunpack.c.h.b16 %v7251
      %v7355 = vunpack.c.l.b16 %v7252
      %v7356 = vunpack.c.h.b16 %v7252
      %v7357 = vunpack.c.l.b16 %v7253
      %v7358 = vunpack.c.h.b16 %v7253
      %v7359 = vunpack.c.l.b16 %v7254
      %v7360 = vunpack.c.h.b16 %v7254
      %v7361 = vunpack.c.l.b16 %v7255
      %v7362 = vunpack.c.h.b16 %v7255
      %v7363 = vpack.c.b16 %v7303, %v7299
      %v7364 = vpack.c.b16 %v7304, %v7300
      %v7365 = vpack.c.b16 %v7305, %v7301
      %v7366 = vpack.c.b16 %v7306, %v7302
      %v7367 = vpack.c.b16 %v7311, %v7307
      %v7368 = vpack.c.b16 %v7312, %v7308
      %v7369 = vpack.c.b16 %v7313, %v7309
      %v7370 = vpack.c.b16 %v7314, %v7310
      %v7371 = vpack.c.b16 %v7319, %v7315
      %v7372 = vpack.c.b16 %v7320, %v7316
      %v7373 = vpack.c.b16 %v7321, %v7317
      %v7374 = vpack.c.b16 %v7322, %v7318
      %v7375 = vpack.c.b16 %v7327, %v7323
      %v7376 = vpack.c.b16 %v7328, %v7324
      %v7377 = vpack.c.b16 %v7329, %v7325
      %v7378 = vpack.c.b16 %v7330, %v7326
      %v7379 = vpack.c.b16 %v7335, %v7331
      %v7380 = vpack.c.b16 %v7336, %v7332
      %v7381 = vpack.c.b16 %v7337, %v7333
      %v7382 = vpack.c.b16 %v7338, %v7334
      %v7383 = vpack.c.b16 %v7343, %v7339
      %v7384 = vpack.c.b16 %v7344, %v7340
      %v7385 = vpack.c.b16 %v7345, %v7341
      %v7386 = vpack.c.b16 %v7346, %v7342
      %v7387 = vpack.c.b16 %v7351, %v7347
      %v7388 = vpack.c.b16 %v7352, %v7348
      %v7389 = vpack.c.b16 %v7353, %v7349
      %v7390 = vpack.c.b16 %v7354, %v7350
      %v7391 = vpack.c.b16 %v7359, %v7355
      %v7392 = vpack.c.b16 %v7360, %v7356
      %v7393 = vpack.c.b16 %v7361, %v7357
      %v7394 = vpack.c.b16 %v7362, %v7358
      %7427 = vmatpush.bf16.msra.mxu0 %v7391
      %7428 = vmatpush.bf16.msra.mxu0 %v7387
      %7429 = vmatpush.bf16.msra.mxu0 %v7383
      %7430 = vmatpush.bf16.msra.mxu0 %v7379
      %7431 = vmatpush.bf16.msra.mxu0 %v7375
      %7432 = vmatpush.bf16.msra.mxu0 %v7371
      %7433 = vmatpush.bf16.msra.mxu0 %v7367
      %7434 = vmatpush.bf16.msra.mxu0 %v7363
      %7435 = vmatmul.bf16.gmra.mxu0 %v7222
      %v7436 = vpop.f32.mrf.mxu0
      %v7437 = vadd.f32 %v7259, %v7436
      %v7438 = vpop.f32.mrf.mxu0
      %7439 = vdwg.mxu0
      %7440 = vmatpush.bf16.msra.mxu0 %v7392
      %7441 = vmatpush.bf16.msra.mxu0 %v7388
      %7442 = vmatpush.bf16.msra.mxu0 %v7384
      %7443 = vmatpush.bf16.msra.mxu0 %v7380
      %7444 = vmatpush.bf16.msra.mxu0 %v7376
      %7445 = vmatpush.bf16.msra.mxu0 %v7372
      %7446 = vmatpush.bf16.msra.mxu0 %v7368
      %7447 = vmatpush.bf16.msra.mxu0 %v7364
      %7448 = vmatmul.bf16.gmra.mxu0 %v7222
      %v7449 = vpop.f32.mrf.mxu0
      %v7450 = vadd.f32 %v7260, %v7449
      %v7451 = vpop.f32.mrf.mxu0
      %7452 = vdwg.mxu0
      %7453 = vmatpush.bf16.msra.mxu0 %v7393
      %7454 = vmatpush.bf16.msra.mxu0 %v7389
      %7455 = vmatpush.bf16.msra.mxu0 %v7385
      %7456 = vmatpush.bf16.msra.mxu0 %v7381
      %7457 = vmatpush.bf16.msra.mxu0 %v7377
      %7458 = vmatpush.bf16.msra.mxu0 %v7373
      %7459 = vmatpush.bf16.msra.mxu0 %v7369
      %7460 = vmatpush.bf16.msra.mxu0 %v7365
      %7461 = vmatmul.bf16.gmra.mxu0 %v7222
      %v7462 = vpop.f32.mrf.mxu0
      %v7463 = vadd.f32 %v7261, %v7462
      %v7464 = vpop.f32.mrf.mxu0
      %7465 = vdwg.mxu0
      %7466 = vmatpush.bf16.msra.mxu0 %v7394
      %7467 = vmatpush.bf16.msra.mxu0 %v7390
      %7468 = vmatpush.bf16.msra.mxu0 %v7386
      %7469 = vmatpush.bf16.msra.mxu0 %v7382
      %7470 = vmatpush.bf16.msra.mxu0 %v7378
      %7471 = vmatpush.bf16.msra.mxu0 %v7374
      %7472 = vmatpush.bf16.msra.mxu0 %v7370
      %7473 = vmatpush.bf16.msra.mxu0 %v7366
      %7474 = vmatmul.bf16.gmra.mxu0 %v7222
      %v7475 = vpop.f32.mrf.mxu0
      %v7476 = vadd.f32 %v7262, %v7475
      %v7477 = vpop.f32.mrf.mxu0
      %7478 = vdwg.mxu0
      %v7479 = vmax.f32 %v7437, 0.0
      %v7480 = vmax.f32 %v7450, 0.0
      %v7481 = vmax.f32 %v7463, 0.0
      %v7482 = vmax.f32 %v7476, 0.0
      %v7483 = vpack.c.bf16 %v7479, %v7479
      %v7484 = vpack.c.bf16 %v7480, %v7480
      %v7485 = vpack.c.bf16 %v7481, %v7481
      %v7486 = vpack.c.bf16 %v7482, %v7482
      %s7487 = scalar_lea.vmem %s39, 512
      %v7488 = vld [vmem:[%s7487] sm:$0xf]
      %v7489 = vld [vmem:[%s7487 + $0x4] sm:$0xf]
      %v7490 = vld [vmem:[%s7487 + $0x8] sm:$0xf]
      %v7491 = vld [vmem:[%s7487 + $0xc] sm:$0xf]
      %v7492 = vld [vmem:[%s7487 + $0x10] sm:$0xf]
      %v7493 = vld [vmem:[%s7487 + $0x14] sm:$0xf]
      %v7494 = vld [vmem:[%s7487 + $0x18] sm:$0xf]
      %v7495 = vld [vmem:[%s7487 + $0x1c] sm:$0xf]
      %v7496 = vld [vmem:[%s7487 + $0x20] sm:$0xf]
      %v7497 = vld [vmem:[%s7487 + $0x24] sm:$0xf]
      %v7498 = vld [vmem:[%s7487 + $0x28] sm:$0xf]
      %v7499 = vld [vmem:[%s7487 + $0x2c] sm:$0xf]
      %v7500 = vld [vmem:[%s7487 + $0x30] sm:$0xf]
      %v7501 = vld [vmem:[%s7487 + $0x34] sm:$0xf]
      %v7502 = vld [vmem:[%s7487 + $0x38] sm:$0xf]
      %v7503 = vld [vmem:[%s7487 + $0x3c] sm:$0xf]
      %v7504 = vld [vmem:[%s7487 + $0x40] sm:$0xf]
      %v7505 = vld [vmem:[%s7487 + $0x44] sm:$0xf]
      %v7506 = vld [vmem:[%s7487 + $0x48] sm:$0xf]
      %v7507 = vld [vmem:[%s7487 + $0x4c] sm:$0xf]
      %v7508 = vld [vmem:[%s7487 + $0x50] sm:$0xf]
      %v7509 = vld [vmem:[%s7487 + $0x54] sm:$0xf]
      %v7510 = vld [vmem:[%s7487 + $0x58] sm:$0xf]
      %v7511 = vld [vmem:[%s7487 + $0x5c] sm:$0xf]
      %v7512 = vld [vmem:[%s7487 + $0x60] sm:$0xf]
      %v7513 = vld [vmem:[%s7487 + $0x64] sm:$0xf]
      %v7514 = vld [vmem:[%s7487 + $0x68] sm:$0xf]
      %v7515 = vld [vmem:[%s7487 + $0x6c] sm:$0xf]
      %v7516 = vld [vmem:[%s7487 + $0x70] sm:$0xf]
      %v7517 = vld [vmem:[%s7487 + $0x74] sm:$0xf]
      %v7518 = vld [vmem:[%s7487 + $0x78] sm:$0xf]
      %v7519 = vld [vmem:[%s7487 + $0x7c] sm:$0xf]
      %v7520 = vld [vmem:[%s7487 + $0x80] sm:$0xf]
      %v7521 = vld [vmem:[%s7487 + $0x84] sm:$0xf]
      %v7522 = vld [vmem:[%s7487 + $0x88] sm:$0xf]
      %v7523 = vld [vmem:[%s7487 + $0x8c] sm:$0xf]
      %v7524 = vld [vmem:[%s7487 + $0x90] sm:$0xf]
      %v7525 = vld [vmem:[%s7487 + $0x94] sm:$0xf]
      %v7526 = vld [vmem:[%s7487 + $0x98] sm:$0xf]
      %v7527 = vld [vmem:[%s7487 + $0x9c] sm:$0xf]
      %v7528 = vld [vmem:[%s7487 + $0xa0] sm:$0xf]
      %v7529 = vld [vmem:[%s7487 + $0xa4] sm:$0xf]
      %v7530 = vld [vmem:[%s7487 + $0xa8] sm:$0xf]
      %v7531 = vld [vmem:[%s7487 + $0xac] sm:$0xf]
      %v7532 = vld [vmem:[%s7487 + $0xb0] sm:$0xf]
      %v7533 = vld [vmem:[%s7487 + $0xb4] sm:$0xf]
      %v7534 = vld [vmem:[%s7487 + $0xb8] sm:$0xf]
      %v7535 = vld [vmem:[%s7487 + $0xbc] sm:$0xf]
      %v7536 = vld [vmem:[%s7487 + $0xc0] sm:$0xf]
      %v7537 = vld [vmem:[%s7487 + $0xc4] sm:$0xf]
      %v7538 = vld [vmem:[%s7487 + $0xc8] sm:$0xf]
      %v7539 = vld [vmem:[%s7487 + $0xcc] sm:$0xf]
      %v7540 = vld [vmem:[%s7487 + $0xd0] sm:$0xf]
      %v7541 = vld [vmem:[%s7487 + $0xd4] sm:$0xf]
      %v7542 = vld [vmem:[%s7487 + $0xd8] sm:$0xf]
      %v7543 = vld [vmem:[%s7487 + $0xdc] sm:$0xf]
      %v7544 = vld [vmem:[%s7487 + $0xe0] sm:$0xf]
      %v7545 = vld [vmem:[%s7487 + $0xe4] sm:$0xf]
      %v7546 = vld [vmem:[%s7487 + $0xe8] sm:$0xf]
      %v7547 = vld [vmem:[%s7487 + $0xec] sm:$0xf]
      %v7548 = vld [vmem:[%s7487 + $0xf0] sm:$0xf]
      %v7549 = vld [vmem:[%s7487 + $0xf4] sm:$0xf]
      %v7550 = vld [vmem:[%s7487 + $0xf8] sm:$0xf]
      %v7551 = vld [vmem:[%s7487 + $0xfc] sm:$0xf]
      %s7552 = scalar_lea.vmem %s41, 2
      %v7553 = vld [vmem:[%s7552] sm:$0x1]
      %v7555 = vperm.slane %v7553, 0
      %v7621 = vunpack.c.l.b16 %v7488
      %v7622 = vunpack.c.l.b16 %v7489
      %v7623 = vunpack.c.l.b16 %v7490
      %v7624 = vunpack.c.l.b16 %v7491
      %v7625 = vunpack.c.l.b16 %v7492
      %v7626 = vunpack.c.l.b16 %v7493
      %v7627 = vunpack.c.l.b16 %v7494
      %v7628 = vunpack.c.l.b16 %v7495
      %v7629 = vunpack.c.l.b16 %v7496
      %v7630 = vunpack.c.l.b16 %v7497
      %v7631 = vunpack.c.l.b16 %v7498
      %v7632 = vunpack.c.l.b16 %v7499
      %v7633 = vunpack.c.l.b16 %v7500
      %v7634 = vunpack.c.l.b16 %v7501
      %v7635 = vunpack.c.l.b16 %v7502
      %v7636 = vunpack.c.l.b16 %v7503
      %v7637 = vunpack.c.l.b16 %v7504
      %v7638 = vunpack.c.l.b16 %v7505
      %v7639 = vunpack.c.l.b16 %v7506
      %v7640 = vunpack.c.l.b16 %v7507
      %v7641 = vunpack.c.l.b16 %v7508
      %v7642 = vunpack.c.l.b16 %v7509
      %v7643 = vunpack.c.l.b16 %v7510
      %v7644 = vunpack.c.l.b16 %v7511
      %v7645 = vunpack.c.l.b16 %v7512
      %v7646 = vunpack.c.l.b16 %v7513
      %v7647 = vunpack.c.l.b16 %v7514
      %v7648 = vunpack.c.l.b16 %v7515
      %v7649 = vunpack.c.l.b16 %v7516
      %v7650 = vunpack.c.l.b16 %v7517
      %v7651 = vunpack.c.l.b16 %v7518
      %v7652 = vunpack.c.l.b16 %v7519
      %v7653 = vunpack.c.l.b16 %v7520
      %v7654 = vunpack.c.l.b16 %v7521
      %v7655 = vunpack.c.l.b16 %v7522
      %v7656 = vunpack.c.l.b16 %v7523
      %v7657 = vunpack.c.l.b16 %v7524
      %v7658 = vunpack.c.l.b16 %v7525
      %v7659 = vunpack.c.l.b16 %v7526
      %v7660 = vunpack.c.l.b16 %v7527
      %v7661 = vunpack.c.l.b16 %v7528
      %v7662 = vunpack.c.l.b16 %v7529
      %v7663 = vunpack.c.l.b16 %v7530
      %v7664 = vunpack.c.l.b16 %v7531
      %v7665 = vunpack.c.l.b16 %v7532
      %v7666 = vunpack.c.l.b16 %v7533
      %v7667 = vunpack.c.l.b16 %v7534
      %v7668 = vunpack.c.l.b16 %v7535
      %v7669 = vunpack.c.l.b16 %v7536
      %v7670 = vunpack.c.l.b16 %v7537
      %v7671 = vunpack.c.l.b16 %v7538
      %v7672 = vunpack.c.l.b16 %v7539
      %v7673 = vunpack.c.l.b16 %v7540
      %v7674 = vunpack.c.l.b16 %v7541
      %v7675 = vunpack.c.l.b16 %v7542
      %v7676 = vunpack.c.l.b16 %v7543
      %v7677 = vunpack.c.l.b16 %v7544
      %v7678 = vunpack.c.l.b16 %v7545
      %v7679 = vunpack.c.l.b16 %v7546
      %v7680 = vunpack.c.l.b16 %v7547
      %v7681 = vunpack.c.l.b16 %v7548
      %v7682 = vunpack.c.l.b16 %v7549
      %v7683 = vunpack.c.l.b16 %v7550
      %v7684 = vunpack.c.l.b16 %v7551
      %v7685 = vpack.c.b16 %v7622, %v7621
      %v7686 = vpack.c.b16 %v7624, %v7623
      %v7687 = vpack.c.b16 %v7626, %v7625
      %v7688 = vpack.c.b16 %v7628, %v7627
      %v7689 = vpack.c.b16 %v7630, %v7629
      %v7690 = vpack.c.b16 %v7632, %v7631
      %v7691 = vpack.c.b16 %v7634, %v7633
      %v7692 = vpack.c.b16 %v7636, %v7635
      %v7693 = vpack.c.b16 %v7638, %v7637
      %v7694 = vpack.c.b16 %v7640, %v7639
      %v7695 = vpack.c.b16 %v7642, %v7641
      %v7696 = vpack.c.b16 %v7644, %v7643
      %v7697 = vpack.c.b16 %v7646, %v7645
      %v7698 = vpack.c.b16 %v7648, %v7647
      %v7699 = vpack.c.b16 %v7650, %v7649
      %v7700 = vpack.c.b16 %v7652, %v7651
      %v7701 = vpack.c.b16 %v7654, %v7653
      %v7702 = vpack.c.b16 %v7656, %v7655
      %v7703 = vpack.c.b16 %v7658, %v7657
      %v7704 = vpack.c.b16 %v7660, %v7659
      %v7705 = vpack.c.b16 %v7662, %v7661
      %v7706 = vpack.c.b16 %v7664, %v7663
      %v7707 = vpack.c.b16 %v7666, %v7665
      %v7708 = vpack.c.b16 %v7668, %v7667
      %v7709 = vpack.c.b16 %v7670, %v7669
      %v7710 = vpack.c.b16 %v7672, %v7671
      %v7711 = vpack.c.b16 %v7674, %v7673
      %v7712 = vpack.c.b16 %v7676, %v7675
      %v7713 = vpack.c.b16 %v7678, %v7677
      %v7714 = vpack.c.b16 %v7680, %v7679
      %v7715 = vpack.c.b16 %v7682, %v7681
      %v7716 = vpack.c.b16 %v7684, %v7683
      %7749 = vmatpush.bf16.msra.mxu0 %v7692
      %7750 = vmatpush.bf16.msra.mxu0 %v7691
      %7751 = vmatpush.bf16.msra.mxu0 %v7690
      %7752 = vmatpush.bf16.msra.mxu0 %v7689
      %7753 = vmatpush.bf16.msra.mxu0 %v7688
      %7754 = vmatpush.bf16.msra.mxu0 %v7687
      %7755 = vmatpush.bf16.msra.mxu0 %v7686
      %7756 = vmatpush.bf16.msra.mxu0 %v7685
      %7757 = vmatmul.bf16.gmra.mxu0 %v7483
      %v7758 = vpop.f32.mrf.mxu0
      %v7759 = vadd.f32 %v7555, %v7758
      %v7760 = vpop.f32.mrf.mxu0
      %7761 = vdwg.mxu0
      %7762 = vmatpush.bf16.msra.mxu0 %v7700
      %7763 = vmatpush.bf16.msra.mxu0 %v7699
      %7764 = vmatpush.bf16.msra.mxu0 %v7698
      %7765 = vmatpush.bf16.msra.mxu0 %v7697
      %7766 = vmatpush.bf16.msra.mxu0 %v7696
      %7767 = vmatpush.bf16.msra.mxu0 %v7695
      %7768 = vmatpush.bf16.msra.mxu0 %v7694
      %7769 = vmatpush.bf16.msra.mxu0 %v7693
      %7770 = vmatmul.bf16.gmra.mxu0 %v7484
      %v7771 = vpop.f32.mrf.mxu0
      %v7772 = vadd.f32 %v7759, %v7771
      %v7773 = vpop.f32.mrf.mxu0
      %7774 = vdwg.mxu0
      %7775 = vmatpush.bf16.msra.mxu0 %v7708
      %7776 = vmatpush.bf16.msra.mxu0 %v7707
      %7777 = vmatpush.bf16.msra.mxu0 %v7706
      %7778 = vmatpush.bf16.msra.mxu0 %v7705
      %7779 = vmatpush.bf16.msra.mxu0 %v7704
      %7780 = vmatpush.bf16.msra.mxu0 %v7703
      %7781 = vmatpush.bf16.msra.mxu0 %v7702
      %7782 = vmatpush.bf16.msra.mxu0 %v7701
      %7783 = vmatmul.bf16.gmra.mxu0 %v7485
      %v7784 = vpop.f32.mrf.mxu0
      %v7785 = vadd.f32 %v7772, %v7784
      %v7786 = vpop.f32.mrf.mxu0
      %7787 = vdwg.mxu0
      %7788 = vmatpush.bf16.msra.mxu0 %v7716
      %7789 = vmatpush.bf16.msra.mxu0 %v7715
      %7790 = vmatpush.bf16.msra.mxu0 %v7714
      %7791 = vmatpush.bf16.msra.mxu0 %v7713
      %7792 = vmatpush.bf16.msra.mxu0 %v7712
      %7793 = vmatpush.bf16.msra.mxu0 %v7711
      %7794 = vmatpush.bf16.msra.mxu0 %v7710
      %7795 = vmatpush.bf16.msra.mxu0 %v7709
      %7796 = vmatmul.bf16.gmra.mxu0 %v7486
      %v7797 = vpop.f32.mrf.mxu0
      %v7798 = vadd.f32 %v7785, %v7797
      %v7799 = vpop.f32.mrf.mxu0
      %7800 = vdwg.mxu0
      %v7801 = vadd.f32 %v7221, %v7798
      %s7802 = scalar_lea.vmem %s51, 2
      %v7803 = vld [vmem:[%s7802] sm:$0x1]
      %s7804 = scalar_lea.vmem %s53, 2
      %v7805 = vld [vmem:[%s7804] sm:$0x1]
      %7806 = vadd.xlane.f32.xlu0 %v7801
      %v7807 = vpop.xlane.xlu0 %7806
      %v7808 = vmul.f32 %v7807, %v2466
      %v7809 = vsub.f32 %v7801, %v7808
      %v7810 = vmul.f32 %v7809, %v7809
      %7811 = vadd.xlane.f32.xlu0 %v7810
      %v7812 = vpop.xlane.xlu0 %7811
      %v7813 = vmul.f32 %v7812, %v2466
      %v7814 = vadd.f32 %v7813, 1e-05
      %v7815 = vrsqrt.pop %v7814
      %v7816 = vmul.f32 %v7815, %v7814
      %v7817 = vmul.f32 %v7816, %v7815
      %v7818 = vmul.f32 0.5, %v7817
      %v7819 = vsub.f32 1.5, %v7818
      %v7820 = vmul.f32 %v7815, %v7819
      %vm7821 = vweird.f32 %v7814
      %vm7822 = vweird.f32 %v7815
      %vm7823 = vmor %vm7821, %vm7822
      %v7824 = vsel %vm7823, %v7815, %v7820
      %v7825 = vmul.f32 %v7809, %v7824
      %v7827 = vperm.slane %v7803, 0
      %v7829 = vmul.f32 %v7825, %v7827
      %v7831 = vperm.slane %v7805, 0
      %v7833 = vadd.f32 %v7829, %v7831
      %v7834 = vpack.c.bf16 %v7833, %v7833
      %v7835 = vld [vmem:[%s55] sm:$0xf]
      %v7836 = vld [vmem:[%s55 + $0x4] sm:$0xf]
      %v7837 = vld [vmem:[%s55 + $0x8] sm:$0xf]
      %v7838 = vld [vmem:[%s55 + $0xc] sm:$0xf]
      %v7839 = vld [vmem:[%s55 + $0x10] sm:$0xf]
      %v7840 = vld [vmem:[%s55 + $0x14] sm:$0xf]
      %v7841 = vld [vmem:[%s55 + $0x18] sm:$0xf]
      %v7842 = vld [vmem:[%s55 + $0x1c] sm:$0xf]
      %v7843 = vld [vmem:[%s55 + $0x20] sm:$0xf]
      %v7844 = vld [vmem:[%s55 + $0x24] sm:$0xf]
      %v7845 = vld [vmem:[%s55 + $0x28] sm:$0xf]
      %v7846 = vld [vmem:[%s55 + $0x2c] sm:$0xf]
      %v7847 = vld [vmem:[%s55 + $0x30] sm:$0xf]
      %v7848 = vld [vmem:[%s55 + $0x34] sm:$0xf]
      %v7849 = vld [vmem:[%s55 + $0x38] sm:$0xf]
      %v7850 = vld [vmem:[%s55 + $0x3c] sm:$0xf]
      %v7851 = vld [vmem:[%s57] sm:$0x1]
      %v7853 = vperm.slane %v7851, 0
      %v7871 = vunpack.c.l.b16 %v7835
      %v7872 = vunpack.c.l.b16 %v7836
      %v7873 = vunpack.c.l.b16 %v7837
      %v7874 = vunpack.c.l.b16 %v7838
      %v7875 = vunpack.c.l.b16 %v7839
      %v7876 = vunpack.c.l.b16 %v7840
      %v7877 = vunpack.c.l.b16 %v7841
      %v7878 = vunpack.c.l.b16 %v7842
      %v7879 = vunpack.c.l.b16 %v7843
      %v7880 = vunpack.c.l.b16 %v7844
      %v7881 = vunpack.c.l.b16 %v7845
      %v7882 = vunpack.c.l.b16 %v7846
      %v7883 = vunpack.c.l.b16 %v7847
      %v7884 = vunpack.c.l.b16 %v7848
      %v7885 = vunpack.c.l.b16 %v7849
      %v7886 = vunpack.c.l.b16 %v7850
      %v7887 = vpack.c.b16 %v7872, %v7871
      %v7888 = vpack.c.b16 %v7874, %v7873
      %v7889 = vpack.c.b16 %v7876, %v7875
      %v7890 = vpack.c.b16 %v7878, %v7877
      %v7891 = vpack.c.b16 %v7880, %v7879
      %v7892 = vpack.c.b16 %v7882, %v7881
      %v7893 = vpack.c.b16 %v7884, %v7883
      %v7894 = vpack.c.b16 %v7886, %v7885
      %7903 = vmatpush.bf16.msra.mxu0 %v7894
      %7904 = vmatpush.bf16.msra.mxu0 %v7893
      %7905 = vmatpush.bf16.msra.mxu0 %v7892
      %7906 = vmatpush.bf16.msra.mxu0 %v7891
      %7907 = vmatpush.bf16.msra.mxu0 %v7890
      %7908 = vmatpush.bf16.msra.mxu0 %v7889
      %7909 = vmatpush.bf16.msra.mxu0 %v7888
      %7910 = vmatpush.bf16.msra.mxu0 %v7887
      %7911 = vmatmul.bf16.gmra.mxu0 %v7834
      %v7912 = vpop.f32.mrf.mxu0
      %v7913 = vadd.f32 %v7853, %v7912
      %v7914 = vpop.f32.mrf.mxu0
      %7915 = vdwg.mxu0
      %7916 = vst [vmem:[%s934] sm:$0xff] %v7913
      %p7917 = scmp.lt.s32.totalorder %s70, 1
      %s7918 = scalar_select %p7917, %s70, 1
      %s7919 = smul.addr %s7918, 8
      %s7920 = scalar_lea.vmem %s59, %s7919
      // Predicated region
      $region137: #{encoder_decoder_forward.1} parent=135 // pred_check
        %p7921 = pneg %p712
      $region138: #{encoder_decoder_forward.1} parent=135 // pred_check_branch
        %7923 = sbr.rel (%p7921) target = $region140
      $region139: #{encoder_decoder_forward.1} parent=135 // pred_region
        _
      $region140: #{encoder_decoder_forward.1} parent=135 // pred_fallthru
        _
    $region136: #{encoder_decoder_forward.1} parent=5 // pred_fallthru
      _
    %p7924 = scmp.le.s32.totalorder 2, %s65
    // Predicated region
    $region141: #{encoder_decoder_forward.1} parent=5 // pred_check
      %p7925 = pneg %p7924
    $region142: #{encoder_decoder_forward.1} parent=5 // pred_check_branch
      %7927 = sbr.rel (%p7925) target = $region144
    $region143: #{encoder_decoder_forward.1} parent=5 // pred_region
      %s7928 = ssub.s32 %s65, 2
      // Predicated region
      $region145: #{encoder_decoder_forward.1} parent=143 // pred_check
        %p7929 = pneg %p718
      $region146: #{encoder_decoder_forward.1} parent=143 // pred_check_branch
        %7931 = sbr.rel (%p7929) target = $region148
      $region147: #{encoder_decoder_forward.1} parent=143 // pred_region
        %p7932 = scmp.lt.s32.totalorder %s71, 1
        %s7933 = scalar_select %p7932, %s71, 1
        %s7934 = smul.addr %s7933, 8
        %s7935 = scalar_lea.vmem %s59, %s7934
      $region148: #{encoder_decoder_forward.1} parent=143 // pred_fallthru
        _
    $region144: #{encoder_decoder_forward.1} parent=5 // pred_fallthru
      _
  $region6: #{encoder_decoder_forward.1} parent=0 // loop_footer
    %s69 = sadd.s32 1, %s65
  $region7: #{encoder_decoder_forward.1} parent=0 // loop_footer_branch
    %64 = sbr.rel target = $region3
  $region8: #{encoder_decoder_forward.1} parent=0 // loop_exit
    _

</llo_original>
